<compile_context>
chip_gen: v7x
topology: tpu7x:2x2x1
jax: 0.10.0
libtpu: 0.0.40
codegen_flags: <defaults>
</compile_context>

<pallas_src>
import functools

import jax
import jax.numpy as jnp
from jax.experimental import pallas as pl
from jax.experimental.pallas import tpu as pltpu

# fixed hyper-params from NAML.__init__
FILTER_NUM = 400
WINDOW = 3
QUERY_DIM = 200


def _round_up(x, m):
    return ((x + m - 1) // m) * m


# ----------------------------------------------------------------------------
# Pallas kernels
# ----------------------------------------------------------------------------
def text_encoder_kernel(xc_ref, wc_ref, bc_ref, w1_ref, b1_ref, w2_ref, b2_ref,
                        out_ref, *, seq_len, use_relu):
    """Conv1d (single im2col matmul) + optional ReLU + attention pooling for a
    block of BN news texts.  Sequence rows >= seq_len (added only for sublane
    alignment) are masked out of the softmax so they contribute exactly zero."""
    BN, Lp, KE = xc_ref.shape
    Fn = wc_ref.shape[1]
    Q = w1_ref.shape[1]

    # Conv1d as one (BN*Lp, K*E) x (K*E, Fn) MXU matmul, f32 accumulation.
    x2 = xc_ref[...].reshape(BN * Lp, KE)                            # bf16
    c = jnp.dot(x2, wc_ref[...],
                preferred_element_type=jnp.float32) + bc_ref[...]     # (BN*Lp, Fn)
    if use_relu:
        c = jnp.maximum(c, 0.0)

    # Attention scores: a = q^T tanh(V c + v)
    h = jnp.tanh(jnp.dot(c.astype(jnp.bfloat16), w1_ref[...],
                         preferred_element_type=jnp.float32) + b1_ref[...])
    h3 = h.reshape(BN, Lp, Q)
    a = jnp.sum(h3 * w2_ref[...][None, :, :], axis=-1) + b2_ref[...]  # (BN, Lp)

    # Mask alignment-padding rows, per-item softmax along the sequence axis.
    pos = jax.lax.broadcasted_iota(jnp.int32, (BN, Lp), 1)
    a = jnp.where(pos < seq_len, a, -1e9)
    a = a - jnp.max(a, axis=1, keepdims=True)
    e = jnp.exp(a)
    alpha = e * pl.reciprocal(jnp.sum(e, axis=1, keepdims=True), approx=True)

    # Pool with a batched (1, Lp) x (Lp, Fn) MXU matmul.
    c3 = c.reshape(BN, Lp, Fn)
    pooled = jnp.einsum('bks,bsf->bkf', alpha[:, None, :], c3,
                        preferred_element_type=jnp.float32)           # (BN, 1, Fn)
    out_ref[...] = pooled[:, 0, :]


def attn_pool_kernel(x_ref, w1_ref, b1_ref, w2_ref, b2_ref, out_ref):
    """AttentionPooling (no mask) over an encoded sequence, BN items per block."""
    BN, S, Fn = x_ref.shape
    Q = w1_ref.shape[1]

    x = x_ref[...]                                                    # (BN, S, Fn) f32
    x2 = x.reshape(BN * S, Fn)
    h = jnp.tanh(jnp.dot(x2.astype(jnp.bfloat16), w1_ref[...],
                         preferred_element_type=jnp.float32) + b1_ref[...])
    h3 = h.reshape(BN, S, Q)
    a = jnp.sum(h3 * w2_ref[...][None, :, :], axis=-1) + b2_ref[...]  # (BN, S)

    a = a - jnp.max(a, axis=1, keepdims=True)
    e = jnp.exp(a)
    alpha = e * pl.reciprocal(jnp.sum(e, axis=1, keepdims=True), approx=True)

    pooled = jnp.einsum('bks,bsf->bkf', alpha[:, None, :], x,
                        preferred_element_type=jnp.float32)           # (BN, 1, Fn)
    out_ref[...] = pooled[:, 0, :]


# ----------------------------------------------------------------------------
# Wrappers (embedding gathers, im2col, padding, pallas_call setup)
# ----------------------------------------------------------------------------
def _block_and_pad(x, cap):
    """Pick a batch block size (whole batch if small, else `cap`) and zero-pad
    the leading dim to a multiple of it."""
    n = x.shape[0]
    bn = n if n <= cap else cap             # cap is a multiple of 8
    n_pad = _round_up(n, bn)
    if n_pad != n:
        x = jnp.pad(x, ((0, n_pad - n),) + ((0, 0),) * (x.ndim - 1))
    return x, bn, n_pad


def text_encode(tokens, word_emb, p, use_relu, *, block_n=128):
    N, L = tokens.shape
    E = word_emb.shape[1]
    Fn, _, K = p["conv_w"].shape
    Q = p["fc1_w"].shape[0]
    pad = K // 2

    x_emb = jnp.take(word_emb, tokens, axis=0)                    # (N, L, E)
    xp = jnp.pad(x_emb, ((0, 0), (pad, pad), (0, 0)))             # (N, L+2pad, E)
    # im2col: column block k holds xp[:, k:k+L, :]  ->  (N, L, K*E)
    xcol = jnp.concatenate([xp[:, k:k + L, :] for k in range(K)], axis=-1)
    # pad sequence axis to a bf16-friendly sublane multiple (masked in-kernel)
    Lp = _round_up(L, 16)
    if Lp != L:
        xcol = jnp.pad(xcol, ((0, 0), (0, Lp - L), (0, 0)))
    xcol = xcol.astype(jnp.bfloat16)

    xcol, BN, Np = _block_and_pad(xcol, block_n)

    # conv weights (Fn, E, K) -> (K*E, Fn); row k*E+e == conv_w[:, e, k]
    wc = jnp.transpose(p["conv_w"], (2, 1, 0)).reshape(K * E, Fn)

    out = pl.pallas_call(
        functools.partial(text_encoder_kernel, seq_len=L, use_relu=use_relu),
        out_shape=jax.ShapeDtypeStruct((Np, Fn), jnp.float32),
        grid=(Np // BN,),
        in_specs=[
            pl.BlockSpec((BN, Lp, K * E), lambda i: (i, 0, 0)),
            pl.BlockSpec((K * E, Fn), lambda i: (0, 0)),
            pl.BlockSpec((1, Fn), lambda i: (0, 0)),
            pl.BlockSpec((Fn, Q), lambda i: (0, 0)),
            pl.BlockSpec((1, Q), lambda i: (0, 0)),
            pl.BlockSpec((1, Q), lambda i: (0, 0)),
            pl.BlockSpec((1, 1), lambda i: (0, 0)),
        ],
        out_specs=pl.BlockSpec((BN, Fn), lambda i: (i, 0)),
        compiler_params=pltpu.CompilerParams(
            dimension_semantics=("parallel",)),
    )(xcol,
      wc.astype(jnp.bfloat16),
      p["conv_b"][None, :],
      p["fc1_w"].T.astype(jnp.bfloat16),
      p["fc1_b"][None, :],
      p["fc2_w"],                      # (1, Q) f32
      p["fc2_b"].reshape(1, 1))
    return out[:N]


def attention_pool(x, p, *, block_n=256):
    N, S, Fn = x.shape
    Q = p["fc1_w"].shape[0]
    xpad, BN, Np = _block_and_pad(x, block_n)

    out = pl.pallas_call(
        attn_pool_kernel,
        out_shape=jax.ShapeDtypeStruct((Np, Fn), jnp.float32),
        grid=(Np // BN,),
        in_specs=[
            pl.BlockSpec((BN, S, Fn), lambda i: (i, 0, 0)),
            pl.BlockSpec((Fn, Q), lambda i: (0, 0)),
            pl.BlockSpec((1, Q), lambda i: (0, 0)),
            pl.BlockSpec((1, Q), lambda i: (0, 0)),
            pl.BlockSpec((1, 1), lambda i: (0, 0)),
        ],
        out_specs=pl.BlockSpec((BN, Fn), lambda i: (i, 0)),
        compiler_params=pltpu.CompilerParams(
            dimension_semantics=("parallel",)),
    )(xpad,
      p["fc1_w"].T.astype(jnp.bfloat16),
      p["fc1_b"][None, :],
      p["fc2_w"],
      p["fc2_b"].reshape(1, 1))
    return out[:N]


def cate_encode(cate_ids, cate_emb, p):
    # Small (N, Ec) x (Ec, Fn) GEMM + ReLU: left to XLA per perf review
    # (a pallas_call here is pure launch overhead).
    x = jnp.take(cate_emb, cate_ids, axis=0)
    return jnp.maximum(x @ p["fc_w"].T + p["fc_b"], 0.0)


def score(r, u):
    # y[b, s] = <r[b, s], u[b]> — trivially fused by XLA (2-wide output kernel
    # would be all masked partial stores + launch overhead).
    return jnp.einsum('bsf,bf->bs', r, u)


# ----------------------------------------------------------------------------
# Model forward (mirrors the PyTorch module structure)
# ----------------------------------------------------------------------------
def news_encode(params, news, args):
    title = news[:, :30]
    body = news[:, 30:-2]
    cate = news[:, -2]
    subcate = news[:, -1]

    r_t = text_encode(title, params["word_emb"], params["title"],
                      args["use_relu"])
    if args["use_body"] and args["use_cate"]:
        r_b = text_encode(body, params["word_emb"], params["body"],
                          args["use_relu"])
        r_c = cate_encode(cate, params["cate_emb"], params["cate"])
        r_sc = cate_encode(subcate, params["cate_emb"], params["subcate"])
        r = jnp.stack((r_t, r_b, r_c, r_sc), axis=1)
        r = attention_pool(r, params["news_attn"])
    elif args["use_body"]:
        r_b = text_encode(body, params["word_emb"], params["body"],
                          args["use_relu"])
        r = jnp.stack((r_t, r_b), axis=1)
        r = attention_pool(r, params["news_attn"])
    elif args["use_cate"]:
        r_c = cate_encode(cate, params["cate_emb"], params["cate"])
        r_sc = cate_encode(subcate, params["cate_emb"], params["subcate"])
        r = jnp.stack((r_t, r_c, r_sc), axis=1)
        r = attention_pool(r, params["news_attn"])
    else:
        r = r_t
    return r


def naml_forward(params, hist, samp, args):
    B, n_news, n_seq = hist.shape
    n_samp = samp.shape[1]

    h = news_encode(params, hist.reshape(B * n_news, n_seq), args)
    h = h.reshape(B, n_news, -1)
    u = attention_pool(h, params["user_attn"])                  # (B, Fn)

    r = news_encode(params, samp.reshape(B * n_samp, n_seq), args)
    r = r.reshape(B, n_samp, -1)

    y = score(r, u)                                             # (B, n_samp)
    return y


# ----------------------------------------------------------------------------
# Deterministic parameter initialization
# ----------------------------------------------------------------------------
def init_params(key, vocab, word_dim, n_cate, cate_dim):
    keys = iter(jax.random.split(key, 32))

    def rnd(shape, scale=0.05):
        return jax.random.normal(next(keys), shape, jnp.float32) * scale

    def text_params():
        return {
            "conv_w": rnd((FILTER_NUM, word_dim, WINDOW)),
            "conv_b": rnd((FILTER_NUM,)),
            "fc1_w": rnd((QUERY_DIM, FILTER_NUM)),
            "fc1_b": rnd((QUERY_DIM,)),
            "fc2_w": rnd((1, QUERY_DIM)),
            "fc2_b": rnd((1,)),
        }

    def attn_params():
        return {
            "fc1_w": rnd((QUERY_DIM, FILTER_NUM)),
            "fc1_b": rnd((QUERY_DIM,)),
            "fc2_w": rnd((1, QUERY_DIM)),
            "fc2_b": rnd((1,)),
        }

    def cate_params():
        return {
            "fc_w": rnd((FILTER_NUM, cate_dim)),
            "fc_b": rnd((FILTER_NUM,)),
        }

    return {
        "word_emb": rnd((vocab, word_dim), 0.1),
        "cate_emb": rnd((n_cate, cate_dim), 0.1),
        "title": text_params(),
        "body": text_params(),
        "cate": cate_params(),
        "subcate": cate_params(),
        "news_attn": attn_params(),
        "user_attn": attn_params(),
    }


# ----------------------------------------------------------------------------
if __name__ == "__main__":
    key = jax.random.PRNGKey(0)
    k_param, k_ht, k_hb, k_hc, k_st, k_sb, k_sc = jax.random.split(key, 7)

    # small shapes consistent with the forward:
    B, n_news, n_samp = 2, 3, 2
    title_len, body_len = 30, 8           # title slice is hard-coded [:30]
    n_seq = title_len + body_len + 2      # ... + cate + subcate columns
    vocab, word_dim = 50, 64
    n_cate, cate_dim = 10, 32
    args = {"use_body": True, "use_cate": True, "use_relu": False}

    params = init_params(k_param, vocab, word_dim, n_cate, cate_dim)

    def make_news(kw, kb, kc, n_rows):
        words = jax.random.randint(kw, (n_rows, title_len), 0, vocab, jnp.int32)
        body = jax.random.randint(kb, (n_rows, body_len), 0, vocab, jnp.int32)
        cats = jax.random.randint(kc, (n_rows, 2), 0, n_cate, jnp.int32)
        return jnp.concatenate([words, body, cats], axis=1)

    hist = make_news(k_ht, k_hb, k_hc, B * n_news).reshape(B, n_news, n_seq)
    samp = make_news(k_st, k_sb, k_sc, B * n_samp).reshape(B, n_samp, n_seq)

    fwd = jax.jit(functools.partial(naml_forward, args=args))
    y = fwd(params, hist, samp)
    y = jax.block_until_ready(y)
    assert y.shape == (B, n_samp), y.shape
    print("KERNEL_OK")
</pallas_src>

<mosaic_0001>
module attributes {stable_mosaic.version = 11 : i64} {
  func.func @text_encoder_kernel(%arg0: i32, %arg1: memref<6x16x192xbf16, #tpu.memory_space<vmem>>, %arg2: memref<192x400xbf16, #tpu.memory_space<vmem>>, %arg3: memref<1x400xf32, #tpu.memory_space<vmem>>, %arg4: memref<400x200xbf16, #tpu.memory_space<vmem>>, %arg5: memref<1x200xf32, #tpu.memory_space<vmem>>, %arg6: memref<1x200xf32, #tpu.memory_space<vmem>>, %arg7: memref<1x1xf32, #tpu.memory_space<vmem>>, %arg8: memref<6x400xf32, #tpu.memory_space<vmem>>) attributes {dimension_semantics = [#tpu.dimension_semantics<parallel>], iteration_bounds = array<i64: 1>, scalar_prefetch = 0 : i64, scratch_operands = 0 : i64, tpu.core_type = #tpu.core_type<tc>, window_params = [{transform_indices = @transform_0, window_bounds = array<i64: 6, 16, 192>}, {pipeline_mode = #tpu.pipeline_mode<synchronous>, transform_indices = @transform_1, window_bounds = array<i64: 192, 400>}, {pipeline_mode = #tpu.pipeline_mode<synchronous>, transform_indices = @transform_2, window_bounds = array<i64: 1, 400>}, {pipeline_mode = #tpu.pipeline_mode<synchronous>, transform_indices = @transform_3, window_bounds = array<i64: 400, 200>}, {pipeline_mode = #tpu.pipeline_mode<synchronous>, transform_indices = @transform_4, window_bounds = array<i64: 1, 200>}, {pipeline_mode = #tpu.pipeline_mode<synchronous>, transform_indices = @transform_5, window_bounds = array<i64: 1, 200>}, {pipeline_mode = #tpu.pipeline_mode<synchronous>, transform_indices = @transform_6, window_bounds = array<i64: 1, 1>}, {transform_indices = @transform_7, window_bounds = array<i64: 6, 400>}]} {
    %c0 = arith.constant 0 : index
    %c0_0 = arith.constant 0 : index
    %c0_1 = arith.constant 0 : index
    %0 = vector.load %arg1[%c0, %c0_0, %c0_1] : memref<6x16x192xbf16, #tpu.memory_space<vmem>>, vector<6x16x192xbf16>
    %1 = vector.shape_cast %0 : vector<6x16x192xbf16> to vector<96x192xbf16>
    %c0_2 = arith.constant 0 : index
    %c0_3 = arith.constant 0 : index
    %2 = vector.load %arg2[%c0_2, %c0_3] : memref<192x400xbf16, #tpu.memory_space<vmem>>, vector<192x400xbf16>
    %cst = arith.constant dense<0.000000e+00> : vector<96x400xf32>
    %3 = tpu.matmul %1, %2, %cst {dimension_numbers = #tpu.dot_dimension_numbers<[1], [0], [0], [1], [0, 0, 1, 1], [], []>} : vector<96x192xbf16>, vector<192x400xbf16>, vector<96x400xf32> -> vector<96x400xf32>
    %c0_4 = arith.constant 0 : index
    %c0_5 = arith.constant 0 : index
    %4 = vector.load %arg3[%c0_4, %c0_5] : memref<1x400xf32, #tpu.memory_space<vmem>>, vector<1x400xf32>
    %5 = vector.broadcast %4 : vector<1x400xf32> to vector<96x400xf32>
    %6 = arith.addf %3, %5 : vector<96x400xf32>
    %7 = arith.truncf %6 : vector<96x400xf32> to vector<96x400xbf16>
    %c0_6 = arith.constant 0 : index
    %c0_7 = arith.constant 0 : index
    %8 = vector.load %arg4[%c0_6, %c0_7] : memref<400x200xbf16, #tpu.memory_space<vmem>>, vector<400x200xbf16>
    %cst_8 = arith.constant dense<0.000000e+00> : vector<96x200xf32>
    %9 = tpu.matmul %7, %8, %cst_8 {dimension_numbers = #tpu.dot_dimension_numbers<[1], [0], [0], [1], [0, 0, 1, 1], [], []>} : vector<96x400xbf16>, vector<400x200xbf16>, vector<96x200xf32> -> vector<96x200xf32>
    %c0_9 = arith.constant 0 : index
    %c0_10 = arith.constant 0 : index
    %10 = vector.load %arg5[%c0_9, %c0_10] : memref<1x200xf32, #tpu.memory_space<vmem>>, vector<1x200xf32>
    %11 = vector.broadcast %10 : vector<1x200xf32> to vector<96x200xf32>
    %12 = arith.addf %9, %11 : vector<96x200xf32>
    %13 = math.tanh %12 : vector<96x200xf32>
    %14 = vector.shape_cast %13 : vector<96x200xf32> to vector<6x16x200xf32>
    %c0_11 = arith.constant 0 : index
    %c0_12 = arith.constant 0 : index
    %15 = vector.load %arg6[%c0_11, %c0_12] : memref<1x200xf32, #tpu.memory_space<vmem>>, vector<1x200xf32>
    %16 = vector.shape_cast %15 : vector<1x200xf32> to vector<1x1x200xf32>
    %17 = vector.broadcast %16 : vector<1x1x200xf32> to vector<6x16x200xf32>
    %18 = arith.mulf %14, %17 : vector<6x16x200xf32>
    %cst_13 = arith.constant dense<0.000000e+00> : vector<6x16xf32>
    %19 = vector.multi_reduction <add>, %18, %cst_13 [2] : vector<6x16x200xf32> to vector<6x16xf32>
    %c0_14 = arith.constant 0 : index
    %c0_15 = arith.constant 0 : index
    %20 = vector.load %arg7[%c0_14, %c0_15] : memref<1x1xf32, #tpu.memory_space<vmem>>, vector<1x1xf32>
    %21 = vector.broadcast %20 : vector<1x1xf32> to vector<6x16xf32>
    %22 = arith.addf %19, %21 : vector<6x16xf32>
    %23 = tpu.iota {dimensions = array<i32: 1>} : vector<6x16xi32>
    %c8_i32 = arith.constant 8 : i32
    %24 = vector.broadcast %c8_i32 : i32 to vector<6x16xi32>
    %25 = arith.cmpi slt, %23, %24 : vector<6x16xi32>
    %cst_16 = arith.constant -1.000000e+09 : f32
    %26 = vector.broadcast %cst_16 : f32 to vector<6x16xf32>
    %27 = arith.select %25, %22, %26 : vector<6x16xi1>, vector<6x16xf32>
    %cst_17 = arith.constant dense<0xFF800000> : vector<6xf32>
    %28 = vector.multi_reduction <maximumf>, %27, %cst_17 [1] : vector<6x16xf32> to vector<6xf32>
    %29 = vector.shape_cast %28 : vector<6xf32> to vector<6x1xf32>
    %30 = vector.broadcast %29 : vector<6x1xf32> to vector<6x16xf32>
    %31 = arith.subf %27, %30 : vector<6x16xf32>
    %32 = math.exp %31 : vector<6x16xf32>
    %cst_18 = arith.constant dense<0.000000e+00> : vector<6xf32>
    %33 = vector.multi_reduction <add>, %32, %cst_18 [1] : vector<6x16xf32> to vector<6xf32>
    %34 = vector.shape_cast %33 : vector<6xf32> to vector<6x1xf32>
    %35 = tpu.reciprocal %34 {approx = true} : vector<6x1xf32> -> vector<6x1xf32>
    %36 = vector.broadcast %35 : vector<6x1xf32> to vector<6x16xf32>
    %37 = arith.mulf %32, %36 : vector<6x16xf32>
    %38 = vector.shape_cast %6 : vector<96x400xf32> to vector<6x16x400xf32>
    %39 = vector.shape_cast %37 : vector<6x16xf32> to vector<6x1x16xf32>
    "tpu.trace_start"() <{level = 10 : i32, message = "bks,bsf->bkf"}> : () -> ()
    %cst_19 = arith.constant dense<0.000000e+00> : vector<6x1x400xf32>
    %40 = tpu.matmul %39, %38, %cst_19 {dimension_numbers = #tpu.dot_dimension_numbers<[2], [1], [1], [2], [0, 0, 0, 1, 1, 2], [0], [0]>} : vector<6x1x16xf32>, vector<6x16x400xf32>, vector<6x1x400xf32> -> vector<6x1x400xf32>
    "tpu.trace_stop"() : () -> ()
    %41 = vector.shape_cast %40 : vector<6x1x400xf32> to vector<6x400xf32>
    %c0_20 = arith.constant 0 : index
    %c0_21 = arith.constant 0 : index
    %42 = vector.load %arg8[%c0_20, %c0_21] : memref<6x400xf32, #tpu.memory_space<vmem>>, vector<6x400xf32>
    tpu.vector_store %arg8[%c0_20, %c0_21], %41 {strides = array<i32>} : memref<6x400xf32, #tpu.memory_space<vmem>>, vector<6x400xf32>,
    return
  }
  func.func @transform_0(%arg0: i32) -> (i32, i32, i32) {
    %c0_i32 = arith.constant 0 : i32
    %c0_i32_0 = arith.constant 0 : i32
    %c0_i32_1 = arith.constant 0 : i32
    return %arg0, %c0_i32, %c0_i32_0 : i32, i32, i32
  }
  func.func @transform_1(%arg0: i32) -> (i32, i32) {
    %c0_i32 = arith.constant 0 : i32
    %c0_i32_0 = arith.constant 0 : i32
    %c0_i32_1 = arith.constant 0 : i32
    return %c0_i32, %c0_i32_0 : i32, i32
  }
  func.func @transform_2(%arg0: i32) -> (i32, i32) {
    %c0_i32 = arith.constant 0 : i32
    %c0_i32_0 = arith.constant 0 : i32
    %c0_i32_1 = arith.constant 0 : i32
    return %c0_i32, %c0_i32_0 : i32, i32
  }
  func.func @transform_3(%arg0: i32) -> (i32, i32) {
    %c0_i32 = arith.constant 0 : i32
    %c0_i32_0 = arith.constant 0 : i32
    %c0_i32_1 = arith.constant 0 : i32
    return %c0_i32, %c0_i32_0 : i32, i32
  }
  func.func @transform_4(%arg0: i32) -> (i32, i32) {
    %c0_i32 = arith.constant 0 : i32
    %c0_i32_0 = arith.constant 0 : i32
    %c0_i32_1 = arith.constant 0 : i32
    return %c0_i32, %c0_i32_0 : i32, i32
  }
  func.func @transform_5(%arg0: i32) -> (i32, i32) {
    %c0_i32 = arith.constant 0 : i32
    %c0_i32_0 = arith.constant 0 : i32
    %c0_i32_1 = arith.constant 0 : i32
    return %c0_i32, %c0_i32_0 : i32, i32
  }
  func.func @transform_6(%arg0: i32) -> (i32, i32) {
    %c0_i32 = arith.constant 0 : i32
    %c0_i32_0 = arith.constant 0 : i32
    %c0_i32_1 = arith.constant 0 : i32
    return %c0_i32, %c0_i32_0 : i32, i32
  }
  func.func @transform_7(%arg0: i32) -> (i32, i32) {
    %c0_i32 = arith.constant 0 : i32
    %c0_i32_0 = arith.constant 0 : i32
    return %arg0, %c0_i32 : i32, i32
  }
}

module attributes {stable_mosaic.version = 11 : i64} {
  func.func @text_encoder_kernel(%arg0: i32, %arg1: memref<4x16x192xbf16, #tpu.memory_space<vmem>>, %arg2: memref<192x400xbf16, #tpu.memory_space<vmem>>, %arg3: memref<1x400xf32, #tpu.memory_space<vmem>>, %arg4: memref<400x200xbf16, #tpu.memory_space<vmem>>, %arg5: memref<1x200xf32, #tpu.memory_space<vmem>>, %arg6: memref<1x200xf32, #tpu.memory_space<vmem>>, %arg7: memref<1x1xf32, #tpu.memory_space<vmem>>, %arg8: memref<4x400xf32, #tpu.memory_space<vmem>>) attributes {dimension_semantics = [#tpu.dimension_semantics<parallel>], iteration_bounds = array<i64: 1>, scalar_prefetch = 0 : i64, scratch_operands = 0 : i64, tpu.core_type = #tpu.core_type<tc>, window_params = [{transform_indices = @transform_0, window_bounds = array<i64: 4, 16, 192>}, {pipeline_mode = #tpu.pipeline_mode<synchronous>, transform_indices = @transform_1, window_bounds = array<i64: 192, 400>}, {pipeline_mode = #tpu.pipeline_mode<synchronous>, transform_indices = @transform_2, window_bounds = array<i64: 1, 400>}, {pipeline_mode = #tpu.pipeline_mode<synchronous>, transform_indices = @transform_3, window_bounds = array<i64: 400, 200>}, {pipeline_mode = #tpu.pipeline_mode<synchronous>, transform_indices = @transform_4, window_bounds = array<i64: 1, 200>}, {pipeline_mode = #tpu.pipeline_mode<synchronous>, transform_indices = @transform_5, window_bounds = array<i64: 1, 200>}, {pipeline_mode = #tpu.pipeline_mode<synchronous>, transform_indices = @transform_6, window_bounds = array<i64: 1, 1>}, {transform_indices = @transform_7, window_bounds = array<i64: 4, 400>}]} {
    %c0 = arith.constant 0 : index
    %c0_0 = arith.constant 0 : index
    %c0_1 = arith.constant 0 : index
    %0 = vector.load %arg1[%c0, %c0_0, %c0_1] : memref<4x16x192xbf16, #tpu.memory_space<vmem>>, vector<4x16x192xbf16>
    %1 = vector.shape_cast %0 : vector<4x16x192xbf16> to vector<64x192xbf16>
    %c0_2 = arith.constant 0 : index
    %c0_3 = arith.constant 0 : index
    %2 = vector.load %arg2[%c0_2, %c0_3] : memref<192x400xbf16, #tpu.memory_space<vmem>>, vector<192x400xbf16>
    %cst = arith.constant dense<0.000000e+00> : vector<64x400xf32>
    %3 = tpu.matmul %1, %2, %cst {dimension_numbers = #tpu.dot_dimension_numbers<[1], [0], [0], [1], [0, 0, 1, 1], [], []>} : vector<64x192xbf16>, vector<192x400xbf16>, vector<64x400xf32> -> vector<64x400xf32>
    %c0_4 = arith.constant 0 : index
    %c0_5 = arith.constant 0 : index
    %4 = vector.load %arg3[%c0_4, %c0_5] : memref<1x400xf32, #tpu.memory_space<vmem>>, vector<1x400xf32>
    %5 = vector.broadcast %4 : vector<1x400xf32> to vector<64x400xf32>
    %6 = arith.addf %3, %5 : vector<64x400xf32>
    %7 = arith.truncf %6 : vector<64x400xf32> to vector<64x400xbf16>
    %c0_6 = arith.constant 0 : index
    %c0_7 = arith.constant 0 : index
    %8 = vector.load %arg4[%c0_6, %c0_7] : memref<400x200xbf16, #tpu.memory_space<vmem>>, vector<400x200xbf16>
    %cst_8 = arith.constant dense<0.000000e+00> : vector<64x200xf32>
    %9 = tpu.matmul %7, %8, %cst_8 {dimension_numbers = #tpu.dot_dimension_numbers<[1], [0], [0], [1], [0, 0, 1, 1], [], []>} : vector<64x400xbf16>, vector<400x200xbf16>, vector<64x200xf32> -> vector<64x200xf32>
    %c0_9 = arith.constant 0 : index
    %c0_10 = arith.constant 0 : index
    %10 = vector.load %arg5[%c0_9, %c0_10] : memref<1x200xf32, #tpu.memory_space<vmem>>, vector<1x200xf32>
    %11 = vector.broadcast %10 : vector<1x200xf32> to vector<64x200xf32>
    %12 = arith.addf %9, %11 : vector<64x200xf32>
    %13 = math.tanh %12 : vector<64x200xf32>
    %14 = vector.shape_cast %13 : vector<64x200xf32> to vector<4x16x200xf32>
    %c0_11 = arith.constant 0 : index
    %c0_12 = arith.constant 0 : index
    %15 = vector.load %arg6[%c0_11, %c0_12] : memref<1x200xf32, #tpu.memory_space<vmem>>, vector<1x200xf32>
    %16 = vector.shape_cast %15 : vector<1x200xf32> to vector<1x1x200xf32>
    %17 = vector.broadcast %16 : vector<1x1x200xf32> to vector<4x16x200xf32>
    %18 = arith.mulf %14, %17 : vector<4x16x200xf32>
    %cst_13 = arith.constant dense<0.000000e+00> : vector<4x16xf32>
    %19 = vector.multi_reduction <add>, %18, %cst_13 [2] : vector<4x16x200xf32> to vector<4x16xf32>
    %c0_14 = arith.constant 0 : index
    %c0_15 = arith.constant 0 : index
    %20 = vector.load %arg7[%c0_14, %c0_15] : memref<1x1xf32, #tpu.memory_space<vmem>>, vector<1x1xf32>
    %21 = vector.broadcast %20 : vector<1x1xf32> to vector<4x16xf32>
    %22 = arith.addf %19, %21 : vector<4x16xf32>
    %23 = tpu.iota {dimensions = array<i32: 1>} : vector<4x16xi32>
    %c8_i32 = arith.constant 8 : i32
    %24 = vector.broadcast %c8_i32 : i32 to vector<4x16xi32>
    %25 = arith.cmpi slt, %23, %24 : vector<4x16xi32>
    %cst_16 = arith.constant -1.000000e+09 : f32
    %26 = vector.broadcast %cst_16 : f32 to vector<4x16xf32>
    %27 = arith.select %25, %22, %26 : vector<4x16xi1>, vector<4x16xf32>
    %cst_17 = arith.constant dense<0xFF800000> : vector<4xf32>
    %28 = vector.multi_reduction <maximumf>, %27, %cst_17 [1] : vector<4x16xf32> to vector<4xf32>
    %29 = vector.shape_cast %28 : vector<4xf32> to vector<4x1xf32>
    %30 = vector.broadcast %29 : vector<4x1xf32> to vector<4x16xf32>
    %31 = arith.subf %27, %30 : vector<4x16xf32>
    %32 = math.exp %31 : vector<4x16xf32>
    %cst_18 = arith.constant dense<0.000000e+00> : vector<4xf32>
    %33 = vector.multi_reduction <add>, %32, %cst_18 [1] : vector<4x16xf32> to vector<4xf32>
    %34 = vector.shape_cast %33 : vector<4xf32> to vector<4x1xf32>
    %35 = tpu.reciprocal %34 {approx = true} : vector<4x1xf32> -> vector<4x1xf32>
    %36 = vector.broadcast %35 : vector<4x1xf32> to vector<4x16xf32>
    %37 = arith.mulf %32, %36 : vector<4x16xf32>
    %38 = vector.shape_cast %6 : vector<64x400xf32> to vector<4x16x400xf32>
    %39 = vector.shape_cast %37 : vector<4x16xf32> to vector<4x1x16xf32>
    "tpu.trace_start"() <{level = 10 : i32, message = "bks,bsf->bkf"}> : () -> ()
    %cst_19 = arith.constant dense<0.000000e+00> : vector<4x1x400xf32>
    %40 = tpu.matmul %39, %38, %cst_19 {dimension_numbers = #tpu.dot_dimension_numbers<[2], [1], [1], [2], [0, 0, 0, 1, 1, 2], [0], [0]>} : vector<4x1x16xf32>, vector<4x16x400xf32>, vector<4x1x400xf32> -> vector<4x1x400xf32>
    "tpu.trace_stop"() : () -> ()
    %41 = vector.shape_cast %40 : vector<4x1x400xf32> to vector<4x400xf32>
    %c0_20 = arith.constant 0 : index
    %c0_21 = arith.constant 0 : index
    %42 = vector.load %arg8[%c0_20, %c0_21] : memref<4x400xf32, #tpu.memory_space<vmem>>, vector<4x400xf32>
    tpu.vector_store %arg8[%c0_20, %c0_21], %41 {strides = array<i32>} : memref<4x400xf32, #tpu.memory_space<vmem>>, vector<4x400xf32>,
    return
  }
  func.func @transform_0(%arg0: i32) -> (i32, i32, i32) {
    %c0_i32 = arith.constant 0 : i32
    %c0_i32_0 = arith.constant 0 : i32
    %c0_i32_1 = arith.constant 0 : i32
    return %arg0, %c0_i32, %c0_i32_0 : i32, i32, i32
  }
  func.func @transform_1(%arg0: i32) -> (i32, i32) {
    %c0_i32 = arith.constant 0 : i32
    %c0_i32_0 = arith.constant 0 : i32
    %c0_i32_1 = arith.constant 0 : i32
    return %c0_i32, %c0_i32_0 : i32, i32
  }
  func.func @transform_2(%arg0: i32) -> (i32, i32) {
    %c0_i32 = arith.constant 0 : i32
    %c0_i32_0 = arith.constant 0 : i32
    %c0_i32_1 = arith.constant 0 : i32
    return %c0_i32, %c0_i32_0 : i32, i32
  }
  func.func @transform_3(%arg0: i32) -> (i32, i32) {
    %c0_i32 = arith.constant 0 : i32
    %c0_i32_0 = arith.constant 0 : i32
    %c0_i32_1 = arith.constant 0 : i32
    return %c0_i32, %c0_i32_0 : i32, i32
  }
  func.func @transform_4(%arg0: i32) -> (i32, i32) {
    %c0_i32 = arith.constant 0 : i32
    %c0_i32_0 = arith.constant 0 : i32
    %c0_i32_1 = arith.constant 0 : i32
    return %c0_i32, %c0_i32_0 : i32, i32
  }
  func.func @transform_5(%arg0: i32) -> (i32, i32) {
    %c0_i32 = arith.constant 0 : i32
    %c0_i32_0 = arith.constant 0 : i32
    %c0_i32_1 = arith.constant 0 : i32
    return %c0_i32, %c0_i32_0 : i32, i32
  }
  func.func @transform_6(%arg0: i32) -> (i32, i32) {
    %c0_i32 = arith.constant 0 : i32
    %c0_i32_0 = arith.constant 0 : i32
    %c0_i32_1 = arith.constant 0 : i32
    return %c0_i32, %c0_i32_0 : i32, i32
  }
  func.func @transform_7(%arg0: i32) -> (i32, i32) {
    %c0_i32 = arith.constant 0 : i32
    %c0_i32_0 = arith.constant 0 : i32
    return %arg0, %c0_i32 : i32, i32
  }
}

module attributes {stable_mosaic.version = 11 : i64} {
  func.func @text_encoder_kernel(%arg0: i32, %arg1: memref<6x32x192xbf16, #tpu.memory_space<vmem>>, %arg2: memref<192x400xbf16, #tpu.memory_space<vmem>>, %arg3: memref<1x400xf32, #tpu.memory_space<vmem>>, %arg4: memref<400x200xbf16, #tpu.memory_space<vmem>>, %arg5: memref<1x200xf32, #tpu.memory_space<vmem>>, %arg6: memref<1x200xf32, #tpu.memory_space<vmem>>, %arg7: memref<1x1xf32, #tpu.memory_space<vmem>>, %arg8: memref<6x400xf32, #tpu.memory_space<vmem>>) attributes {dimension_semantics = [#tpu.dimension_semantics<parallel>], iteration_bounds = array<i64: 1>, scalar_prefetch = 0 : i64, scratch_operands = 0 : i64, tpu.core_type = #tpu.core_type<tc>, window_params = [{transform_indices = @transform_0, window_bounds = array<i64: 6, 32, 192>}, {pipeline_mode = #tpu.pipeline_mode<synchronous>, transform_indices = @transform_1, window_bounds = array<i64: 192, 400>}, {pipeline_mode = #tpu.pipeline_mode<synchronous>, transform_indices = @transform_2, window_bounds = array<i64: 1, 400>}, {pipeline_mode = #tpu.pipeline_mode<synchronous>, transform_indices = @transform_3, window_bounds = array<i64: 400, 200>}, {pipeline_mode = #tpu.pipeline_mode<synchronous>, transform_indices = @transform_4, window_bounds = array<i64: 1, 200>}, {pipeline_mode = #tpu.pipeline_mode<synchronous>, transform_indices = @transform_5, window_bounds = array<i64: 1, 200>}, {pipeline_mode = #tpu.pipeline_mode<synchronous>, transform_indices = @transform_6, window_bounds = array<i64: 1, 1>}, {transform_indices = @transform_7, window_bounds = array<i64: 6, 400>}]} {
    %c0 = arith.constant 0 : index
    %c0_0 = arith.constant 0 : index
    %c0_1 = arith.constant 0 : index
    %0 = vector.load %arg1[%c0, %c0_0, %c0_1] : memref<6x32x192xbf16, #tpu.memory_space<vmem>>, vector<6x32x192xbf16>
    %1 = vector.shape_cast %0 : vector<6x32x192xbf16> to vector<192x192xbf16>
    %c0_2 = arith.constant 0 : index
    %c0_3 = arith.constant 0 : index
    %2 = vector.load %arg2[%c0_2, %c0_3] : memref<192x400xbf16, #tpu.memory_space<vmem>>, vector<192x400xbf16>
    %cst = arith.constant dense<0.000000e+00> : vector<192x400xf32>
    %3 = tpu.matmul %1, %2, %cst {dimension_numbers = #tpu.dot_dimension_numbers<[1], [0], [0], [1], [0, 0, 1, 1], [], []>} : vector<192x192xbf16>, vector<192x400xbf16>, vector<192x400xf32> -> vector<192x400xf32>
    %c0_4 = arith.constant 0 : index
    %c0_5 = arith.constant 0 : index
    %4 = vector.load %arg3[%c0_4, %c0_5] : memref<1x400xf32, #tpu.memory_space<vmem>>, vector<1x400xf32>
    %5 = vector.broadcast %4 : vector<1x400xf32> to vector<192x400xf32>
    %6 = arith.addf %3, %5 : vector<192x400xf32>
    %7 = arith.truncf %6 : vector<192x400xf32> to vector<192x400xbf16>
    %c0_6 = arith.constant 0 : index
    %c0_7 = arith.constant 0 : index
    %8 = vector.load %arg4[%c0_6, %c0_7] : memref<400x200xbf16, #tpu.memory_space<vmem>>, vector<400x200xbf16>
    %cst_8 = arith.constant dense<0.000000e+00> : vector<192x200xf32>
    %9 = tpu.matmul %7, %8, %cst_8 {dimension_numbers = #tpu.dot_dimension_numbers<[1], [0], [0], [1], [0, 0, 1, 1], [], []>} : vector<192x400xbf16>, vector<400x200xbf16>, vector<192x200xf32> -> vector<192x200xf32>
    %c0_9 = arith.constant 0 : index
    %c0_10 = arith.constant 0 : index
    %10 = vector.load %arg5[%c0_9, %c0_10] : memref<1x200xf32, #tpu.memory_space<vmem>>, vector<1x200xf32>
    %11 = vector.broadcast %10 : vector<1x200xf32> to vector<192x200xf32>
    %12 = arith.addf %9, %11 : vector<192x200xf32>
    %13 = math.tanh %12 : vector<192x200xf32>
    %14 = vector.shape_cast %13 : vector<192x200xf32> to vector<6x32x200xf32>
    %c0_11 = arith.constant 0 : index
    %c0_12 = arith.constant 0 : index
    %15 = vector.load %arg6[%c0_11, %c0_12] : memref<1x200xf32, #tpu.memory_space<vmem>>, vector<1x200xf32>
    %16 = vector.shape_cast %15 : vector<1x200xf32> to vector<1x1x200xf32>
    %17 = vector.broadcast %16 : vector<1x1x200xf32> to vector<6x32x200xf32>
    %18 = arith.mulf %14, %17 : vector<6x32x200xf32>
    %cst_13 = arith.constant dense<0.000000e+00> : vector<6x32xf32>
    %19 = vector.multi_reduction <add>, %18, %cst_13 [2] : vector<6x32x200xf32> to vector<6x32xf32>
    %c0_14 = arith.constant 0 : index
    %c0_15 = arith.constant 0 : index
    %20 = vector.load %arg7[%c0_14, %c0_15] : memref<1x1xf32, #tpu.memory_space<vmem>>, vector<1x1xf32>
    %21 = vector.broadcast %20 : vector<1x1xf32> to vector<6x32xf32>
    %22 = arith.addf %19, %21 : vector<6x32xf32>
    %23 = tpu.iota {dimensions = array<i32: 1>} : vector<6x32xi32>
    %c30_i32 = arith.constant 30 : i32
    %24 = vector.broadcast %c30_i32 : i32 to vector<6x32xi32>
    %25 = arith.cmpi slt, %23, %24 : vector<6x32xi32>
    %cst_16 = arith.constant -1.000000e+09 : f32
    %26 = vector.broadcast %cst_16 : f32 to vector<6x32xf32>
    %27 = arith.select %25, %22, %26 : vector<6x32xi1>, vector<6x32xf32>
    %cst_17 = arith.constant dense<0xFF800000> : vector<6xf32>
    %28 = vector.multi_reduction <maximumf>, %27, %cst_17 [1] : vector<6x32xf32> to vector<6xf32>
    %29 = vector.shape_cast %28 : vector<6xf32> to vector<6x1xf32>
    %30 = vector.broadcast %29 : vector<6x1xf32> to vector<6x32xf32>
    %31 = arith.subf %27, %30 : vector<6x32xf32>
    %32 = math.exp %31 : vector<6x32xf32>
    %cst_18 = arith.constant dense<0.000000e+00> : vector<6xf32>
    %33 = vector.multi_reduction <add>, %32, %cst_18 [1] : vector<6x32xf32> to vector<6xf32>
    %34 = vector.shape_cast %33 : vector<6xf32> to vector<6x1xf32>
    %35 = tpu.reciprocal %34 {approx = true} : vector<6x1xf32> -> vector<6x1xf32>
    %36 = vector.broadcast %35 : vector<6x1xf32> to vector<6x32xf32>
    %37 = arith.mulf %32, %36 : vector<6x32xf32>
    %38 = vector.shape_cast %6 : vector<192x400xf32> to vector<6x32x400xf32>
    %39 = vector.shape_cast %37 : vector<6x32xf32> to vector<6x1x32xf32>
    "tpu.trace_start"() <{level = 10 : i32, message = "bks,bsf->bkf"}> : () -> ()
    %cst_19 = arith.constant dense<0.000000e+00> : vector<6x1x400xf32>
    %40 = tpu.matmul %39, %38, %cst_19 {dimension_numbers = #tpu.dot_dimension_numbers<[2], [1], [1], [2], [0, 0, 0, 1, 1, 2], [0], [0]>} : vector<6x1x32xf32>, vector<6x32x400xf32>, vector<6x1x400xf32> -> vector<6x1x400xf32>
    "tpu.trace_stop"() : () -> ()
    %41 = vector.shape_cast %40 : vector<6x1x400xf32> to vector<6x400xf32>
    %c0_20 = arith.constant 0 : index
    %c0_21 = arith.constant 0 : index
    %42 = vector.load %arg8[%c0_20, %c0_21] : memref<6x400xf32, #tpu.memory_space<vmem>>, vector<6x400xf32>
    tpu.vector_store %arg8[%c0_20, %c0_21], %41 {strides = array<i32>} : memref<6x400xf32, #tpu.memory_space<vmem>>, vector<6x400xf32>,
    return
  }
  func.func @transform_0(%arg0: i32) -> (i32, i32, i32) {
    %c0_i32 = arith.constant 0 : i32
    %c0_i32_0 = arith.constant 0 : i32
    %c0_i32_1 = arith.constant 0 : i32
    return %arg0, %c0_i32, %c0_i32_0 : i32, i32, i32
  }
  func.func @transform_1(%arg0: i32) -> (i32, i32) {
    %c0_i32 = arith.constant 0 : i32
    %c0_i32_0 = arith.constant 0 : i32
    %c0_i32_1 = arith.constant 0 : i32
    return %c0_i32, %c0_i32_0 : i32, i32
  }
  func.func @transform_2(%arg0: i32) -> (i32, i32) {
    %c0_i32 = arith.constant 0 : i32
    %c0_i32_0 = arith.constant 0 : i32
    %c0_i32_1 = arith.constant 0 : i32
    return %c0_i32, %c0_i32_0 : i32, i32
  }
  func.func @transform_3(%arg0: i32) -> (i32, i32) {
    %c0_i32 = arith.constant 0 : i32
    %c0_i32_0 = arith.constant 0 : i32
    %c0_i32_1 = arith.constant 0 : i32
    return %c0_i32, %c0_i32_0 : i32, i32
  }
  func.func @transform_4(%arg0: i32) -> (i32, i32) {
    %c0_i32 = arith.constant 0 : i32
    %c0_i32_0 = arith.constant 0 : i32
    %c0_i32_1 = arith.constant 0 : i32
    return %c0_i32, %c0_i32_0 : i32, i32
  }
  func.func @transform_5(%arg0: i32) -> (i32, i32) {
    %c0_i32 = arith.constant 0 : i32
    %c0_i32_0 = arith.constant 0 : i32
    %c0_i32_1 = arith.constant 0 : i32
    return %c0_i32, %c0_i32_0 : i32, i32
  }
  func.func @transform_6(%arg0: i32) -> (i32, i32) {
    %c0_i32 = arith.constant 0 : i32
    %c0_i32_0 = arith.constant 0 : i32
    %c0_i32_1 = arith.constant 0 : i32
    return %c0_i32, %c0_i32_0 : i32, i32
  }
  func.func @transform_7(%arg0: i32) -> (i32, i32) {
    %c0_i32 = arith.constant 0 : i32
    %c0_i32_0 = arith.constant 0 : i32
    return %arg0, %c0_i32 : i32, i32
  }
}

module attributes {stable_mosaic.version = 11 : i64} {
  func.func @text_encoder_kernel(%arg0: i32, %arg1: memref<4x32x192xbf16, #tpu.memory_space<vmem>>, %arg2: memref<192x400xbf16, #tpu.memory_space<vmem>>, %arg3: memref<1x400xf32, #tpu.memory_space<vmem>>, %arg4: memref<400x200xbf16, #tpu.memory_space<vmem>>, %arg5: memref<1x200xf32, #tpu.memory_space<vmem>>, %arg6: memref<1x200xf32, #tpu.memory_space<vmem>>, %arg7: memref<1x1xf32, #tpu.memory_space<vmem>>, %arg8: memref<4x400xf32, #tpu.memory_space<vmem>>) attributes {dimension_semantics = [#tpu.dimension_semantics<parallel>], iteration_bounds = array<i64: 1>, scalar_prefetch = 0 : i64, scratch_operands = 0 : i64, tpu.core_type = #tpu.core_type<tc>, window_params = [{transform_indices = @transform_0, window_bounds = array<i64: 4, 32, 192>}, {pipeline_mode = #tpu.pipeline_mode<synchronous>, transform_indices = @transform_1, window_bounds = array<i64: 192, 400>}, {pipeline_mode = #tpu.pipeline_mode<synchronous>, transform_indices = @transform_2, window_bounds = array<i64: 1, 400>}, {pipeline_mode = #tpu.pipeline_mode<synchronous>, transform_indices = @transform_3, window_bounds = array<i64: 400, 200>}, {pipeline_mode = #tpu.pipeline_mode<synchronous>, transform_indices = @transform_4, window_bounds = array<i64: 1, 200>}, {pipeline_mode = #tpu.pipeline_mode<synchronous>, transform_indices = @transform_5, window_bounds = array<i64: 1, 200>}, {pipeline_mode = #tpu.pipeline_mode<synchronous>, transform_indices = @transform_6, window_bounds = array<i64: 1, 1>}, {transform_indices = @transform_7, window_bounds = array<i64: 4, 400>}]} {
    %c0 = arith.constant 0 : index
    %c0_0 = arith.constant 0 : index
    %c0_1 = arith.constant 0 : index
    %0 = vector.load %arg1[%c0, %c0_0, %c0_1] : memref<4x32x192xbf16, #tpu.memory_space<vmem>>, vector<4x32x192xbf16>
    %1 = vector.shape_cast %0 : vector<4x32x192xbf16> to vector<128x192xbf16>
    %c0_2 = arith.constant 0 : index
    %c0_3 = arith.constant 0 : index
    %2 = vector.load %arg2[%c0_2, %c0_3] : memref<192x400xbf16, #tpu.memory_space<vmem>>, vector<192x400xbf16>
    %cst = arith.constant dense<0.000000e+00> : vector<128x400xf32>
    %3 = tpu.matmul %1, %2, %cst {dimension_numbers = #tpu.dot_dimension_numbers<[1], [0], [0], [1], [0, 0, 1, 1], [], []>} : vector<128x192xbf16>, vector<192x400xbf16>, vector<128x400xf32> -> vector<128x400xf32>
    %c0_4 = arith.constant 0 : index
    %c0_5 = arith.constant 0 : index
    %4 = vector.load %arg3[%c0_4, %c0_5] : memref<1x400xf32, #tpu.memory_space<vmem>>, vector<1x400xf32>
    %5 = vector.broadcast %4 : vector<1x400xf32> to vector<128x400xf32>
    %6 = arith.addf %3, %5 : vector<128x400xf32>
    %7 = arith.truncf %6 : vector<128x400xf32> to vector<128x400xbf16>
    %c0_6 = arith.constant 0 : index
    %c0_7 = arith.constant 0 : index
    %8 = vector.load %arg4[%c0_6, %c0_7] : memref<400x200xbf16, #tpu.memory_space<vmem>>, vector<400x200xbf16>
    %cst_8 = arith.constant dense<0.000000e+00> : vector<128x200xf32>
    %9 = tpu.matmul %7, %8, %cst_8 {dimension_numbers = #tpu.dot_dimension_numbers<[1], [0], [0], [1], [0, 0, 1, 1], [], []>} : vector<128x400xbf16>, vector<400x200xbf16>, vector<128x200xf32> -> vector<128x200xf32>
    %c0_9 = arith.constant 0 : index
    %c0_10 = arith.constant 0 : index
    %10 = vector.load %arg5[%c0_9, %c0_10] : memref<1x200xf32, #tpu.memory_space<vmem>>, vector<1x200xf32>
    %11 = vector.broadcast %10 : vector<1x200xf32> to vector<128x200xf32>
    %12 = arith.addf %9, %11 : vector<128x200xf32>
    %13 = math.tanh %12 : vector<128x200xf32>
    %14 = vector.shape_cast %13 : vector<128x200xf32> to vector<4x32x200xf32>
    %c0_11 = arith.constant 0 : index
    %c0_12 = arith.constant 0 : index
    %15 = vector.load %arg6[%c0_11, %c0_12] : memref<1x200xf32, #tpu.memory_space<vmem>>, vector<1x200xf32>
    %16 = vector.shape_cast %15 : vector<1x200xf32> to vector<1x1x200xf32>
    %17 = vector.broadcast %16 : vector<1x1x200xf32> to vector<4x32x200xf32>
    %18 = arith.mulf %14, %17 : vector<4x32x200xf32>
    %cst_13 = arith.constant dense<0.000000e+00> : vector<4x32xf32>
    %19 = vector.multi_reduction <add>, %18, %cst_13 [2] : vector<4x32x200xf32> to vector<4x32xf32>
    %c0_14 = arith.constant 0 : index
    %c0_15 = arith.constant 0 : index
    %20 = vector.load %arg7[%c0_14, %c0_15] : memref<1x1xf32, #tpu.memory_space<vmem>>, vector<1x1xf32>
    %21 = vector.broadcast %20 : vector<1x1xf32> to vector<4x32xf32>
    %22 = arith.addf %19, %21 : vector<4x32xf32>
    %23 = tpu.iota {dimensions = array<i32: 1>} : vector<4x32xi32>
    %c30_i32 = arith.constant 30 : i32
    %24 = vector.broadcast %c30_i32 : i32 to vector<4x32xi32>
    %25 = arith.cmpi slt, %23, %24 : vector<4x32xi32>
    %cst_16 = arith.constant -1.000000e+09 : f32
    %26 = vector.broadcast %cst_16 : f32 to vector<4x32xf32>
    %27 = arith.select %25, %22, %26 : vector<4x32xi1>, vector<4x32xf32>
    %cst_17 = arith.constant dense<0xFF800000> : vector<4xf32>
    %28 = vector.multi_reduction <maximumf>, %27, %cst_17 [1] : vector<4x32xf32> to vector<4xf32>
    %29 = vector.shape_cast %28 : vector<4xf32> to vector<4x1xf32>
    %30 = vector.broadcast %29 : vector<4x1xf32> to vector<4x32xf32>
    %31 = arith.subf %27, %30 : vector<4x32xf32>
    %32 = math.exp %31 : vector<4x32xf32>
    %cst_18 = arith.constant dense<0.000000e+00> : vector<4xf32>
    %33 = vector.multi_reduction <add>, %32, %cst_18 [1] : vector<4x32xf32> to vector<4xf32>
    %34 = vector.shape_cast %33 : vector<4xf32> to vector<4x1xf32>
    %35 = tpu.reciprocal %34 {approx = true} : vector<4x1xf32> -> vector<4x1xf32>
    %36 = vector.broadcast %35 : vector<4x1xf32> to vector<4x32xf32>
    %37 = arith.mulf %32, %36 : vector<4x32xf32>
    %38 = vector.shape_cast %6 : vector<128x400xf32> to vector<4x32x400xf32>
    %39 = vector.shape_cast %37 : vector<4x32xf32> to vector<4x1x32xf32>
    "tpu.trace_start"() <{level = 10 : i32, message = "bks,bsf->bkf"}> : () -> ()
    %cst_19 = arith.constant dense<0.000000e+00> : vector<4x1x400xf32>
    %40 = tpu.matmul %39, %38, %cst_19 {dimension_numbers = #tpu.dot_dimension_numbers<[2], [1], [1], [2], [0, 0, 0, 1, 1, 2], [0], [0]>} : vector<4x1x32xf32>, vector<4x32x400xf32>, vector<4x1x400xf32> -> vector<4x1x400xf32>
    "tpu.trace_stop"() : () -> ()
    %41 = vector.shape_cast %40 : vector<4x1x400xf32> to vector<4x400xf32>
    %c0_20 = arith.constant 0 : index
    %c0_21 = arith.constant 0 : index
    %42 = vector.load %arg8[%c0_20, %c0_21] : memref<4x400xf32, #tpu.memory_space<vmem>>, vector<4x400xf32>
    tpu.vector_store %arg8[%c0_20, %c0_21], %41 {strides = array<i32>} : memref<4x400xf32, #tpu.memory_space<vmem>>, vector<4x400xf32>,
    return
  }
  func.func @transform_0(%arg0: i32) -> (i32, i32, i32) {
    %c0_i32 = arith.constant 0 : i32
    %c0_i32_0 = arith.constant 0 : i32
    %c0_i32_1 = arith.constant 0 : i32
    return %arg0, %c0_i32, %c0_i32_0 : i32, i32, i32
  }
  func.func @transform_1(%arg0: i32) -> (i32, i32) {
    %c0_i32 = arith.constant 0 : i32
    %c0_i32_0 = arith.constant 0 : i32
    %c0_i32_1 = arith.constant 0 : i32
    return %c0_i32, %c0_i32_0 : i32, i32
  }
  func.func @transform_2(%arg0: i32) -> (i32, i32) {
    %c0_i32 = arith.constant 0 : i32
    %c0_i32_0 = arith.constant 0 : i32
    %c0_i32_1 = arith.constant 0 : i32
    return %c0_i32, %c0_i32_0 : i32, i32
  }
  func.func @transform_3(%arg0: i32) -> (i32, i32) {
    %c0_i32 = arith.constant 0 : i32
    %c0_i32_0 = arith.constant 0 : i32
    %c0_i32_1 = arith.constant 0 : i32
    return %c0_i32, %c0_i32_0 : i32, i32
  }
  func.func @transform_4(%arg0: i32) -> (i32, i32) {
    %c0_i32 = arith.constant 0 : i32
    %c0_i32_0 = arith.constant 0 : i32
    %c0_i32_1 = arith.constant 0 : i32
    return %c0_i32, %c0_i32_0 : i32, i32
  }
  func.func @transform_5(%arg0: i32) -> (i32, i32) {
    %c0_i32 = arith.constant 0 : i32
    %c0_i32_0 = arith.constant 0 : i32
    %c0_i32_1 = arith.constant 0 : i32
    return %c0_i32, %c0_i32_0 : i32, i32
  }
  func.func @transform_6(%arg0: i32) -> (i32, i32) {
    %c0_i32 = arith.constant 0 : i32
    %c0_i32_0 = arith.constant 0 : i32
    %c0_i32_1 = arith.constant 0 : i32
    return %c0_i32, %c0_i32_0 : i32, i32
  }
  func.func @transform_7(%arg0: i32) -> (i32, i32) {
    %c0_i32 = arith.constant 0 : i32
    %c0_i32_0 = arith.constant 0 : i32
    return %arg0, %c0_i32 : i32, i32
  }
}

module attributes {stable_mosaic.version = 11 : i64} {
  func.func @attn_pool_kernel(%arg0: i32, %arg1: memref<6x4x400xf32, #tpu.memory_space<vmem>>, %arg2: memref<400x200xbf16, #tpu.memory_space<vmem>>, %arg3: memref<1x200xf32, #tpu.memory_space<vmem>>, %arg4: memref<1x200xf32, #tpu.memory_space<vmem>>, %arg5: memref<1x1xf32, #tpu.memory_space<vmem>>, %arg6: memref<6x400xf32, #tpu.memory_space<vmem>>) attributes {dimension_semantics = [#tpu.dimension_semantics<parallel>], iteration_bounds = array<i64: 1>, scalar_prefetch = 0 : i64, scratch_operands = 0 : i64, tpu.core_type = #tpu.core_type<tc>, window_params = [{transform_indices = @transform_0, window_bounds = array<i64: 6, 4, 400>}, {pipeline_mode = #tpu.pipeline_mode<synchronous>, transform_indices = @transform_1, window_bounds = array<i64: 400, 200>}, {pipeline_mode = #tpu.pipeline_mode<synchronous>, transform_indices = @transform_2, window_bounds = array<i64: 1, 200>}, {pipeline_mode = #tpu.pipeline_mode<synchronous>, transform_indices = @transform_3, window_bounds = array<i64: 1, 200>}, {pipeline_mode = #tpu.pipeline_mode<synchronous>, transform_indices = @transform_4, window_bounds = array<i64: 1, 1>}, {transform_indices = @transform_5, window_bounds = array<i64: 6, 400>}]} {
    %c0 = arith.constant 0 : index
    %c0_0 = arith.constant 0 : index
    %c0_1 = arith.constant 0 : index
    %0 = vector.load %arg1[%c0, %c0_0, %c0_1] : memref<6x4x400xf32, #tpu.memory_space<vmem>>, vector<6x4x400xf32>
    %1 = vector.shape_cast %0 : vector<6x4x400xf32> to vector<24x400xf32>
    %2 = arith.truncf %1 : vector<24x400xf32> to vector<24x400xbf16>
    %c0_2 = arith.constant 0 : index
    %c0_3 = arith.constant 0 : index
    %3 = vector.load %arg2[%c0_2, %c0_3] : memref<400x200xbf16, #tpu.memory_space<vmem>>, vector<400x200xbf16>
    %cst = arith.constant dense<0.000000e+00> : vector<24x200xf32>
    %4 = tpu.matmul %2, %3, %cst {dimension_numbers = #tpu.dot_dimension_numbers<[1], [0], [0], [1], [0, 0, 1, 1], [], []>} : vector<24x400xbf16>, vector<400x200xbf16>, vector<24x200xf32> -> vector<24x200xf32>
    %c0_4 = arith.constant 0 : index
    %c0_5 = arith.constant 0 : index
    %5 = vector.load %arg3[%c0_4, %c0_5] : memref<1x200xf32, #tpu.memory_space<vmem>>, vector<1x200xf32>
    %6 = vector.broadcast %5 : vector<1x200xf32> to vector<24x200xf32>
    %7 = arith.addf %4, %6 : vector<24x200xf32>
    %8 = math.tanh %7 : vector<24x200xf32>
    %9 = vector.shape_cast %8 : vector<24x200xf32> to vector<6x4x200xf32>
    %c0_6 = arith.constant 0 : index
    %c0_7 = arith.constant 0 : index
    %10 = vector.load %arg4[%c0_6, %c0_7] : memref<1x200xf32, #tpu.memory_space<vmem>>, vector<1x200xf32>
    %11 = vector.shape_cast %10 : vector<1x200xf32> to vector<1x1x200xf32>
    %12 = vector.broadcast %11 : vector<1x1x200xf32> to vector<6x4x200xf32>
    %13 = arith.mulf %9, %12 : vector<6x4x200xf32>
    %cst_8 = arith.constant dense<0.000000e+00> : vector<6x4xf32>
    %14 = vector.multi_reduction <add>, %13, %cst_8 [2] : vector<6x4x200xf32> to vector<6x4xf32>
    %c0_9 = arith.constant 0 : index
    %c0_10 = arith.constant 0 : index
    %15 = vector.load %arg5[%c0_9, %c0_10] : memref<1x1xf32, #tpu.memory_space<vmem>>, vector<1x1xf32>
    %16 = vector.broadcast %15 : vector<1x1xf32> to vector<6x4xf32>
    %17 = arith.addf %14, %16 : vector<6x4xf32>
    %cst_11 = arith.constant dense<0xFF800000> : vector<6xf32>
    %18 = vector.multi_reduction <maximumf>, %17, %cst_11 [1] : vector<6x4xf32> to vector<6xf32>
    %19 = vector.shape_cast %18 : vector<6xf32> to vector<6x1xf32>
    %20 = vector.broadcast %19 : vector<6x1xf32> to vector<6x4xf32>
    %21 = arith.subf %17, %20 : vector<6x4xf32>
    %22 = math.exp %21 : vector<6x4xf32>
    %cst_12 = arith.constant dense<0.000000e+00> : vector<6xf32>
    %23 = vector.multi_reduction <add>, %22, %cst_12 [1] : vector<6x4xf32> to vector<6xf32>
    %24 = vector.shape_cast %23 : vector<6xf32> to vector<6x1xf32>
    %25 = tpu.reciprocal %24 {approx = true} : vector<6x1xf32> -> vector<6x1xf32>
    %26 = vector.broadcast %25 : vector<6x1xf32> to vector<6x4xf32>
    %27 = arith.mulf %22, %26 : vector<6x4xf32>
    %28 = vector.shape_cast %27 : vector<6x4xf32> to vector<6x1x4xf32>
    "tpu.trace_start"() <{level = 10 : i32, message = "bks,bsf->bkf"}> : () -> ()
    %cst_13 = arith.constant dense<0.000000e+00> : vector<6x1x400xf32>
    %29 = tpu.matmul %28, %0, %cst_13 {dimension_numbers = #tpu.dot_dimension_numbers<[2], [1], [1], [2], [0, 0, 0, 1, 1, 2], [0], [0]>} : vector<6x1x4xf32>, vector<6x4x400xf32>, vector<6x1x400xf32> -> vector<6x1x400xf32>
    "tpu.trace_stop"() : () -> ()
    %30 = vector.shape_cast %29 : vector<6x1x400xf32> to vector<6x400xf32>
    %c0_14 = arith.constant 0 : index
    %c0_15 = arith.constant 0 : index
    %31 = vector.load %arg6[%c0_14, %c0_15] : memref<6x400xf32, #tpu.memory_space<vmem>>, vector<6x400xf32>
    tpu.vector_store %arg6[%c0_14, %c0_15], %30 {strides = array<i32>} : memref<6x400xf32, #tpu.memory_space<vmem>>, vector<6x400xf32>,
    return
  }
  func.func @transform_0(%arg0: i32) -> (i32, i32, i32) {
    %c0_i32 = arith.constant 0 : i32
    %c0_i32_0 = arith.constant 0 : i32
    %c0_i32_1 = arith.constant 0 : i32
    return %arg0, %c0_i32, %c0_i32_0 : i32, i32, i32
  }
  func.func @transform_1(%arg0: i32) -> (i32, i32) {
    %c0_i32 = arith.constant 0 : i32
    %c0_i32_0 = arith.constant 0 : i32
    %c0_i32_1 = arith.constant 0 : i32
    return %c0_i32, %c0_i32_0 : i32, i32
  }
  func.func @transform_2(%arg0: i32) -> (i32, i32) {
    %c0_i32 = arith.constant 0 : i32
    %c0_i32_0 = arith.constant 0 : i32
    %c0_i32_1 = arith.constant 0 : i32
    return %c0_i32, %c0_i32_0 : i32, i32
  }
  func.func @transform_3(%arg0: i32) -> (i32, i32) {
    %c0_i32 = arith.constant 0 : i32
    %c0_i32_0 = arith.constant 0 : i32
    %c0_i32_1 = arith.constant 0 : i32
    return %c0_i32, %c0_i32_0 : i32, i32
  }
  func.func @transform_4(%arg0: i32) -> (i32, i32) {
    %c0_i32 = arith.constant 0 : i32
    %c0_i32_0 = arith.constant 0 : i32
    %c0_i32_1 = arith.constant 0 : i32
    return %c0_i32, %c0_i32_0 : i32, i32
  }
  func.func @transform_5(%arg0: i32) -> (i32, i32) {
    %c0_i32 = arith.constant 0 : i32
    %c0_i32_0 = arith.constant 0 : i32
    return %arg0, %c0_i32 : i32, i32
  }
}

module attributes {stable_mosaic.version = 11 : i64} {
  func.func @attn_pool_kernel(%arg0: i32, %arg1: memref<4x4x400xf32, #tpu.memory_space<vmem>>, %arg2: memref<400x200xbf16, #tpu.memory_space<vmem>>, %arg3: memref<1x200xf32, #tpu.memory_space<vmem>>, %arg4: memref<1x200xf32, #tpu.memory_space<vmem>>, %arg5: memref<1x1xf32, #tpu.memory_space<vmem>>, %arg6: memref<4x400xf32, #tpu.memory_space<vmem>>) attributes {dimension_semantics = [#tpu.dimension_semantics<parallel>], iteration_bounds = array<i64: 1>, scalar_prefetch = 0 : i64, scratch_operands = 0 : i64, tpu.core_type = #tpu.core_type<tc>, window_params = [{transform_indices = @transform_0, window_bounds = array<i64: 4, 4, 400>}, {pipeline_mode = #tpu.pipeline_mode<synchronous>, transform_indices = @transform_1, window_bounds = array<i64: 400, 200>}, {pipeline_mode = #tpu.pipeline_mode<synchronous>, transform_indices = @transform_2, window_bounds = array<i64: 1, 200>}, {pipeline_mode = #tpu.pipeline_mode<synchronous>, transform_indices = @transform_3, window_bounds = array<i64: 1, 200>}, {pipeline_mode = #tpu.pipeline_mode<synchronous>, transform_indices = @transform_4, window_bounds = array<i64: 1, 1>}, {transform_indices = @transform_5, window_bounds = array<i64: 4, 400>}]} {
    %c0 = arith.constant 0 : index
    %c0_0 = arith.constant 0 : index
    %c0_1 = arith.constant 0 : index
    %0 = vector.load %arg1[%c0, %c0_0, %c0_1] : memref<4x4x400xf32, #tpu.memory_space<vmem>>, vector<4x4x400xf32>
    %1 = vector.shape_cast %0 : vector<4x4x400xf32> to vector<16x400xf32>
    %2 = arith.truncf %1 : vector<16x400xf32> to vector<16x400xbf16>
    %c0_2 = arith.constant 0 : index
    %c0_3 = arith.constant 0 : index
    %3 = vector.load %arg2[%c0_2, %c0_3] : memref<400x200xbf16, #tpu.memory_space<vmem>>, vector<400x200xbf16>
    %cst = arith.constant dense<0.000000e+00> : vector<16x200xf32>
    %4 = tpu.matmul %2, %3, %cst {dimension_numbers = #tpu.dot_dimension_numbers<[1], [0], [0], [1], [0, 0, 1, 1], [], []>} : vector<16x400xbf16>, vector<400x200xbf16>, vector<16x200xf32> -> vector<16x200xf32>
    %c0_4 = arith.constant 0 : index
    %c0_5 = arith.constant 0 : index
    %5 = vector.load %arg3[%c0_4, %c0_5] : memref<1x200xf32, #tpu.memory_space<vmem>>, vector<1x200xf32>
    %6 = vector.broadcast %5 : vector<1x200xf32> to vector<16x200xf32>
    %7 = arith.addf %4, %6 : vector<16x200xf32>
    %8 = math.tanh %7 : vector<16x200xf32>
    %9 = vector.shape_cast %8 : vector<16x200xf32> to vector<4x4x200xf32>
    %c0_6 = arith.constant 0 : index
    %c0_7 = arith.constant 0 : index
    %10 = vector.load %arg4[%c0_6, %c0_7] : memref<1x200xf32, #tpu.memory_space<vmem>>, vector<1x200xf32>
    %11 = vector.shape_cast %10 : vector<1x200xf32> to vector<1x1x200xf32>
    %12 = vector.broadcast %11 : vector<1x1x200xf32> to vector<4x4x200xf32>
    %13 = arith.mulf %9, %12 : vector<4x4x200xf32>
    %cst_8 = arith.constant dense<0.000000e+00> : vector<4x4xf32>
    %14 = vector.multi_reduction <add>, %13, %cst_8 [2] : vector<4x4x200xf32> to vector<4x4xf32>
    %c0_9 = arith.constant 0 : index
    %c0_10 = arith.constant 0 : index
    %15 = vector.load %arg5[%c0_9, %c0_10] : memref<1x1xf32, #tpu.memory_space<vmem>>, vector<1x1xf32>
    %16 = vector.broadcast %15 : vector<1x1xf32> to vector<4x4xf32>
    %17 = arith.addf %14, %16 : vector<4x4xf32>
    %cst_11 = arith.constant dense<0xFF800000> : vector<4xf32>
    %18 = vector.multi_reduction <maximumf>, %17, %cst_11 [1] : vector<4x4xf32> to vector<4xf32>
    %19 = vector.shape_cast %18 : vector<4xf32> to vector<4x1xf32>
    %20 = vector.broadcast %19 : vector<4x1xf32> to vector<4x4xf32>
    %21 = arith.subf %17, %20 : vector<4x4xf32>
    %22 = math.exp %21 : vector<4x4xf32>
    %cst_12 = arith.constant dense<0.000000e+00> : vector<4xf32>
    %23 = vector.multi_reduction <add>, %22, %cst_12 [1] : vector<4x4xf32> to vector<4xf32>
    %24 = vector.shape_cast %23 : vector<4xf32> to vector<4x1xf32>
    %25 = tpu.reciprocal %24 {approx = true} : vector<4x1xf32> -> vector<4x1xf32>
    %26 = vector.broadcast %25 : vector<4x1xf32> to vector<4x4xf32>
    %27 = arith.mulf %22, %26 : vector<4x4xf32>
    %28 = vector.shape_cast %27 : vector<4x4xf32> to vector<4x1x4xf32>
    "tpu.trace_start"() <{level = 10 : i32, message = "bks,bsf->bkf"}> : () -> ()
    %cst_13 = arith.constant dense<0.000000e+00> : vector<4x1x400xf32>
    %29 = tpu.matmul %28, %0, %cst_13 {dimension_numbers = #tpu.dot_dimension_numbers<[2], [1], [1], [2], [0, 0, 0, 1, 1, 2], [0], [0]>} : vector<4x1x4xf32>, vector<4x4x400xf32>, vector<4x1x400xf32> -> vector<4x1x400xf32>
    "tpu.trace_stop"() : () -> ()
    %30 = vector.shape_cast %29 : vector<4x1x400xf32> to vector<4x400xf32>
    %c0_14 = arith.constant 0 : index
    %c0_15 = arith.constant 0 : index
    %31 = vector.load %arg6[%c0_14, %c0_15] : memref<4x400xf32, #tpu.memory_space<vmem>>, vector<4x400xf32>
    tpu.vector_store %arg6[%c0_14, %c0_15], %30 {strides = array<i32>} : memref<4x400xf32, #tpu.memory_space<vmem>>, vector<4x400xf32>,
    return
  }
  func.func @transform_0(%arg0: i32) -> (i32, i32, i32) {
    %c0_i32 = arith.constant 0 : i32
    %c0_i32_0 = arith.constant 0 : i32
    %c0_i32_1 = arith.constant 0 : i32
    return %arg0, %c0_i32, %c0_i32_0 : i32, i32, i32
  }
  func.func @transform_1(%arg0: i32) -> (i32, i32) {
    %c0_i32 = arith.constant 0 : i32
    %c0_i32_0 = arith.constant 0 : i32
    %c0_i32_1 = arith.constant 0 : i32
    return %c0_i32, %c0_i32_0 : i32, i32
  }
  func.func @transform_2(%arg0: i32) -> (i32, i32) {
    %c0_i32 = arith.constant 0 : i32
    %c0_i32_0 = arith.constant 0 : i32
    %c0_i32_1 = arith.constant 0 : i32
    return %c0_i32, %c0_i32_0 : i32, i32
  }
  func.func @transform_3(%arg0: i32) -> (i32, i32) {
    %c0_i32 = arith.constant 0 : i32
    %c0_i32_0 = arith.constant 0 : i32
    %c0_i32_1 = arith.constant 0 : i32
    return %c0_i32, %c0_i32_0 : i32, i32
  }
  func.func @transform_4(%arg0: i32) -> (i32, i32) {
    %c0_i32 = arith.constant 0 : i32
    %c0_i32_0 = arith.constant 0 : i32
    %c0_i32_1 = arith.constant 0 : i32
    return %c0_i32, %c0_i32_0 : i32, i32
  }
  func.func @transform_5(%arg0: i32) -> (i32, i32) {
    %c0_i32 = arith.constant 0 : i32
    %c0_i32_0 = arith.constant 0 : i32
    return %arg0, %c0_i32 : i32, i32
  }
}

module attributes {stable_mosaic.version = 11 : i64} {
  func.func @attn_pool_kernel(%arg0: i32, %arg1: memref<2x3x400xf32, #tpu.memory_space<vmem>>, %arg2: memref<400x200xbf16, #tpu.memory_space<vmem>>, %arg3: memref<1x200xf32, #tpu.memory_space<vmem>>, %arg4: memref<1x200xf32, #tpu.memory_space<vmem>>, %arg5: memref<1x1xf32, #tpu.memory_space<vmem>>, %arg6: memref<2x400xf32, #tpu.memory_space<vmem>>) attributes {dimension_semantics = [#tpu.dimension_semantics<parallel>], iteration_bounds = array<i64: 1>, scalar_prefetch = 0 : i64, scratch_operands = 0 : i64, tpu.core_type = #tpu.core_type<tc>, window_params = [{transform_indices = @transform_0, window_bounds = array<i64: 2, 3, 400>}, {pipeline_mode = #tpu.pipeline_mode<synchronous>, transform_indices = @transform_1, window_bounds = array<i64: 400, 200>}, {pipeline_mode = #tpu.pipeline_mode<synchronous>, transform_indices = @transform_2, window_bounds = array<i64: 1, 200>}, {pipeline_mode = #tpu.pipeline_mode<synchronous>, transform_indices = @transform_3, window_bounds = array<i64: 1, 200>}, {pipeline_mode = #tpu.pipeline_mode<synchronous>, transform_indices = @transform_4, window_bounds = array<i64: 1, 1>}, {transform_indices = @transform_5, window_bounds = array<i64: 2, 400>}]} {
    %c0 = arith.constant 0 : index
    %c0_0 = arith.constant 0 : index
    %c0_1 = arith.constant 0 : index
    %0 = vector.load %arg1[%c0, %c0_0, %c0_1] : memref<2x3x400xf32, #tpu.memory_space<vmem>>, vector<2x3x400xf32>
    %1 = vector.shape_cast %0 : vector<2x3x400xf32> to vector<6x400xf32>
    %2 = arith.truncf %1 : vector<6x400xf32> to vector<6x400xbf16>
    %c0_2 = arith.constant 0 : index
    %c0_3 = arith.constant 0 : index
    %3 = vector.load %arg2[%c0_2, %c0_3] : memref<400x200xbf16, #tpu.memory_space<vmem>>, vector<400x200xbf16>
    %cst = arith.constant dense<0.000000e+00> : vector<6x200xf32>
    %4 = tpu.matmul %2, %3, %cst {dimension_numbers = #tpu.dot_dimension_numbers<[1], [0], [0], [1], [0, 0, 1, 1], [], []>} : vector<6x400xbf16>, vector<400x200xbf16>, vector<6x200xf32> -> vector<6x200xf32>
    %c0_4 = arith.constant 0 : index
    %c0_5 = arith.constant 0 : index
    %5 = vector.load %arg3[%c0_4, %c0_5] : memref<1x200xf32, #tpu.memory_space<vmem>>, vector<1x200xf32>
    %6 = vector.broadcast %5 : vector<1x200xf32> to vector<6x200xf32>
    %7 = arith.addf %4, %6 : vector<6x200xf32>
    %8 = math.tanh %7 : vector<6x200xf32>
    %9 = vector.shape_cast %8 : vector<6x200xf32> to vector<2x3x200xf32>
    %c0_6 = arith.constant 0 : index
    %c0_7 = arith.constant 0 : index
    %10 = vector.load %arg4[%c0_6, %c0_7] : memref<1x200xf32, #tpu.memory_space<vmem>>, vector<1x200xf32>
    %11 = vector.shape_cast %10 : vector<1x200xf32> to vector<1x1x200xf32>
    %12 = vector.broadcast %11 : vector<1x1x200xf32> to vector<2x3x200xf32>
    %13 = arith.mulf %9, %12 : vector<2x3x200xf32>
    %cst_8 = arith.constant dense<0.000000e+00> : vector<2x3xf32>
    %14 = vector.multi_reduction <add>, %13, %cst_8 [2] : vector<2x3x200xf32> to vector<2x3xf32>
    %c0_9 = arith.constant 0 : index
    %c0_10 = arith.constant 0 : index
    %15 = vector.load %arg5[%c0_9, %c0_10] : memref<1x1xf32, #tpu.memory_space<vmem>>, vector<1x1xf32>
    %16 = vector.broadcast %15 : vector<1x1xf32> to vector<2x3xf32>
    %17 = arith.addf %14, %16 : vector<2x3xf32>
    %cst_11 = arith.constant dense<0xFF800000> : vector<2xf32>
    %18 = vector.multi_reduction <maximumf>, %17, %cst_11 [1] : vector<2x3xf32> to vector<2xf32>
    %19 = vector.shape_cast %18 : vector<2xf32> to vector<2x1xf32>
    %20 = vector.broadcast %19 : vector<2x1xf32> to vector<2x3xf32>
    %21 = arith.subf %17, %20 : vector<2x3xf32>
    %22 = math.exp %21 : vector<2x3xf32>
    %cst_12 = arith.constant dense<0.000000e+00> : vector<2xf32>
    %23 = vector.multi_reduction <add>, %22, %cst_12 [1] : vector<2x3xf32> to vector<2xf32>
    %24 = vector.shape_cast %23 : vector<2xf32> to vector<2x1xf32>
    %25 = tpu.reciprocal %24 {approx = true} : vector<2x1xf32> -> vector<2x1xf32>
    %26 = vector.broadcast %25 : vector<2x1xf32> to vector<2x3xf32>
    %27 = arith.mulf %22, %26 : vector<2x3xf32>
    %28 = vector.shape_cast %27 : vector<2x3xf32> to vector<2x1x3xf32>
    "tpu.trace_start"() <{level = 10 : i32, message = "bks,bsf->bkf"}> : () -> ()
    %cst_13 = arith.constant dense<0.000000e+00> : vector<2x1x400xf32>
    %29 = tpu.matmul %28, %0, %cst_13 {dimension_numbers = #tpu.dot_dimension_numbers<[2], [1], [1], [2], [0, 0, 0, 1, 1, 2], [0], [0]>} : vector<2x1x3xf32>, vector<2x3x400xf32>, vector<2x1x400xf32> -> vector<2x1x400xf32>
    "tpu.trace_stop"() : () -> ()
    %30 = vector.shape_cast %29 : vector<2x1x400xf32> to vector<2x400xf32>
    %c0_14 = arith.constant 0 : index
    %c0_15 = arith.constant 0 : index
    %31 = vector.load %arg6[%c0_14, %c0_15] : memref<2x400xf32, #tpu.memory_space<vmem>>, vector<2x400xf32>
    tpu.vector_store %arg6[%c0_14, %c0_15], %30 {strides = array<i32>} : memref<2x400xf32, #tpu.memory_space<vmem>>, vector<2x400xf32>,
    return
  }
  func.func @transform_0(%arg0: i32) -> (i32, i32, i32) {
    %c0_i32 = arith.constant 0 : i32
    %c0_i32_0 = arith.constant 0 : i32
    %c0_i32_1 = arith.constant 0 : i32
    return %arg0, %c0_i32, %c0_i32_0 : i32, i32, i32
  }
  func.func @transform_1(%arg0: i32) -> (i32, i32) {
    %c0_i32 = arith.constant 0 : i32
    %c0_i32_0 = arith.constant 0 : i32
    %c0_i32_1 = arith.constant 0 : i32
    return %c0_i32, %c0_i32_0 : i32, i32
  }
  func.func @transform_2(%arg0: i32) -> (i32, i32) {
    %c0_i32 = arith.constant 0 : i32
    %c0_i32_0 = arith.constant 0 : i32
    %c0_i32_1 = arith.constant 0 : i32
    return %c0_i32, %c0_i32_0 : i32, i32
  }
  func.func @transform_3(%arg0: i32) -> (i32, i32) {
    %c0_i32 = arith.constant 0 : i32
    %c0_i32_0 = arith.constant 0 : i32
    %c0_i32_1 = arith.constant 0 : i32
    return %c0_i32, %c0_i32_0 : i32, i32
  }
  func.func @transform_4(%arg0: i32) -> (i32, i32) {
    %c0_i32 = arith.constant 0 : i32
    %c0_i32_0 = arith.constant 0 : i32
    %c0_i32_1 = arith.constant 0 : i32
    return %c0_i32, %c0_i32_0 : i32, i32
  }
  func.func @transform_5(%arg0: i32) -> (i32, i32) {
    %c0_i32 = arith.constant 0 : i32
    %c0_i32_0 = arith.constant 0 : i32
    return %arg0, %c0_i32 : i32, i32
  }
}

</mosaic_0001>

<llo_original>
// kernel: naml_forward.12
$region0: #{naml_forward.12}
  #allocation0 [shape = 'u32[]', space=smem, size = 0x4, offset = 0x4, fixed_abs, tag = 'smem constant byte address 0x4 - core index']
  #allocation1 [shape = 'u32[144,128]{1,0:T(1,128)}', space=vmem, size = 0x12000, scoped, tag = 'internal scratch']
  #allocation2 [shape = 'f32[1,1]{1,0:T(1,128)S(1)}', space=vmem, size = 0x200, scoped, tag = 'scoped memory for naml_forward.12']
  %s0 = inlined_call_operand.vmem [shape: bf16[4,16,192], index: 0, kind: input, shape index: {}]
  %s1 = inlined_call_operand.vmem [shape: bf16[192,400], index: 1, kind: input, shape index: {}]
  %s2 = inlined_call_operand.vmem [shape: f32[1,400], index: 2, kind: input, shape index: {}]
  %s3 = inlined_call_operand.vmem [shape: bf16[400,200], index: 3, kind: input, shape index: {}]
  %s4 = inlined_call_operand.vmem [shape: f32[1,200], index: 4, kind: input, shape index: {}]
  %s5 = inlined_call_operand.vmem [shape: f32[1,200], index: 5, kind: input, shape index: {}]
  %s6 = inlined_call_operand.<no memory space> [shape: f32[1,1], index: 6, kind: input, shape index: {}]
  %s7 = inlined_call_operand.vmem [shape: f32[4,400], index: 7, kind: output, shape index: {}]
  %s8 = sld [smem:[#allocation0]]
  $region38: #{naml_forward.12} parent=0
    _
  %s10 = ssub.s32 1, %s8
  %s11 = scalar_select 0, %s10, %s8
  %v12 = vstv %s6
  %13 = vst [vmem:[#allocation2] sm:$0x1] %v12
  // Predicated region
  $region2: #{naml_forward.12} parent=0 // pred_check
    _
  $region3: #{naml_forward.12} parent=0 // pred_check_branch
    %15 = sbr.rel (0) target = $region5
  $region4: #{naml_forward.12} parent=0 // pred_region
    _
  $region5: #{naml_forward.12} parent=0 // pred_fallthru
    _
  // Predicated region
  $region6: #{naml_forward.12} parent=0 // pred_check
    _
  $region7: #{naml_forward.12} parent=0 // pred_check_branch
    %17 = sbr.rel (0) target = $region9
  $region8: #{naml_forward.12} parent=0 // pred_region
    _
  $region9: #{naml_forward.12} parent=0 // pred_fallthru
    _
  // Predicated region
  $region10: #{naml_forward.12} parent=0 // pred_check
    _
  $region11: #{naml_forward.12} parent=0 // pred_check_branch
    %19 = sbr.rel (0) target = $region13
  $region12: #{naml_forward.12} parent=0 // pred_region
    _
  $region13: #{naml_forward.12} parent=0 // pred_fallthru
    _
  // Predicated region
  $region14: #{naml_forward.12} parent=0 // pred_check
    _
  $region15: #{naml_forward.12} parent=0 // pred_check_branch
    %21 = sbr.rel (0) target = $region17
  $region16: #{naml_forward.12} parent=0 // pred_region
    _
  $region17: #{naml_forward.12} parent=0 // pred_fallthru
    _
  // Predicated region
  $region18: #{naml_forward.12} parent=0 // pred_check
    _
  $region19: #{naml_forward.12} parent=0 // pred_check_branch
    %23 = sbr.rel (0) target = $region21
  $region20: #{naml_forward.12} parent=0 // pred_region
    _
  $region21: #{naml_forward.12} parent=0 // pred_fallthru
    _
  // Predicated region
  $region22: #{naml_forward.12} parent=0 // pred_check
    _
  $region23: #{naml_forward.12} parent=0 // pred_check_branch
    %25 = sbr.rel (0) target = $region25
  $region24: #{naml_forward.12} parent=0 // pred_region
    _
  $region25: #{naml_forward.12} parent=0 // pred_fallthru
    _
  // Predicated region
  $region26: #{naml_forward.12} parent=0 // pred_check
    _
  $region27: #{naml_forward.12} parent=0 // pred_check_branch
    %27 = sbr.rel (0) target = $region29
  $region28: #{naml_forward.12} parent=0 // pred_region
    _
  $region29: #{naml_forward.12} parent=0 // pred_fallthru
    _
  %v29 = vld [vmem:[%s0] sm:$0xff]
  %v30 = vld [vmem:[%s0 + $0x8] sm:$0xff]
  %v31 = vld [vmem:[%s0 + $0x10] sm:$0xff]
  %v32 = vld [vmem:[%s0 + $0x18] sm:$0xff]
  %v33 = vld [vmem:[%s0 + $0x20] sm:$0xff]
  %v34 = vld [vmem:[%s0 + $0x28] sm:$0xff]
  %v35 = vld [vmem:[%s0 + $0x30] sm:$0xff]
  %v36 = vld [vmem:[%s0 + $0x38] sm:$0xff]
  %v37 = vld [vmem:[%s1] sm:$0xff]
  %v38 = vld [vmem:[%s1 + $0x8] sm:$0xff]
  %v39 = vld [vmem:[%s1 + $0x10] sm:$0xff]
  %v40 = vld [vmem:[%s1 + $0x18] sm:$0xff]
  %v41 = vld [vmem:[%s1 + $0x20] sm:$0xff]
  %v42 = vld [vmem:[%s1 + $0x28] sm:$0xff]
  %v43 = vld [vmem:[%s1 + $0x30] sm:$0xff]
  %v44 = vld [vmem:[%s1 + $0x38] sm:$0xff]
  %v45 = vld [vmem:[%s1 + $0x40] sm:$0xff]
  %v46 = vld [vmem:[%s1 + $0x48] sm:$0xff]
  %v47 = vld [vmem:[%s1 + $0x50] sm:$0xff]
  %v48 = vld [vmem:[%s1 + $0x58] sm:$0xff]
  %v49 = vld [vmem:[%s1 + $0x60] sm:$0xff]
  %v50 = vld [vmem:[%s1 + $0x68] sm:$0xff]
  %v51 = vld [vmem:[%s1 + $0x70] sm:$0xff]
  %v52 = vld [vmem:[%s1 + $0x78] sm:$0xff]
  %v53 = vld [vmem:[%s1 + $0x80] sm:$0xff]
  %v54 = vld [vmem:[%s1 + $0x88] sm:$0xff]
  %v55 = vld [vmem:[%s1 + $0x90] sm:$0xff]
  %v56 = vld [vmem:[%s1 + $0x98] sm:$0xff]
  %v57 = vld [vmem:[%s1 + $0xa0] sm:$0xff]
  %v58 = vld [vmem:[%s1 + $0xa8] sm:$0xff]
  %v59 = vld [vmem:[%s1 + $0xb0] sm:$0xff]
  %v60 = vld [vmem:[%s1 + $0xb8] sm:$0xff]
  %v61 = vld [vmem:[%s1 + $0xc0] sm:$0xff]
  %v62 = vld [vmem:[%s1 + $0xc8] sm:$0xff]
  %v63 = vld [vmem:[%s1 + $0xd0] sm:$0xff]
  %v64 = vld [vmem:[%s1 + $0xd8] sm:$0xff]
  %v65 = vld [vmem:[%s1 + $0xe0] sm:$0xff]
  %v66 = vld [vmem:[%s1 + $0xe8] sm:$0xff]
  %v67 = vld [vmem:[%s1 + $0xf0] sm:$0xff]
  %v68 = vld [vmem:[%s1 + $0xf8] sm:$0xff]
  %v69 = vld [vmem:[%s1 + $0x100] sm:$0xff]
  %v70 = vld [vmem:[%s1 + $0x108] sm:$0xff]
  %v71 = vld [vmem:[%s1 + $0x110] sm:$0xff]
  %v72 = vld [vmem:[%s1 + $0x118] sm:$0xff]
  %v73 = vld [vmem:[%s1 + $0x120] sm:$0xff]
  %v74 = vld [vmem:[%s1 + $0x128] sm:$0xff]
  %v75 = vld [vmem:[%s1 + $0x130] sm:$0xff]
  %v76 = vld [vmem:[%s1 + $0x138] sm:$0xff]
  %v77 = vld [vmem:[%s1 + $0x140] sm:$0xff]
  %v78 = vld [vmem:[%s1 + $0x148] sm:$0xff]
  %v79 = vld [vmem:[%s1 + $0x150] sm:$0xff]
  %v80 = vld [vmem:[%s1 + $0x158] sm:$0xff]
  %v81 = vld [vmem:[%s1 + $0x160] sm:$0xff]
  %v82 = vld [vmem:[%s1 + $0x168] sm:$0xff]
  %v83 = vld [vmem:[%s1 + $0x170] sm:$0xff]
  %v84 = vld [vmem:[%s1 + $0x178] sm:$0xff]
  %v85 = vld [vmem:[%s2] sm:$0xf]
  %v87 = vlaneseq
  %v88 = vshrl.u32 %v87, 7
  %v89 = vsub.s32 0, %v88
  %v90 = vrot.slane %v85, %v89
  %v91 = vlaneseq
  %v92 = vshrl.u32 %v91, 7
  %v93 = vsub.s32 1, %v92
  %v94 = vrot.slane %v85, %v93
  %v95 = vlaneseq
  %v96 = vshrl.u32 %v95, 7
  %v97 = vsub.s32 2, %v96
  %v98 = vrot.slane %v85, %v97
  %v99 = vlaneseq
  %v100 = vshrl.u32 %v99, 7
  %v101 = vsub.s32 3, %v100
  %v102 = vrot.slane %v85, %v101
  %v115 = vunpack.c.l.b16 %v29
  %v116 = vunpack.c.h.b16 %v29
  %v117 = vunpack.c.l.b16 %v30
  %v118 = vunpack.c.h.b16 %v30
  %v119 = vunpack.c.l.b16 %v31
  %v120 = vunpack.c.h.b16 %v31
  %v121 = vunpack.c.l.b16 %v32
  %v122 = vunpack.c.h.b16 %v32
  %v123 = vunpack.c.l.b16 %v33
  %v124 = vunpack.c.h.b16 %v33
  %v125 = vunpack.c.l.b16 %v34
  %v126 = vunpack.c.h.b16 %v34
  %v127 = vunpack.c.l.b16 %v35
  %v128 = vunpack.c.h.b16 %v35
  %v129 = vunpack.c.l.b16 %v36
  %v130 = vunpack.c.h.b16 %v36
  %v131 = vpack.c.b16 %v117, %v115
  %v132 = vpack.c.b16 %v118, %v116
  %v133 = vpack.c.b16 %v121, %v119
  %v134 = vpack.c.b16 %v122, %v120
  %v135 = vpack.c.b16 %v125, %v123
  %v136 = vpack.c.b16 %v126, %v124
  %v137 = vpack.c.b16 %v129, %v127
  %v138 = vpack.c.b16 %v130, %v128
  %v191 = vunpack.c.l.b16 %v37
  %v192 = vunpack.c.h.b16 %v37
  %v193 = vunpack.c.l.b16 %v38
  %v194 = vunpack.c.h.b16 %v38
  %v195 = vunpack.c.l.b16 %v39
  %v196 = vunpack.c.h.b16 %v39
  %v197 = vunpack.c.l.b16 %v40
  %v198 = vunpack.c.h.b16 %v40
  %v199 = vunpack.c.l.b16 %v41
  %v200 = vunpack.c.h.b16 %v41
  %v201 = vunpack.c.l.b16 %v42
  %v202 = vunpack.c.h.b16 %v42
  %v203 = vunpack.c.l.b16 %v43
  %v204 = vunpack.c.h.b16 %v43
  %v205 = vunpack.c.l.b16 %v44
  %v206 = vunpack.c.h.b16 %v44
  %v207 = vunpack.c.l.b16 %v45
  %v208 = vunpack.c.h.b16 %v45
  %v209 = vunpack.c.l.b16 %v46
  %v210 = vunpack.c.h.b16 %v46
  %v211 = vunpack.c.l.b16 %v47
  %v212 = vunpack.c.h.b16 %v47
  %v213 = vunpack.c.l.b16 %v48
  %v214 = vunpack.c.h.b16 %v48
  %v215 = vunpack.c.l.b16 %v49
  %v216 = vunpack.c.h.b16 %v49
  %v217 = vunpack.c.l.b16 %v50
  %v218 = vunpack.c.h.b16 %v50
  %v219 = vunpack.c.l.b16 %v51
  %v220 = vunpack.c.h.b16 %v51
  %v221 = vunpack.c.l.b16 %v52
  %v222 = vunpack.c.h.b16 %v52
  %v223 = vunpack.c.l.b16 %v53
  %v224 = vunpack.c.h.b16 %v53
  %v225 = vunpack.c.l.b16 %v54
  %v226 = vunpack.c.h.b16 %v54
  %v227 = vunpack.c.l.b16 %v55
  %v228 = vunpack.c.h.b16 %v55
  %v229 = vunpack.c.l.b16 %v56
  %v230 = vunpack.c.h.b16 %v56
  %v231 = vunpack.c.l.b16 %v57
  %v232 = vunpack.c.h.b16 %v57
  %v233 = vunpack.c.l.b16 %v58
  %v234 = vunpack.c.h.b16 %v58
  %v235 = vunpack.c.l.b16 %v59
  %v236 = vunpack.c.h.b16 %v59
  %v237 = vunpack.c.l.b16 %v60
  %v238 = vunpack.c.h.b16 %v60
  %v239 = vunpack.c.l.b16 %v61
  %v240 = vunpack.c.h.b16 %v61
  %v241 = vunpack.c.l.b16 %v62
  %v242 = vunpack.c.h.b16 %v62
  %v243 = vunpack.c.l.b16 %v63
  %v244 = vunpack.c.h.b16 %v63
  %v245 = vunpack.c.l.b16 %v64
  %v246 = vunpack.c.h.b16 %v64
  %v247 = vunpack.c.l.b16 %v65
  %v248 = vunpack.c.h.b16 %v65
  %v249 = vunpack.c.l.b16 %v66
  %v250 = vunpack.c.h.b16 %v66
  %v251 = vunpack.c.l.b16 %v67
  %v252 = vunpack.c.h.b16 %v67
  %v253 = vunpack.c.l.b16 %v68
  %v254 = vunpack.c.h.b16 %v68
  %v255 = vunpack.c.l.b16 %v69
  %v256 = vunpack.c.h.b16 %v69
  %v257 = vunpack.c.l.b16 %v70
  %v258 = vunpack.c.h.b16 %v70
  %v259 = vunpack.c.l.b16 %v71
  %v260 = vunpack.c.h.b16 %v71
  %v261 = vunpack.c.l.b16 %v72
  %v262 = vunpack.c.h.b16 %v72
  %v263 = vunpack.c.l.b16 %v73
  %v264 = vunpack.c.h.b16 %v73
  %v265 = vunpack.c.l.b16 %v74
  %v266 = vunpack.c.h.b16 %v74
  %v267 = vunpack.c.l.b16 %v75
  %v268 = vunpack.c.h.b16 %v75
  %v269 = vunpack.c.l.b16 %v76
  %v270 = vunpack.c.h.b16 %v76
  %v271 = vunpack.c.l.b16 %v77
  %v272 = vunpack.c.h.b16 %v77
  %v273 = vunpack.c.l.b16 %v78
  %v274 = vunpack.c.h.b16 %v78
  %v275 = vunpack.c.l.b16 %v79
  %v276 = vunpack.c.h.b16 %v79
  %v277 = vunpack.c.l.b16 %v80
  %v278 = vunpack.c.h.b16 %v80
  %v279 = vunpack.c.l.b16 %v81
  %v280 = vunpack.c.h.b16 %v81
  %v281 = vunpack.c.l.b16 %v82
  %v282 = vunpack.c.h.b16 %v82
  %v283 = vunpack.c.l.b16 %v83
  %v284 = vunpack.c.h.b16 %v83
  %v285 = vunpack.c.l.b16 %v84
  %v286 = vunpack.c.h.b16 %v84
  %v287 = vpack.c.b16 %v195, %v191
  %v288 = vpack.c.b16 %v196, %v192
  %v289 = vpack.c.b16 %v197, %v193
  %v290 = vpack.c.b16 %v198, %v194
  %v291 = vpack.c.b16 %v203, %v199
  %v292 = vpack.c.b16 %v204, %v200
  %v293 = vpack.c.b16 %v205, %v201
  %v294 = vpack.c.b16 %v206, %v202
  %v295 = vpack.c.b16 %v211, %v207
  %v296 = vpack.c.b16 %v212, %v208
  %v297 = vpack.c.b16 %v213, %v209
  %v298 = vpack.c.b16 %v214, %v210
  %v299 = vpack.c.b16 %v219, %v215
  %v300 = vpack.c.b16 %v220, %v216
  %v301 = vpack.c.b16 %v221, %v217
  %v302 = vpack.c.b16 %v222, %v218
  %v303 = vpack.c.b16 %v227, %v223
  %v304 = vpack.c.b16 %v228, %v224
  %v305 = vpack.c.b16 %v229, %v225
  %v306 = vpack.c.b16 %v230, %v226
  %v307 = vpack.c.b16 %v235, %v231
  %v308 = vpack.c.b16 %v236, %v232
  %v309 = vpack.c.b16 %v237, %v233
  %v310 = vpack.c.b16 %v238, %v234
  %v311 = vpack.c.b16 %v243, %v239
  %v312 = vpack.c.b16 %v244, %v240
  %v313 = vpack.c.b16 %v245, %v241
  %v314 = vpack.c.b16 %v246, %v242
  %v315 = vpack.c.b16 %v251, %v247
  %v316 = vpack.c.b16 %v252, %v248
  %v317 = vpack.c.b16 %v253, %v249
  %v318 = vpack.c.b16 %v254, %v250
  %v319 = vpack.c.b16 %v259, %v255
  %v320 = vpack.c.b16 %v260, %v256
  %v321 = vpack.c.b16 %v261, %v257
  %v322 = vpack.c.b16 %v262, %v258
  %v323 = vpack.c.b16 %v267, %v263
  %v324 = vpack.c.b16 %v268, %v264
  %v325 = vpack.c.b16 %v269, %v265
  %v326 = vpack.c.b16 %v270, %v266
  %v327 = vpack.c.b16 %v275, %v271
  %v328 = vpack.c.b16 %v276, %v272
  %v329 = vpack.c.b16 %v277, %v273
  %v330 = vpack.c.b16 %v278, %v274
  %v331 = vpack.c.b16 %v283, %v279
  %v332 = vpack.c.b16 %v284, %v280
  %v333 = vpack.c.b16 %v285, %v281
  %v334 = vpack.c.b16 %v286, %v282
  %vm383 = vcmask 523264
  %v385 = vsel %vm383, %v132, 0
  %v388 = vsel %vm383, %v134, 0
  %v391 = vsel %vm383, %v136, 0
  %v394 = vsel %vm383, %v138, 0
  %396 = vmatprep.subr.bf16.mxu0 %v288
  %397 = vmatpush1.bf16.msra.mxu0 %v287
  %398 = vmatprep.subr.bf16.mxu0 %v292
  %399 = vmatpush1.bf16.msra.mxu0 %v291
  %400 = vmatprep.subr.bf16.mxu0 %v296
  %401 = vmatpush1.bf16.msra.mxu0 %v295
  %402 = vmatprep.subr.bf16.mxu0 %v300
  %403 = vmatpush1.bf16.msra.mxu0 %v299
  %404 = vmatprep.subr.bf16.mxu0 %v304
  %405 = vmatpush1.bf16.msra.mxu0 %v303
  %406 = vmatprep.subr.bf16.mxu0 %v308
  %407 = vmatpush1.bf16.msra.mxu0 %v307
  %408 = vmatprep.subr.bf16.mxu0 %v312
  %409 = vmatpush1.bf16.msra.mxu0 %v311
  %410 = vmatprep.subr.bf16.mxu0 %v316
  %411 = vmatpush1.bf16.msra.mxu0 %v315
  %412 = vmatprep.subr.bf16.mxu0 %v320
  %413 = vmatpush1.bf16.msra.mxu0 %v319
  %414 = vmatprep.subr.bf16.mxu0 %v324
  %415 = vmatpush1.bf16.msra.mxu0 %v323
  %416 = vmatprep.subr.bf16.mxu0 %v328
  %417 = vmatpush1.bf16.msra.mxu0 %v327
  %418 = vmatprep.subr.bf16.mxu0 %v332
  %419 = vmatpush1.bf16.msra.mxu0 %v331
  %420 = vmatprep.subr.bf16.mxu0 0
  %421 = vmatpush1.bf16.msra.mxu0 0
  %422 = vmatprep.subr.bf16.mxu0 0
  %423 = vmatpush1.bf16.msra.mxu0 0
  %424 = vmatprep.subr.bf16.mxu0 0
  %425 = vmatpush1.bf16.msra.mxu0 0
  %426 = vmatprep.subr.bf16.mxu0 0
  %427 = vmatpush1.bf16.msra.mxu0 0
  %428 = vmatprep.mubr.bf16.mxu0 %v385
  %429 = vmatmul.mubr.bf16.gmra.mrb[0].mxu0 %v131
  %v430 = vpop.f32.mrb[0].mxu0
  %v431 = vadd.f32 %v90, %v430
  %v432 = vpop.f32.mrb[0].mxu0
  %v433 = vadd.f32 %v94, %v432
  %v434 = vpop.f32.mrb[0].mxu0
  %v435 = vadd.f32 %v90, %v434
  %v436 = vpop.f32.mrb[0].mxu0
  %v437 = vadd.f32 %v94, %v436
  %438 = vmatprep.mubr.bf16.mxu0 %v388
  %439 = vmatmul.mubr.bf16.gmra.mrb[0].mxu0 %v133
  %v440 = vpop.f32.mrb[0].mxu0
  %v441 = vadd.f32 %v90, %v440
  %v442 = vpop.f32.mrb[0].mxu0
  %v443 = vadd.f32 %v94, %v442
  %v444 = vpop.f32.mrb[0].mxu0
  %v445 = vadd.f32 %v90, %v444
  %v446 = vpop.f32.mrb[0].mxu0
  %v447 = vadd.f32 %v94, %v446
  %448 = vmatprep.mubr.bf16.mxu0 %v391
  %449 = vmatmul.mubr.bf16.gmra.mrb[0].mxu0 %v135
  %v450 = vpop.f32.mrb[0].mxu0
  %v451 = vadd.f32 %v90, %v450
  %v452 = vpop.f32.mrb[0].mxu0
  %v453 = vadd.f32 %v94, %v452
  %v454 = vpop.f32.mrb[0].mxu0
  %v455 = vadd.f32 %v90, %v454
  %v456 = vpop.f32.mrb[0].mxu0
  %v457 = vadd.f32 %v94, %v456
  %458 = vmatprep.mubr.bf16.mxu0 %v394
  %459 = vmatmul.mubr.bf16.gmra.mrb[0].mxu0 %v137
  %v460 = vpop.f32.mrb[0].mxu0
  %v461 = vadd.f32 %v90, %v460
  %v462 = vpop.f32.mrb[0].mxu0
  %v463 = vadd.f32 %v94, %v462
  %v464 = vpop.f32.mrb[0].mxu0
  %v465 = vadd.f32 %v90, %v464
  %v466 = vpop.f32.mrb[0].mxu0
  %v467 = vadd.f32 %v94, %v466
  %468 = vdwg.mxu0
  %469 = vmatprep.subr.bf16.mxu0 %v290
  %470 = vmatpush1.bf16.msra.mxu0 %v289
  %471 = vmatprep.subr.bf16.mxu0 %v294
  %472 = vmatpush1.bf16.msra.mxu0 %v293
  %473 = vmatprep.subr.bf16.mxu0 %v298
  %474 = vmatpush1.bf16.msra.mxu0 %v297
  %475 = vmatprep.subr.bf16.mxu0 %v302
  %476 = vmatpush1.bf16.msra.mxu0 %v301
  %477 = vmatprep.subr.bf16.mxu0 %v306
  %478 = vmatpush1.bf16.msra.mxu0 %v305
  %479 = vmatprep.subr.bf16.mxu0 %v310
  %480 = vmatpush1.bf16.msra.mxu0 %v309
  %481 = vmatprep.subr.bf16.mxu0 %v314
  %482 = vmatpush1.bf16.msra.mxu0 %v313
  %483 = vmatprep.subr.bf16.mxu0 %v318
  %484 = vmatpush1.bf16.msra.mxu0 %v317
  %485 = vmatprep.subr.bf16.mxu0 %v322
  %486 = vmatpush1.bf16.msra.mxu0 %v321
  %487 = vmatprep.subr.bf16.mxu0 %v326
  %488 = vmatpush1.bf16.msra.mxu0 %v325
  %489 = vmatprep.subr.bf16.mxu0 %v330
  %490 = vmatpush1.bf16.msra.mxu0 %v329
  %491 = vmatprep.subr.bf16.mxu0 %v334
  %492 = vmatpush1.bf16.msra.mxu0 %v333
  %493 = vmatprep.subr.bf16.mxu0 0
  %494 = vmatpush1.bf16.msra.mxu0 0
  %495 = vmatprep.subr.bf16.mxu0 0
  %496 = vmatpush1.bf16.msra.mxu0 0
  %497 = vmatprep.subr.bf16.mxu0 0
  %498 = vmatpush1.bf16.msra.mxu0 0
  %499 = vmatprep.subr.bf16.mxu0 0
  %500 = vmatpush1.bf16.msra.mxu0 0
  %501 = vmatprep.mubr.bf16.mxu0 %v385
  %502 = vmatmul.mubr.bf16.gmra.mrb[0].mxu0 %v131
  %v503 = vpop.f32.mrb[0].mxu0
  %v504 = vadd.f32 %v98, %v503
  %v505 = vpop.f32.mrb[0].mxu0
  %v506 = vadd.f32 %v102, %v505
  %v507 = vpop.f32.mrb[0].mxu0
  %v508 = vadd.f32 %v98, %v507
  %v509 = vpop.f32.mrb[0].mxu0
  %v510 = vadd.f32 %v102, %v509
  %511 = vmatprep.mubr.bf16.mxu0 %v388
  %512 = vmatmul.mubr.bf16.gmra.mrb[0].mxu0 %v133
  %v513 = vpop.f32.mrb[0].mxu0
  %v514 = vadd.f32 %v98, %v513
  %v515 = vpop.f32.mrb[0].mxu0
  %v516 = vadd.f32 %v102, %v515
  %v517 = vpop.f32.mrb[0].mxu0
  %v518 = vadd.f32 %v98, %v517
  %v519 = vpop.f32.mrb[0].mxu0
  %v520 = vadd.f32 %v102, %v519
  %521 = vmatprep.mubr.bf16.mxu0 %v391
  %522 = vmatmul.mubr.bf16.gmra.mrb[0].mxu0 %v135
  %v523 = vpop.f32.mrb[0].mxu0
  %v524 = vadd.f32 %v98, %v523
  %v525 = vpop.f32.mrb[0].mxu0
  %v526 = vadd.f32 %v102, %v525
  %v527 = vpop.f32.mrb[0].mxu0
  %v528 = vadd.f32 %v98, %v527
  %v529 = vpop.f32.mrb[0].mxu0
  %v530 = vadd.f32 %v102, %v529
  %531 = vmatprep.mubr.bf16.mxu0 %v394
  %532 = vmatmul.mubr.bf16.gmra.mrb[0].mxu0 %v137
  %v533 = vpop.f32.mrb[0].mxu0
  %v534 = vadd.f32 %v98, %v533
  %v535 = vpop.f32.mrb[0].mxu0
  %v536 = vadd.f32 %v102, %v535
  %v537 = vpop.f32.mrb[0].mxu0
  %v538 = vadd.f32 %v98, %v537
  %v539 = vpop.f32.mrb[0].mxu0
  %v540 = vadd.f32 %v102, %v539
  %541 = vdwg.mxu0
  %v542 = vpack.c.bf16 %v435, %v431
  %v543 = vpack.c.bf16 %v437, %v433
  %v544 = vpack.c.bf16 %v508, %v504
  %v545 = vpack.c.bf16 %v510, %v506
  %v546 = vpack.c.bf16 %v445, %v441
  %v547 = vpack.c.bf16 %v447, %v443
  %v548 = vpack.c.bf16 %v518, %v514
  %v549 = vpack.c.bf16 %v520, %v516
  %v550 = vpack.c.bf16 %v455, %v451
  %v551 = vpack.c.bf16 %v457, %v453
  %v552 = vpack.c.bf16 %v528, %v524
  %v553 = vpack.c.bf16 %v530, %v526
  %v554 = vpack.c.bf16 %v465, %v461
  %v555 = vpack.c.bf16 %v467, %v463
  %v556 = vpack.c.bf16 %v538, %v534
  %v557 = vpack.c.bf16 %v540, %v536
  %v558 = vld [vmem:[%s3] sm:$0xff]
  %v559 = vld [vmem:[%s3 + $0x8] sm:$0xff]
  %v560 = vld [vmem:[%s3 + $0x10] sm:$0xff]
  %v561 = vld [vmem:[%s3 + $0x18] sm:$0xff]
  %v562 = vld [vmem:[%s3 + $0x20] sm:$0xff]
  %v563 = vld [vmem:[%s3 + $0x28] sm:$0xff]
  %v564 = vld [vmem:[%s3 + $0x30] sm:$0xff]
  %v565 = vld [vmem:[%s3 + $0x38] sm:$0xff]
  %v566 = vld [vmem:[%s3 + $0x40] sm:$0xff]
  %v567 = vld [vmem:[%s3 + $0x48] sm:$0xff]
  %v568 = vld [vmem:[%s3 + $0x50] sm:$0xff]
  %v569 = vld [vmem:[%s3 + $0x58] sm:$0xff]
  %v570 = vld [vmem:[%s3 + $0x60] sm:$0xff]
  %v571 = vld [vmem:[%s3 + $0x68] sm:$0xff]
  %v572 = vld [vmem:[%s3 + $0x70] sm:$0xff]
  %v573 = vld [vmem:[%s3 + $0x78] sm:$0xff]
  %v574 = vld [vmem:[%s3 + $0x80] sm:$0xff]
  %v575 = vld [vmem:[%s3 + $0x88] sm:$0xff]
  %v576 = vld [vmem:[%s3 + $0x90] sm:$0xff]
  %v577 = vld [vmem:[%s3 + $0x98] sm:$0xff]
  %v578 = vld [vmem:[%s3 + $0xa0] sm:$0xff]
  %v579 = vld [vmem:[%s3 + $0xa8] sm:$0xff]
  %v580 = vld [vmem:[%s3 + $0xb0] sm:$0xff]
  %v581 = vld [vmem:[%s3 + $0xb8] sm:$0xff]
  %v582 = vld [vmem:[%s3 + $0xc0] sm:$0xff]
  %v583 = vld [vmem:[%s3 + $0xc8] sm:$0xff]
  %v584 = vld [vmem:[%s3 + $0xd0] sm:$0xff]
  %v585 = vld [vmem:[%s3 + $0xd8] sm:$0xff]
  %v586 = vld [vmem:[%s3 + $0xe0] sm:$0xff]
  %v587 = vld [vmem:[%s3 + $0xe8] sm:$0xff]
  %v588 = vld [vmem:[%s3 + $0xf0] sm:$0xff]
  %v589 = vld [vmem:[%s3 + $0xf8] sm:$0xff]
  %v590 = vld [vmem:[%s3 + $0x100] sm:$0xff]
  %v591 = vld [vmem:[%s3 + $0x108] sm:$0xff]
  %v592 = vld [vmem:[%s3 + $0x110] sm:$0xff]
  %v593 = vld [vmem:[%s3 + $0x118] sm:$0xff]
  %v594 = vld [vmem:[%s3 + $0x120] sm:$0xff]
  %v595 = vld [vmem:[%s3 + $0x128] sm:$0xff]
  %v596 = vld [vmem:[%s3 + $0x130] sm:$0xff]
  %v597 = vld [vmem:[%s3 + $0x138] sm:$0xff]
  %v598 = vld [vmem:[%s3 + $0x140] sm:$0xff]
  %v599 = vld [vmem:[%s3 + $0x148] sm:$0xff]
  %v600 = vld [vmem:[%s3 + $0x150] sm:$0xff]
  %v601 = vld [vmem:[%s3 + $0x158] sm:$0xff]
  %v602 = vld [vmem:[%s3 + $0x160] sm:$0xff]
  %v603 = vld [vmem:[%s3 + $0x168] sm:$0xff]
  %v604 = vld [vmem:[%s3 + $0x170] sm:$0xff]
  %v605 = vld [vmem:[%s3 + $0x178] sm:$0xff]
  %v606 = vld [vmem:[%s3 + $0x180] sm:$0xff]
  %v607 = vld [vmem:[%s3 + $0x188] sm:$0xff]
  %v608 = vld [vmem:[%s4] sm:$0x3]
  %v610 = vlaneseq
  %v611 = vshrl.u32 %v610, 7
  %v612 = vsub.s32 0, %v611
  %v613 = vrot.slane %v608, %v612
  %v614 = vlaneseq
  %v615 = vshrl.u32 %v614, 7
  %v616 = vsub.s32 1, %v615
  %v617 = vrot.slane %v608, %v616
  %v670 = vunpack.c.l.b16 %v558
  %v671 = vunpack.c.h.b16 %v558
  %v672 = vunpack.c.l.b16 %v559
  %v673 = vunpack.c.h.b16 %v559
  %v674 = vunpack.c.l.b16 %v560
  %v675 = vunpack.c.h.b16 %v560
  %v676 = vunpack.c.l.b16 %v561
  %v677 = vunpack.c.h.b16 %v561
  %v678 = vunpack.c.l.b16 %v562
  %v679 = vunpack.c.h.b16 %v562
  %v680 = vunpack.c.l.b16 %v563
  %v681 = vunpack.c.h.b16 %v563
  %v682 = vunpack.c.l.b16 %v564
  %v683 = vunpack.c.h.b16 %v564
  %v684 = vunpack.c.l.b16 %v565
  %v685 = vunpack.c.h.b16 %v565
  %v686 = vunpack.c.l.b16 %v566
  %v687 = vunpack.c.h.b16 %v566
  %v688 = vunpack.c.l.b16 %v567
  %v689 = vunpack.c.h.b16 %v567
  %v690 = vunpack.c.l.b16 %v568
  %v691 = vunpack.c.h.b16 %v568
  %v692 = vunpack.c.l.b16 %v569
  %v693 = vunpack.c.h.b16 %v569
  %v694 = vunpack.c.l.b16 %v570
  %v695 = vunpack.c.h.b16 %v570
  %v696 = vunpack.c.l.b16 %v571
  %v697 = vunpack.c.h.b16 %v571
  %v698 = vunpack.c.l.b16 %v572
  %v699 = vunpack.c.h.b16 %v572
  %v700 = vunpack.c.l.b16 %v573
  %v701 = vunpack.c.h.b16 %v573
  %v702 = vunpack.c.l.b16 %v574
  %v703 = vunpack.c.h.b16 %v574
  %v704 = vunpack.c.l.b16 %v575
  %v705 = vunpack.c.h.b16 %v575
  %v706 = vunpack.c.l.b16 %v576
  %v707 = vunpack.c.h.b16 %v576
  %v708 = vunpack.c.l.b16 %v577
  %v709 = vunpack.c.h.b16 %v577
  %v710 = vunpack.c.l.b16 %v578
  %v711 = vunpack.c.h.b16 %v578
  %v712 = vunpack.c.l.b16 %v579
  %v713 = vunpack.c.h.b16 %v579
  %v714 = vunpack.c.l.b16 %v580
  %v715 = vunpack.c.h.b16 %v580
  %v716 = vunpack.c.l.b16 %v581
  %v717 = vunpack.c.h.b16 %v581
  %v718 = vunpack.c.l.b16 %v582
  %v719 = vunpack.c.h.b16 %v582
  %v720 = vunpack.c.l.b16 %v583
  %v721 = vunpack.c.h.b16 %v583
  %v722 = vunpack.c.l.b16 %v584
  %v723 = vunpack.c.h.b16 %v584
  %v724 = vunpack.c.l.b16 %v585
  %v725 = vunpack.c.h.b16 %v585
  %v726 = vunpack.c.l.b16 %v586
  %v727 = vunpack.c.h.b16 %v586
  %v728 = vunpack.c.l.b16 %v587
  %v729 = vunpack.c.h.b16 %v587
  %v730 = vunpack.c.l.b16 %v588
  %v731 = vunpack.c.h.b16 %v588
  %v732 = vunpack.c.l.b16 %v589
  %v733 = vunpack.c.h.b16 %v589
  %v734 = vunpack.c.l.b16 %v590
  %v735 = vunpack.c.h.b16 %v590
  %v736 = vunpack.c.l.b16 %v591
  %v737 = vunpack.c.h.b16 %v591
  %v738 = vunpack.c.l.b16 %v592
  %v739 = vunpack.c.h.b16 %v592
  %v740 = vunpack.c.l.b16 %v593
  %v741 = vunpack.c.h.b16 %v593
  %v742 = vunpack.c.l.b16 %v594
  %v743 = vunpack.c.h.b16 %v594
  %v744 = vunpack.c.l.b16 %v595
  %v745 = vunpack.c.h.b16 %v595
  %v746 = vunpack.c.l.b16 %v596
  %v747 = vunpack.c.h.b16 %v596
  %v748 = vunpack.c.l.b16 %v597
  %v749 = vunpack.c.h.b16 %v597
  %v750 = vunpack.c.l.b16 %v598
  %v751 = vunpack.c.h.b16 %v598
  %v752 = vunpack.c.l.b16 %v599
  %v753 = vunpack.c.h.b16 %v599
  %v754 = vunpack.c.l.b16 %v600
  %v755 = vunpack.c.h.b16 %v600
  %v756 = vunpack.c.l.b16 %v601
  %v757 = vunpack.c.h.b16 %v601
  %v758 = vunpack.c.l.b16 %v602
  %v759 = vunpack.c.h.b16 %v602
  %v760 = vunpack.c.l.b16 %v603
  %v761 = vunpack.c.h.b16 %v603
  %v762 = vunpack.c.l.b16 %v604
  %v763 = vunpack.c.h.b16 %v604
  %v764 = vunpack.c.l.b16 %v605
  %v765 = vunpack.c.h.b16 %v605
  %v766 = vunpack.c.l.b16 %v606
  %v767 = vunpack.c.h.b16 %v606
  %v768 = vunpack.c.l.b16 %v607
  %v769 = vunpack.c.h.b16 %v607
  %v770 = vpack.c.b16 %v672, %v670
  %v771 = vpack.c.b16 %v673, %v671
  %v772 = vpack.c.b16 %v676, %v674
  %v773 = vpack.c.b16 %v677, %v675
  %v774 = vpack.c.b16 %v680, %v678
  %v775 = vpack.c.b16 %v681, %v679
  %v776 = vpack.c.b16 %v684, %v682
  %v777 = vpack.c.b16 %v685, %v683
  %v778 = vpack.c.b16 %v688, %v686
  %v779 = vpack.c.b16 %v689, %v687
  %v780 = vpack.c.b16 %v692, %v690
  %v781 = vpack.c.b16 %v693, %v691
  %v782 = vpack.c.b16 %v696, %v694
  %v783 = vpack.c.b16 %v697, %v695
  %v784 = vpack.c.b16 %v700, %v698
  %v785 = vpack.c.b16 %v701, %v699
  %v786 = vpack.c.b16 %v704, %v702
  %v787 = vpack.c.b16 %v705, %v703
  %v788 = vpack.c.b16 %v708, %v706
  %v789 = vpack.c.b16 %v709, %v707
  %v790 = vpack.c.b16 %v712, %v710
  %v791 = vpack.c.b16 %v713, %v711
  %v792 = vpack.c.b16 %v716, %v714
  %v793 = vpack.c.b16 %v717, %v715
  %v794 = vpack.c.b16 %v720, %v718
  %v795 = vpack.c.b16 %v721, %v719
  %v796 = vpack.c.b16 %v724, %v722
  %v797 = vpack.c.b16 %v725, %v723
  %v798 = vpack.c.b16 %v728, %v726
  %v799 = vpack.c.b16 %v729, %v727
  %v800 = vpack.c.b16 %v732, %v730
  %v801 = vpack.c.b16 %v733, %v731
  %v802 = vpack.c.b16 %v736, %v734
  %v803 = vpack.c.b16 %v737, %v735
  %v804 = vpack.c.b16 %v740, %v738
  %v805 = vpack.c.b16 %v741, %v739
  %v806 = vpack.c.b16 %v744, %v742
  %v807 = vpack.c.b16 %v745, %v743
  %v808 = vpack.c.b16 %v748, %v746
  %v809 = vpack.c.b16 %v749, %v747
  %v810 = vpack.c.b16 %v752, %v750
  %v811 = vpack.c.b16 %v753, %v751
  %v812 = vpack.c.b16 %v756, %v754
  %v813 = vpack.c.b16 %v757, %v755
  %v814 = vpack.c.b16 %v760, %v758
  %v815 = vpack.c.b16 %v761, %v759
  %v816 = vpack.c.b16 %v764, %v762
  %v817 = vpack.c.b16 %v765, %v763
  %v818 = vpack.c.b16 %v768, %v766
  %v819 = vpack.c.b16 %v769, %v767
  %vm870 = vcmask 130048
  %v872 = vsel %vm870, %v545, 0
  %v875 = vsel %vm870, %v549, 0
  %v878 = vsel %vm870, %v553, 0
  %v881 = vsel %vm870, %v557, 0
  %883 = vmatprep.subr.bf16.mxu0 %v771
  %884 = vmatpush1.bf16.msra.mxu0 %v770
  %885 = vmatprep.subr.bf16.mxu0 %v773
  %886 = vmatpush1.bf16.msra.mxu0 %v772
  %887 = vmatprep.subr.bf16.mxu0 %v775
  %888 = vmatpush1.bf16.msra.mxu0 %v774
  %889 = vmatprep.subr.bf16.mxu0 %v777
  %890 = vmatpush1.bf16.msra.mxu0 %v776
  %891 = vmatprep.subr.bf16.mxu0 %v779
  %892 = vmatpush1.bf16.msra.mxu0 %v778
  %893 = vmatprep.subr.bf16.mxu0 %v781
  %894 = vmatpush1.bf16.msra.mxu0 %v780
  %895 = vmatprep.subr.bf16.mxu0 %v783
  %896 = vmatpush1.bf16.msra.mxu0 %v782
  %897 = vmatprep.subr.bf16.mxu0 %v785
  %898 = vmatpush1.bf16.msra.mxu0 %v784
  %899 = vmatprep.subr.bf16.mxu0 %v787
  %900 = vmatpush1.bf16.msra.mxu0 %v786
  %901 = vmatprep.subr.bf16.mxu0 %v789
  %902 = vmatpush1.bf16.msra.mxu0 %v788
  %903 = vmatprep.subr.bf16.mxu0 %v791
  %904 = vmatpush1.bf16.msra.mxu0 %v790
  %905 = vmatprep.subr.bf16.mxu0 %v793
  %906 = vmatpush1.bf16.msra.mxu0 %v792
  %907 = vmatprep.subr.bf16.mxu0 %v795
  %908 = vmatpush1.bf16.msra.mxu0 %v794
  %909 = vmatprep.subr.bf16.mxu0 %v797
  %910 = vmatpush1.bf16.msra.mxu0 %v796
  %911 = vmatprep.subr.bf16.mxu0 %v799
  %912 = vmatpush1.bf16.msra.mxu0 %v798
  %913 = vmatprep.subr.bf16.mxu0 %v801
  %914 = vmatpush1.bf16.msra.mxu0 %v800
  %915 = vmatprep.mubr.bf16.mxu0 %v543
  %916 = vmatmul.mubr.bf16.gmra.mrb[0].mxu0 %v542
  %v917 = vpop.f32.mrb[0].mxu0
  %v918 = vadd.f32 %v613, %v917
  %v919 = vpop.f32.mrb[0].mxu0
  %v920 = vadd.f32 %v617, %v919
  %v921 = vpop.f32.mrb[0].mxu0
  %v922 = vadd.f32 %v613, %v921
  %v923 = vpop.f32.mrb[0].mxu0
  %v924 = vadd.f32 %v617, %v923
  %925 = vmatprep.mubr.bf16.mxu0 %v547
  %926 = vmatmul.mubr.bf16.gmra.mrb[0].mxu0 %v546
  %v927 = vpop.f32.mrb[0].mxu0
  %v928 = vadd.f32 %v613, %v927
  %v929 = vpop.f32.mrb[0].mxu0
  %v930 = vadd.f32 %v617, %v929
  %v931 = vpop.f32.mrb[0].mxu0
  %v932 = vadd.f32 %v613, %v931
  %v933 = vpop.f32.mrb[0].mxu0
  %v934 = vadd.f32 %v617, %v933
  %935 = vmatprep.mubr.bf16.mxu0 %v551
  %936 = vmatmul.mubr.bf16.gmra.mrb[0].mxu0 %v550
  %v937 = vpop.f32.mrb[0].mxu0
  %v938 = vadd.f32 %v613, %v937
  %v939 = vpop.f32.mrb[0].mxu0
  %v940 = vadd.f32 %v617, %v939
  %v941 = vpop.f32.mrb[0].mxu0
  %v942 = vadd.f32 %v613, %v941
  %v943 = vpop.f32.mrb[0].mxu0
  %v944 = vadd.f32 %v617, %v943
  %945 = vmatprep.mubr.bf16.mxu0 %v555
  %946 = vmatmul.mubr.bf16.gmra.mrb[0].mxu0 %v554
  %v947 = vpop.f32.mrb[0].mxu0
  %v948 = vadd.f32 %v613, %v947
  %v949 = vpop.f32.mrb[0].mxu0
  %v950 = vadd.f32 %v617, %v949
  %v951 = vpop.f32.mrb[0].mxu0
  %v952 = vadd.f32 %v613, %v951
  %v953 = vpop.f32.mrb[0].mxu0
  %v954 = vadd.f32 %v617, %v953
  %955 = vdwg.mxu0
  %956 = vmatprep.subr.bf16.mxu0 %v803
  %957 = vmatpush1.bf16.msra.mxu0 %v802
  %958 = vmatprep.subr.bf16.mxu0 %v805
  %959 = vmatpush1.bf16.msra.mxu0 %v804
  %960 = vmatprep.subr.bf16.mxu0 %v807
  %961 = vmatpush1.bf16.msra.mxu0 %v806
  %962 = vmatprep.subr.bf16.mxu0 %v809
  %963 = vmatpush1.bf16.msra.mxu0 %v808
  %964 = vmatprep.subr.bf16.mxu0 %v811
  %965 = vmatpush1.bf16.msra.mxu0 %v810
  %966 = vmatprep.subr.bf16.mxu0 %v813
  %967 = vmatpush1.bf16.msra.mxu0 %v812
  %968 = vmatprep.subr.bf16.mxu0 %v815
  %969 = vmatpush1.bf16.msra.mxu0 %v814
  %970 = vmatprep.subr.bf16.mxu0 %v817
  %971 = vmatpush1.bf16.msra.mxu0 %v816
  %972 = vmatprep.subr.bf16.mxu0 %v819
  %973 = vmatpush1.bf16.msra.mxu0 %v818
  %974 = vmatprep.subr.bf16.mxu0 0
  %975 = vmatpush1.bf16.msra.mxu0 0
  %976 = vmatprep.subr.bf16.mxu0 0
  %977 = vmatpush1.bf16.msra.mxu0 0
  %978 = vmatprep.subr.bf16.mxu0 0
  %979 = vmatpush1.bf16.msra.mxu0 0
  %980 = vmatprep.subr.bf16.mxu0 0
  %981 = vmatpush1.bf16.msra.mxu0 0
  %982 = vmatprep.subr.bf16.mxu0 0
  %983 = vmatpush1.bf16.msra.mxu0 0
  %984 = vmatprep.subr.bf16.mxu0 0
  %985 = vmatpush1.bf16.msra.mxu0 0
  %986 = vmatprep.subr.bf16.mxu0 0
  %987 = vmatpush1.bf16.msra.mxu0 0
  %988 = vmatprep.mubr.bf16.mxu0 %v872
  %989 = vmatmul.mubr.bf16.gmra.mrb[0].mxu0 %v544
  %v990 = vpop.f32.mrb[0].mxu0
  %v991 = vadd.f32 %v918, %v990
  %v992 = vpop.f32.mrb[0].mxu0
  %v993 = vadd.f32 %v920, %v992
  %v994 = vpop.f32.mrb[0].mxu0
  %v995 = vadd.f32 %v922, %v994
  %v996 = vpop.f32.mrb[0].mxu0
  %v997 = vadd.f32 %v924, %v996
  %998 = vmatprep.mubr.bf16.mxu0 %v875
  %999 = vmatmul.mubr.bf16.gmra.mrb[0].mxu0 %v548
  %v1000 = vpop.f32.mrb[0].mxu0
  %v1001 = vadd.f32 %v928, %v1000
  %v1002 = vpop.f32.mrb[0].mxu0
  %v1003 = vadd.f32 %v930, %v1002
  %v1004 = vpop.f32.mrb[0].mxu0
  %v1005 = vadd.f32 %v932, %v1004
  %v1006 = vpop.f32.mrb[0].mxu0
  %v1007 = vadd.f32 %v934, %v1006
  %1008 = vmatprep.mubr.bf16.mxu0 %v878
  %1009 = vmatmul.mubr.bf16.gmra.mrb[0].mxu0 %v552
  %v1010 = vpop.f32.mrb[0].mxu0
  %v1011 = vadd.f32 %v938, %v1010
  %v1012 = vpop.f32.mrb[0].mxu0
  %v1013 = vadd.f32 %v940, %v1012
  %v1014 = vpop.f32.mrb[0].mxu0
  %v1015 = vadd.f32 %v942, %v1014
  %v1016 = vpop.f32.mrb[0].mxu0
  %v1017 = vadd.f32 %v944, %v1016
  %1018 = vmatprep.mubr.bf16.mxu0 %v881
  %1019 = vmatmul.mubr.bf16.gmra.mrb[0].mxu0 %v556
  %v1020 = vpop.f32.mrb[0].mxu0
  %v1021 = vadd.f32 %v948, %v1020
  %v1022 = vpop.f32.mrb[0].mxu0
  %v1023 = vadd.f32 %v950, %v1022
  %v1024 = vpop.f32.mrb[0].mxu0
  %v1025 = vadd.f32 %v952, %v1024
  %v1026 = vpop.f32.mrb[0].mxu0
  %v1027 = vadd.f32 %v954, %v1026
  %1028 = vdwg.mxu0
  %v1029 = vtanh.pop %v991
  %v1030 = vtanh.pop %v993
  %v1031 = vtanh.pop %v995
  %v1032 = vtanh.pop %v997
  %v1033 = vtanh.pop %v1001
  %v1034 = vtanh.pop %v1003
  %v1035 = vtanh.pop %v1005
  %v1036 = vtanh.pop %v1007
  %v1037 = vtanh.pop %v1011
  %v1038 = vtanh.pop %v1013
  %v1039 = vtanh.pop %v1015
  %v1040 = vtanh.pop %v1017
  %v1041 = vtanh.pop %v1021
  %v1042 = vtanh.pop %v1023
  %v1043 = vtanh.pop %v1025
  %v1044 = vtanh.pop %v1027
  %v1045 = vld [vmem:[%s5] sm:$0x3]
  %v1047 = vlaneseq
  %v1048 = vshrl.u32 %v1047, 7
  %v1049 = vsub.s32 0, %v1048
  %v1050 = vrot.slane %v1045, %v1049
  %v1051 = vlaneseq
  %v1052 = vshrl.u32 %v1051, 7
  %v1053 = vsub.s32 1, %v1052
  %v1054 = vrot.slane %v1045, %v1053
  %v1057 = vmul.f32 %v1029, %v1050
  %v1058 = vmul.f32 %v1030, %v1054
  %v1059 = vmul.f32 %v1031, %v1050
  %v1060 = vmul.f32 %v1032, %v1054
  %v1061 = vmul.f32 %v1033, %v1050
  %v1062 = vmul.f32 %v1034, %v1054
  %v1063 = vmul.f32 %v1035, %v1050
  %v1064 = vmul.f32 %v1036, %v1054
  %v1065 = vmul.f32 %v1037, %v1050
  %v1066 = vmul.f32 %v1038, %v1054
  %v1067 = vmul.f32 %v1039, %v1050
  %v1068 = vmul.f32 %v1040, %v1054
  %v1069 = vmul.f32 %v1041, %v1050
  %v1070 = vmul.f32 %v1042, %v1054
  %v1071 = vmul.f32 %v1043, %v1050
  %v1072 = vmul.f32 %v1044, %v1054
  %vm1073 = vcmask 588800
  %v1074 = vsel %vm1073, %v1058, 0.0
  %v1075 = vadd.f32 %v1057, %v1074
  %1076 = vadd.xlane.f32.xlu0 %v1075
  %v1077 = vpop.xlane.xlu0 %1076
  %v1078 = vsel %vm1073, %v1060, 0.0
  %v1079 = vadd.f32 %v1059, %v1078
  %1080 = vadd.xlane.f32.xlu0 %v1079
  %v1081 = vpop.xlane.xlu0 %1080
  %v1082 = vsel %vm1073, %v1062, 0.0
  %v1083 = vadd.f32 %v1061, %v1082
  %1084 = vadd.xlane.f32.xlu0 %v1083
  %v1085 = vpop.xlane.xlu0 %1084
  %v1086 = vsel %vm1073, %v1064, 0.0
  %v1087 = vadd.f32 %v1063, %v1086
  %1088 = vadd.xlane.f32.xlu0 %v1087
  %v1089 = vpop.xlane.xlu0 %1088
  %v1090 = vsel %vm1073, %v1066, 0.0
  %v1091 = vadd.f32 %v1065, %v1090
  %1092 = vadd.xlane.f32.xlu0 %v1091
  %v1093 = vpop.xlane.xlu0 %1092
  %v1094 = vsel %vm1073, %v1068, 0.0
  %v1095 = vadd.f32 %v1067, %v1094
  %1096 = vadd.xlane.f32.xlu0 %v1095
  %v1097 = vpop.xlane.xlu0 %1096
  %v1098 = vsel %vm1073, %v1070, 0.0
  %v1099 = vadd.f32 %v1069, %v1098
  %1100 = vadd.xlane.f32.xlu0 %v1099
  %v1101 = vpop.xlane.xlu0 %1100
  %v1102 = vsel %vm1073, %v1072, 0.0
  %v1103 = vadd.f32 %v1071, %v1102
  %1104 = vadd.xlane.f32.xlu0 %v1103
  %v1105 = vpop.xlane.xlu0 %1104
  %v1106 = vld [vmem:[#allocation2] sm:$0x1]
  %v1108 = vlaneseq
  %v1109 = vshrl.u32 %v1108, 7
  %v1110 = vsub.s32 0, %v1109
  %v1111 = vrot.slane %v1106, %v1110
  %1112 = vset.pattern.permute.xlu0 0
  %1113 = vperm.xlu0 %1112, %v1111
  %v1114 = vpop.permute.xlu0 %1113
  %v1116 = vadd.f32 %v1077, %v1114
  %v1117 = vadd.f32 %v1081, %v1114
  %v1118 = vadd.f32 %v1085, %v1114
  %v1119 = vadd.f32 %v1089, %v1114
  %v1120 = vadd.f32 %v1093, %v1114
  %v1121 = vadd.f32 %v1097, %v1114
  %v1122 = vadd.f32 %v1101, %v1114
  %v1123 = vadd.f32 %v1105, %v1114
  %v1124 = vlaneseq
  %v1125 = vand.u32 %v1124, 127
  %vm1126 = vcmp.lt.s32.totalorder %v1125, 8
  %v1135 = vlaneseq
  %v1136 = vshrl.u32 %v1135, 7
  %v1137 = vsub.s32 %v1125, %v1136
  %v1138 = vrot.slane %v1116, %v1137
  %v1139 = vadd.s32 %v1125, 4294967288
  %v1140 = vlaneseq
  %v1141 = vshrl.u32 %v1140, 7
  %v1142 = vsub.s32 %v1139, %v1141
  %v1143 = vrot.slane %v1117, %v1142
  %vm1144 = vcmask 130112
  %v1145 = vsel %vm1144, %v1143, %v1138
  %v1146 = vlaneseq
  %v1147 = vshrl.u32 %v1146, 7
  %v1148 = vsub.s32 %v1125, %v1147
  %v1149 = vrot.slane %v1118, %v1148
  %v1150 = vlaneseq
  %v1151 = vshrl.u32 %v1150, 7
  %v1152 = vsub.s32 %v1139, %v1151
  %v1153 = vrot.slane %v1119, %v1152
  %v1154 = vsel %vm1144, %v1153, %v1149
  %v1155 = vlaneseq
  %v1156 = vshrl.u32 %v1155, 7
  %v1157 = vsub.s32 %v1125, %v1156
  %v1158 = vrot.slane %v1120, %v1157
  %v1159 = vlaneseq
  %v1160 = vshrl.u32 %v1159, 7
  %v1161 = vsub.s32 %v1139, %v1160
  %v1162 = vrot.slane %v1121, %v1161
  %v1163 = vsel %vm1144, %v1162, %v1158
  %v1164 = vlaneseq
  %v1165 = vshrl.u32 %v1164, 7
  %v1166 = vsub.s32 %v1125, %v1165
  %v1167 = vrot.slane %v1122, %v1166
  %v1168 = vlaneseq
  %v1169 = vshrl.u32 %v1168, 7
  %v1170 = vsub.s32 %v1139, %v1169
  %v1171 = vrot.slane %v1123, %v1170
  %v1172 = vsel %vm1144, %v1171, %v1167
  %vm1173 = vcmask 1041409
  %v1174 = vsel %vm1173, %v1154, %v1145
  %vm1175 = vcmask 1042434
  %v1176 = vsel %vm1175, %v1163, %v1174
  %vm1177 = vcmask 1043459
  %v1178 = vsel %vm1177, %v1172, %v1176
  %v1180 = vsel %vm1126, %v1178, -1e+09
  %vm1181 = vcmask 125952
  %v1182 = vsel %vm1181, %v1180, -inf
  %1183 = vmax.xlane.f32.xlu0 %v1182
  %v1184 = vpop.xlane.xlu0 %1183
  %v1185 = vsub.f32 %v1180, %v1184
  %v1186 = vmul.f32 %v1185, 1.442695
  %v1187 = vpow.pop %v1186
  %v1188 = vsel %vm1181, %v1187, 0.0
  %1189 = vadd.xlane.f32.xlu0 %v1188
  %v1190 = vpop.xlane.xlu0 %1189
  %v1191 = vrcp.pop %v1190
  %v1192 = vmul.f32 %v1187, %v1191
  %v1195 = vunpack.c.l.s4 1966171168
  %v1196 = vunpack.c.0.s8 %v1195
  %v1197 = vlaneseq
  %v1198 = vshrl.u32 %v1197, 7
  %v1199 = vsub.s32 %v1196, %v1198
  %v1200 = vrot.slane %v1192, %v1199
  %v1201 = vcombine.high %v1200, %v1200
  %v1203 = vunpack.c.l.s4 1966171168
  %v1204 = vunpack.c.0.s8 %v1203
  %v1205 = vlaneseq
  %v1206 = vshrl.u32 %v1205, 7
  %v1207 = vsub.s32 %v1204, %v1206
  %v1208 = vrot.slane %v1200, %v1207
  %v1210 = vunpack.c.l.s4 1966171168
  %v1211 = vunpack.c.0.s8 %v1210
  %v1212 = vlaneseq
  %v1213 = vshrl.u32 %v1212, 7
  %v1214 = vsub.s32 %v1211, %v1213
  %v1215 = vrot.slane %v1201, %v1214
  %v1216 = vcombine.high %v1208, %v1208
  %v1217 = vcombine.high %v1215, %v1215
  %v1218 = vsel %vm870, %v1208, 0
  %1220 = vmatprep.subr.mxu0 %v433
  %1221 = vmatpush1.msra.mxu0 %v431
  %1222 = vmatprep.subr.mxu0 %v437
  %1223 = vmatpush1.msra.mxu0 %v435
  %1224 = vmatprep.subr.mxu0 0.0
  %1225 = vmatpush1.msra.mxu0 0.0
  %1226 = vmatprep.subr.mxu0 0.0
  %1227 = vmatpush1.msra.mxu0 0.0
  %1228 = vmatprep.subr.mxu0 0.0
  %1229 = vmatpush1.msra.mxu0 0.0
  %1230 = vmatprep.subr.mxu0 0.0
  %1231 = vmatpush1.msra.mxu0 0.0
  %1232 = vmatprep.subr.mxu0 0.0
  %1233 = vmatpush1.msra.mxu0 0.0
  %1234 = vmatprep.subr.mxu0 0.0
  %1235 = vmatpush1.msra.mxu0 0.0
  %1236 = vmatprep.subr.mxu0 0.0
  %1237 = vmatpush1.msra.mxu0 0.0
  %1238 = vmatprep.subr.mxu0 0.0
  %1239 = vmatpush1.msra.mxu0 0.0
  %1240 = vmatprep.subr.mxu0 0.0
  %1241 = vmatpush1.msra.mxu0 0.0
  %1242 = vmatprep.subr.mxu0 0.0
  %1243 = vmatpush1.msra.mxu0 0.0
  %1244 = vmatprep.subr.mxu0 0.0
  %1245 = vmatpush1.msra.mxu0 0.0
  %1246 = vmatprep.subr.mxu0 0.0
  %1247 = vmatpush1.msra.mxu0 0.0
  %1248 = vmatprep.subr.mxu0 0.0
  %1249 = vmatpush1.msra.mxu0 0.0
  %1250 = vmatprep.subr.mxu0 0.0
  %1251 = vmatpush1.msra.mxu0 0.0
  %1252 = vmatprep.subr.mxu0 0.0
  %1253 = vmatpush1.msra.mxu0 0.0
  %1254 = vmatprep.subr.mxu0 0.0
  %1255 = vmatpush1.msra.mxu0 0.0
  %1256 = vmatprep.subr.mxu0 0.0
  %1257 = vmatpush1.msra.mxu0 0.0
  %1258 = vmatprep.subr.mxu0 0.0
  %1259 = vmatpush1.msra.mxu0 0.0
  %1260 = vmatprep.subr.mxu0 0.0
  %1261 = vmatpush1.msra.mxu0 0.0
  %1262 = vmatprep.subr.mxu0 0.0
  %1263 = vmatpush1.msra.mxu0 0.0
  %1264 = vmatprep.subr.mxu0 0.0
  %1265 = vmatpush1.msra.mxu0 0.0
  %1266 = vmatprep.subr.mxu0 0.0
  %1267 = vmatpush1.msra.mxu0 0.0
  %1268 = vmatprep.subr.mxu0 0.0
  %1269 = vmatpush1.msra.mxu0 0.0
  %1270 = vmatprep.subr.mxu0 0.0
  %1271 = vmatpush1.msra.mxu0 0.0
  %1272 = vmatprep.subr.mxu0 0.0
  %1273 = vmatpush1.msra.mxu0 0.0
  %1274 = vmatprep.subr.mxu0 0.0
  %1275 = vmatpush1.msra.mxu0 0.0
  %1276 = vmatprep.subr.mxu0 0.0
  %1277 = vmatpush1.msra.mxu0 0.0
  %1278 = vmatprep.subr.mxu0 0.0
  %1279 = vmatpush1.msra.mxu0 0.0
  %1280 = vmatprep.subr.mxu0 0.0
  %1281 = vmatpush1.msra.mxu0 0.0
  %1282 = vmatprep.subr.mxu0 0.0
  %1283 = vmatpush1.msra.mxu0 0.0
  %1284 = vmatprep.mubr.f32.mxu0 0.0
  %1285 = vmatmul.mubr.f32.gmra.mrb[0].mxu0 %v1218
  %v1286 = vpop.f32.mrb[0].mxu0
  %v1287 = vadd.f32 0.0, %v1286
  %v1288 = vpop.f32.mrb[0].mxu0
  %v1289 = vadd.f32 0.0, %v1288
  %1290 = vdwg.mxu0
  %1291 = vmatprep.subr.mxu0 %v506
  %1292 = vmatpush1.msra.mxu0 %v504
  %1293 = vmatprep.subr.mxu0 %v510
  %1294 = vmatpush1.msra.mxu0 %v508
  %1295 = vmatprep.subr.mxu0 0.0
  %1296 = vmatpush1.msra.mxu0 0.0
  %1297 = vmatprep.subr.mxu0 0.0
  %1298 = vmatpush1.msra.mxu0 0.0
  %1299 = vmatprep.subr.mxu0 0.0
  %1300 = vmatpush1.msra.mxu0 0.0
  %1301 = vmatprep.subr.mxu0 0.0
  %1302 = vmatpush1.msra.mxu0 0.0
  %1303 = vmatprep.subr.mxu0 0.0
  %1304 = vmatpush1.msra.mxu0 0.0
  %1305 = vmatprep.subr.mxu0 0.0
  %1306 = vmatpush1.msra.mxu0 0.0
  %1307 = vmatprep.subr.mxu0 0.0
  %1308 = vmatpush1.msra.mxu0 0.0
  %1309 = vmatprep.subr.mxu0 0.0
  %1310 = vmatpush1.msra.mxu0 0.0
  %1311 = vmatprep.subr.mxu0 0.0
  %1312 = vmatpush1.msra.mxu0 0.0
  %1313 = vmatprep.subr.mxu0 0.0
  %1314 = vmatpush1.msra.mxu0 0.0
  %1315 = vmatprep.subr.mxu0 0.0
  %1316 = vmatpush1.msra.mxu0 0.0
  %1317 = vmatprep.subr.mxu0 0.0
  %1318 = vmatpush1.msra.mxu0 0.0
  %1319 = vmatprep.subr.mxu0 0.0
  %1320 = vmatpush1.msra.mxu0 0.0
  %1321 = vmatprep.subr.mxu0 0.0
  %1322 = vmatpush1.msra.mxu0 0.0
  %1323 = vmatprep.subr.mxu0 0.0
  %1324 = vmatpush1.msra.mxu0 0.0
  %1325 = vmatprep.subr.mxu0 0.0
  %1326 = vmatpush1.msra.mxu0 0.0
  %1327 = vmatprep.subr.mxu0 0.0
  %1328 = vmatpush1.msra.mxu0 0.0
  %1329 = vmatprep.subr.mxu0 0.0
  %1330 = vmatpush1.msra.mxu0 0.0
  %1331 = vmatprep.subr.mxu0 0.0
  %1332 = vmatpush1.msra.mxu0 0.0
  %1333 = vmatprep.subr.mxu0 0.0
  %1334 = vmatpush1.msra.mxu0 0.0
  %1335 = vmatprep.subr.mxu0 0.0
  %1336 = vmatpush1.msra.mxu0 0.0
  %1337 = vmatprep.subr.mxu0 0.0
  %1338 = vmatpush1.msra.mxu0 0.0
  %1339 = vmatprep.subr.mxu0 0.0
  %1340 = vmatpush1.msra.mxu0 0.0
  %1341 = vmatprep.subr.mxu0 0.0
  %1342 = vmatpush1.msra.mxu0 0.0
  %1343 = vmatprep.subr.mxu0 0.0
  %1344 = vmatpush1.msra.mxu0 0.0
  %1345 = vmatprep.subr.mxu0 0.0
  %1346 = vmatpush1.msra.mxu0 0.0
  %1347 = vmatprep.subr.mxu0 0.0
  %1348 = vmatpush1.msra.mxu0 0.0
  %1349 = vmatprep.subr.mxu0 0.0
  %1350 = vmatpush1.msra.mxu0 0.0
  %1351 = vmatprep.subr.mxu0 0.0
  %1352 = vmatpush1.msra.mxu0 0.0
  %1353 = vmatprep.subr.mxu0 0.0
  %1354 = vmatpush1.msra.mxu0 0.0
  %1355 = vmatprep.mubr.f32.mxu0 0.0
  %1356 = vmatmul.mubr.f32.gmra.mrb[0].mxu0 %v1218
  %v1357 = vpop.f32.mrb[0].mxu0
  %v1358 = vadd.f32 0.0, %v1357
  %v1359 = vpop.f32.mrb[0].mxu0
  %v1360 = vadd.f32 0.0, %v1359
  %1361 = vdwg.mxu0
  %v1362 = vsel %vm870, %v1215, 0
  %1364 = vmatprep.subr.mxu0 %v443
  %1365 = vmatpush1.msra.mxu0 %v441
  %1366 = vmatprep.subr.mxu0 %v447
  %1367 = vmatpush1.msra.mxu0 %v445
  %1368 = vmatprep.subr.mxu0 0.0
  %1369 = vmatpush1.msra.mxu0 0.0
  %1370 = vmatprep.subr.mxu0 0.0
  %1371 = vmatpush1.msra.mxu0 0.0
  %1372 = vmatprep.subr.mxu0 0.0
  %1373 = vmatpush1.msra.mxu0 0.0
  %1374 = vmatprep.subr.mxu0 0.0
  %1375 = vmatpush1.msra.mxu0 0.0
  %1376 = vmatprep.subr.mxu0 0.0
  %1377 = vmatpush1.msra.mxu0 0.0
  %1378 = vmatprep.subr.mxu0 0.0
  %1379 = vmatpush1.msra.mxu0 0.0
  %1380 = vmatprep.subr.mxu0 0.0
  %1381 = vmatpush1.msra.mxu0 0.0
  %1382 = vmatprep.subr.mxu0 0.0
  %1383 = vmatpush1.msra.mxu0 0.0
  %1384 = vmatprep.subr.mxu0 0.0
  %1385 = vmatpush1.msra.mxu0 0.0
  %1386 = vmatprep.subr.mxu0 0.0
  %1387 = vmatpush1.msra.mxu0 0.0
  %1388 = vmatprep.subr.mxu0 0.0
  %1389 = vmatpush1.msra.mxu0 0.0
  %1390 = vmatprep.subr.mxu0 0.0
  %1391 = vmatpush1.msra.mxu0 0.0
  %1392 = vmatprep.subr.mxu0 0.0
  %1393 = vmatpush1.msra.mxu0 0.0
  %1394 = vmatprep.subr.mxu0 0.0
  %1395 = vmatpush1.msra.mxu0 0.0
  %1396 = vmatprep.subr.mxu0 0.0
  %1397 = vmatpush1.msra.mxu0 0.0
  %1398 = vmatprep.subr.mxu0 0.0
  %1399 = vmatpush1.msra.mxu0 0.0
  %1400 = vmatprep.subr.mxu0 0.0
  %1401 = vmatpush1.msra.mxu0 0.0
  %1402 = vmatprep.subr.mxu0 0.0
  %1403 = vmatpush1.msra.mxu0 0.0
  %1404 = vmatprep.subr.mxu0 0.0
  %1405 = vmatpush1.msra.mxu0 0.0
  %1406 = vmatprep.subr.mxu0 0.0
  %1407 = vmatpush1.msra.mxu0 0.0
  %1408 = vmatprep.subr.mxu0 0.0
  %1409 = vmatpush1.msra.mxu0 0.0
  %1410 = vmatprep.subr.mxu0 0.0
  %1411 = vmatpush1.msra.mxu0 0.0
  %1412 = vmatprep.subr.mxu0 0.0
  %1413 = vmatpush1.msra.mxu0 0.0
  %1414 = vmatprep.subr.mxu0 0.0
  %1415 = vmatpush1.msra.mxu0 0.0
  %1416 = vmatprep.subr.mxu0 0.0
  %1417 = vmatpush1.msra.mxu0 0.0
  %1418 = vmatprep.subr.mxu0 0.0
  %1419 = vmatpush1.msra.mxu0 0.0
  %1420 = vmatprep.subr.mxu0 0.0
  %1421 = vmatpush1.msra.mxu0 0.0
  %1422 = vmatprep.subr.mxu0 0.0
  %1423 = vmatpush1.msra.mxu0 0.0
  %1424 = vmatprep.subr.mxu0 0.0
  %1425 = vmatpush1.msra.mxu0 0.0
  %1426 = vmatprep.subr.mxu0 0.0
  %1427 = vmatpush1.msra.mxu0 0.0
  %1428 = vmatprep.mubr.f32.mxu0 0.0
  %1429 = vmatmul.mubr.f32.gmra.mrb[0].mxu0 %v1362
  %v1430 = vpop.f32.mrb[0].mxu0
  %v1431 = vadd.f32 0.0, %v1430
  %v1432 = vpop.f32.mrb[0].mxu0
  %v1433 = vadd.f32 0.0, %v1432
  %1434 = vdwg.mxu0
  %1435 = vmatprep.subr.mxu0 %v516
  %1436 = vmatpush1.msra.mxu0 %v514
  %1437 = vmatprep.subr.mxu0 %v520
  %1438 = vmatpush1.msra.mxu0 %v518
  %1439 = vmatprep.subr.mxu0 0.0
  %1440 = vmatpush1.msra.mxu0 0.0
  %1441 = vmatprep.subr.mxu0 0.0
  %1442 = vmatpush1.msra.mxu0 0.0
  %1443 = vmatprep.subr.mxu0 0.0
  %1444 = vmatpush1.msra.mxu0 0.0
  %1445 = vmatprep.subr.mxu0 0.0
  %1446 = vmatpush1.msra.mxu0 0.0
  %1447 = vmatprep.subr.mxu0 0.0
  %1448 = vmatpush1.msra.mxu0 0.0
  %1449 = vmatprep.subr.mxu0 0.0
  %1450 = vmatpush1.msra.mxu0 0.0
  %1451 = vmatprep.subr.mxu0 0.0
  %1452 = vmatpush1.msra.mxu0 0.0
  %1453 = vmatprep.subr.mxu0 0.0
  %1454 = vmatpush1.msra.mxu0 0.0
  %1455 = vmatprep.subr.mxu0 0.0
  %1456 = vmatpush1.msra.mxu0 0.0
  %1457 = vmatprep.subr.mxu0 0.0
  %1458 = vmatpush1.msra.mxu0 0.0
  %1459 = vmatprep.subr.mxu0 0.0
  %1460 = vmatpush1.msra.mxu0 0.0
  %1461 = vmatprep.subr.mxu0 0.0
  %1462 = vmatpush1.msra.mxu0 0.0
  %1463 = vmatprep.subr.mxu0 0.0
  %1464 = vmatpush1.msra.mxu0 0.0
  %1465 = vmatprep.subr.mxu0 0.0
  %1466 = vmatpush1.msra.mxu0 0.0
  %1467 = vmatprep.subr.mxu0 0.0
  %1468 = vmatpush1.msra.mxu0 0.0
  %1469 = vmatprep.subr.mxu0 0.0
  %1470 = vmatpush1.msra.mxu0 0.0
  %1471 = vmatprep.subr.mxu0 0.0
  %1472 = vmatpush1.msra.mxu0 0.0
  %1473 = vmatprep.subr.mxu0 0.0
  %1474 = vmatpush1.msra.mxu0 0.0
  %1475 = vmatprep.subr.mxu0 0.0
  %1476 = vmatpush1.msra.mxu0 0.0
  %1477 = vmatprep.subr.mxu0 0.0
  %1478 = vmatpush1.msra.mxu0 0.0
  %1479 = vmatprep.subr.mxu0 0.0
  %1480 = vmatpush1.msra.mxu0 0.0
  %1481 = vmatprep.subr.mxu0 0.0
  %1482 = vmatpush1.msra.mxu0 0.0
  %1483 = vmatprep.subr.mxu0 0.0
  %1484 = vmatpush1.msra.mxu0 0.0
  %1485 = vmatprep.subr.mxu0 0.0
  %1486 = vmatpush1.msra.mxu0 0.0
  %1487 = vmatprep.subr.mxu0 0.0
  %1488 = vmatpush1.msra.mxu0 0.0
  %1489 = vmatprep.subr.mxu0 0.0
  %1490 = vmatpush1.msra.mxu0 0.0
  %1491 = vmatprep.subr.mxu0 0.0
  %1492 = vmatpush1.msra.mxu0 0.0
  %1493 = vmatprep.subr.mxu0 0.0
  %1494 = vmatpush1.msra.mxu0 0.0
  %1495 = vmatprep.subr.mxu0 0.0
  %1496 = vmatpush1.msra.mxu0 0.0
  %1497 = vmatprep.subr.mxu0 0.0
  %1498 = vmatpush1.msra.mxu0 0.0
  %1499 = vmatprep.mubr.f32.mxu0 0.0
  %1500 = vmatmul.mubr.f32.gmra.mrb[0].mxu0 %v1362
  %v1501 = vpop.f32.mrb[0].mxu0
  %v1502 = vadd.f32 0.0, %v1501
  %v1503 = vpop.f32.mrb[0].mxu0
  %v1504 = vadd.f32 0.0, %v1503
  %1505 = vdwg.mxu0
  %v1506 = vsel %vm870, %v1216, 0
  %1508 = vmatprep.subr.mxu0 %v453
  %1509 = vmatpush1.msra.mxu0 %v451
  %1510 = vmatprep.subr.mxu0 %v457
  %1511 = vmatpush1.msra.mxu0 %v455
  %1512 = vmatprep.subr.mxu0 0.0
  %1513 = vmatpush1.msra.mxu0 0.0
  %1514 = vmatprep.subr.mxu0 0.0
  %1515 = vmatpush1.msra.mxu0 0.0
  %1516 = vmatprep.subr.mxu0 0.0
  %1517 = vmatpush1.msra.mxu0 0.0
  %1518 = vmatprep.subr.mxu0 0.0
  %1519 = vmatpush1.msra.mxu0 0.0
  %1520 = vmatprep.subr.mxu0 0.0
  %1521 = vmatpush1.msra.mxu0 0.0
  %1522 = vmatprep.subr.mxu0 0.0
  %1523 = vmatpush1.msra.mxu0 0.0
  %1524 = vmatprep.subr.mxu0 0.0
  %1525 = vmatpush1.msra.mxu0 0.0
  %1526 = vmatprep.subr.mxu0 0.0
  %1527 = vmatpush1.msra.mxu0 0.0
  %1528 = vmatprep.subr.mxu0 0.0
  %1529 = vmatpush1.msra.mxu0 0.0
  %1530 = vmatprep.subr.mxu0 0.0
  %1531 = vmatpush1.msra.mxu0 0.0
  %1532 = vmatprep.subr.mxu0 0.0
  %1533 = vmatpush1.msra.mxu0 0.0
  %1534 = vmatprep.subr.mxu0 0.0
  %1535 = vmatpush1.msra.mxu0 0.0
  %1536 = vmatprep.subr.mxu0 0.0
  %1537 = vmatpush1.msra.mxu0 0.0
  %1538 = vmatprep.subr.mxu0 0.0
  %1539 = vmatpush1.msra.mxu0 0.0
  %1540 = vmatprep.subr.mxu0 0.0
  %1541 = vmatpush1.msra.mxu0 0.0
  %1542 = vmatprep.subr.mxu0 0.0
  %1543 = vmatpush1.msra.mxu0 0.0
  %1544 = vmatprep.subr.mxu0 0.0
  %1545 = vmatpush1.msra.mxu0 0.0
  %1546 = vmatprep.subr.mxu0 0.0
  %1547 = vmatpush1.msra.mxu0 0.0
  %1548 = vmatprep.subr.mxu0 0.0
  %1549 = vmatpush1.msra.mxu0 0.0
  %1550 = vmatprep.subr.mxu0 0.0
  %1551 = vmatpush1.msra.mxu0 0.0
  %1552 = vmatprep.subr.mxu0 0.0
  %1553 = vmatpush1.msra.mxu0 0.0
  %1554 = vmatprep.subr.mxu0 0.0
  %1555 = vmatpush1.msra.mxu0 0.0
  %1556 = vmatprep.subr.mxu0 0.0
  %1557 = vmatpush1.msra.mxu0 0.0
  %1558 = vmatprep.subr.mxu0 0.0
  %1559 = vmatpush1.msra.mxu0 0.0
  %1560 = vmatprep.subr.mxu0 0.0
  %1561 = vmatpush1.msra.mxu0 0.0
  %1562 = vmatprep.subr.mxu0 0.0
  %1563 = vmatpush1.msra.mxu0 0.0
  %1564 = vmatprep.subr.mxu0 0.0
  %1565 = vmatpush1.msra.mxu0 0.0
  %1566 = vmatprep.subr.mxu0 0.0
  %1567 = vmatpush1.msra.mxu0 0.0
  %1568 = vmatprep.subr.mxu0 0.0
  %1569 = vmatpush1.msra.mxu0 0.0
  %1570 = vmatprep.subr.mxu0 0.0
  %1571 = vmatpush1.msra.mxu0 0.0
  %1572 = vmatprep.mubr.f32.mxu0 0.0
  %1573 = vmatmul.mubr.f32.gmra.mrb[0].mxu0 %v1506
  %v1574 = vpop.f32.mrb[0].mxu0
  %v1575 = vadd.f32 0.0, %v1574
  %v1576 = vpop.f32.mrb[0].mxu0
  %v1577 = vadd.f32 0.0, %v1576
  %1578 = vdwg.mxu0
  %1579 = vmatprep.subr.mxu0 %v526
  %1580 = vmatpush1.msra.mxu0 %v524
  %1581 = vmatprep.subr.mxu0 %v530
  %1582 = vmatpush1.msra.mxu0 %v528
  %1583 = vmatprep.subr.mxu0 0.0
  %1584 = vmatpush1.msra.mxu0 0.0
  %1585 = vmatprep.subr.mxu0 0.0
  %1586 = vmatpush1.msra.mxu0 0.0
  %1587 = vmatprep.subr.mxu0 0.0
  %1588 = vmatpush1.msra.mxu0 0.0
  %1589 = vmatprep.subr.mxu0 0.0
  %1590 = vmatpush1.msra.mxu0 0.0
  %1591 = vmatprep.subr.mxu0 0.0
  %1592 = vmatpush1.msra.mxu0 0.0
  %1593 = vmatprep.subr.mxu0 0.0
  %1594 = vmatpush1.msra.mxu0 0.0
  %1595 = vmatprep.subr.mxu0 0.0
  %1596 = vmatpush1.msra.mxu0 0.0
  %1597 = vmatprep.subr.mxu0 0.0
  %1598 = vmatpush1.msra.mxu0 0.0
  %1599 = vmatprep.subr.mxu0 0.0
  %1600 = vmatpush1.msra.mxu0 0.0
  %1601 = vmatprep.subr.mxu0 0.0
  %1602 = vmatpush1.msra.mxu0 0.0
  %1603 = vmatprep.subr.mxu0 0.0
  %1604 = vmatpush1.msra.mxu0 0.0
  %1605 = vmatprep.subr.mxu0 0.0
  %1606 = vmatpush1.msra.mxu0 0.0
  %1607 = vmatprep.subr.mxu0 0.0
  %1608 = vmatpush1.msra.mxu0 0.0
  %1609 = vmatprep.subr.mxu0 0.0
  %1610 = vmatpush1.msra.mxu0 0.0
  %1611 = vmatprep.subr.mxu0 0.0
  %1612 = vmatpush1.msra.mxu0 0.0
  %1613 = vmatprep.subr.mxu0 0.0
  %1614 = vmatpush1.msra.mxu0 0.0
  %1615 = vmatprep.subr.mxu0 0.0
  %1616 = vmatpush1.msra.mxu0 0.0
  %1617 = vmatprep.subr.mxu0 0.0
  %1618 = vmatpush1.msra.mxu0 0.0
  %1619 = vmatprep.subr.mxu0 0.0
  %1620 = vmatpush1.msra.mxu0 0.0
  %1621 = vmatprep.subr.mxu0 0.0
  %1622 = vmatpush1.msra.mxu0 0.0
  %1623 = vmatprep.subr.mxu0 0.0
  %1624 = vmatpush1.msra.mxu0 0.0
  %1625 = vmatprep.subr.mxu0 0.0
  %1626 = vmatpush1.msra.mxu0 0.0
  %1627 = vmatprep.subr.mxu0 0.0
  %1628 = vmatpush1.msra.mxu0 0.0
  %1629 = vmatprep.subr.mxu0 0.0
  %1630 = vmatpush1.msra.mxu0 0.0
  %1631 = vmatprep.subr.mxu0 0.0
  %1632 = vmatpush1.msra.mxu0 0.0
  %1633 = vmatprep.subr.mxu0 0.0
  %1634 = vmatpush1.msra.mxu0 0.0
  %1635 = vmatprep.subr.mxu0 0.0
  %1636 = vmatpush1.msra.mxu0 0.0
  %1637 = vmatprep.subr.mxu0 0.0
  %1638 = vmatpush1.msra.mxu0 0.0
  %1639 = vmatprep.subr.mxu0 0.0
  %1640 = vmatpush1.msra.mxu0 0.0
  %1641 = vmatprep.subr.mxu0 0.0
  %1642 = vmatpush1.msra.mxu0 0.0
  %1643 = vmatprep.mubr.f32.mxu0 0.0
  %1644 = vmatmul.mubr.f32.gmra.mrb[0].mxu0 %v1506
  %v1645 = vpop.f32.mrb[0].mxu0
  %v1646 = vadd.f32 0.0, %v1645
  %v1647 = vpop.f32.mrb[0].mxu0
  %v1648 = vadd.f32 0.0, %v1647
  %1649 = vdwg.mxu0
  %v1650 = vsel %vm870, %v1217, 0
  %1652 = vmatprep.subr.mxu0 %v463
  %1653 = vmatpush1.msra.mxu0 %v461
  %1654 = vmatprep.subr.mxu0 %v467
  %1655 = vmatpush1.msra.mxu0 %v465
  %1656 = vmatprep.subr.mxu0 0.0
  %1657 = vmatpush1.msra.mxu0 0.0
  %1658 = vmatprep.subr.mxu0 0.0
  %1659 = vmatpush1.msra.mxu0 0.0
  %1660 = vmatprep.subr.mxu0 0.0
  %1661 = vmatpush1.msra.mxu0 0.0
  %1662 = vmatprep.subr.mxu0 0.0
  %1663 = vmatpush1.msra.mxu0 0.0
  %1664 = vmatprep.subr.mxu0 0.0
  %1665 = vmatpush1.msra.mxu0 0.0
  %1666 = vmatprep.subr.mxu0 0.0
  %1667 = vmatpush1.msra.mxu0 0.0
  %1668 = vmatprep.subr.mxu0 0.0
  %1669 = vmatpush1.msra.mxu0 0.0
  %1670 = vmatprep.subr.mxu0 0.0
  %1671 = vmatpush1.msra.mxu0 0.0
  %1672 = vmatprep.subr.mxu0 0.0
  %1673 = vmatpush1.msra.mxu0 0.0
  %1674 = vmatprep.subr.mxu0 0.0
  %1675 = vmatpush1.msra.mxu0 0.0
  %1676 = vmatprep.subr.mxu0 0.0
  %1677 = vmatpush1.msra.mxu0 0.0
  %1678 = vmatprep.subr.mxu0 0.0
  %1679 = vmatpush1.msra.mxu0 0.0
  %1680 = vmatprep.subr.mxu0 0.0
  %1681 = vmatpush1.msra.mxu0 0.0
  %1682 = vmatprep.subr.mxu0 0.0
  %1683 = vmatpush1.msra.mxu0 0.0
  %1684 = vmatprep.subr.mxu0 0.0
  %1685 = vmatpush1.msra.mxu0 0.0
  %1686 = vmatprep.subr.mxu0 0.0
  %1687 = vmatpush1.msra.mxu0 0.0
  %1688 = vmatprep.subr.mxu0 0.0
  %1689 = vmatpush1.msra.mxu0 0.0
  %1690 = vmatprep.subr.mxu0 0.0
  %1691 = vmatpush1.msra.mxu0 0.0
  %1692 = vmatprep.subr.mxu0 0.0
  %1693 = vmatpush1.msra.mxu0 0.0
  %1694 = vmatprep.subr.mxu0 0.0
  %1695 = vmatpush1.msra.mxu0 0.0
  %1696 = vmatprep.subr.mxu0 0.0
  %1697 = vmatpush1.msra.mxu0 0.0
  %1698 = vmatprep.subr.mxu0 0.0
  %1699 = vmatpush1.msra.mxu0 0.0
  %1700 = vmatprep.subr.mxu0 0.0
  %1701 = vmatpush1.msra.mxu0 0.0
  %1702 = vmatprep.subr.mxu0 0.0
  %1703 = vmatpush1.msra.mxu0 0.0
  %1704 = vmatprep.subr.mxu0 0.0
  %1705 = vmatpush1.msra.mxu0 0.0
  %1706 = vmatprep.subr.mxu0 0.0
  %1707 = vmatpush1.msra.mxu0 0.0
  %1708 = vmatprep.subr.mxu0 0.0
  %1709 = vmatpush1.msra.mxu0 0.0
  %1710 = vmatprep.subr.mxu0 0.0
  %1711 = vmatpush1.msra.mxu0 0.0
  %1712 = vmatprep.subr.mxu0 0.0
  %1713 = vmatpush1.msra.mxu0 0.0
  %1714 = vmatprep.subr.mxu0 0.0
  %1715 = vmatpush1.msra.mxu0 0.0
  %1716 = vmatprep.mubr.f32.mxu0 0.0
  %1717 = vmatmul.mubr.f32.gmra.mrb[0].mxu0 %v1650
  %v1718 = vpop.f32.mrb[0].mxu0
  %v1719 = vadd.f32 0.0, %v1718
  %v1720 = vpop.f32.mrb[0].mxu0
  %v1721 = vadd.f32 0.0, %v1720
  %1722 = vdwg.mxu0
  %1723 = vmatprep.subr.mxu0 %v536
  %1724 = vmatpush1.msra.mxu0 %v534
  %1725 = vmatprep.subr.mxu0 %v540
  %1726 = vmatpush1.msra.mxu0 %v538
  %1727 = vmatprep.subr.mxu0 0.0
  %1728 = vmatpush1.msra.mxu0 0.0
  %1729 = vmatprep.subr.mxu0 0.0
  %1730 = vmatpush1.msra.mxu0 0.0
  %1731 = vmatprep.subr.mxu0 0.0
  %1732 = vmatpush1.msra.mxu0 0.0
  %1733 = vmatprep.subr.mxu0 0.0
  %1734 = vmatpush1.msra.mxu0 0.0
  %1735 = vmatprep.subr.mxu0 0.0
  %1736 = vmatpush1.msra.mxu0 0.0
  %1737 = vmatprep.subr.mxu0 0.0
  %1738 = vmatpush1.msra.mxu0 0.0
  %1739 = vmatprep.subr.mxu0 0.0
  %1740 = vmatpush1.msra.mxu0 0.0
  %1741 = vmatprep.subr.mxu0 0.0
  %1742 = vmatpush1.msra.mxu0 0.0
  %1743 = vmatprep.subr.mxu0 0.0
  %1744 = vmatpush1.msra.mxu0 0.0
  %1745 = vmatprep.subr.mxu0 0.0
  %1746 = vmatpush1.msra.mxu0 0.0
  %1747 = vmatprep.subr.mxu0 0.0
  %1748 = vmatpush1.msra.mxu0 0.0
  %1749 = vmatprep.subr.mxu0 0.0
  %1750 = vmatpush1.msra.mxu0 0.0
  %1751 = vmatprep.subr.mxu0 0.0
  %1752 = vmatpush1.msra.mxu0 0.0
  %1753 = vmatprep.subr.mxu0 0.0
  %1754 = vmatpush1.msra.mxu0 0.0
  %1755 = vmatprep.subr.mxu0 0.0
  %1756 = vmatpush1.msra.mxu0 0.0
  %1757 = vmatprep.subr.mxu0 0.0
  %1758 = vmatpush1.msra.mxu0 0.0
  %1759 = vmatprep.subr.mxu0 0.0
  %1760 = vmatpush1.msra.mxu0 0.0
  %1761 = vmatprep.subr.mxu0 0.0
  %1762 = vmatpush1.msra.mxu0 0.0
  %1763 = vmatprep.subr.mxu0 0.0
  %1764 = vmatpush1.msra.mxu0 0.0
  %1765 = vmatprep.subr.mxu0 0.0
  %1766 = vmatpush1.msra.mxu0 0.0
  %1767 = vmatprep.subr.mxu0 0.0
  %1768 = vmatpush1.msra.mxu0 0.0
  %1769 = vmatprep.subr.mxu0 0.0
  %1770 = vmatpush1.msra.mxu0 0.0
  %1771 = vmatprep.subr.mxu0 0.0
  %1772 = vmatpush1.msra.mxu0 0.0
  %1773 = vmatprep.subr.mxu0 0.0
  %1774 = vmatpush1.msra.mxu0 0.0
  %1775 = vmatprep.subr.mxu0 0.0
  %1776 = vmatpush1.msra.mxu0 0.0
  %1777 = vmatprep.subr.mxu0 0.0
  %1778 = vmatpush1.msra.mxu0 0.0
  %1779 = vmatprep.subr.mxu0 0.0
  %1780 = vmatpush1.msra.mxu0 0.0
  %1781 = vmatprep.subr.mxu0 0.0
  %1782 = vmatpush1.msra.mxu0 0.0
  %1783 = vmatprep.subr.mxu0 0.0
  %1784 = vmatpush1.msra.mxu0 0.0
  %1785 = vmatprep.subr.mxu0 0.0
  %1786 = vmatpush1.msra.mxu0 0.0
  %1787 = vmatprep.mubr.f32.mxu0 0.0
  %1788 = vmatmul.mubr.f32.gmra.mrb[0].mxu0 %v1650
  %v1789 = vpop.f32.mrb[0].mxu0
  %v1790 = vadd.f32 0.0, %v1789
  %v1791 = vpop.f32.mrb[0].mxu0
  %v1792 = vadd.f32 0.0, %v1791
  %1793 = vdwg.mxu0
  %v1810 = vcombine.low %v1287, %v1289
  %v1811 = vcombine.low %v1358, %v1360
  %v1812 = vcombine.low %v1431, %v1433
  %v1813 = vcombine.low %v1502, %v1504
  %v1814 = vcombine.low %v1575, %v1577
  %v1815 = vcombine.low %v1646, %v1648
  %v1816 = vcombine.low %v1719, %v1721
  %v1817 = vcombine.low %v1790, %v1792
  %v1818 = vrot.slane %v1812, 7
  %v1819 = vsel %vm1173, %v1818, %v1810
  %vm1820 = vcmask 1045509
  %v1821 = vsel %vm1820, %v1818, %v1819
  %v1822 = vrot.slane %v1814, 6
  %v1823 = vsel %vm1175, %v1822, %v1821
  %vm1824 = vcmask 1046534
  %v1825 = vsel %vm1824, %v1822, %v1823
  %v1826 = vrot.slane %v1816, 5
  %v1827 = vsel %vm1177, %v1826, %v1825
  %vm1828 = vcmask 1047559
  %v1829 = vsel %vm1828, %v1826, %v1827
  %v1830 = vrot.slane %v1813, 7
  %v1831 = vsel %vm1173, %v1830, %v1811
  %v1832 = vsel %vm1820, %v1830, %v1831
  %v1833 = vrot.slane %v1815, 6
  %v1834 = vsel %vm1175, %v1833, %v1832
  %v1835 = vsel %vm1824, %v1833, %v1834
  %v1836 = vrot.slane %v1817, 5
  %v1837 = vsel %vm1177, %v1836, %v1835
  %v1838 = vsel %vm1828, %v1836, %v1837
  %1841 = vst [vmem:[%s7] sm:$0xff] %v1829
  %vm1842 = vcmask 1043456
  %vm1843 = vcmask 130052
  %vm1844 = vmor %vm1843, %vm1842
  %1845 = vst.msk [vmem:[%s7 + $0x8] sm:$0xff] %vm1844, %v1838
  // Predicated region
  $region30: #{naml_forward.12} parent=0 // pred_check
    _
  $region31: #{naml_forward.12} parent=0 // pred_check_branch
    %1847 = sbr.rel (0) target = $region33
  $region32: #{naml_forward.12} parent=0 // pred_region
    _
  $region33: #{naml_forward.12} parent=0 // pred_fallthru
    _
  // Predicated region
  $region34: #{naml_forward.12} parent=0 // pred_check
    _
  $region35: #{naml_forward.12} parent=0 // pred_check_branch
    %1849 = sbr.rel (0) target = $region37
  $region36: #{naml_forward.12} parent=0 // pred_region
    _
  $region37: #{naml_forward.12} parent=0 // pred_fallthru
    _

// kernel: naml_forward.8
$region0: #{naml_forward.8}
  #allocation0 [shape = 'u32[]', space=smem, size = 0x4, offset = 0x4, fixed_abs, tag = 'smem constant byte address 0x4 - core index']
  #allocation1 [shape = 'u32[144,128]{1,0:T(1,128)}', space=vmem, size = 0x12000, scoped, tag = 'internal scratch']
  #allocation2 [shape = 'f32[1,1]{1,0:T(1,128)S(1)}', space=vmem, size = 0x200, scoped, tag = 'scoped memory for naml_forward.8']
  %s0 = inlined_call_operand.vmem [shape: bf16[6,16,192], index: 0, kind: input, shape index: {}]
  %s1 = inlined_call_operand.vmem [shape: bf16[192,400], index: 1, kind: input, shape index: {}]
  %s2 = inlined_call_operand.vmem [shape: f32[1,400], index: 2, kind: input, shape index: {}]
  %s3 = inlined_call_operand.vmem [shape: bf16[400,200], index: 3, kind: input, shape index: {}]
  %s4 = inlined_call_operand.vmem [shape: f32[1,200], index: 4, kind: input, shape index: {}]
  %s5 = inlined_call_operand.vmem [shape: f32[1,200], index: 5, kind: input, shape index: {}]
  %s6 = inlined_call_operand.<no memory space> [shape: f32[1,1], index: 6, kind: input, shape index: {}]
  %s7 = inlined_call_operand.vmem [shape: f32[6,400], index: 7, kind: output, shape index: {}]
  %s8 = sld [smem:[#allocation0]]
  $region38: #{naml_forward.8} parent=0
    _
  %s10 = ssub.s32 1, %s8
  %s11 = scalar_select 0, %s10, %s8
  %v12 = vstv %s6
  %13 = vst [vmem:[#allocation2] sm:$0x1] %v12
  // Predicated region
  $region2: #{naml_forward.8} parent=0 // pred_check
    _
  $region3: #{naml_forward.8} parent=0 // pred_check_branch
    %15 = sbr.rel (0) target = $region5
  $region4: #{naml_forward.8} parent=0 // pred_region
    _
  $region5: #{naml_forward.8} parent=0 // pred_fallthru
    _
  // Predicated region
  $region6: #{naml_forward.8} parent=0 // pred_check
    _
  $region7: #{naml_forward.8} parent=0 // pred_check_branch
    %17 = sbr.rel (0) target = $region9
  $region8: #{naml_forward.8} parent=0 // pred_region
    _
  $region9: #{naml_forward.8} parent=0 // pred_fallthru
    _
  // Predicated region
  $region10: #{naml_forward.8} parent=0 // pred_check
    _
  $region11: #{naml_forward.8} parent=0 // pred_check_branch
    %19 = sbr.rel (0) target = $region13
  $region12: #{naml_forward.8} parent=0 // pred_region
    _
  $region13: #{naml_forward.8} parent=0 // pred_fallthru
    _
  // Predicated region
  $region14: #{naml_forward.8} parent=0 // pred_check
    _
  $region15: #{naml_forward.8} parent=0 // pred_check_branch
    %21 = sbr.rel (0) target = $region17
  $region16: #{naml_forward.8} parent=0 // pred_region
    _
  $region17: #{naml_forward.8} parent=0 // pred_fallthru
    _
  // Predicated region
  $region18: #{naml_forward.8} parent=0 // pred_check
    _
  $region19: #{naml_forward.8} parent=0 // pred_check_branch
    %23 = sbr.rel (0) target = $region21
  $region20: #{naml_forward.8} parent=0 // pred_region
    _
  $region21: #{naml_forward.8} parent=0 // pred_fallthru
    _
  // Predicated region
  $region22: #{naml_forward.8} parent=0 // pred_check
    _
  $region23: #{naml_forward.8} parent=0 // pred_check_branch
    %25 = sbr.rel (0) target = $region25
  $region24: #{naml_forward.8} parent=0 // pred_region
    _
  $region25: #{naml_forward.8} parent=0 // pred_fallthru
    _
  // Predicated region
  $region26: #{naml_forward.8} parent=0 // pred_check
    _
  $region27: #{naml_forward.8} parent=0 // pred_check_branch
    %27 = sbr.rel (0) target = $region29
  $region28: #{naml_forward.8} parent=0 // pred_region
    _
  $region29: #{naml_forward.8} parent=0 // pred_fallthru
    _
  %v29 = vld [vmem:[%s0] sm:$0xff]
  %v30 = vld [vmem:[%s0 + $0x8] sm:$0xff]
  %v31 = vld [vmem:[%s0 + $0x10] sm:$0xff]
  %v32 = vld [vmem:[%s0 + $0x18] sm:$0xff]
  %v33 = vld [vmem:[%s0 + $0x20] sm:$0xff]
  %v34 = vld [vmem:[%s0 + $0x28] sm:$0xff]
  %v35 = vld [vmem:[%s0 + $0x30] sm:$0xff]
  %v36 = vld [vmem:[%s0 + $0x38] sm:$0xff]
  %v37 = vld [vmem:[%s0 + $0x40] sm:$0xff]
  %v38 = vld [vmem:[%s0 + $0x48] sm:$0xff]
  %v39 = vld [vmem:[%s0 + $0x50] sm:$0xff]
  %v40 = vld [vmem:[%s0 + $0x58] sm:$0xff]
  %v41 = vld [vmem:[%s1] sm:$0xff]
  %v42 = vld [vmem:[%s1 + $0x8] sm:$0xff]
  %v43 = vld [vmem:[%s1 + $0x10] sm:$0xff]
  %v44 = vld [vmem:[%s1 + $0x18] sm:$0xff]
  %v45 = vld [vmem:[%s1 + $0x20] sm:$0xff]
  %v46 = vld [vmem:[%s1 + $0x28] sm:$0xff]
  %v47 = vld [vmem:[%s1 + $0x30] sm:$0xff]
  %v48 = vld [vmem:[%s1 + $0x38] sm:$0xff]
  %v49 = vld [vmem:[%s1 + $0x40] sm:$0xff]
  %v50 = vld [vmem:[%s1 + $0x48] sm:$0xff]
  %v51 = vld [vmem:[%s1 + $0x50] sm:$0xff]
  %v52 = vld [vmem:[%s1 + $0x58] sm:$0xff]
  %v53 = vld [vmem:[%s1 + $0x60] sm:$0xff]
  %v54 = vld [vmem:[%s1 + $0x68] sm:$0xff]
  %v55 = vld [vmem:[%s1 + $0x70] sm:$0xff]
  %v56 = vld [vmem:[%s1 + $0x78] sm:$0xff]
  %v57 = vld [vmem:[%s1 + $0x80] sm:$0xff]
  %v58 = vld [vmem:[%s1 + $0x88] sm:$0xff]
  %v59 = vld [vmem:[%s1 + $0x90] sm:$0xff]
  %v60 = vld [vmem:[%s1 + $0x98] sm:$0xff]
  %v61 = vld [vmem:[%s1 + $0xa0] sm:$0xff]
  %v62 = vld [vmem:[%s1 + $0xa8] sm:$0xff]
  %v63 = vld [vmem:[%s1 + $0xb0] sm:$0xff]
  %v64 = vld [vmem:[%s1 + $0xb8] sm:$0xff]
  %v65 = vld [vmem:[%s1 + $0xc0] sm:$0xff]
  %v66 = vld [vmem:[%s1 + $0xc8] sm:$0xff]
  %v67 = vld [vmem:[%s1 + $0xd0] sm:$0xff]
  %v68 = vld [vmem:[%s1 + $0xd8] sm:$0xff]
  %v69 = vld [vmem:[%s1 + $0xe0] sm:$0xff]
  %v70 = vld [vmem:[%s1 + $0xe8] sm:$0xff]
  %v71 = vld [vmem:[%s1 + $0xf0] sm:$0xff]
  %v72 = vld [vmem:[%s1 + $0xf8] sm:$0xff]
  %v73 = vld [vmem:[%s1 + $0x100] sm:$0xff]
  %v74 = vld [vmem:[%s1 + $0x108] sm:$0xff]
  %v75 = vld [vmem:[%s1 + $0x110] sm:$0xff]
  %v76 = vld [vmem:[%s1 + $0x118] sm:$0xff]
  %v77 = vld [vmem:[%s1 + $0x120] sm:$0xff]
  %v78 = vld [vmem:[%s1 + $0x128] sm:$0xff]
  %v79 = vld [vmem:[%s1 + $0x130] sm:$0xff]
  %v80 = vld [vmem:[%s1 + $0x138] sm:$0xff]
  %v81 = vld [vmem:[%s1 + $0x140] sm:$0xff]
  %v82 = vld [vmem:[%s1 + $0x148] sm:$0xff]
  %v83 = vld [vmem:[%s1 + $0x150] sm:$0xff]
  %v84 = vld [vmem:[%s1 + $0x158] sm:$0xff]
  %v85 = vld [vmem:[%s1 + $0x160] sm:$0xff]
  %v86 = vld [vmem:[%s1 + $0x168] sm:$0xff]
  %v87 = vld [vmem:[%s1 + $0x170] sm:$0xff]
  %v88 = vld [vmem:[%s1 + $0x178] sm:$0xff]
  %v89 = vld [vmem:[%s2] sm:$0xf]
  %v91 = vlaneseq
  %v92 = vshrl.u32 %v91, 7
  %v93 = vsub.s32 0, %v92
  %v94 = vrot.slane %v89, %v93
  %v95 = vlaneseq
  %v96 = vshrl.u32 %v95, 7
  %v97 = vsub.s32 1, %v96
  %v98 = vrot.slane %v89, %v97
  %v99 = vlaneseq
  %v100 = vshrl.u32 %v99, 7
  %v101 = vsub.s32 2, %v100
  %v102 = vrot.slane %v89, %v101
  %v103 = vlaneseq
  %v104 = vshrl.u32 %v103, 7
  %v105 = vsub.s32 3, %v104
  %v106 = vrot.slane %v89, %v105
  %v123 = vunpack.c.l.b16 %v29
  %v124 = vunpack.c.h.b16 %v29
  %v125 = vunpack.c.l.b16 %v30
  %v126 = vunpack.c.h.b16 %v30
  %v127 = vunpack.c.l.b16 %v31
  %v128 = vunpack.c.h.b16 %v31
  %v129 = vunpack.c.l.b16 %v32
  %v130 = vunpack.c.h.b16 %v32
  %v131 = vunpack.c.l.b16 %v33
  %v132 = vunpack.c.h.b16 %v33
  %v133 = vunpack.c.l.b16 %v34
  %v134 = vunpack.c.h.b16 %v34
  %v135 = vunpack.c.l.b16 %v35
  %v136 = vunpack.c.h.b16 %v35
  %v137 = vunpack.c.l.b16 %v36
  %v138 = vunpack.c.h.b16 %v36
  %v139 = vunpack.c.l.b16 %v37
  %v140 = vunpack.c.h.b16 %v37
  %v141 = vunpack.c.l.b16 %v38
  %v142 = vunpack.c.h.b16 %v38
  %v143 = vunpack.c.l.b16 %v39
  %v144 = vunpack.c.h.b16 %v39
  %v145 = vunpack.c.l.b16 %v40
  %v146 = vunpack.c.h.b16 %v40
  %v147 = vpack.c.b16 %v125, %v123
  %v148 = vpack.c.b16 %v126, %v124
  %v149 = vpack.c.b16 %v129, %v127
  %v150 = vpack.c.b16 %v130, %v128
  %v151 = vpack.c.b16 %v133, %v131
  %v152 = vpack.c.b16 %v134, %v132
  %v153 = vpack.c.b16 %v137, %v135
  %v154 = vpack.c.b16 %v138, %v136
  %v155 = vpack.c.b16 %v141, %v139
  %v156 = vpack.c.b16 %v142, %v140
  %v157 = vpack.c.b16 %v145, %v143
  %v158 = vpack.c.b16 %v146, %v144
  %v213 = vunpack.c.l.b16 %v41
  %v214 = vunpack.c.h.b16 %v41
  %v215 = vunpack.c.l.b16 %v42
  %v216 = vunpack.c.h.b16 %v42
  %v217 = vunpack.c.l.b16 %v43
  %v218 = vunpack.c.h.b16 %v43
  %v219 = vunpack.c.l.b16 %v44
  %v220 = vunpack.c.h.b16 %v44
  %v221 = vunpack.c.l.b16 %v45
  %v222 = vunpack.c.h.b16 %v45
  %v223 = vunpack.c.l.b16 %v46
  %v224 = vunpack.c.h.b16 %v46
  %v225 = vunpack.c.l.b16 %v47
  %v226 = vunpack.c.h.b16 %v47
  %v227 = vunpack.c.l.b16 %v48
  %v228 = vunpack.c.h.b16 %v48
  %v229 = vunpack.c.l.b16 %v49
  %v230 = vunpack.c.h.b16 %v49
  %v231 = vunpack.c.l.b16 %v50
  %v232 = vunpack.c.h.b16 %v50
  %v233 = vunpack.c.l.b16 %v51
  %v234 = vunpack.c.h.b16 %v51
  %v235 = vunpack.c.l.b16 %v52
  %v236 = vunpack.c.h.b16 %v52
  %v237 = vunpack.c.l.b16 %v53
  %v238 = vunpack.c.h.b16 %v53
  %v239 = vunpack.c.l.b16 %v54
  %v240 = vunpack.c.h.b16 %v54
  %v241 = vunpack.c.l.b16 %v55
  %v242 = vunpack.c.h.b16 %v55
  %v243 = vunpack.c.l.b16 %v56
  %v244 = vunpack.c.h.b16 %v56
  %v245 = vunpack.c.l.b16 %v57
  %v246 = vunpack.c.h.b16 %v57
  %v247 = vunpack.c.l.b16 %v58
  %v248 = vunpack.c.h.b16 %v58
  %v249 = vunpack.c.l.b16 %v59
  %v250 = vunpack.c.h.b16 %v59
  %v251 = vunpack.c.l.b16 %v60
  %v252 = vunpack.c.h.b16 %v60
  %v253 = vunpack.c.l.b16 %v61
  %v254 = vunpack.c.h.b16 %v61
  %v255 = vunpack.c.l.b16 %v62
  %v256 = vunpack.c.h.b16 %v62
  %v257 = vunpack.c.l.b16 %v63
  %v258 = vunpack.c.h.b16 %v63
  %v259 = vunpack.c.l.b16 %v64
  %v260 = vunpack.c.h.b16 %v64
  %v261 = vunpack.c.l.b16 %v65
  %v262 = vunpack.c.h.b16 %v65
  %v263 = vunpack.c.l.b16 %v66
  %v264 = vunpack.c.h.b16 %v66
  %v265 = vunpack.c.l.b16 %v67
  %v266 = vunpack.c.h.b16 %v67
  %v267 = vunpack.c.l.b16 %v68
  %v268 = vunpack.c.h.b16 %v68
  %v269 = vunpack.c.l.b16 %v69
  %v270 = vunpack.c.h.b16 %v69
  %v271 = vunpack.c.l.b16 %v70
  %v272 = vunpack.c.h.b16 %v70
  %v273 = vunpack.c.l.b16 %v71
  %v274 = vunpack.c.h.b16 %v71
  %v275 = vunpack.c.l.b16 %v72
  %v276 = vunpack.c.h.b16 %v72
  %v277 = vunpack.c.l.b16 %v73
  %v278 = vunpack.c.h.b16 %v73
  %v279 = vunpack.c.l.b16 %v74
  %v280 = vunpack.c.h.b16 %v74
  %v281 = vunpack.c.l.b16 %v75
  %v282 = vunpack.c.h.b16 %v75
  %v283 = vunpack.c.l.b16 %v76
  %v284 = vunpack.c.h.b16 %v76
  %v285 = vunpack.c.l.b16 %v77
  %v286 = vunpack.c.h.b16 %v77
  %v287 = vunpack.c.l.b16 %v78
  %v288 = vunpack.c.h.b16 %v78
  %v289 = vunpack.c.l.b16 %v79
  %v290 = vunpack.c.h.b16 %v79
  %v291 = vunpack.c.l.b16 %v80
  %v292 = vunpack.c.h.b16 %v80
  %v293 = vunpack.c.l.b16 %v81
  %v294 = vunpack.c.h.b16 %v81
  %v295 = vunpack.c.l.b16 %v82
  %v296 = vunpack.c.h.b16 %v82
  %v297 = vunpack.c.l.b16 %v83
  %v298 = vunpack.c.h.b16 %v83
  %v299 = vunpack.c.l.b16 %v84
  %v300 = vunpack.c.h.b16 %v84
  %v301 = vunpack.c.l.b16 %v85
  %v302 = vunpack.c.h.b16 %v85
  %v303 = vunpack.c.l.b16 %v86
  %v304 = vunpack.c.h.b16 %v86
  %v305 = vunpack.c.l.b16 %v87
  %v306 = vunpack.c.h.b16 %v87
  %v307 = vunpack.c.l.b16 %v88
  %v308 = vunpack.c.h.b16 %v88
  %v309 = vpack.c.b16 %v217, %v213
  %v310 = vpack.c.b16 %v218, %v214
  %v311 = vpack.c.b16 %v219, %v215
  %v312 = vpack.c.b16 %v220, %v216
  %v313 = vpack.c.b16 %v225, %v221
  %v314 = vpack.c.b16 %v226, %v222
  %v315 = vpack.c.b16 %v227, %v223
  %v316 = vpack.c.b16 %v228, %v224
  %v317 = vpack.c.b16 %v233, %v229
  %v318 = vpack.c.b16 %v234, %v230
  %v319 = vpack.c.b16 %v235, %v231
  %v320 = vpack.c.b16 %v236, %v232
  %v321 = vpack.c.b16 %v241, %v237
  %v322 = vpack.c.b16 %v242, %v238
  %v323 = vpack.c.b16 %v243, %v239
  %v324 = vpack.c.b16 %v244, %v240
  %v325 = vpack.c.b16 %v249, %v245
  %v326 = vpack.c.b16 %v250, %v246
  %v327 = vpack.c.b16 %v251, %v247
  %v328 = vpack.c.b16 %v252, %v248
  %v329 = vpack.c.b16 %v257, %v253
  %v330 = vpack.c.b16 %v258, %v254
  %v331 = vpack.c.b16 %v259, %v255
  %v332 = vpack.c.b16 %v260, %v256
  %v333 = vpack.c.b16 %v265, %v261
  %v334 = vpack.c.b16 %v266, %v262
  %v335 = vpack.c.b16 %v267, %v263
  %v336 = vpack.c.b16 %v268, %v264
  %v337 = vpack.c.b16 %v273, %v269
  %v338 = vpack.c.b16 %v274, %v270
  %v339 = vpack.c.b16 %v275, %v271
  %v340 = vpack.c.b16 %v276, %v272
  %v341 = vpack.c.b16 %v281, %v277
  %v342 = vpack.c.b16 %v282, %v278
  %v343 = vpack.c.b16 %v283, %v279
  %v344 = vpack.c.b16 %v284, %v280
  %v345 = vpack.c.b16 %v289, %v285
  %v346 = vpack.c.b16 %v290, %v286
  %v347 = vpack.c.b16 %v291, %v287
  %v348 = vpack.c.b16 %v292, %v288
  %v349 = vpack.c.b16 %v297, %v293
  %v350 = vpack.c.b16 %v298, %v294
  %v351 = vpack.c.b16 %v299, %v295
  %v352 = vpack.c.b16 %v300, %v296
  %v353 = vpack.c.b16 %v305, %v301
  %v354 = vpack.c.b16 %v306, %v302
  %v355 = vpack.c.b16 %v307, %v303
  %v356 = vpack.c.b16 %v308, %v304
  %vm405 = vcmask 523264
  %v407 = vsel %vm405, %v148, 0
  %v410 = vsel %vm405, %v150, 0
  %v413 = vsel %vm405, %v152, 0
  %v416 = vsel %vm405, %v154, 0
  %v419 = vsel %vm405, %v156, 0
  %v422 = vsel %vm405, %v158, 0
  %424 = vmatprep.subr.bf16.mxu0 %v310
  %425 = vmatpush1.bf16.msra.mxu0 %v309
  %426 = vmatprep.subr.bf16.mxu0 %v314
  %427 = vmatpush1.bf16.msra.mxu0 %v313
  %428 = vmatprep.subr.bf16.mxu0 %v318
  %429 = vmatpush1.bf16.msra.mxu0 %v317
  %430 = vmatprep.subr.bf16.mxu0 %v322
  %431 = vmatpush1.bf16.msra.mxu0 %v321
  %432 = vmatprep.subr.bf16.mxu0 %v326
  %433 = vmatpush1.bf16.msra.mxu0 %v325
  %434 = vmatprep.subr.bf16.mxu0 %v330
  %435 = vmatpush1.bf16.msra.mxu0 %v329
  %436 = vmatprep.subr.bf16.mxu0 %v334
  %437 = vmatpush1.bf16.msra.mxu0 %v333
  %438 = vmatprep.subr.bf16.mxu0 %v338
  %439 = vmatpush1.bf16.msra.mxu0 %v337
  %440 = vmatprep.subr.bf16.mxu0 %v342
  %441 = vmatpush1.bf16.msra.mxu0 %v341
  %442 = vmatprep.subr.bf16.mxu0 %v346
  %443 = vmatpush1.bf16.msra.mxu0 %v345
  %444 = vmatprep.subr.bf16.mxu0 %v350
  %445 = vmatpush1.bf16.msra.mxu0 %v349
  %446 = vmatprep.subr.bf16.mxu0 %v354
  %447 = vmatpush1.bf16.msra.mxu0 %v353
  %448 = vmatprep.subr.bf16.mxu0 0
  %449 = vmatpush1.bf16.msra.mxu0 0
  %450 = vmatprep.subr.bf16.mxu0 0
  %451 = vmatpush1.bf16.msra.mxu0 0
  %452 = vmatprep.subr.bf16.mxu0 0
  %453 = vmatpush1.bf16.msra.mxu0 0
  %454 = vmatprep.subr.bf16.mxu0 0
  %455 = vmatpush1.bf16.msra.mxu0 0
  %456 = vmatprep.mubr.bf16.mxu0 %v407
  %457 = vmatmul.mubr.bf16.gmra.mrb[0].mxu0 %v147
  %v458 = vpop.f32.mrb[0].mxu0
  %v459 = vadd.f32 %v94, %v458
  %v460 = vpop.f32.mrb[0].mxu0
  %v461 = vadd.f32 %v98, %v460
  %v462 = vpop.f32.mrb[0].mxu0
  %v463 = vadd.f32 %v94, %v462
  %v464 = vpop.f32.mrb[0].mxu0
  %v465 = vadd.f32 %v98, %v464
  %466 = vmatprep.mubr.bf16.mxu0 %v410
  %467 = vmatmul.mubr.bf16.gmra.mrb[0].mxu0 %v149
  %v468 = vpop.f32.mrb[0].mxu0
  %v469 = vadd.f32 %v94, %v468
  %v470 = vpop.f32.mrb[0].mxu0
  %v471 = vadd.f32 %v98, %v470
  %v472 = vpop.f32.mrb[0].mxu0
  %v473 = vadd.f32 %v94, %v472
  %v474 = vpop.f32.mrb[0].mxu0
  %v475 = vadd.f32 %v98, %v474
  %476 = vmatprep.mubr.bf16.mxu0 %v413
  %477 = vmatmul.mubr.bf16.gmra.mrb[0].mxu0 %v151
  %v478 = vpop.f32.mrb[0].mxu0
  %v479 = vadd.f32 %v94, %v478
  %v480 = vpop.f32.mrb[0].mxu0
  %v481 = vadd.f32 %v98, %v480
  %v482 = vpop.f32.mrb[0].mxu0
  %v483 = vadd.f32 %v94, %v482
  %v484 = vpop.f32.mrb[0].mxu0
  %v485 = vadd.f32 %v98, %v484
  %486 = vmatprep.mubr.bf16.mxu0 %v416
  %487 = vmatmul.mubr.bf16.gmra.mrb[0].mxu0 %v153
  %v488 = vpop.f32.mrb[0].mxu0
  %v489 = vadd.f32 %v94, %v488
  %v490 = vpop.f32.mrb[0].mxu0
  %v491 = vadd.f32 %v98, %v490
  %v492 = vpop.f32.mrb[0].mxu0
  %v493 = vadd.f32 %v94, %v492
  %v494 = vpop.f32.mrb[0].mxu0
  %v495 = vadd.f32 %v98, %v494
  %496 = vmatprep.mubr.bf16.mxu0 %v419
  %497 = vmatmul.mubr.bf16.gmra.mrb[0].mxu0 %v155
  %v498 = vpop.f32.mrb[0].mxu0
  %v499 = vadd.f32 %v94, %v498
  %v500 = vpop.f32.mrb[0].mxu0
  %v501 = vadd.f32 %v98, %v500
  %v502 = vpop.f32.mrb[0].mxu0
  %v503 = vadd.f32 %v94, %v502
  %v504 = vpop.f32.mrb[0].mxu0
  %v505 = vadd.f32 %v98, %v504
  %506 = vmatprep.mubr.bf16.mxu0 %v422
  %507 = vmatmul.mubr.bf16.gmra.mrb[0].mxu0 %v157
  %v508 = vpop.f32.mrb[0].mxu0
  %v509 = vadd.f32 %v94, %v508
  %v510 = vpop.f32.mrb[0].mxu0
  %v511 = vadd.f32 %v98, %v510
  %v512 = vpop.f32.mrb[0].mxu0
  %v513 = vadd.f32 %v94, %v512
  %v514 = vpop.f32.mrb[0].mxu0
  %v515 = vadd.f32 %v98, %v514
  %516 = vdwg.mxu0
  %517 = vmatprep.subr.bf16.mxu0 %v312
  %518 = vmatpush1.bf16.msra.mxu0 %v311
  %519 = vmatprep.subr.bf16.mxu0 %v316
  %520 = vmatpush1.bf16.msra.mxu0 %v315
  %521 = vmatprep.subr.bf16.mxu0 %v320
  %522 = vmatpush1.bf16.msra.mxu0 %v319
  %523 = vmatprep.subr.bf16.mxu0 %v324
  %524 = vmatpush1.bf16.msra.mxu0 %v323
  %525 = vmatprep.subr.bf16.mxu0 %v328
  %526 = vmatpush1.bf16.msra.mxu0 %v327
  %527 = vmatprep.subr.bf16.mxu0 %v332
  %528 = vmatpush1.bf16.msra.mxu0 %v331
  %529 = vmatprep.subr.bf16.mxu0 %v336
  %530 = vmatpush1.bf16.msra.mxu0 %v335
  %531 = vmatprep.subr.bf16.mxu0 %v340
  %532 = vmatpush1.bf16.msra.mxu0 %v339
  %533 = vmatprep.subr.bf16.mxu0 %v344
  %534 = vmatpush1.bf16.msra.mxu0 %v343
  %535 = vmatprep.subr.bf16.mxu0 %v348
  %536 = vmatpush1.bf16.msra.mxu0 %v347
  %537 = vmatprep.subr.bf16.mxu0 %v352
  %538 = vmatpush1.bf16.msra.mxu0 %v351
  %539 = vmatprep.subr.bf16.mxu0 %v356
  %540 = vmatpush1.bf16.msra.mxu0 %v355
  %541 = vmatprep.subr.bf16.mxu0 0
  %542 = vmatpush1.bf16.msra.mxu0 0
  %543 = vmatprep.subr.bf16.mxu0 0
  %544 = vmatpush1.bf16.msra.mxu0 0
  %545 = vmatprep.subr.bf16.mxu0 0
  %546 = vmatpush1.bf16.msra.mxu0 0
  %547 = vmatprep.subr.bf16.mxu0 0
  %548 = vmatpush1.bf16.msra.mxu0 0
  %549 = vmatprep.mubr.bf16.mxu0 %v407
  %550 = vmatmul.mubr.bf16.gmra.mrb[0].mxu0 %v147
  %v551 = vpop.f32.mrb[0].mxu0
  %v552 = vadd.f32 %v102, %v551
  %v553 = vpop.f32.mrb[0].mxu0
  %v554 = vadd.f32 %v106, %v553
  %v555 = vpop.f32.mrb[0].mxu0
  %v556 = vadd.f32 %v102, %v555
  %v557 = vpop.f32.mrb[0].mxu0
  %v558 = vadd.f32 %v106, %v557
  %559 = vmatprep.mubr.bf16.mxu0 %v410
  %560 = vmatmul.mubr.bf16.gmra.mrb[0].mxu0 %v149
  %v561 = vpop.f32.mrb[0].mxu0
  %v562 = vadd.f32 %v102, %v561
  %v563 = vpop.f32.mrb[0].mxu0
  %v564 = vadd.f32 %v106, %v563
  %v565 = vpop.f32.mrb[0].mxu0
  %v566 = vadd.f32 %v102, %v565
  %v567 = vpop.f32.mrb[0].mxu0
  %v568 = vadd.f32 %v106, %v567
  %569 = vmatprep.mubr.bf16.mxu0 %v413
  %570 = vmatmul.mubr.bf16.gmra.mrb[0].mxu0 %v151
  %v571 = vpop.f32.mrb[0].mxu0
  %v572 = vadd.f32 %v102, %v571
  %v573 = vpop.f32.mrb[0].mxu0
  %v574 = vadd.f32 %v106, %v573
  %v575 = vpop.f32.mrb[0].mxu0
  %v576 = vadd.f32 %v102, %v575
  %v577 = vpop.f32.mrb[0].mxu0
  %v578 = vadd.f32 %v106, %v577
  %579 = vmatprep.mubr.bf16.mxu0 %v416
  %580 = vmatmul.mubr.bf16.gmra.mrb[0].mxu0 %v153
  %v581 = vpop.f32.mrb[0].mxu0
  %v582 = vadd.f32 %v102, %v581
  %v583 = vpop.f32.mrb[0].mxu0
  %v584 = vadd.f32 %v106, %v583
  %v585 = vpop.f32.mrb[0].mxu0
  %v586 = vadd.f32 %v102, %v585
  %v587 = vpop.f32.mrb[0].mxu0
  %v588 = vadd.f32 %v106, %v587
  %589 = vmatprep.mubr.bf16.mxu0 %v419
  %590 = vmatmul.mubr.bf16.gmra.mrb[0].mxu0 %v155
  %v591 = vpop.f32.mrb[0].mxu0
  %v592 = vadd.f32 %v102, %v591
  %v593 = vpop.f32.mrb[0].mxu0
  %v594 = vadd.f32 %v106, %v593
  %v595 = vpop.f32.mrb[0].mxu0
  %v596 = vadd.f32 %v102, %v595
  %v597 = vpop.f32.mrb[0].mxu0
  %v598 = vadd.f32 %v106, %v597
  %599 = vmatprep.mubr.bf16.mxu0 %v422
  %600 = vmatmul.mubr.bf16.gmra.mrb[0].mxu0 %v157
  %v601 = vpop.f32.mrb[0].mxu0
  %v602 = vadd.f32 %v102, %v601
  %v603 = vpop.f32.mrb[0].mxu0
  %v604 = vadd.f32 %v106, %v603
  %v605 = vpop.f32.mrb[0].mxu0
  %v606 = vadd.f32 %v102, %v605
  %v607 = vpop.f32.mrb[0].mxu0
  %v608 = vadd.f32 %v106, %v607
  %609 = vdwg.mxu0
  %v610 = vpack.c.bf16 %v463, %v459
  %v611 = vpack.c.bf16 %v465, %v461
  %v612 = vpack.c.bf16 %v556, %v552
  %v613 = vpack.c.bf16 %v558, %v554
  %v614 = vpack.c.bf16 %v473, %v469
  %v615 = vpack.c.bf16 %v475, %v471
  %v616 = vpack.c.bf16 %v566, %v562
  %v617 = vpack.c.bf16 %v568, %v564
  %v618 = vpack.c.bf16 %v483, %v479
  %v619 = vpack.c.bf16 %v485, %v481
  %v620 = vpack.c.bf16 %v576, %v572
  %v621 = vpack.c.bf16 %v578, %v574
  %v622 = vpack.c.bf16 %v493, %v489
  %v623 = vpack.c.bf16 %v495, %v491
  %v624 = vpack.c.bf16 %v586, %v582
  %v625 = vpack.c.bf16 %v588, %v584
  %v626 = vpack.c.bf16 %v503, %v499
  %v627 = vpack.c.bf16 %v505, %v501
  %v628 = vpack.c.bf16 %v596, %v592
  %v629 = vpack.c.bf16 %v598, %v594
  %v630 = vpack.c.bf16 %v513, %v509
  %v631 = vpack.c.bf16 %v515, %v511
  %v632 = vpack.c.bf16 %v606, %v602
  %v633 = vpack.c.bf16 %v608, %v604
  %v634 = vld [vmem:[%s3] sm:$0xff]
  %v635 = vld [vmem:[%s3 + $0x8] sm:$0xff]
  %v636 = vld [vmem:[%s3 + $0x10] sm:$0xff]
  %v637 = vld [vmem:[%s3 + $0x18] sm:$0xff]
  %v638 = vld [vmem:[%s3 + $0x20] sm:$0xff]
  %v639 = vld [vmem:[%s3 + $0x28] sm:$0xff]
  %v640 = vld [vmem:[%s3 + $0x30] sm:$0xff]
  %v641 = vld [vmem:[%s3 + $0x38] sm:$0xff]
  %v642 = vld [vmem:[%s3 + $0x40] sm:$0xff]
  %v643 = vld [vmem:[%s3 + $0x48] sm:$0xff]
  %v644 = vld [vmem:[%s3 + $0x50] sm:$0xff]
  %v645 = vld [vmem:[%s3 + $0x58] sm:$0xff]
  %v646 = vld [vmem:[%s3 + $0x60] sm:$0xff]
  %v647 = vld [vmem:[%s3 + $0x68] sm:$0xff]
  %v648 = vld [vmem:[%s3 + $0x70] sm:$0xff]
  %v649 = vld [vmem:[%s3 + $0x78] sm:$0xff]
  %v650 = vld [vmem:[%s3 + $0x80] sm:$0xff]
  %v651 = vld [vmem:[%s3 + $0x88] sm:$0xff]
  %v652 = vld [vmem:[%s3 + $0x90] sm:$0xff]
  %v653 = vld [vmem:[%s3 + $0x98] sm:$0xff]
  %v654 = vld [vmem:[%s3 + $0xa0] sm:$0xff]
  %v655 = vld [vmem:[%s3 + $0xa8] sm:$0xff]
  %v656 = vld [vmem:[%s3 + $0xb0] sm:$0xff]
  %v657 = vld [vmem:[%s3 + $0xb8] sm:$0xff]
  %v658 = vld [vmem:[%s3 + $0xc0] sm:$0xff]
  %v659 = vld [vmem:[%s3 + $0xc8] sm:$0xff]
  %v660 = vld [vmem:[%s3 + $0xd0] sm:$0xff]
  %v661 = vld [vmem:[%s3 + $0xd8] sm:$0xff]
  %v662 = vld [vmem:[%s3 + $0xe0] sm:$0xff]
  %v663 = vld [vmem:[%s3 + $0xe8] sm:$0xff]
  %v664 = vld [vmem:[%s3 + $0xf0] sm:$0xff]
  %v665 = vld [vmem:[%s3 + $0xf8] sm:$0xff]
  %v666 = vld [vmem:[%s3 + $0x100] sm:$0xff]
  %v667 = vld [vmem:[%s3 + $0x108] sm:$0xff]
  %v668 = vld [vmem:[%s3 + $0x110] sm:$0xff]
  %v669 = vld [vmem:[%s3 + $0x118] sm:$0xff]
  %v670 = vld [vmem:[%s3 + $0x120] sm:$0xff]
  %v671 = vld [vmem:[%s3 + $0x128] sm:$0xff]
  %v672 = vld [vmem:[%s3 + $0x130] sm:$0xff]
  %v673 = vld [vmem:[%s3 + $0x138] sm:$0xff]
  %v674 = vld [vmem:[%s3 + $0x140] sm:$0xff]
  %v675 = vld [vmem:[%s3 + $0x148] sm:$0xff]
  %v676 = vld [vmem:[%s3 + $0x150] sm:$0xff]
  %v677 = vld [vmem:[%s3 + $0x158] sm:$0xff]
  %v678 = vld [vmem:[%s3 + $0x160] sm:$0xff]
  %v679 = vld [vmem:[%s3 + $0x168] sm:$0xff]
  %v680 = vld [vmem:[%s3 + $0x170] sm:$0xff]
  %v681 = vld [vmem:[%s3 + $0x178] sm:$0xff]
  %v682 = vld [vmem:[%s3 + $0x180] sm:$0xff]
  %v683 = vld [vmem:[%s3 + $0x188] sm:$0xff]
  %v684 = vld [vmem:[%s4] sm:$0x3]
  %v686 = vlaneseq
  %v687 = vshrl.u32 %v686, 7
  %v688 = vsub.s32 0, %v687
  %v689 = vrot.slane %v684, %v688
  %v690 = vlaneseq
  %v691 = vshrl.u32 %v690, 7
  %v692 = vsub.s32 1, %v691
  %v693 = vrot.slane %v684, %v692
  %v746 = vunpack.c.l.b16 %v634
  %v747 = vunpack.c.h.b16 %v634
  %v748 = vunpack.c.l.b16 %v635
  %v749 = vunpack.c.h.b16 %v635
  %v750 = vunpack.c.l.b16 %v636
  %v751 = vunpack.c.h.b16 %v636
  %v752 = vunpack.c.l.b16 %v637
  %v753 = vunpack.c.h.b16 %v637
  %v754 = vunpack.c.l.b16 %v638
  %v755 = vunpack.c.h.b16 %v638
  %v756 = vunpack.c.l.b16 %v639
  %v757 = vunpack.c.h.b16 %v639
  %v758 = vunpack.c.l.b16 %v640
  %v759 = vunpack.c.h.b16 %v640
  %v760 = vunpack.c.l.b16 %v641
  %v761 = vunpack.c.h.b16 %v641
  %v762 = vunpack.c.l.b16 %v642
  %v763 = vunpack.c.h.b16 %v642
  %v764 = vunpack.c.l.b16 %v643
  %v765 = vunpack.c.h.b16 %v643
  %v766 = vunpack.c.l.b16 %v644
  %v767 = vunpack.c.h.b16 %v644
  %v768 = vunpack.c.l.b16 %v645
  %v769 = vunpack.c.h.b16 %v645
  %v770 = vunpack.c.l.b16 %v646
  %v771 = vunpack.c.h.b16 %v646
  %v772 = vunpack.c.l.b16 %v647
  %v773 = vunpack.c.h.b16 %v647
  %v774 = vunpack.c.l.b16 %v648
  %v775 = vunpack.c.h.b16 %v648
  %v776 = vunpack.c.l.b16 %v649
  %v777 = vunpack.c.h.b16 %v649
  %v778 = vunpack.c.l.b16 %v650
  %v779 = vunpack.c.h.b16 %v650
  %v780 = vunpack.c.l.b16 %v651
  %v781 = vunpack.c.h.b16 %v651
  %v782 = vunpack.c.l.b16 %v652
  %v783 = vunpack.c.h.b16 %v652
  %v784 = vunpack.c.l.b16 %v653
  %v785 = vunpack.c.h.b16 %v653
  %v786 = vunpack.c.l.b16 %v654
  %v787 = vunpack.c.h.b16 %v654
  %v788 = vunpack.c.l.b16 %v655
  %v789 = vunpack.c.h.b16 %v655
  %v790 = vunpack.c.l.b16 %v656
  %v791 = vunpack.c.h.b16 %v656
  %v792 = vunpack.c.l.b16 %v657
  %v793 = vunpack.c.h.b16 %v657
  %v794 = vunpack.c.l.b16 %v658
  %v795 = vunpack.c.h.b16 %v658
  %v796 = vunpack.c.l.b16 %v659
  %v797 = vunpack.c.h.b16 %v659
  %v798 = vunpack.c.l.b16 %v660
  %v799 = vunpack.c.h.b16 %v660
  %v800 = vunpack.c.l.b16 %v661
  %v801 = vunpack.c.h.b16 %v661
  %v802 = vunpack.c.l.b16 %v662
  %v803 = vunpack.c.h.b16 %v662
  %v804 = vunpack.c.l.b16 %v663
  %v805 = vunpack.c.h.b16 %v663
  %v806 = vunpack.c.l.b16 %v664
  %v807 = vunpack.c.h.b16 %v664
  %v808 = vunpack.c.l.b16 %v665
  %v809 = vunpack.c.h.b16 %v665
  %v810 = vunpack.c.l.b16 %v666
  %v811 = vunpack.c.h.b16 %v666
  %v812 = vunpack.c.l.b16 %v667
  %v813 = vunpack.c.h.b16 %v667
  %v814 = vunpack.c.l.b16 %v668
  %v815 = vunpack.c.h.b16 %v668
  %v816 = vunpack.c.l.b16 %v669
  %v817 = vunpack.c.h.b16 %v669
  %v818 = vunpack.c.l.b16 %v670
  %v819 = vunpack.c.h.b16 %v670
  %v820 = vunpack.c.l.b16 %v671
  %v821 = vunpack.c.h.b16 %v671
  %v822 = vunpack.c.l.b16 %v672
  %v823 = vunpack.c.h.b16 %v672
  %v824 = vunpack.c.l.b16 %v673
  %v825 = vunpack.c.h.b16 %v673
  %v826 = vunpack.c.l.b16 %v674
  %v827 = vunpack.c.h.b16 %v674
  %v828 = vunpack.c.l.b16 %v675
  %v829 = vunpack.c.h.b16 %v675
  %v830 = vunpack.c.l.b16 %v676
  %v831 = vunpack.c.h.b16 %v676
  %v832 = vunpack.c.l.b16 %v677
  %v833 = vunpack.c.h.b16 %v677
  %v834 = vunpack.c.l.b16 %v678
  %v835 = vunpack.c.h.b16 %v678
  %v836 = vunpack.c.l.b16 %v679
  %v837 = vunpack.c.h.b16 %v679
  %v838 = vunpack.c.l.b16 %v680
  %v839 = vunpack.c.h.b16 %v680
  %v840 = vunpack.c.l.b16 %v681
  %v841 = vunpack.c.h.b16 %v681
  %v842 = vunpack.c.l.b16 %v682
  %v843 = vunpack.c.h.b16 %v682
  %v844 = vunpack.c.l.b16 %v683
  %v845 = vunpack.c.h.b16 %v683
  %v846 = vpack.c.b16 %v748, %v746
  %v847 = vpack.c.b16 %v749, %v747
  %v848 = vpack.c.b16 %v752, %v750
  %v849 = vpack.c.b16 %v753, %v751
  %v850 = vpack.c.b16 %v756, %v754
  %v851 = vpack.c.b16 %v757, %v755
  %v852 = vpack.c.b16 %v760, %v758
  %v853 = vpack.c.b16 %v761, %v759
  %v854 = vpack.c.b16 %v764, %v762
  %v855 = vpack.c.b16 %v765, %v763
  %v856 = vpack.c.b16 %v768, %v766
  %v857 = vpack.c.b16 %v769, %v767
  %v858 = vpack.c.b16 %v772, %v770
  %v859 = vpack.c.b16 %v773, %v771
  %v860 = vpack.c.b16 %v776, %v774
  %v861 = vpack.c.b16 %v777, %v775
  %v862 = vpack.c.b16 %v780, %v778
  %v863 = vpack.c.b16 %v781, %v779
  %v864 = vpack.c.b16 %v784, %v782
  %v865 = vpack.c.b16 %v785, %v783
  %v866 = vpack.c.b16 %v788, %v786
  %v867 = vpack.c.b16 %v789, %v787
  %v868 = vpack.c.b16 %v792, %v790
  %v869 = vpack.c.b16 %v793, %v791
  %v870 = vpack.c.b16 %v796, %v794
  %v871 = vpack.c.b16 %v797, %v795
  %v872 = vpack.c.b16 %v800, %v798
  %v873 = vpack.c.b16 %v801, %v799
  %v874 = vpack.c.b16 %v804, %v802
  %v875 = vpack.c.b16 %v805, %v803
  %v876 = vpack.c.b16 %v808, %v806
  %v877 = vpack.c.b16 %v809, %v807
  %v878 = vpack.c.b16 %v812, %v810
  %v879 = vpack.c.b16 %v813, %v811
  %v880 = vpack.c.b16 %v816, %v814
  %v881 = vpack.c.b16 %v817, %v815
  %v882 = vpack.c.b16 %v820, %v818
  %v883 = vpack.c.b16 %v821, %v819
  %v884 = vpack.c.b16 %v824, %v822
  %v885 = vpack.c.b16 %v825, %v823
  %v886 = vpack.c.b16 %v828, %v826
  %v887 = vpack.c.b16 %v829, %v827
  %v888 = vpack.c.b16 %v832, %v830
  %v889 = vpack.c.b16 %v833, %v831
  %v890 = vpack.c.b16 %v836, %v834
  %v891 = vpack.c.b16 %v837, %v835
  %v892 = vpack.c.b16 %v840, %v838
  %v893 = vpack.c.b16 %v841, %v839
  %v894 = vpack.c.b16 %v844, %v842
  %v895 = vpack.c.b16 %v845, %v843
  %vm946 = vcmask 130048
  %v948 = vsel %vm946, %v613, 0
  %v951 = vsel %vm946, %v617, 0
  %v954 = vsel %vm946, %v621, 0
  %v957 = vsel %vm946, %v625, 0
  %v960 = vsel %vm946, %v629, 0
  %v963 = vsel %vm946, %v633, 0
  %965 = vmatprep.subr.bf16.mxu0 %v847
  %966 = vmatpush1.bf16.msra.mxu0 %v846
  %967 = vmatprep.subr.bf16.mxu0 %v849
  %968 = vmatpush1.bf16.msra.mxu0 %v848
  %969 = vmatprep.subr.bf16.mxu0 %v851
  %970 = vmatpush1.bf16.msra.mxu0 %v850
  %971 = vmatprep.subr.bf16.mxu0 %v853
  %972 = vmatpush1.bf16.msra.mxu0 %v852
  %973 = vmatprep.subr.bf16.mxu0 %v855
  %974 = vmatpush1.bf16.msra.mxu0 %v854
  %975 = vmatprep.subr.bf16.mxu0 %v857
  %976 = vmatpush1.bf16.msra.mxu0 %v856
  %977 = vmatprep.subr.bf16.mxu0 %v859
  %978 = vmatpush1.bf16.msra.mxu0 %v858
  %979 = vmatprep.subr.bf16.mxu0 %v861
  %980 = vmatpush1.bf16.msra.mxu0 %v860
  %981 = vmatprep.subr.bf16.mxu0 %v863
  %982 = vmatpush1.bf16.msra.mxu0 %v862
  %983 = vmatprep.subr.bf16.mxu0 %v865
  %984 = vmatpush1.bf16.msra.mxu0 %v864
  %985 = vmatprep.subr.bf16.mxu0 %v867
  %986 = vmatpush1.bf16.msra.mxu0 %v866
  %987 = vmatprep.subr.bf16.mxu0 %v869
  %988 = vmatpush1.bf16.msra.mxu0 %v868
  %989 = vmatprep.subr.bf16.mxu0 %v871
  %990 = vmatpush1.bf16.msra.mxu0 %v870
  %991 = vmatprep.subr.bf16.mxu0 %v873
  %992 = vmatpush1.bf16.msra.mxu0 %v872
  %993 = vmatprep.subr.bf16.mxu0 %v875
  %994 = vmatpush1.bf16.msra.mxu0 %v874
  %995 = vmatprep.subr.bf16.mxu0 %v877
  %996 = vmatpush1.bf16.msra.mxu0 %v876
  %997 = vmatprep.mubr.bf16.mxu0 %v611
  %998 = vmatmul.mubr.bf16.gmra.mrb[0].mxu0 %v610
  %v999 = vpop.f32.mrb[0].mxu0
  %v1000 = vadd.f32 %v689, %v999
  %v1001 = vpop.f32.mrb[0].mxu0
  %v1002 = vadd.f32 %v693, %v1001
  %v1003 = vpop.f32.mrb[0].mxu0
  %v1004 = vadd.f32 %v689, %v1003
  %v1005 = vpop.f32.mrb[0].mxu0
  %v1006 = vadd.f32 %v693, %v1005
  %1007 = vmatprep.mubr.bf16.mxu0 %v615
  %1008 = vmatmul.mubr.bf16.gmra.mrb[0].mxu0 %v614
  %v1009 = vpop.f32.mrb[0].mxu0
  %v1010 = vadd.f32 %v689, %v1009
  %v1011 = vpop.f32.mrb[0].mxu0
  %v1012 = vadd.f32 %v693, %v1011
  %v1013 = vpop.f32.mrb[0].mxu0
  %v1014 = vadd.f32 %v689, %v1013
  %v1015 = vpop.f32.mrb[0].mxu0
  %v1016 = vadd.f32 %v693, %v1015
  %1017 = vmatprep.mubr.bf16.mxu0 %v619
  %1018 = vmatmul.mubr.bf16.gmra.mrb[0].mxu0 %v618
  %v1019 = vpop.f32.mrb[0].mxu0
  %v1020 = vadd.f32 %v689, %v1019
  %v1021 = vpop.f32.mrb[0].mxu0
  %v1022 = vadd.f32 %v693, %v1021
  %v1023 = vpop.f32.mrb[0].mxu0
  %v1024 = vadd.f32 %v689, %v1023
  %v1025 = vpop.f32.mrb[0].mxu0
  %v1026 = vadd.f32 %v693, %v1025
  %1027 = vmatprep.mubr.bf16.mxu0 %v623
  %1028 = vmatmul.mubr.bf16.gmra.mrb[0].mxu0 %v622
  %v1029 = vpop.f32.mrb[0].mxu0
  %v1030 = vadd.f32 %v689, %v1029
  %v1031 = vpop.f32.mrb[0].mxu0
  %v1032 = vadd.f32 %v693, %v1031
  %v1033 = vpop.f32.mrb[0].mxu0
  %v1034 = vadd.f32 %v689, %v1033
  %v1035 = vpop.f32.mrb[0].mxu0
  %v1036 = vadd.f32 %v693, %v1035
  %1037 = vmatprep.mubr.bf16.mxu0 %v627
  %1038 = vmatmul.mubr.bf16.gmra.mrb[0].mxu0 %v626
  %v1039 = vpop.f32.mrb[0].mxu0
  %v1040 = vadd.f32 %v689, %v1039
  %v1041 = vpop.f32.mrb[0].mxu0
  %v1042 = vadd.f32 %v693, %v1041
  %v1043 = vpop.f32.mrb[0].mxu0
  %v1044 = vadd.f32 %v689, %v1043
  %v1045 = vpop.f32.mrb[0].mxu0
  %v1046 = vadd.f32 %v693, %v1045
  %1047 = vmatprep.mubr.bf16.mxu0 %v631
  %1048 = vmatmul.mubr.bf16.gmra.mrb[0].mxu0 %v630
  %v1049 = vpop.f32.mrb[0].mxu0
  %v1050 = vadd.f32 %v689, %v1049
  %v1051 = vpop.f32.mrb[0].mxu0
  %v1052 = vadd.f32 %v693, %v1051
  %v1053 = vpop.f32.mrb[0].mxu0
  %v1054 = vadd.f32 %v689, %v1053
  %v1055 = vpop.f32.mrb[0].mxu0
  %v1056 = vadd.f32 %v693, %v1055
  %1057 = vdwg.mxu0
  %1058 = vmatprep.subr.bf16.mxu0 %v879
  %1059 = vmatpush1.bf16.msra.mxu0 %v878
  %1060 = vmatprep.subr.bf16.mxu0 %v881
  %1061 = vmatpush1.bf16.msra.mxu0 %v880
  %1062 = vmatprep.subr.bf16.mxu0 %v883
  %1063 = vmatpush1.bf16.msra.mxu0 %v882
  %1064 = vmatprep.subr.bf16.mxu0 %v885
  %1065 = vmatpush1.bf16.msra.mxu0 %v884
  %1066 = vmatprep.subr.bf16.mxu0 %v887
  %1067 = vmatpush1.bf16.msra.mxu0 %v886
  %1068 = vmatprep.subr.bf16.mxu0 %v889
  %1069 = vmatpush1.bf16.msra.mxu0 %v888
  %1070 = vmatprep.subr.bf16.mxu0 %v891
  %1071 = vmatpush1.bf16.msra.mxu0 %v890
  %1072 = vmatprep.subr.bf16.mxu0 %v893
  %1073 = vmatpush1.bf16.msra.mxu0 %v892
  %1074 = vmatprep.subr.bf16.mxu0 %v895
  %1075 = vmatpush1.bf16.msra.mxu0 %v894
  %1076 = vmatprep.subr.bf16.mxu0 0
  %1077 = vmatpush1.bf16.msra.mxu0 0
  %1078 = vmatprep.subr.bf16.mxu0 0
  %1079 = vmatpush1.bf16.msra.mxu0 0
  %1080 = vmatprep.subr.bf16.mxu0 0
  %1081 = vmatpush1.bf16.msra.mxu0 0
  %1082 = vmatprep.subr.bf16.mxu0 0
  %1083 = vmatpush1.bf16.msra.mxu0 0
  %1084 = vmatprep.subr.bf16.mxu0 0
  %1085 = vmatpush1.bf16.msra.mxu0 0
  %1086 = vmatprep.subr.bf16.mxu0 0
  %1087 = vmatpush1.bf16.msra.mxu0 0
  %1088 = vmatprep.subr.bf16.mxu0 0
  %1089 = vmatpush1.bf16.msra.mxu0 0
  %1090 = vmatprep.mubr.bf16.mxu0 %v948
  %1091 = vmatmul.mubr.bf16.gmra.mrb[0].mxu0 %v612
  %v1092 = vpop.f32.mrb[0].mxu0
  %v1093 = vadd.f32 %v1000, %v1092
  %v1094 = vpop.f32.mrb[0].mxu0
  %v1095 = vadd.f32 %v1002, %v1094
  %v1096 = vpop.f32.mrb[0].mxu0
  %v1097 = vadd.f32 %v1004, %v1096
  %v1098 = vpop.f32.mrb[0].mxu0
  %v1099 = vadd.f32 %v1006, %v1098
  %1100 = vmatprep.mubr.bf16.mxu0 %v951
  %1101 = vmatmul.mubr.bf16.gmra.mrb[0].mxu0 %v616
  %v1102 = vpop.f32.mrb[0].mxu0
  %v1103 = vadd.f32 %v1010, %v1102
  %v1104 = vpop.f32.mrb[0].mxu0
  %v1105 = vadd.f32 %v1012, %v1104
  %v1106 = vpop.f32.mrb[0].mxu0
  %v1107 = vadd.f32 %v1014, %v1106
  %v1108 = vpop.f32.mrb[0].mxu0
  %v1109 = vadd.f32 %v1016, %v1108
  %1110 = vmatprep.mubr.bf16.mxu0 %v954
  %1111 = vmatmul.mubr.bf16.gmra.mrb[0].mxu0 %v620
  %v1112 = vpop.f32.mrb[0].mxu0
  %v1113 = vadd.f32 %v1020, %v1112
  %v1114 = vpop.f32.mrb[0].mxu0
  %v1115 = vadd.f32 %v1022, %v1114
  %v1116 = vpop.f32.mrb[0].mxu0
  %v1117 = vadd.f32 %v1024, %v1116
  %v1118 = vpop.f32.mrb[0].mxu0
  %v1119 = vadd.f32 %v1026, %v1118
  %1120 = vmatprep.mubr.bf16.mxu0 %v957
  %1121 = vmatmul.mubr.bf16.gmra.mrb[0].mxu0 %v624
  %v1122 = vpop.f32.mrb[0].mxu0
  %v1123 = vadd.f32 %v1030, %v1122
  %v1124 = vpop.f32.mrb[0].mxu0
  %v1125 = vadd.f32 %v1032, %v1124
  %v1126 = vpop.f32.mrb[0].mxu0
  %v1127 = vadd.f32 %v1034, %v1126
  %v1128 = vpop.f32.mrb[0].mxu0
  %v1129 = vadd.f32 %v1036, %v1128
  %1130 = vmatprep.mubr.bf16.mxu0 %v960
  %1131 = vmatmul.mubr.bf16.gmra.mrb[0].mxu0 %v628
  %v1132 = vpop.f32.mrb[0].mxu0
  %v1133 = vadd.f32 %v1040, %v1132
  %v1134 = vpop.f32.mrb[0].mxu0
  %v1135 = vadd.f32 %v1042, %v1134
  %v1136 = vpop.f32.mrb[0].mxu0
  %v1137 = vadd.f32 %v1044, %v1136
  %v1138 = vpop.f32.mrb[0].mxu0
  %v1139 = vadd.f32 %v1046, %v1138
  %1140 = vmatprep.mubr.bf16.mxu0 %v963
  %1141 = vmatmul.mubr.bf16.gmra.mrb[0].mxu0 %v632
  %v1142 = vpop.f32.mrb[0].mxu0
  %v1143 = vadd.f32 %v1050, %v1142
  %v1144 = vpop.f32.mrb[0].mxu0
  %v1145 = vadd.f32 %v1052, %v1144
  %v1146 = vpop.f32.mrb[0].mxu0
  %v1147 = vadd.f32 %v1054, %v1146
  %v1148 = vpop.f32.mrb[0].mxu0
  %v1149 = vadd.f32 %v1056, %v1148
  %1150 = vdwg.mxu0
  %v1151 = vtanh.pop %v1093
  %v1152 = vtanh.pop %v1095
  %v1153 = vtanh.pop %v1097
  %v1154 = vtanh.pop %v1099
  %v1155 = vtanh.pop %v1103
  %v1156 = vtanh.pop %v1105
  %v1157 = vtanh.pop %v1107
  %v1158 = vtanh.pop %v1109
  %v1159 = vtanh.pop %v1113
  %v1160 = vtanh.pop %v1115
  %v1161 = vtanh.pop %v1117
  %v1162 = vtanh.pop %v1119
  %v1163 = vtanh.pop %v1123
  %v1164 = vtanh.pop %v1125
  %v1165 = vtanh.pop %v1127
  %v1166 = vtanh.pop %v1129
  %v1167 = vtanh.pop %v1133
  %v1168 = vtanh.pop %v1135
  %v1169 = vtanh.pop %v1137
  %v1170 = vtanh.pop %v1139
  %v1171 = vtanh.pop %v1143
  %v1172 = vtanh.pop %v1145
  %v1173 = vtanh.pop %v1147
  %v1174 = vtanh.pop %v1149
  %v1175 = vld [vmem:[%s5] sm:$0x3]
  %v1177 = vlaneseq
  %v1178 = vshrl.u32 %v1177, 7
  %v1179 = vsub.s32 0, %v1178
  %v1180 = vrot.slane %v1175, %v1179
  %v1181 = vlaneseq
  %v1182 = vshrl.u32 %v1181, 7
  %v1183 = vsub.s32 1, %v1182
  %v1184 = vrot.slane %v1175, %v1183
  %v1187 = vmul.f32 %v1151, %v1180
  %v1188 = vmul.f32 %v1152, %v1184
  %v1189 = vmul.f32 %v1153, %v1180
  %v1190 = vmul.f32 %v1154, %v1184
  %v1191 = vmul.f32 %v1155, %v1180
  %v1192 = vmul.f32 %v1156, %v1184
  %v1193 = vmul.f32 %v1157, %v1180
  %v1194 = vmul.f32 %v1158, %v1184
  %v1195 = vmul.f32 %v1159, %v1180
  %v1196 = vmul.f32 %v1160, %v1184
  %v1197 = vmul.f32 %v1161, %v1180
  %v1198 = vmul.f32 %v1162, %v1184
  %v1199 = vmul.f32 %v1163, %v1180
  %v1200 = vmul.f32 %v1164, %v1184
  %v1201 = vmul.f32 %v1165, %v1180
  %v1202 = vmul.f32 %v1166, %v1184
  %v1203 = vmul.f32 %v1167, %v1180
  %v1204 = vmul.f32 %v1168, %v1184
  %v1205 = vmul.f32 %v1169, %v1180
  %v1206 = vmul.f32 %v1170, %v1184
  %v1207 = vmul.f32 %v1171, %v1180
  %v1208 = vmul.f32 %v1172, %v1184
  %v1209 = vmul.f32 %v1173, %v1180
  %v1210 = vmul.f32 %v1174, %v1184
  %vm1211 = vcmask 588800
  %v1212 = vsel %vm1211, %v1188, 0.0
  %v1213 = vadd.f32 %v1187, %v1212
  %1214 = vadd.xlane.f32.xlu0 %v1213
  %v1215 = vpop.xlane.xlu0 %1214
  %v1216 = vsel %vm1211, %v1190, 0.0
  %v1217 = vadd.f32 %v1189, %v1216
  %1218 = vadd.xlane.f32.xlu0 %v1217
  %v1219 = vpop.xlane.xlu0 %1218
  %v1220 = vsel %vm1211, %v1192, 0.0
  %v1221 = vadd.f32 %v1191, %v1220
  %1222 = vadd.xlane.f32.xlu0 %v1221
  %v1223 = vpop.xlane.xlu0 %1222
  %v1224 = vsel %vm1211, %v1194, 0.0
  %v1225 = vadd.f32 %v1193, %v1224
  %1226 = vadd.xlane.f32.xlu0 %v1225
  %v1227 = vpop.xlane.xlu0 %1226
  %v1228 = vsel %vm1211, %v1196, 0.0
  %v1229 = vadd.f32 %v1195, %v1228
  %1230 = vadd.xlane.f32.xlu0 %v1229
  %v1231 = vpop.xlane.xlu0 %1230
  %v1232 = vsel %vm1211, %v1198, 0.0
  %v1233 = vadd.f32 %v1197, %v1232
  %1234 = vadd.xlane.f32.xlu0 %v1233
  %v1235 = vpop.xlane.xlu0 %1234
  %v1236 = vsel %vm1211, %v1200, 0.0
  %v1237 = vadd.f32 %v1199, %v1236
  %1238 = vadd.xlane.f32.xlu0 %v1237
  %v1239 = vpop.xlane.xlu0 %1238
  %v1240 = vsel %vm1211, %v1202, 0.0
  %v1241 = vadd.f32 %v1201, %v1240
  %1242 = vadd.xlane.f32.xlu0 %v1241
  %v1243 = vpop.xlane.xlu0 %1242
  %v1244 = vsel %vm1211, %v1204, 0.0
  %v1245 = vadd.f32 %v1203, %v1244
  %1246 = vadd.xlane.f32.xlu0 %v1245
  %v1247 = vpop.xlane.xlu0 %1246
  %v1248 = vsel %vm1211, %v1206, 0.0
  %v1249 = vadd.f32 %v1205, %v1248
  %1250 = vadd.xlane.f32.xlu0 %v1249
  %v1251 = vpop.xlane.xlu0 %1250
  %v1252 = vsel %vm1211, %v1208, 0.0
  %v1253 = vadd.f32 %v1207, %v1252
  %1254 = vadd.xlane.f32.xlu0 %v1253
  %v1255 = vpop.xlane.xlu0 %1254
  %v1256 = vsel %vm1211, %v1210, 0.0
  %v1257 = vadd.f32 %v1209, %v1256
  %1258 = vadd.xlane.f32.xlu0 %v1257
  %v1259 = vpop.xlane.xlu0 %1258
  %v1260 = vld [vmem:[#allocation2] sm:$0x1]
  %v1262 = vlaneseq
  %v1263 = vshrl.u32 %v1262, 7
  %v1264 = vsub.s32 0, %v1263
  %v1265 = vrot.slane %v1260, %v1264
  %1266 = vset.pattern.permute.xlu0 0
  %1267 = vperm.xlu0 %1266, %v1265
  %v1268 = vpop.permute.xlu0 %1267
  %v1270 = vadd.f32 %v1215, %v1268
  %v1271 = vadd.f32 %v1219, %v1268
  %v1272 = vadd.f32 %v1223, %v1268
  %v1273 = vadd.f32 %v1227, %v1268
  %v1274 = vadd.f32 %v1231, %v1268
  %v1275 = vadd.f32 %v1235, %v1268
  %v1276 = vadd.f32 %v1239, %v1268
  %v1277 = vadd.f32 %v1243, %v1268
  %v1278 = vadd.f32 %v1247, %v1268
  %v1279 = vadd.f32 %v1251, %v1268
  %v1280 = vadd.f32 %v1255, %v1268
  %v1281 = vadd.f32 %v1259, %v1268
  %v1282 = vlaneseq
  %v1283 = vand.u32 %v1282, 127
  %vm1284 = vcmp.lt.s32.totalorder %v1283, 8
  %v1297 = vlaneseq
  %v1298 = vshrl.u32 %v1297, 7
  %v1299 = vsub.s32 %v1283, %v1298
  %v1300 = vrot.slane %v1270, %v1299
  %v1301 = vadd.s32 %v1283, 4294967288
  %v1302 = vlaneseq
  %v1303 = vshrl.u32 %v1302, 7
  %v1304 = vsub.s32 %v1301, %v1303
  %v1305 = vrot.slane %v1271, %v1304
  %vm1306 = vcmask 130112
  %v1307 = vsel %vm1306, %v1305, %v1300
  %v1308 = vlaneseq
  %v1309 = vshrl.u32 %v1308, 7
  %v1310 = vsub.s32 %v1283, %v1309
  %v1311 = vrot.slane %v1272, %v1310
  %v1312 = vlaneseq
  %v1313 = vshrl.u32 %v1312, 7
  %v1314 = vsub.s32 %v1301, %v1313
  %v1315 = vrot.slane %v1273, %v1314
  %v1316 = vsel %vm1306, %v1315, %v1311
  %v1317 = vlaneseq
  %v1318 = vshrl.u32 %v1317, 7
  %v1319 = vsub.s32 %v1283, %v1318
  %v1320 = vrot.slane %v1274, %v1319
  %v1321 = vlaneseq
  %v1322 = vshrl.u32 %v1321, 7
  %v1323 = vsub.s32 %v1301, %v1322
  %v1324 = vrot.slane %v1275, %v1323
  %v1325 = vsel %vm1306, %v1324, %v1320
  %v1326 = vlaneseq
  %v1327 = vshrl.u32 %v1326, 7
  %v1328 = vsub.s32 %v1283, %v1327
  %v1329 = vrot.slane %v1276, %v1328
  %v1330 = vlaneseq
  %v1331 = vshrl.u32 %v1330, 7
  %v1332 = vsub.s32 %v1301, %v1331
  %v1333 = vrot.slane %v1277, %v1332
  %v1334 = vsel %vm1306, %v1333, %v1329
  %v1335 = vlaneseq
  %v1336 = vshrl.u32 %v1335, 7
  %v1337 = vsub.s32 %v1283, %v1336
  %v1338 = vrot.slane %v1278, %v1337
  %v1339 = vlaneseq
  %v1340 = vshrl.u32 %v1339, 7
  %v1341 = vsub.s32 %v1301, %v1340
  %v1342 = vrot.slane %v1279, %v1341
  %v1343 = vsel %vm1306, %v1342, %v1338
  %v1344 = vlaneseq
  %v1345 = vshrl.u32 %v1344, 7
  %v1346 = vsub.s32 %v1283, %v1345
  %v1347 = vrot.slane %v1280, %v1346
  %v1348 = vlaneseq
  %v1349 = vshrl.u32 %v1348, 7
  %v1350 = vsub.s32 %v1301, %v1349
  %v1351 = vrot.slane %v1281, %v1350
  %v1352 = vsel %vm1306, %v1351, %v1347
  %vm1353 = vcmask 1041409
  %v1354 = vsel %vm1353, %v1316, %v1307
  %vm1355 = vcmask 1042434
  %v1356 = vsel %vm1355, %v1325, %v1354
  %vm1357 = vcmask 1043459
  %v1358 = vsel %vm1357, %v1334, %v1356
  %vm1359 = vcmask 1044484
  %v1360 = vsel %vm1359, %v1343, %v1358
  %vm1361 = vcmask 1045509
  %v1362 = vsel %vm1361, %v1352, %v1360
  %v1364 = vsel %vm1284, %v1362, -1e+09
  %vm1365 = vcmask 128000
  %v1366 = vsel %vm1365, %v1364, -inf
  %1367 = vmax.xlane.f32.xlu0 %v1366
  %v1368 = vpop.xlane.xlu0 %1367
  %v1369 = vsub.f32 %v1364, %v1368
  %v1370 = vmul.f32 %v1369, 1.442695
  %v1371 = vpow.pop %v1370
  %v1372 = vsel %vm1365, %v1371, 0.0
  %1373 = vadd.xlane.f32.xlu0 %v1372
  %v1374 = vpop.xlane.xlu0 %1373
  %v1375 = vrcp.pop %v1374
  %v1376 = vmul.f32 %v1371, %v1375
  %v1378 = vcombine.high %v1376, %v1376
  %v1380 = vunpack.c.l.s4 1966171168
  %v1381 = vunpack.c.0.s8 %v1380
  %v1382 = vlaneseq
  %v1383 = vshrl.u32 %v1382, 7
  %v1384 = vsub.s32 %v1381, %v1383
  %v1385 = vrot.slane %v1376, %v1384
  %v1387 = vunpack.c.l.s4 1966171168
  %v1388 = vunpack.c.0.s8 %v1387
  %v1389 = vlaneseq
  %v1390 = vshrl.u32 %v1389, 7
  %v1391 = vsub.s32 %v1388, %v1390
  %v1392 = vrot.slane %v1378, %v1391
  %v1393 = vcombine.high %v1385, %v1385
  %v1394 = vcombine.high %v1392, %v1392
  %v1396 = vunpack.c.l.s4 1966171168
  %v1397 = vunpack.c.0.s8 %v1396
  %v1398 = vlaneseq
  %v1399 = vshrl.u32 %v1398, 7
  %v1400 = vsub.s32 %v1397, %v1399
  %v1401 = vrot.slane %v1385, %v1400
  %v1403 = vunpack.c.l.s4 1966171168
  %v1404 = vunpack.c.0.s8 %v1403
  %v1405 = vlaneseq
  %v1406 = vshrl.u32 %v1405, 7
  %v1407 = vsub.s32 %v1404, %v1406
  %v1408 = vrot.slane %v1392, %v1407
  %v1410 = vunpack.c.l.s4 1966171168
  %v1411 = vunpack.c.0.s8 %v1410
  %v1412 = vlaneseq
  %v1413 = vshrl.u32 %v1412, 7
  %v1414 = vsub.s32 %v1411, %v1413
  %v1415 = vrot.slane %v1393, %v1414
  %v1417 = vunpack.c.l.s4 1966171168
  %v1418 = vunpack.c.0.s8 %v1417
  %v1419 = vlaneseq
  %v1420 = vshrl.u32 %v1419, 7
  %v1421 = vsub.s32 %v1418, %v1420
  %v1422 = vrot.slane %v1394, %v1421
  %v1423 = vcombine.high %v1401, %v1401
  %v1424 = vcombine.high %v1415, %v1415
  %v1425 = vsel %vm946, %v1401, 0
  %1427 = vmatprep.subr.mxu0 %v461
  %1428 = vmatpush1.msra.mxu0 %v459
  %1429 = vmatprep.subr.mxu0 %v465
  %1430 = vmatpush1.msra.mxu0 %v463
  %1431 = vmatprep.subr.mxu0 0.0
  %1432 = vmatpush1.msra.mxu0 0.0
  %1433 = vmatprep.subr.mxu0 0.0
  %1434 = vmatpush1.msra.mxu0 0.0
  %1435 = vmatprep.subr.mxu0 0.0
  %1436 = vmatpush1.msra.mxu0 0.0
  %1437 = vmatprep.subr.mxu0 0.0
  %1438 = vmatpush1.msra.mxu0 0.0
  %1439 = vmatprep.subr.mxu0 0.0
  %1440 = vmatpush1.msra.mxu0 0.0
  %1441 = vmatprep.subr.mxu0 0.0
  %1442 = vmatpush1.msra.mxu0 0.0
  %1443 = vmatprep.subr.mxu0 0.0
  %1444 = vmatpush1.msra.mxu0 0.0
  %1445 = vmatprep.subr.mxu0 0.0
  %1446 = vmatpush1.msra.mxu0 0.0
  %1447 = vmatprep.subr.mxu0 0.0
  %1448 = vmatpush1.msra.mxu0 0.0
  %1449 = vmatprep.subr.mxu0 0.0
  %1450 = vmatpush1.msra.mxu0 0.0
  %1451 = vmatprep.subr.mxu0 0.0
  %1452 = vmatpush1.msra.mxu0 0.0
  %1453 = vmatprep.subr.mxu0 0.0
  %1454 = vmatpush1.msra.mxu0 0.0
  %1455 = vmatprep.subr.mxu0 0.0
  %1456 = vmatpush1.msra.mxu0 0.0
  %1457 = vmatprep.subr.mxu0 0.0
  %1458 = vmatpush1.msra.mxu0 0.0
  %1459 = vmatprep.subr.mxu0 0.0
  %1460 = vmatpush1.msra.mxu0 0.0
  %1461 = vmatprep.subr.mxu0 0.0
  %1462 = vmatpush1.msra.mxu0 0.0
  %1463 = vmatprep.subr.mxu0 0.0
  %1464 = vmatpush1.msra.mxu0 0.0
  %1465 = vmatprep.subr.mxu0 0.0
  %1466 = vmatpush1.msra.mxu0 0.0
  %1467 = vmatprep.subr.mxu0 0.0
  %1468 = vmatpush1.msra.mxu0 0.0
  %1469 = vmatprep.subr.mxu0 0.0
  %1470 = vmatpush1.msra.mxu0 0.0
  %1471 = vmatprep.subr.mxu0 0.0
  %1472 = vmatpush1.msra.mxu0 0.0
  %1473 = vmatprep.subr.mxu0 0.0
  %1474 = vmatpush1.msra.mxu0 0.0
  %1475 = vmatprep.subr.mxu0 0.0
  %1476 = vmatpush1.msra.mxu0 0.0
  %1477 = vmatprep.subr.mxu0 0.0
  %1478 = vmatpush1.msra.mxu0 0.0
  %1479 = vmatprep.subr.mxu0 0.0
  %1480 = vmatpush1.msra.mxu0 0.0
  %1481 = vmatprep.subr.mxu0 0.0
  %1482 = vmatpush1.msra.mxu0 0.0
  %1483 = vmatprep.subr.mxu0 0.0
  %1484 = vmatpush1.msra.mxu0 0.0
  %1485 = vmatprep.subr.mxu0 0.0
  %1486 = vmatpush1.msra.mxu0 0.0
  %1487 = vmatprep.subr.mxu0 0.0
  %1488 = vmatpush1.msra.mxu0 0.0
  %1489 = vmatprep.subr.mxu0 0.0
  %1490 = vmatpush1.msra.mxu0 0.0
  %1491 = vmatprep.mubr.f32.mxu0 0.0
  %1492 = vmatmul.mubr.f32.gmra.mrb[0].mxu0 %v1425
  %v1493 = vpop.f32.mrb[0].mxu0
  %v1494 = vadd.f32 0.0, %v1493
  %v1495 = vpop.f32.mrb[0].mxu0
  %v1496 = vadd.f32 0.0, %v1495
  %1497 = vdwg.mxu0
  %1498 = vmatprep.subr.mxu0 %v554
  %1499 = vmatpush1.msra.mxu0 %v552
  %1500 = vmatprep.subr.mxu0 %v558
  %1501 = vmatpush1.msra.mxu0 %v556
  %1502 = vmatprep.subr.mxu0 0.0
  %1503 = vmatpush1.msra.mxu0 0.0
  %1504 = vmatprep.subr.mxu0 0.0
  %1505 = vmatpush1.msra.mxu0 0.0
  %1506 = vmatprep.subr.mxu0 0.0
  %1507 = vmatpush1.msra.mxu0 0.0
  %1508 = vmatprep.subr.mxu0 0.0
  %1509 = vmatpush1.msra.mxu0 0.0
  %1510 = vmatprep.subr.mxu0 0.0
  %1511 = vmatpush1.msra.mxu0 0.0
  %1512 = vmatprep.subr.mxu0 0.0
  %1513 = vmatpush1.msra.mxu0 0.0
  %1514 = vmatprep.subr.mxu0 0.0
  %1515 = vmatpush1.msra.mxu0 0.0
  %1516 = vmatprep.subr.mxu0 0.0
  %1517 = vmatpush1.msra.mxu0 0.0
  %1518 = vmatprep.subr.mxu0 0.0
  %1519 = vmatpush1.msra.mxu0 0.0
  %1520 = vmatprep.subr.mxu0 0.0
  %1521 = vmatpush1.msra.mxu0 0.0
  %1522 = vmatprep.subr.mxu0 0.0
  %1523 = vmatpush1.msra.mxu0 0.0
  %1524 = vmatprep.subr.mxu0 0.0
  %1525 = vmatpush1.msra.mxu0 0.0
  %1526 = vmatprep.subr.mxu0 0.0
  %1527 = vmatpush1.msra.mxu0 0.0
  %1528 = vmatprep.subr.mxu0 0.0
  %1529 = vmatpush1.msra.mxu0 0.0
  %1530 = vmatprep.subr.mxu0 0.0
  %1531 = vmatpush1.msra.mxu0 0.0
  %1532 = vmatprep.subr.mxu0 0.0
  %1533 = vmatpush1.msra.mxu0 0.0
  %1534 = vmatprep.subr.mxu0 0.0
  %1535 = vmatpush1.msra.mxu0 0.0
  %1536 = vmatprep.subr.mxu0 0.0
  %1537 = vmatpush1.msra.mxu0 0.0
  %1538 = vmatprep.subr.mxu0 0.0
  %1539 = vmatpush1.msra.mxu0 0.0
  %1540 = vmatprep.subr.mxu0 0.0
  %1541 = vmatpush1.msra.mxu0 0.0
  %1542 = vmatprep.subr.mxu0 0.0
  %1543 = vmatpush1.msra.mxu0 0.0
  %1544 = vmatprep.subr.mxu0 0.0
  %1545 = vmatpush1.msra.mxu0 0.0
  %1546 = vmatprep.subr.mxu0 0.0
  %1547 = vmatpush1.msra.mxu0 0.0
  %1548 = vmatprep.subr.mxu0 0.0
  %1549 = vmatpush1.msra.mxu0 0.0
  %1550 = vmatprep.subr.mxu0 0.0
  %1551 = vmatpush1.msra.mxu0 0.0
  %1552 = vmatprep.subr.mxu0 0.0
  %1553 = vmatpush1.msra.mxu0 0.0
  %1554 = vmatprep.subr.mxu0 0.0
  %1555 = vmatpush1.msra.mxu0 0.0
  %1556 = vmatprep.subr.mxu0 0.0
  %1557 = vmatpush1.msra.mxu0 0.0
  %1558 = vmatprep.subr.mxu0 0.0
  %1559 = vmatpush1.msra.mxu0 0.0
  %1560 = vmatprep.subr.mxu0 0.0
  %1561 = vmatpush1.msra.mxu0 0.0
  %1562 = vmatprep.mubr.f32.mxu0 0.0
  %1563 = vmatmul.mubr.f32.gmra.mrb[0].mxu0 %v1425
  %v1564 = vpop.f32.mrb[0].mxu0
  %v1565 = vadd.f32 0.0, %v1564
  %v1566 = vpop.f32.mrb[0].mxu0
  %v1567 = vadd.f32 0.0, %v1566
  %1568 = vdwg.mxu0
  %v1569 = vsel %vm946, %v1415, 0
  %1571 = vmatprep.subr.mxu0 %v471
  %1572 = vmatpush1.msra.mxu0 %v469
  %1573 = vmatprep.subr.mxu0 %v475
  %1574 = vmatpush1.msra.mxu0 %v473
  %1575 = vmatprep.subr.mxu0 0.0
  %1576 = vmatpush1.msra.mxu0 0.0
  %1577 = vmatprep.subr.mxu0 0.0
  %1578 = vmatpush1.msra.mxu0 0.0
  %1579 = vmatprep.subr.mxu0 0.0
  %1580 = vmatpush1.msra.mxu0 0.0
  %1581 = vmatprep.subr.mxu0 0.0
  %1582 = vmatpush1.msra.mxu0 0.0
  %1583 = vmatprep.subr.mxu0 0.0
  %1584 = vmatpush1.msra.mxu0 0.0
  %1585 = vmatprep.subr.mxu0 0.0
  %1586 = vmatpush1.msra.mxu0 0.0
  %1587 = vmatprep.subr.mxu0 0.0
  %1588 = vmatpush1.msra.mxu0 0.0
  %1589 = vmatprep.subr.mxu0 0.0
  %1590 = vmatpush1.msra.mxu0 0.0
  %1591 = vmatprep.subr.mxu0 0.0
  %1592 = vmatpush1.msra.mxu0 0.0
  %1593 = vmatprep.subr.mxu0 0.0
  %1594 = vmatpush1.msra.mxu0 0.0
  %1595 = vmatprep.subr.mxu0 0.0
  %1596 = vmatpush1.msra.mxu0 0.0
  %1597 = vmatprep.subr.mxu0 0.0
  %1598 = vmatpush1.msra.mxu0 0.0
  %1599 = vmatprep.subr.mxu0 0.0
  %1600 = vmatpush1.msra.mxu0 0.0
  %1601 = vmatprep.subr.mxu0 0.0
  %1602 = vmatpush1.msra.mxu0 0.0
  %1603 = vmatprep.subr.mxu0 0.0
  %1604 = vmatpush1.msra.mxu0 0.0
  %1605 = vmatprep.subr.mxu0 0.0
  %1606 = vmatpush1.msra.mxu0 0.0
  %1607 = vmatprep.subr.mxu0 0.0
  %1608 = vmatpush1.msra.mxu0 0.0
  %1609 = vmatprep.subr.mxu0 0.0
  %1610 = vmatpush1.msra.mxu0 0.0
  %1611 = vmatprep.subr.mxu0 0.0
  %1612 = vmatpush1.msra.mxu0 0.0
  %1613 = vmatprep.subr.mxu0 0.0
  %1614 = vmatpush1.msra.mxu0 0.0
  %1615 = vmatprep.subr.mxu0 0.0
  %1616 = vmatpush1.msra.mxu0 0.0
  %1617 = vmatprep.subr.mxu0 0.0
  %1618 = vmatpush1.msra.mxu0 0.0
  %1619 = vmatprep.subr.mxu0 0.0
  %1620 = vmatpush1.msra.mxu0 0.0
  %1621 = vmatprep.subr.mxu0 0.0
  %1622 = vmatpush1.msra.mxu0 0.0
  %1623 = vmatprep.subr.mxu0 0.0
  %1624 = vmatpush1.msra.mxu0 0.0
  %1625 = vmatprep.subr.mxu0 0.0
  %1626 = vmatpush1.msra.mxu0 0.0
  %1627 = vmatprep.subr.mxu0 0.0
  %1628 = vmatpush1.msra.mxu0 0.0
  %1629 = vmatprep.subr.mxu0 0.0
  %1630 = vmatpush1.msra.mxu0 0.0
  %1631 = vmatprep.subr.mxu0 0.0
  %1632 = vmatpush1.msra.mxu0 0.0
  %1633 = vmatprep.subr.mxu0 0.0
  %1634 = vmatpush1.msra.mxu0 0.0
  %1635 = vmatprep.mubr.f32.mxu0 0.0
  %1636 = vmatmul.mubr.f32.gmra.mrb[0].mxu0 %v1569
  %v1637 = vpop.f32.mrb[0].mxu0
  %v1638 = vadd.f32 0.0, %v1637
  %v1639 = vpop.f32.mrb[0].mxu0
  %v1640 = vadd.f32 0.0, %v1639
  %1641 = vdwg.mxu0
  %1642 = vmatprep.subr.mxu0 %v564
  %1643 = vmatpush1.msra.mxu0 %v562
  %1644 = vmatprep.subr.mxu0 %v568
  %1645 = vmatpush1.msra.mxu0 %v566
  %1646 = vmatprep.subr.mxu0 0.0
  %1647 = vmatpush1.msra.mxu0 0.0
  %1648 = vmatprep.subr.mxu0 0.0
  %1649 = vmatpush1.msra.mxu0 0.0
  %1650 = vmatprep.subr.mxu0 0.0
  %1651 = vmatpush1.msra.mxu0 0.0
  %1652 = vmatprep.subr.mxu0 0.0
  %1653 = vmatpush1.msra.mxu0 0.0
  %1654 = vmatprep.subr.mxu0 0.0
  %1655 = vmatpush1.msra.mxu0 0.0
  %1656 = vmatprep.subr.mxu0 0.0
  %1657 = vmatpush1.msra.mxu0 0.0
  %1658 = vmatprep.subr.mxu0 0.0
  %1659 = vmatpush1.msra.mxu0 0.0
  %1660 = vmatprep.subr.mxu0 0.0
  %1661 = vmatpush1.msra.mxu0 0.0
  %1662 = vmatprep.subr.mxu0 0.0
  %1663 = vmatpush1.msra.mxu0 0.0
  %1664 = vmatprep.subr.mxu0 0.0
  %1665 = vmatpush1.msra.mxu0 0.0
  %1666 = vmatprep.subr.mxu0 0.0
  %1667 = vmatpush1.msra.mxu0 0.0
  %1668 = vmatprep.subr.mxu0 0.0
  %1669 = vmatpush1.msra.mxu0 0.0
  %1670 = vmatprep.subr.mxu0 0.0
  %1671 = vmatpush1.msra.mxu0 0.0
  %1672 = vmatprep.subr.mxu0 0.0
  %1673 = vmatpush1.msra.mxu0 0.0
  %1674 = vmatprep.subr.mxu0 0.0
  %1675 = vmatpush1.msra.mxu0 0.0
  %1676 = vmatprep.subr.mxu0 0.0
  %1677 = vmatpush1.msra.mxu0 0.0
  %1678 = vmatprep.subr.mxu0 0.0
  %1679 = vmatpush1.msra.mxu0 0.0
  %1680 = vmatprep.subr.mxu0 0.0
  %1681 = vmatpush1.msra.mxu0 0.0
  %1682 = vmatprep.subr.mxu0 0.0
  %1683 = vmatpush1.msra.mxu0 0.0
  %1684 = vmatprep.subr.mxu0 0.0
  %1685 = vmatpush1.msra.mxu0 0.0
  %1686 = vmatprep.subr.mxu0 0.0
  %1687 = vmatpush1.msra.mxu0 0.0
  %1688 = vmatprep.subr.mxu0 0.0
  %1689 = vmatpush1.msra.mxu0 0.0
  %1690 = vmatprep.subr.mxu0 0.0
  %1691 = vmatpush1.msra.mxu0 0.0
  %1692 = vmatprep.subr.mxu0 0.0
  %1693 = vmatpush1.msra.mxu0 0.0
  %1694 = vmatprep.subr.mxu0 0.0
  %1695 = vmatpush1.msra.mxu0 0.0
  %1696 = vmatprep.subr.mxu0 0.0
  %1697 = vmatpush1.msra.mxu0 0.0
  %1698 = vmatprep.subr.mxu0 0.0
  %1699 = vmatpush1.msra.mxu0 0.0
  %1700 = vmatprep.subr.mxu0 0.0
  %1701 = vmatpush1.msra.mxu0 0.0
  %1702 = vmatprep.subr.mxu0 0.0
  %1703 = vmatpush1.msra.mxu0 0.0
  %1704 = vmatprep.subr.mxu0 0.0
  %1705 = vmatpush1.msra.mxu0 0.0
  %1706 = vmatprep.mubr.f32.mxu0 0.0
  %1707 = vmatmul.mubr.f32.gmra.mrb[0].mxu0 %v1569
  %v1708 = vpop.f32.mrb[0].mxu0
  %v1709 = vadd.f32 0.0, %v1708
  %v1710 = vpop.f32.mrb[0].mxu0
  %v1711 = vadd.f32 0.0, %v1710
  %1712 = vdwg.mxu0
  %v1713 = vsel %vm946, %v1423, 0
  %1715 = vmatprep.subr.mxu0 %v481
  %1716 = vmatpush1.msra.mxu0 %v479
  %1717 = vmatprep.subr.mxu0 %v485
  %1718 = vmatpush1.msra.mxu0 %v483
  %1719 = vmatprep.subr.mxu0 0.0
  %1720 = vmatpush1.msra.mxu0 0.0
  %1721 = vmatprep.subr.mxu0 0.0
  %1722 = vmatpush1.msra.mxu0 0.0
  %1723 = vmatprep.subr.mxu0 0.0
  %1724 = vmatpush1.msra.mxu0 0.0
  %1725 = vmatprep.subr.mxu0 0.0
  %1726 = vmatpush1.msra.mxu0 0.0
  %1727 = vmatprep.subr.mxu0 0.0
  %1728 = vmatpush1.msra.mxu0 0.0
  %1729 = vmatprep.subr.mxu0 0.0
  %1730 = vmatpush1.msra.mxu0 0.0
  %1731 = vmatprep.subr.mxu0 0.0
  %1732 = vmatpush1.msra.mxu0 0.0
  %1733 = vmatprep.subr.mxu0 0.0
  %1734 = vmatpush1.msra.mxu0 0.0
  %1735 = vmatprep.subr.mxu0 0.0
  %1736 = vmatpush1.msra.mxu0 0.0
  %1737 = vmatprep.subr.mxu0 0.0
  %1738 = vmatpush1.msra.mxu0 0.0
  %1739 = vmatprep.subr.mxu0 0.0
  %1740 = vmatpush1.msra.mxu0 0.0
  %1741 = vmatprep.subr.mxu0 0.0
  %1742 = vmatpush1.msra.mxu0 0.0
  %1743 = vmatprep.subr.mxu0 0.0
  %1744 = vmatpush1.msra.mxu0 0.0
  %1745 = vmatprep.subr.mxu0 0.0
  %1746 = vmatpush1.msra.mxu0 0.0
  %1747 = vmatprep.subr.mxu0 0.0
  %1748 = vmatpush1.msra.mxu0 0.0
  %1749 = vmatprep.subr.mxu0 0.0
  %1750 = vmatpush1.msra.mxu0 0.0
  %1751 = vmatprep.subr.mxu0 0.0
  %1752 = vmatpush1.msra.mxu0 0.0
  %1753 = vmatprep.subr.mxu0 0.0
  %1754 = vmatpush1.msra.mxu0 0.0
  %1755 = vmatprep.subr.mxu0 0.0
  %1756 = vmatpush1.msra.mxu0 0.0
  %1757 = vmatprep.subr.mxu0 0.0
  %1758 = vmatpush1.msra.mxu0 0.0
  %1759 = vmatprep.subr.mxu0 0.0
  %1760 = vmatpush1.msra.mxu0 0.0
  %1761 = vmatprep.subr.mxu0 0.0
  %1762 = vmatpush1.msra.mxu0 0.0
  %1763 = vmatprep.subr.mxu0 0.0
  %1764 = vmatpush1.msra.mxu0 0.0
  %1765 = vmatprep.subr.mxu0 0.0
  %1766 = vmatpush1.msra.mxu0 0.0
  %1767 = vmatprep.subr.mxu0 0.0
  %1768 = vmatpush1.msra.mxu0 0.0
  %1769 = vmatprep.subr.mxu0 0.0
  %1770 = vmatpush1.msra.mxu0 0.0
  %1771 = vmatprep.subr.mxu0 0.0
  %1772 = vmatpush1.msra.mxu0 0.0
  %1773 = vmatprep.subr.mxu0 0.0
  %1774 = vmatpush1.msra.mxu0 0.0
  %1775 = vmatprep.subr.mxu0 0.0
  %1776 = vmatpush1.msra.mxu0 0.0
  %1777 = vmatprep.subr.mxu0 0.0
  %1778 = vmatpush1.msra.mxu0 0.0
  %1779 = vmatprep.mubr.f32.mxu0 0.0
  %1780 = vmatmul.mubr.f32.gmra.mrb[0].mxu0 %v1713
  %v1781 = vpop.f32.mrb[0].mxu0
  %v1782 = vadd.f32 0.0, %v1781
  %v1783 = vpop.f32.mrb[0].mxu0
  %v1784 = vadd.f32 0.0, %v1783
  %1785 = vdwg.mxu0
  %1786 = vmatprep.subr.mxu0 %v574
  %1787 = vmatpush1.msra.mxu0 %v572
  %1788 = vmatprep.subr.mxu0 %v578
  %1789 = vmatpush1.msra.mxu0 %v576
  %1790 = vmatprep.subr.mxu0 0.0
  %1791 = vmatpush1.msra.mxu0 0.0
  %1792 = vmatprep.subr.mxu0 0.0
  %1793 = vmatpush1.msra.mxu0 0.0
  %1794 = vmatprep.subr.mxu0 0.0
  %1795 = vmatpush1.msra.mxu0 0.0
  %1796 = vmatprep.subr.mxu0 0.0
  %1797 = vmatpush1.msra.mxu0 0.0
  %1798 = vmatprep.subr.mxu0 0.0
  %1799 = vmatpush1.msra.mxu0 0.0
  %1800 = vmatprep.subr.mxu0 0.0
  %1801 = vmatpush1.msra.mxu0 0.0
  %1802 = vmatprep.subr.mxu0 0.0
  %1803 = vmatpush1.msra.mxu0 0.0
  %1804 = vmatprep.subr.mxu0 0.0
  %1805 = vmatpush1.msra.mxu0 0.0
  %1806 = vmatprep.subr.mxu0 0.0
  %1807 = vmatpush1.msra.mxu0 0.0
  %1808 = vmatprep.subr.mxu0 0.0
  %1809 = vmatpush1.msra.mxu0 0.0
  %1810 = vmatprep.subr.mxu0 0.0
  %1811 = vmatpush1.msra.mxu0 0.0
  %1812 = vmatprep.subr.mxu0 0.0
  %1813 = vmatpush1.msra.mxu0 0.0
  %1814 = vmatprep.subr.mxu0 0.0
  %1815 = vmatpush1.msra.mxu0 0.0
  %1816 = vmatprep.subr.mxu0 0.0
  %1817 = vmatpush1.msra.mxu0 0.0
  %1818 = vmatprep.subr.mxu0 0.0
  %1819 = vmatpush1.msra.mxu0 0.0
  %1820 = vmatprep.subr.mxu0 0.0
  %1821 = vmatpush1.msra.mxu0 0.0
  %1822 = vmatprep.subr.mxu0 0.0
  %1823 = vmatpush1.msra.mxu0 0.0
  %1824 = vmatprep.subr.mxu0 0.0
  %1825 = vmatpush1.msra.mxu0 0.0
  %1826 = vmatprep.subr.mxu0 0.0
  %1827 = vmatpush1.msra.mxu0 0.0
  %1828 = vmatprep.subr.mxu0 0.0
  %1829 = vmatpush1.msra.mxu0 0.0
  %1830 = vmatprep.subr.mxu0 0.0
  %1831 = vmatpush1.msra.mxu0 0.0
  %1832 = vmatprep.subr.mxu0 0.0
  %1833 = vmatpush1.msra.mxu0 0.0
  %1834 = vmatprep.subr.mxu0 0.0
  %1835 = vmatpush1.msra.mxu0 0.0
  %1836 = vmatprep.subr.mxu0 0.0
  %1837 = vmatpush1.msra.mxu0 0.0
  %1838 = vmatprep.subr.mxu0 0.0
  %1839 = vmatpush1.msra.mxu0 0.0
  %1840 = vmatprep.subr.mxu0 0.0
  %1841 = vmatpush1.msra.mxu0 0.0
  %1842 = vmatprep.subr.mxu0 0.0
  %1843 = vmatpush1.msra.mxu0 0.0
  %1844 = vmatprep.subr.mxu0 0.0
  %1845 = vmatpush1.msra.mxu0 0.0
  %1846 = vmatprep.subr.mxu0 0.0
  %1847 = vmatpush1.msra.mxu0 0.0
  %1848 = vmatprep.subr.mxu0 0.0
  %1849 = vmatpush1.msra.mxu0 0.0
  %1850 = vmatprep.mubr.f32.mxu0 0.0
  %1851 = vmatmul.mubr.f32.gmra.mrb[0].mxu0 %v1713
  %v1852 = vpop.f32.mrb[0].mxu0
  %v1853 = vadd.f32 0.0, %v1852
  %v1854 = vpop.f32.mrb[0].mxu0
  %v1855 = vadd.f32 0.0, %v1854
  %1856 = vdwg.mxu0
  %v1857 = vsel %vm946, %v1424, 0
  %1859 = vmatprep.subr.mxu0 %v491
  %1860 = vmatpush1.msra.mxu0 %v489
  %1861 = vmatprep.subr.mxu0 %v495
  %1862 = vmatpush1.msra.mxu0 %v493
  %1863 = vmatprep.subr.mxu0 0.0
  %1864 = vmatpush1.msra.mxu0 0.0
  %1865 = vmatprep.subr.mxu0 0.0
  %1866 = vmatpush1.msra.mxu0 0.0
  %1867 = vmatprep.subr.mxu0 0.0
  %1868 = vmatpush1.msra.mxu0 0.0
  %1869 = vmatprep.subr.mxu0 0.0
  %1870 = vmatpush1.msra.mxu0 0.0
  %1871 = vmatprep.subr.mxu0 0.0
  %1872 = vmatpush1.msra.mxu0 0.0
  %1873 = vmatprep.subr.mxu0 0.0
  %1874 = vmatpush1.msra.mxu0 0.0
  %1875 = vmatprep.subr.mxu0 0.0
  %1876 = vmatpush1.msra.mxu0 0.0
  %1877 = vmatprep.subr.mxu0 0.0
  %1878 = vmatpush1.msra.mxu0 0.0
  %1879 = vmatprep.subr.mxu0 0.0
  %1880 = vmatpush1.msra.mxu0 0.0
  %1881 = vmatprep.subr.mxu0 0.0
  %1882 = vmatpush1.msra.mxu0 0.0
  %1883 = vmatprep.subr.mxu0 0.0
  %1884 = vmatpush1.msra.mxu0 0.0
  %1885 = vmatprep.subr.mxu0 0.0
  %1886 = vmatpush1.msra.mxu0 0.0
  %1887 = vmatprep.subr.mxu0 0.0
  %1888 = vmatpush1.msra.mxu0 0.0
  %1889 = vmatprep.subr.mxu0 0.0
  %1890 = vmatpush1.msra.mxu0 0.0
  %1891 = vmatprep.subr.mxu0 0.0
  %1892 = vmatpush1.msra.mxu0 0.0
  %1893 = vmatprep.subr.mxu0 0.0
  %1894 = vmatpush1.msra.mxu0 0.0
  %1895 = vmatprep.subr.mxu0 0.0
  %1896 = vmatpush1.msra.mxu0 0.0
  %1897 = vmatprep.subr.mxu0 0.0
  %1898 = vmatpush1.msra.mxu0 0.0
  %1899 = vmatprep.subr.mxu0 0.0
  %1900 = vmatpush1.msra.mxu0 0.0
  %1901 = vmatprep.subr.mxu0 0.0
  %1902 = vmatpush1.msra.mxu0 0.0
  %1903 = vmatprep.subr.mxu0 0.0
  %1904 = vmatpush1.msra.mxu0 0.0
  %1905 = vmatprep.subr.mxu0 0.0
  %1906 = vmatpush1.msra.mxu0 0.0
  %1907 = vmatprep.subr.mxu0 0.0
  %1908 = vmatpush1.msra.mxu0 0.0
  %1909 = vmatprep.subr.mxu0 0.0
  %1910 = vmatpush1.msra.mxu0 0.0
  %1911 = vmatprep.subr.mxu0 0.0
  %1912 = vmatpush1.msra.mxu0 0.0
  %1913 = vmatprep.subr.mxu0 0.0
  %1914 = vmatpush1.msra.mxu0 0.0
  %1915 = vmatprep.subr.mxu0 0.0
  %1916 = vmatpush1.msra.mxu0 0.0
  %1917 = vmatprep.subr.mxu0 0.0
  %1918 = vmatpush1.msra.mxu0 0.0
  %1919 = vmatprep.subr.mxu0 0.0
  %1920 = vmatpush1.msra.mxu0 0.0
  %1921 = vmatprep.subr.mxu0 0.0
  %1922 = vmatpush1.msra.mxu0 0.0
  %1923 = vmatprep.mubr.f32.mxu0 0.0
  %1924 = vmatmul.mubr.f32.gmra.mrb[0].mxu0 %v1857
  %v1925 = vpop.f32.mrb[0].mxu0
  %v1926 = vadd.f32 0.0, %v1925
  %v1927 = vpop.f32.mrb[0].mxu0
  %v1928 = vadd.f32 0.0, %v1927
  %1929 = vdwg.mxu0
  %1930 = vmatprep.subr.mxu0 %v584
  %1931 = vmatpush1.msra.mxu0 %v582
  %1932 = vmatprep.subr.mxu0 %v588
  %1933 = vmatpush1.msra.mxu0 %v586
  %1934 = vmatprep.subr.mxu0 0.0
  %1935 = vmatpush1.msra.mxu0 0.0
  %1936 = vmatprep.subr.mxu0 0.0
  %1937 = vmatpush1.msra.mxu0 0.0
  %1938 = vmatprep.subr.mxu0 0.0
  %1939 = vmatpush1.msra.mxu0 0.0
  %1940 = vmatprep.subr.mxu0 0.0
  %1941 = vmatpush1.msra.mxu0 0.0
  %1942 = vmatprep.subr.mxu0 0.0
  %1943 = vmatpush1.msra.mxu0 0.0
  %1944 = vmatprep.subr.mxu0 0.0
  %1945 = vmatpush1.msra.mxu0 0.0
  %1946 = vmatprep.subr.mxu0 0.0
  %1947 = vmatpush1.msra.mxu0 0.0
  %1948 = vmatprep.subr.mxu0 0.0
  %1949 = vmatpush1.msra.mxu0 0.0
  %1950 = vmatprep.subr.mxu0 0.0
  %1951 = vmatpush1.msra.mxu0 0.0
  %1952 = vmatprep.subr.mxu0 0.0
  %1953 = vmatpush1.msra.mxu0 0.0
  %1954 = vmatprep.subr.mxu0 0.0
  %1955 = vmatpush1.msra.mxu0 0.0
  %1956 = vmatprep.subr.mxu0 0.0
  %1957 = vmatpush1.msra.mxu0 0.0
  %1958 = vmatprep.subr.mxu0 0.0
  %1959 = vmatpush1.msra.mxu0 0.0
  %1960 = vmatprep.subr.mxu0 0.0
  %1961 = vmatpush1.msra.mxu0 0.0
  %1962 = vmatprep.subr.mxu0 0.0
  %1963 = vmatpush1.msra.mxu0 0.0
  %1964 = vmatprep.subr.mxu0 0.0
  %1965 = vmatpush1.msra.mxu0 0.0
  %1966 = vmatprep.subr.mxu0 0.0
  %1967 = vmatpush1.msra.mxu0 0.0
  %1968 = vmatprep.subr.mxu0 0.0
  %1969 = vmatpush1.msra.mxu0 0.0
  %1970 = vmatprep.subr.mxu0 0.0
  %1971 = vmatpush1.msra.mxu0 0.0
  %1972 = vmatprep.subr.mxu0 0.0
  %1973 = vmatpush1.msra.mxu0 0.0
  %1974 = vmatprep.subr.mxu0 0.0
  %1975 = vmatpush1.msra.mxu0 0.0
  %1976 = vmatprep.subr.mxu0 0.0
  %1977 = vmatpush1.msra.mxu0 0.0
  %1978 = vmatprep.subr.mxu0 0.0
  %1979 = vmatpush1.msra.mxu0 0.0
  %1980 = vmatprep.subr.mxu0 0.0
  %1981 = vmatpush1.msra.mxu0 0.0
  %1982 = vmatprep.subr.mxu0 0.0
  %1983 = vmatpush1.msra.mxu0 0.0
  %1984 = vmatprep.subr.mxu0 0.0
  %1985 = vmatpush1.msra.mxu0 0.0
  %1986 = vmatprep.subr.mxu0 0.0
  %1987 = vmatpush1.msra.mxu0 0.0
  %1988 = vmatprep.subr.mxu0 0.0
  %1989 = vmatpush1.msra.mxu0 0.0
  %1990 = vmatprep.subr.mxu0 0.0
  %1991 = vmatpush1.msra.mxu0 0.0
  %1992 = vmatprep.subr.mxu0 0.0
  %1993 = vmatpush1.msra.mxu0 0.0
  %1994 = vmatprep.mubr.f32.mxu0 0.0
  %1995 = vmatmul.mubr.f32.gmra.mrb[0].mxu0 %v1857
  %v1996 = vpop.f32.mrb[0].mxu0
  %v1997 = vadd.f32 0.0, %v1996
  %v1998 = vpop.f32.mrb[0].mxu0
  %v1999 = vadd.f32 0.0, %v1998
  %2000 = vdwg.mxu0
  %v2001 = vsel %vm946, %v1408, 0
  %2003 = vmatprep.subr.mxu0 %v501
  %2004 = vmatpush1.msra.mxu0 %v499
  %2005 = vmatprep.subr.mxu0 %v505
  %2006 = vmatpush1.msra.mxu0 %v503
  %2007 = vmatprep.subr.mxu0 0.0
  %2008 = vmatpush1.msra.mxu0 0.0
  %2009 = vmatprep.subr.mxu0 0.0
  %2010 = vmatpush1.msra.mxu0 0.0
  %2011 = vmatprep.subr.mxu0 0.0
  %2012 = vmatpush1.msra.mxu0 0.0
  %2013 = vmatprep.subr.mxu0 0.0
  %2014 = vmatpush1.msra.mxu0 0.0
  %2015 = vmatprep.subr.mxu0 0.0
  %2016 = vmatpush1.msra.mxu0 0.0
  %2017 = vmatprep.subr.mxu0 0.0
  %2018 = vmatpush1.msra.mxu0 0.0
  %2019 = vmatprep.subr.mxu0 0.0
  %2020 = vmatpush1.msra.mxu0 0.0
  %2021 = vmatprep.subr.mxu0 0.0
  %2022 = vmatpush1.msra.mxu0 0.0
  %2023 = vmatprep.subr.mxu0 0.0
  %2024 = vmatpush1.msra.mxu0 0.0
  %2025 = vmatprep.subr.mxu0 0.0
  %2026 = vmatpush1.msra.mxu0 0.0
  %2027 = vmatprep.subr.mxu0 0.0
  %2028 = vmatpush1.msra.mxu0 0.0
  %2029 = vmatprep.subr.mxu0 0.0
  %2030 = vmatpush1.msra.mxu0 0.0
  %2031 = vmatprep.subr.mxu0 0.0
  %2032 = vmatpush1.msra.mxu0 0.0
  %2033 = vmatprep.subr.mxu0 0.0
  %2034 = vmatpush1.msra.mxu0 0.0
  %2035 = vmatprep.subr.mxu0 0.0
  %2036 = vmatpush1.msra.mxu0 0.0
  %2037 = vmatprep.subr.mxu0 0.0
  %2038 = vmatpush1.msra.mxu0 0.0
  %2039 = vmatprep.subr.mxu0 0.0
  %2040 = vmatpush1.msra.mxu0 0.0
  %2041 = vmatprep.subr.mxu0 0.0
  %2042 = vmatpush1.msra.mxu0 0.0
  %2043 = vmatprep.subr.mxu0 0.0
  %2044 = vmatpush1.msra.mxu0 0.0
  %2045 = vmatprep.subr.mxu0 0.0
  %2046 = vmatpush1.msra.mxu0 0.0
  %2047 = vmatprep.subr.mxu0 0.0
  %2048 = vmatpush1.msra.mxu0 0.0
  %2049 = vmatprep.subr.mxu0 0.0
  %2050 = vmatpush1.msra.mxu0 0.0
  %2051 = vmatprep.subr.mxu0 0.0
  %2052 = vmatpush1.msra.mxu0 0.0
  %2053 = vmatprep.subr.mxu0 0.0
  %2054 = vmatpush1.msra.mxu0 0.0
  %2055 = vmatprep.subr.mxu0 0.0
  %2056 = vmatpush1.msra.mxu0 0.0
  %2057 = vmatprep.subr.mxu0 0.0
  %2058 = vmatpush1.msra.mxu0 0.0
  %2059 = vmatprep.subr.mxu0 0.0
  %2060 = vmatpush1.msra.mxu0 0.0
  %2061 = vmatprep.subr.mxu0 0.0
  %2062 = vmatpush1.msra.mxu0 0.0
  %2063 = vmatprep.subr.mxu0 0.0
  %2064 = vmatpush1.msra.mxu0 0.0
  %2065 = vmatprep.subr.mxu0 0.0
  %2066 = vmatpush1.msra.mxu0 0.0
  %2067 = vmatprep.mubr.f32.mxu0 0.0
  %2068 = vmatmul.mubr.f32.gmra.mrb[0].mxu0 %v2001
  %v2069 = vpop.f32.mrb[0].mxu0
  %v2070 = vadd.f32 0.0, %v2069
  %v2071 = vpop.f32.mrb[0].mxu0
  %v2072 = vadd.f32 0.0, %v2071
  %2073 = vdwg.mxu0
  %2074 = vmatprep.subr.mxu0 %v594
  %2075 = vmatpush1.msra.mxu0 %v592
  %2076 = vmatprep.subr.mxu0 %v598
  %2077 = vmatpush1.msra.mxu0 %v596
  %2078 = vmatprep.subr.mxu0 0.0
  %2079 = vmatpush1.msra.mxu0 0.0
  %2080 = vmatprep.subr.mxu0 0.0
  %2081 = vmatpush1.msra.mxu0 0.0
  %2082 = vmatprep.subr.mxu0 0.0
  %2083 = vmatpush1.msra.mxu0 0.0
  %2084 = vmatprep.subr.mxu0 0.0
  %2085 = vmatpush1.msra.mxu0 0.0
  %2086 = vmatprep.subr.mxu0 0.0
  %2087 = vmatpush1.msra.mxu0 0.0
  %2088 = vmatprep.subr.mxu0 0.0
  %2089 = vmatpush1.msra.mxu0 0.0
  %2090 = vmatprep.subr.mxu0 0.0
  %2091 = vmatpush1.msra.mxu0 0.0
  %2092 = vmatprep.subr.mxu0 0.0
  %2093 = vmatpush1.msra.mxu0 0.0
  %2094 = vmatprep.subr.mxu0 0.0
  %2095 = vmatpush1.msra.mxu0 0.0
  %2096 = vmatprep.subr.mxu0 0.0
  %2097 = vmatpush1.msra.mxu0 0.0
  %2098 = vmatprep.subr.mxu0 0.0
  %2099 = vmatpush1.msra.mxu0 0.0
  %2100 = vmatprep.subr.mxu0 0.0
  %2101 = vmatpush1.msra.mxu0 0.0
  %2102 = vmatprep.subr.mxu0 0.0
  %2103 = vmatpush1.msra.mxu0 0.0
  %2104 = vmatprep.subr.mxu0 0.0
  %2105 = vmatpush1.msra.mxu0 0.0
  %2106 = vmatprep.subr.mxu0 0.0
  %2107 = vmatpush1.msra.mxu0 0.0
  %2108 = vmatprep.subr.mxu0 0.0
  %2109 = vmatpush1.msra.mxu0 0.0
  %2110 = vmatprep.subr.mxu0 0.0
  %2111 = vmatpush1.msra.mxu0 0.0
  %2112 = vmatprep.subr.mxu0 0.0
  %2113 = vmatpush1.msra.mxu0 0.0
  %2114 = vmatprep.subr.mxu0 0.0
  %2115 = vmatpush1.msra.mxu0 0.0
  %2116 = vmatprep.subr.mxu0 0.0
  %2117 = vmatpush1.msra.mxu0 0.0
  %2118 = vmatprep.subr.mxu0 0.0
  %2119 = vmatpush1.msra.mxu0 0.0
  %2120 = vmatprep.subr.mxu0 0.0
  %2121 = vmatpush1.msra.mxu0 0.0
  %2122 = vmatprep.subr.mxu0 0.0
  %2123 = vmatpush1.msra.mxu0 0.0
  %2124 = vmatprep.subr.mxu0 0.0
  %2125 = vmatpush1.msra.mxu0 0.0
  %2126 = vmatprep.subr.mxu0 0.0
  %2127 = vmatpush1.msra.mxu0 0.0
  %2128 = vmatprep.subr.mxu0 0.0
  %2129 = vmatpush1.msra.mxu0 0.0
  %2130 = vmatprep.subr.mxu0 0.0
  %2131 = vmatpush1.msra.mxu0 0.0
  %2132 = vmatprep.subr.mxu0 0.0
  %2133 = vmatpush1.msra.mxu0 0.0
  %2134 = vmatprep.subr.mxu0 0.0
  %2135 = vmatpush1.msra.mxu0 0.0
  %2136 = vmatprep.subr.mxu0 0.0
  %2137 = vmatpush1.msra.mxu0 0.0
  %2138 = vmatprep.mubr.f32.mxu0 0.0
  %2139 = vmatmul.mubr.f32.gmra.mrb[0].mxu0 %v2001
  %v2140 = vpop.f32.mrb[0].mxu0
  %v2141 = vadd.f32 0.0, %v2140
  %v2142 = vpop.f32.mrb[0].mxu0
  %v2143 = vadd.f32 0.0, %v2142
  %2144 = vdwg.mxu0
  %v2145 = vsel %vm946, %v1422, 0
  %2147 = vmatprep.subr.mxu0 %v511
  %2148 = vmatpush1.msra.mxu0 %v509
  %2149 = vmatprep.subr.mxu0 %v515
  %2150 = vmatpush1.msra.mxu0 %v513
  %2151 = vmatprep.subr.mxu0 0.0
  %2152 = vmatpush1.msra.mxu0 0.0
  %2153 = vmatprep.subr.mxu0 0.0
  %2154 = vmatpush1.msra.mxu0 0.0
  %2155 = vmatprep.subr.mxu0 0.0
  %2156 = vmatpush1.msra.mxu0 0.0
  %2157 = vmatprep.subr.mxu0 0.0
  %2158 = vmatpush1.msra.mxu0 0.0
  %2159 = vmatprep.subr.mxu0 0.0
  %2160 = vmatpush1.msra.mxu0 0.0
  %2161 = vmatprep.subr.mxu0 0.0
  %2162 = vmatpush1.msra.mxu0 0.0
  %2163 = vmatprep.subr.mxu0 0.0
  %2164 = vmatpush1.msra.mxu0 0.0
  %2165 = vmatprep.subr.mxu0 0.0
  %2166 = vmatpush1.msra.mxu0 0.0
  %2167 = vmatprep.subr.mxu0 0.0
  %2168 = vmatpush1.msra.mxu0 0.0
  %2169 = vmatprep.subr.mxu0 0.0
  %2170 = vmatpush1.msra.mxu0 0.0
  %2171 = vmatprep.subr.mxu0 0.0
  %2172 = vmatpush1.msra.mxu0 0.0
  %2173 = vmatprep.subr.mxu0 0.0
  %2174 = vmatpush1.msra.mxu0 0.0
  %2175 = vmatprep.subr.mxu0 0.0
  %2176 = vmatpush1.msra.mxu0 0.0
  %2177 = vmatprep.subr.mxu0 0.0
  %2178 = vmatpush1.msra.mxu0 0.0
  %2179 = vmatprep.subr.mxu0 0.0
  %2180 = vmatpush1.msra.mxu0 0.0
  %2181 = vmatprep.subr.mxu0 0.0
  %2182 = vmatpush1.msra.mxu0 0.0
  %2183 = vmatprep.subr.mxu0 0.0
  %2184 = vmatpush1.msra.mxu0 0.0
  %2185 = vmatprep.subr.mxu0 0.0
  %2186 = vmatpush1.msra.mxu0 0.0
  %2187 = vmatprep.subr.mxu0 0.0
  %2188 = vmatpush1.msra.mxu0 0.0
  %2189 = vmatprep.subr.mxu0 0.0
  %2190 = vmatpush1.msra.mxu0 0.0
  %2191 = vmatprep.subr.mxu0 0.0
  %2192 = vmatpush1.msra.mxu0 0.0
  %2193 = vmatprep.subr.mxu0 0.0
  %2194 = vmatpush1.msra.mxu0 0.0
  %2195 = vmatprep.subr.mxu0 0.0
  %2196 = vmatpush1.msra.mxu0 0.0
  %2197 = vmatprep.subr.mxu0 0.0
  %2198 = vmatpush1.msra.mxu0 0.0
  %2199 = vmatprep.subr.mxu0 0.0
  %2200 = vmatpush1.msra.mxu0 0.0
  %2201 = vmatprep.subr.mxu0 0.0
  %2202 = vmatpush1.msra.mxu0 0.0
  %2203 = vmatprep.subr.mxu0 0.0
  %2204 = vmatpush1.msra.mxu0 0.0
  %2205 = vmatprep.subr.mxu0 0.0
  %2206 = vmatpush1.msra.mxu0 0.0
  %2207 = vmatprep.subr.mxu0 0.0
  %2208 = vmatpush1.msra.mxu0 0.0
  %2209 = vmatprep.subr.mxu0 0.0
  %2210 = vmatpush1.msra.mxu0 0.0
  %2211 = vmatprep.mubr.f32.mxu0 0.0
  %2212 = vmatmul.mubr.f32.gmra.mrb[0].mxu0 %v2145
  %v2213 = vpop.f32.mrb[0].mxu0
  %v2214 = vadd.f32 0.0, %v2213
  %v2215 = vpop.f32.mrb[0].mxu0
  %v2216 = vadd.f32 0.0, %v2215
  %2217 = vdwg.mxu0
  %2218 = vmatprep.subr.mxu0 %v604
  %2219 = vmatpush1.msra.mxu0 %v602
  %2220 = vmatprep.subr.mxu0 %v608
  %2221 = vmatpush1.msra.mxu0 %v606
  %2222 = vmatprep.subr.mxu0 0.0
  %2223 = vmatpush1.msra.mxu0 0.0
  %2224 = vmatprep.subr.mxu0 0.0
  %2225 = vmatpush1.msra.mxu0 0.0
  %2226 = vmatprep.subr.mxu0 0.0
  %2227 = vmatpush1.msra.mxu0 0.0
  %2228 = vmatprep.subr.mxu0 0.0
  %2229 = vmatpush1.msra.mxu0 0.0
  %2230 = vmatprep.subr.mxu0 0.0
  %2231 = vmatpush1.msra.mxu0 0.0
  %2232 = vmatprep.subr.mxu0 0.0
  %2233 = vmatpush1.msra.mxu0 0.0
  %2234 = vmatprep.subr.mxu0 0.0
  %2235 = vmatpush1.msra.mxu0 0.0
  %2236 = vmatprep.subr.mxu0 0.0
  %2237 = vmatpush1.msra.mxu0 0.0
  %2238 = vmatprep.subr.mxu0 0.0
  %2239 = vmatpush1.msra.mxu0 0.0
  %2240 = vmatprep.subr.mxu0 0.0
  %2241 = vmatpush1.msra.mxu0 0.0
  %2242 = vmatprep.subr.mxu0 0.0
  %2243 = vmatpush1.msra.mxu0 0.0
  %2244 = vmatprep.subr.mxu0 0.0
  %2245 = vmatpush1.msra.mxu0 0.0
  %2246 = vmatprep.subr.mxu0 0.0
  %2247 = vmatpush1.msra.mxu0 0.0
  %2248 = vmatprep.subr.mxu0 0.0
  %2249 = vmatpush1.msra.mxu0 0.0
  %2250 = vmatprep.subr.mxu0 0.0
  %2251 = vmatpush1.msra.mxu0 0.0
  %2252 = vmatprep.subr.mxu0 0.0
  %2253 = vmatpush1.msra.mxu0 0.0
  %2254 = vmatprep.subr.mxu0 0.0
  %2255 = vmatpush1.msra.mxu0 0.0
  %2256 = vmatprep.subr.mxu0 0.0
  %2257 = vmatpush1.msra.mxu0 0.0
  %2258 = vmatprep.subr.mxu0 0.0
  %2259 = vmatpush1.msra.mxu0 0.0
  %2260 = vmatprep.subr.mxu0 0.0
  %2261 = vmatpush1.msra.mxu0 0.0
  %2262 = vmatprep.subr.mxu0 0.0
  %2263 = vmatpush1.msra.mxu0 0.0
  %2264 = vmatprep.subr.mxu0 0.0
  %2265 = vmatpush1.msra.mxu0 0.0
  %2266 = vmatprep.subr.mxu0 0.0
  %2267 = vmatpush1.msra.mxu0 0.0
  %2268 = vmatprep.subr.mxu0 0.0
  %2269 = vmatpush1.msra.mxu0 0.0
  %2270 = vmatprep.subr.mxu0 0.0
  %2271 = vmatpush1.msra.mxu0 0.0
  %2272 = vmatprep.subr.mxu0 0.0
  %2273 = vmatpush1.msra.mxu0 0.0
  %2274 = vmatprep.subr.mxu0 0.0
  %2275 = vmatpush1.msra.mxu0 0.0
  %2276 = vmatprep.subr.mxu0 0.0
  %2277 = vmatpush1.msra.mxu0 0.0
  %2278 = vmatprep.subr.mxu0 0.0
  %2279 = vmatpush1.msra.mxu0 0.0
  %2280 = vmatprep.subr.mxu0 0.0
  %2281 = vmatpush1.msra.mxu0 0.0
  %2282 = vmatprep.mubr.f32.mxu0 0.0
  %2283 = vmatmul.mubr.f32.gmra.mrb[0].mxu0 %v2145
  %v2284 = vpop.f32.mrb[0].mxu0
  %v2285 = vadd.f32 0.0, %v2284
  %v2286 = vpop.f32.mrb[0].mxu0
  %v2287 = vadd.f32 0.0, %v2286
  %2288 = vdwg.mxu0
  %v2313 = vrot.slane %v1638, 7
  %v2314 = vsel %vm1353, %v2313, %v1494
  %v2315 = vrot.slane %v1782, 6
  %v2316 = vsel %vm1355, %v2315, %v2314
  %v2317 = vrot.slane %v1926, 5
  %v2318 = vsel %vm1357, %v2317, %v2316
  %v2319 = vrot.slane %v2070, 4
  %v2320 = vsel %vm1359, %v2319, %v2318
  %v2321 = vrot.slane %v2214, 3
  %v2322 = vsel %vm1361, %v2321, %v2320
  %v2323 = vrot.slane %v1640, 7
  %v2324 = vsel %vm1353, %v2323, %v1496
  %v2325 = vrot.slane %v1784, 6
  %v2326 = vsel %vm1355, %v2325, %v2324
  %v2327 = vrot.slane %v1928, 5
  %v2328 = vsel %vm1357, %v2327, %v2326
  %v2329 = vrot.slane %v2072, 4
  %v2330 = vsel %vm1359, %v2329, %v2328
  %v2331 = vrot.slane %v2216, 3
  %v2332 = vsel %vm1361, %v2331, %v2330
  %v2333 = vrot.slane %v1709, 7
  %v2334 = vsel %vm1353, %v2333, %v1565
  %v2335 = vrot.slane %v1853, 6
  %v2336 = vsel %vm1355, %v2335, %v2334
  %v2337 = vrot.slane %v1997, 5
  %v2338 = vsel %vm1357, %v2337, %v2336
  %v2339 = vrot.slane %v2141, 4
  %v2340 = vsel %vm1359, %v2339, %v2338
  %v2341 = vrot.slane %v2285, 3
  %v2342 = vsel %vm1361, %v2341, %v2340
  %v2343 = vrot.slane %v1711, 7
  %v2344 = vsel %vm1353, %v2343, %v1567
  %v2345 = vrot.slane %v1855, 6
  %v2346 = vsel %vm1355, %v2345, %v2344
  %v2347 = vrot.slane %v1999, 5
  %v2348 = vsel %vm1357, %v2347, %v2346
  %v2349 = vrot.slane %v2143, 4
  %v2350 = vsel %vm1359, %v2349, %v2348
  %v2351 = vrot.slane %v2287, 3
  %v2352 = vsel %vm1361, %v2351, %v2350
  %2357 = vst [vmem:[%s7] sm:$0x3f] %v2322
  %2358 = vst [vmem:[%s7 + $0x8] sm:$0x3f] %v2332
  %2359 = vst [vmem:[%s7 + $0x10] sm:$0x3f] %v2342
  %2360 = vst.msk [vmem:[%s7 + $0x18] sm:$0x3f] %vm1365, %v2352
  // Predicated region
  $region30: #{naml_forward.8} parent=0 // pred_check
    _
  $region31: #{naml_forward.8} parent=0 // pred_check_branch
    %2362 = sbr.rel (0) target = $region33
  $region32: #{naml_forward.8} parent=0 // pred_region
    _
  $region33: #{naml_forward.8} parent=0 // pred_fallthru
    _
  // Predicated region
  $region34: #{naml_forward.8} parent=0 // pred_check
    _
  $region35: #{naml_forward.8} parent=0 // pred_check_branch
    %2364 = sbr.rel (0) target = $region37
  $region36: #{naml_forward.8} parent=0 // pred_region
    _
  $region37: #{naml_forward.8} parent=0 // pred_fallthru
    _

// kernel: naml_forward.11
$region0: #{naml_forward.11}
  #allocation0 [shape = 'u32[]', space=smem, size = 0x4, offset = 0x4, fixed_abs, tag = 'smem constant byte address 0x4 - core index']
  #allocation1 [shape = 'u32[144,128]{1,0:T(1,128)}', space=vmem, size = 0x12000, scoped, tag = 'internal scratch']
  #allocation2 [shape = 'f32[1,1]{1,0:T(1,128)S(1)}', space=vmem, size = 0x200, scoped, tag = 'scoped memory for naml_forward.11']
  %s0 = inlined_call_operand.vmem [shape: bf16[4,32,192], index: 0, kind: input, shape index: {}]
  %s1 = inlined_call_operand.vmem [shape: bf16[192,400], index: 1, kind: input, shape index: {}]
  %s2 = inlined_call_operand.vmem [shape: f32[1,400], index: 2, kind: input, shape index: {}]
  %s3 = inlined_call_operand.vmem [shape: bf16[400,200], index: 3, kind: input, shape index: {}]
  %s4 = inlined_call_operand.vmem [shape: f32[1,200], index: 4, kind: input, shape index: {}]
  %s5 = inlined_call_operand.vmem [shape: f32[1,200], index: 5, kind: input, shape index: {}]
  %s6 = inlined_call_operand.<no memory space> [shape: f32[1,1], index: 6, kind: input, shape index: {}]
  %s7 = inlined_call_operand.vmem [shape: f32[4,400], index: 7, kind: output, shape index: {}]
  %s8 = sld [smem:[#allocation0]]
  $region38: #{naml_forward.11} parent=0
    _
  %s10 = ssub.s32 1, %s8
  %s11 = scalar_select 0, %s10, %s8
  %v12 = vstv %s6
  %13 = vst [vmem:[#allocation2] sm:$0x1] %v12
  // Predicated region
  $region2: #{naml_forward.11} parent=0 // pred_check
    _
  $region3: #{naml_forward.11} parent=0 // pred_check_branch
    %15 = sbr.rel (0) target = $region5
  $region4: #{naml_forward.11} parent=0 // pred_region
    _
  $region5: #{naml_forward.11} parent=0 // pred_fallthru
    _
  // Predicated region
  $region6: #{naml_forward.11} parent=0 // pred_check
    _
  $region7: #{naml_forward.11} parent=0 // pred_check_branch
    %17 = sbr.rel (0) target = $region9
  $region8: #{naml_forward.11} parent=0 // pred_region
    _
  $region9: #{naml_forward.11} parent=0 // pred_fallthru
    _
  // Predicated region
  $region10: #{naml_forward.11} parent=0 // pred_check
    _
  $region11: #{naml_forward.11} parent=0 // pred_check_branch
    %19 = sbr.rel (0) target = $region13
  $region12: #{naml_forward.11} parent=0 // pred_region
    _
  $region13: #{naml_forward.11} parent=0 // pred_fallthru
    _
  // Predicated region
  $region14: #{naml_forward.11} parent=0 // pred_check
    _
  $region15: #{naml_forward.11} parent=0 // pred_check_branch
    %21 = sbr.rel (0) target = $region17
  $region16: #{naml_forward.11} parent=0 // pred_region
    _
  $region17: #{naml_forward.11} parent=0 // pred_fallthru
    _
  // Predicated region
  $region18: #{naml_forward.11} parent=0 // pred_check
    _
  $region19: #{naml_forward.11} parent=0 // pred_check_branch
    %23 = sbr.rel (0) target = $region21
  $region20: #{naml_forward.11} parent=0 // pred_region
    _
  $region21: #{naml_forward.11} parent=0 // pred_fallthru
    _
  // Predicated region
  $region22: #{naml_forward.11} parent=0 // pred_check
    _
  $region23: #{naml_forward.11} parent=0 // pred_check_branch
    %25 = sbr.rel (0) target = $region25
  $region24: #{naml_forward.11} parent=0 // pred_region
    _
  $region25: #{naml_forward.11} parent=0 // pred_fallthru
    _
  // Predicated region
  $region26: #{naml_forward.11} parent=0 // pred_check
    _
  $region27: #{naml_forward.11} parent=0 // pred_check_branch
    %27 = sbr.rel (0) target = $region29
  $region28: #{naml_forward.11} parent=0 // pred_region
    _
  $region29: #{naml_forward.11} parent=0 // pred_fallthru
    _
  %v29 = vld [vmem:[%s0] sm:$0xff]
  %v30 = vld [vmem:[%s0 + $0x8] sm:$0xff]
  %v31 = vld [vmem:[%s0 + $0x10] sm:$0xff]
  %v32 = vld [vmem:[%s0 + $0x18] sm:$0xff]
  %v33 = vld [vmem:[%s0 + $0x20] sm:$0xff]
  %v34 = vld [vmem:[%s0 + $0x28] sm:$0xff]
  %v35 = vld [vmem:[%s0 + $0x30] sm:$0xff]
  %v36 = vld [vmem:[%s0 + $0x38] sm:$0xff]
  %v37 = vld [vmem:[%s0 + $0x40] sm:$0xff]
  %v38 = vld [vmem:[%s0 + $0x48] sm:$0xff]
  %v39 = vld [vmem:[%s0 + $0x50] sm:$0xff]
  %v40 = vld [vmem:[%s0 + $0x58] sm:$0xff]
  %v41 = vld [vmem:[%s0 + $0x60] sm:$0xff]
  %v42 = vld [vmem:[%s0 + $0x68] sm:$0xff]
  %v43 = vld [vmem:[%s0 + $0x70] sm:$0xff]
  %v44 = vld [vmem:[%s0 + $0x78] sm:$0xff]
  %v45 = vld [vmem:[%s1] sm:$0xff]
  %v46 = vld [vmem:[%s1 + $0x8] sm:$0xff]
  %v47 = vld [vmem:[%s1 + $0x10] sm:$0xff]
  %v48 = vld [vmem:[%s1 + $0x18] sm:$0xff]
  %v49 = vld [vmem:[%s1 + $0x20] sm:$0xff]
  %v50 = vld [vmem:[%s1 + $0x28] sm:$0xff]
  %v51 = vld [vmem:[%s1 + $0x30] sm:$0xff]
  %v52 = vld [vmem:[%s1 + $0x38] sm:$0xff]
  %v53 = vld [vmem:[%s1 + $0x40] sm:$0xff]
  %v54 = vld [vmem:[%s1 + $0x48] sm:$0xff]
  %v55 = vld [vmem:[%s1 + $0x50] sm:$0xff]
  %v56 = vld [vmem:[%s1 + $0x58] sm:$0xff]
  %v57 = vld [vmem:[%s1 + $0x60] sm:$0xff]
  %v58 = vld [vmem:[%s1 + $0x68] sm:$0xff]
  %v59 = vld [vmem:[%s1 + $0x70] sm:$0xff]
  %v60 = vld [vmem:[%s1 + $0x78] sm:$0xff]
  %v61 = vld [vmem:[%s1 + $0x80] sm:$0xff]
  %v62 = vld [vmem:[%s1 + $0x88] sm:$0xff]
  %v63 = vld [vmem:[%s1 + $0x90] sm:$0xff]
  %v64 = vld [vmem:[%s1 + $0x98] sm:$0xff]
  %v65 = vld [vmem:[%s1 + $0xa0] sm:$0xff]
  %v66 = vld [vmem:[%s1 + $0xa8] sm:$0xff]
  %v67 = vld [vmem:[%s1 + $0xb0] sm:$0xff]
  %v68 = vld [vmem:[%s1 + $0xb8] sm:$0xff]
  %v69 = vld [vmem:[%s1 + $0xc0] sm:$0xff]
  %v70 = vld [vmem:[%s1 + $0xc8] sm:$0xff]
  %v71 = vld [vmem:[%s1 + $0xd0] sm:$0xff]
  %v72 = vld [vmem:[%s1 + $0xd8] sm:$0xff]
  %v73 = vld [vmem:[%s1 + $0xe0] sm:$0xff]
  %v74 = vld [vmem:[%s1 + $0xe8] sm:$0xff]
  %v75 = vld [vmem:[%s1 + $0xf0] sm:$0xff]
  %v76 = vld [vmem:[%s1 + $0xf8] sm:$0xff]
  %v77 = vld [vmem:[%s1 + $0x100] sm:$0xff]
  %v78 = vld [vmem:[%s1 + $0x108] sm:$0xff]
  %v79 = vld [vmem:[%s1 + $0x110] sm:$0xff]
  %v80 = vld [vmem:[%s1 + $0x118] sm:$0xff]
  %v81 = vld [vmem:[%s1 + $0x120] sm:$0xff]
  %v82 = vld [vmem:[%s1 + $0x128] sm:$0xff]
  %v83 = vld [vmem:[%s1 + $0x130] sm:$0xff]
  %v84 = vld [vmem:[%s1 + $0x138] sm:$0xff]
  %v85 = vld [vmem:[%s1 + $0x140] sm:$0xff]
  %v86 = vld [vmem:[%s1 + $0x148] sm:$0xff]
  %v87 = vld [vmem:[%s1 + $0x150] sm:$0xff]
  %v88 = vld [vmem:[%s1 + $0x158] sm:$0xff]
  %v89 = vld [vmem:[%s1 + $0x160] sm:$0xff]
  %v90 = vld [vmem:[%s1 + $0x168] sm:$0xff]
  %v91 = vld [vmem:[%s1 + $0x170] sm:$0xff]
  %v92 = vld [vmem:[%s1 + $0x178] sm:$0xff]
  %v93 = vld [vmem:[%s2] sm:$0xf]
  %v95 = vlaneseq
  %v96 = vshrl.u32 %v95, 7
  %v97 = vsub.s32 0, %v96
  %v98 = vrot.slane %v93, %v97
  %v99 = vlaneseq
  %v100 = vshrl.u32 %v99, 7
  %v101 = vsub.s32 1, %v100
  %v102 = vrot.slane %v93, %v101
  %v103 = vlaneseq
  %v104 = vshrl.u32 %v103, 7
  %v105 = vsub.s32 2, %v104
  %v106 = vrot.slane %v93, %v105
  %v107 = vlaneseq
  %v108 = vshrl.u32 %v107, 7
  %v109 = vsub.s32 3, %v108
  %v110 = vrot.slane %v93, %v109
  %v131 = vunpack.c.l.b16 %v29
  %v132 = vunpack.c.h.b16 %v29
  %v133 = vunpack.c.l.b16 %v30
  %v134 = vunpack.c.h.b16 %v30
  %v135 = vunpack.c.l.b16 %v31
  %v136 = vunpack.c.h.b16 %v31
  %v137 = vunpack.c.l.b16 %v32
  %v138 = vunpack.c.h.b16 %v32
  %v139 = vunpack.c.l.b16 %v33
  %v140 = vunpack.c.h.b16 %v33
  %v141 = vunpack.c.l.b16 %v34
  %v142 = vunpack.c.h.b16 %v34
  %v143 = vunpack.c.l.b16 %v35
  %v144 = vunpack.c.h.b16 %v35
  %v145 = vunpack.c.l.b16 %v36
  %v146 = vunpack.c.h.b16 %v36
  %v147 = vunpack.c.l.b16 %v37
  %v148 = vunpack.c.h.b16 %v37
  %v149 = vunpack.c.l.b16 %v38
  %v150 = vunpack.c.h.b16 %v38
  %v151 = vunpack.c.l.b16 %v39
  %v152 = vunpack.c.h.b16 %v39
  %v153 = vunpack.c.l.b16 %v40
  %v154 = vunpack.c.h.b16 %v40
  %v155 = vunpack.c.l.b16 %v41
  %v156 = vunpack.c.h.b16 %v41
  %v157 = vunpack.c.l.b16 %v42
  %v158 = vunpack.c.h.b16 %v42
  %v159 = vunpack.c.l.b16 %v43
  %v160 = vunpack.c.h.b16 %v43
  %v161 = vunpack.c.l.b16 %v44
  %v162 = vunpack.c.h.b16 %v44
  %v163 = vpack.c.b16 %v133, %v131
  %v164 = vpack.c.b16 %v134, %v132
  %v165 = vpack.c.b16 %v137, %v135
  %v166 = vpack.c.b16 %v138, %v136
  %v167 = vpack.c.b16 %v141, %v139
  %v168 = vpack.c.b16 %v142, %v140
  %v169 = vpack.c.b16 %v145, %v143
  %v170 = vpack.c.b16 %v146, %v144
  %v171 = vpack.c.b16 %v149, %v147
  %v172 = vpack.c.b16 %v150, %v148
  %v173 = vpack.c.b16 %v153, %v151
  %v174 = vpack.c.b16 %v154, %v152
  %v175 = vpack.c.b16 %v157, %v155
  %v176 = vpack.c.b16 %v158, %v156
  %v177 = vpack.c.b16 %v161, %v159
  %v178 = vpack.c.b16 %v162, %v160
  %v235 = vunpack.c.l.b16 %v45
  %v236 = vunpack.c.h.b16 %v45
  %v237 = vunpack.c.l.b16 %v46
  %v238 = vunpack.c.h.b16 %v46
  %v239 = vunpack.c.l.b16 %v47
  %v240 = vunpack.c.h.b16 %v47
  %v241 = vunpack.c.l.b16 %v48
  %v242 = vunpack.c.h.b16 %v48
  %v243 = vunpack.c.l.b16 %v49
  %v244 = vunpack.c.h.b16 %v49
  %v245 = vunpack.c.l.b16 %v50
  %v246 = vunpack.c.h.b16 %v50
  %v247 = vunpack.c.l.b16 %v51
  %v248 = vunpack.c.h.b16 %v51
  %v249 = vunpack.c.l.b16 %v52
  %v250 = vunpack.c.h.b16 %v52
  %v251 = vunpack.c.l.b16 %v53
  %v252 = vunpack.c.h.b16 %v53
  %v253 = vunpack.c.l.b16 %v54
  %v254 = vunpack.c.h.b16 %v54
  %v255 = vunpack.c.l.b16 %v55
  %v256 = vunpack.c.h.b16 %v55
  %v257 = vunpack.c.l.b16 %v56
  %v258 = vunpack.c.h.b16 %v56
  %v259 = vunpack.c.l.b16 %v57
  %v260 = vunpack.c.h.b16 %v57
  %v261 = vunpack.c.l.b16 %v58
  %v262 = vunpack.c.h.b16 %v58
  %v263 = vunpack.c.l.b16 %v59
  %v264 = vunpack.c.h.b16 %v59
  %v265 = vunpack.c.l.b16 %v60
  %v266 = vunpack.c.h.b16 %v60
  %v267 = vunpack.c.l.b16 %v61
  %v268 = vunpack.c.h.b16 %v61
  %v269 = vunpack.c.l.b16 %v62
  %v270 = vunpack.c.h.b16 %v62
  %v271 = vunpack.c.l.b16 %v63
  %v272 = vunpack.c.h.b16 %v63
  %v273 = vunpack.c.l.b16 %v64
  %v274 = vunpack.c.h.b16 %v64
  %v275 = vunpack.c.l.b16 %v65
  %v276 = vunpack.c.h.b16 %v65
  %v277 = vunpack.c.l.b16 %v66
  %v278 = vunpack.c.h.b16 %v66
  %v279 = vunpack.c.l.b16 %v67
  %v280 = vunpack.c.h.b16 %v67
  %v281 = vunpack.c.l.b16 %v68
  %v282 = vunpack.c.h.b16 %v68
  %v283 = vunpack.c.l.b16 %v69
  %v284 = vunpack.c.h.b16 %v69
  %v285 = vunpack.c.l.b16 %v70
  %v286 = vunpack.c.h.b16 %v70
  %v287 = vunpack.c.l.b16 %v71
  %v288 = vunpack.c.h.b16 %v71
  %v289 = vunpack.c.l.b16 %v72
  %v290 = vunpack.c.h.b16 %v72
  %v291 = vunpack.c.l.b16 %v73
  %v292 = vunpack.c.h.b16 %v73
  %v293 = vunpack.c.l.b16 %v74
  %v294 = vunpack.c.h.b16 %v74
  %v295 = vunpack.c.l.b16 %v75
  %v296 = vunpack.c.h.b16 %v75
  %v297 = vunpack.c.l.b16 %v76
  %v298 = vunpack.c.h.b16 %v76
  %v299 = vunpack.c.l.b16 %v77
  %v300 = vunpack.c.h.b16 %v77
  %v301 = vunpack.c.l.b16 %v78
  %v302 = vunpack.c.h.b16 %v78
  %v303 = vunpack.c.l.b16 %v79
  %v304 = vunpack.c.h.b16 %v79
  %v305 = vunpack.c.l.b16 %v80
  %v306 = vunpack.c.h.b16 %v80
  %v307 = vunpack.c.l.b16 %v81
  %v308 = vunpack.c.h.b16 %v81
  %v309 = vunpack.c.l.b16 %v82
  %v310 = vunpack.c.h.b16 %v82
  %v311 = vunpack.c.l.b16 %v83
  %v312 = vunpack.c.h.b16 %v83
  %v313 = vunpack.c.l.b16 %v84
  %v314 = vunpack.c.h.b16 %v84
  %v315 = vunpack.c.l.b16 %v85
  %v316 = vunpack.c.h.b16 %v85
  %v317 = vunpack.c.l.b16 %v86
  %v318 = vunpack.c.h.b16 %v86
  %v319 = vunpack.c.l.b16 %v87
  %v320 = vunpack.c.h.b16 %v87
  %v321 = vunpack.c.l.b16 %v88
  %v322 = vunpack.c.h.b16 %v88
  %v323 = vunpack.c.l.b16 %v89
  %v324 = vunpack.c.h.b16 %v89
  %v325 = vunpack.c.l.b16 %v90
  %v326 = vunpack.c.h.b16 %v90
  %v327 = vunpack.c.l.b16 %v91
  %v328 = vunpack.c.h.b16 %v91
  %v329 = vunpack.c.l.b16 %v92
  %v330 = vunpack.c.h.b16 %v92
  %v331 = vpack.c.b16 %v239, %v235
  %v332 = vpack.c.b16 %v240, %v236
  %v333 = vpack.c.b16 %v241, %v237
  %v334 = vpack.c.b16 %v242, %v238
  %v335 = vpack.c.b16 %v247, %v243
  %v336 = vpack.c.b16 %v248, %v244
  %v337 = vpack.c.b16 %v249, %v245
  %v338 = vpack.c.b16 %v250, %v246
  %v339 = vpack.c.b16 %v255, %v251
  %v340 = vpack.c.b16 %v256, %v252
  %v341 = vpack.c.b16 %v257, %v253
  %v342 = vpack.c.b16 %v258, %v254
  %v343 = vpack.c.b16 %v263, %v259
  %v344 = vpack.c.b16 %v264, %v260
  %v345 = vpack.c.b16 %v265, %v261
  %v346 = vpack.c.b16 %v266, %v262
  %v347 = vpack.c.b16 %v271, %v267
  %v348 = vpack.c.b16 %v272, %v268
  %v349 = vpack.c.b16 %v273, %v269
  %v350 = vpack.c.b16 %v274, %v270
  %v351 = vpack.c.b16 %v279, %v275
  %v352 = vpack.c.b16 %v280, %v276
  %v353 = vpack.c.b16 %v281, %v277
  %v354 = vpack.c.b16 %v282, %v278
  %v355 = vpack.c.b16 %v287, %v283
  %v356 = vpack.c.b16 %v288, %v284
  %v357 = vpack.c.b16 %v289, %v285
  %v358 = vpack.c.b16 %v290, %v286
  %v359 = vpack.c.b16 %v295, %v291
  %v360 = vpack.c.b16 %v296, %v292
  %v361 = vpack.c.b16 %v297, %v293
  %v362 = vpack.c.b16 %v298, %v294
  %v363 = vpack.c.b16 %v303, %v299
  %v364 = vpack.c.b16 %v304, %v300
  %v365 = vpack.c.b16 %v305, %v301
  %v366 = vpack.c.b16 %v306, %v302
  %v367 = vpack.c.b16 %v311, %v307
  %v368 = vpack.c.b16 %v312, %v308
  %v369 = vpack.c.b16 %v313, %v309
  %v370 = vpack.c.b16 %v314, %v310
  %v371 = vpack.c.b16 %v319, %v315
  %v372 = vpack.c.b16 %v320, %v316
  %v373 = vpack.c.b16 %v321, %v317
  %v374 = vpack.c.b16 %v322, %v318
  %v375 = vpack.c.b16 %v327, %v323
  %v376 = vpack.c.b16 %v328, %v324
  %v377 = vpack.c.b16 %v329, %v325
  %v378 = vpack.c.b16 %v330, %v326
  %vm427 = vcmask 523264
  %v429 = vsel %vm427, %v164, 0
  %v432 = vsel %vm427, %v166, 0
  %v435 = vsel %vm427, %v168, 0
  %v438 = vsel %vm427, %v170, 0
  %v441 = vsel %vm427, %v172, 0
  %v444 = vsel %vm427, %v174, 0
  %v447 = vsel %vm427, %v176, 0
  %v450 = vsel %vm427, %v178, 0
  %452 = vmatprep.subr.bf16.mxu0 %v332
  %453 = vmatpush1.bf16.msra.mxu0 %v331
  %454 = vmatprep.subr.bf16.mxu0 %v336
  %455 = vmatpush1.bf16.msra.mxu0 %v335
  %456 = vmatprep.subr.bf16.mxu0 %v340
  %457 = vmatpush1.bf16.msra.mxu0 %v339
  %458 = vmatprep.subr.bf16.mxu0 %v344
  %459 = vmatpush1.bf16.msra.mxu0 %v343
  %460 = vmatprep.subr.bf16.mxu0 %v348
  %461 = vmatpush1.bf16.msra.mxu0 %v347
  %462 = vmatprep.subr.bf16.mxu0 %v352
  %463 = vmatpush1.bf16.msra.mxu0 %v351
  %464 = vmatprep.subr.bf16.mxu0 %v356
  %465 = vmatpush1.bf16.msra.mxu0 %v355
  %466 = vmatprep.subr.bf16.mxu0 %v360
  %467 = vmatpush1.bf16.msra.mxu0 %v359
  %468 = vmatprep.subr.bf16.mxu0 %v364
  %469 = vmatpush1.bf16.msra.mxu0 %v363
  %470 = vmatprep.subr.bf16.mxu0 %v368
  %471 = vmatpush1.bf16.msra.mxu0 %v367
  %472 = vmatprep.subr.bf16.mxu0 %v372
  %473 = vmatpush1.bf16.msra.mxu0 %v371
  %474 = vmatprep.subr.bf16.mxu0 %v376
  %475 = vmatpush1.bf16.msra.mxu0 %v375
  %476 = vmatprep.subr.bf16.mxu0 0
  %477 = vmatpush1.bf16.msra.mxu0 0
  %478 = vmatprep.subr.bf16.mxu0 0
  %479 = vmatpush1.bf16.msra.mxu0 0
  %480 = vmatprep.subr.bf16.mxu0 0
  %481 = vmatpush1.bf16.msra.mxu0 0
  %482 = vmatprep.subr.bf16.mxu0 0
  %483 = vmatpush1.bf16.msra.mxu0 0
  %484 = vmatprep.mubr.bf16.mxu0 %v429
  %485 = vmatmul.mubr.bf16.gmra.mrb[0].mxu0 %v163
  %v486 = vpop.f32.mrb[0].mxu0
  %v487 = vadd.f32 %v98, %v486
  %v488 = vpop.f32.mrb[0].mxu0
  %v489 = vadd.f32 %v102, %v488
  %v490 = vpop.f32.mrb[0].mxu0
  %v491 = vadd.f32 %v98, %v490
  %v492 = vpop.f32.mrb[0].mxu0
  %v493 = vadd.f32 %v102, %v492
  %494 = vmatprep.mubr.bf16.mxu0 %v432
  %495 = vmatmul.mubr.bf16.gmra.mrb[0].mxu0 %v165
  %v496 = vpop.f32.mrb[0].mxu0
  %v497 = vadd.f32 %v98, %v496
  %v498 = vpop.f32.mrb[0].mxu0
  %v499 = vadd.f32 %v102, %v498
  %v500 = vpop.f32.mrb[0].mxu0
  %v501 = vadd.f32 %v98, %v500
  %v502 = vpop.f32.mrb[0].mxu0
  %v503 = vadd.f32 %v102, %v502
  %504 = vmatprep.mubr.bf16.mxu0 %v435
  %505 = vmatmul.mubr.bf16.gmra.mrb[0].mxu0 %v167
  %v506 = vpop.f32.mrb[0].mxu0
  %v507 = vadd.f32 %v98, %v506
  %v508 = vpop.f32.mrb[0].mxu0
  %v509 = vadd.f32 %v102, %v508
  %v510 = vpop.f32.mrb[0].mxu0
  %v511 = vadd.f32 %v98, %v510
  %v512 = vpop.f32.mrb[0].mxu0
  %v513 = vadd.f32 %v102, %v512
  %514 = vmatprep.mubr.bf16.mxu0 %v438
  %515 = vmatmul.mubr.bf16.gmra.mrb[0].mxu0 %v169
  %v516 = vpop.f32.mrb[0].mxu0
  %v517 = vadd.f32 %v98, %v516
  %v518 = vpop.f32.mrb[0].mxu0
  %v519 = vadd.f32 %v102, %v518
  %v520 = vpop.f32.mrb[0].mxu0
  %v521 = vadd.f32 %v98, %v520
  %v522 = vpop.f32.mrb[0].mxu0
  %v523 = vadd.f32 %v102, %v522
  %524 = vmatprep.mubr.bf16.mxu0 %v441
  %525 = vmatmul.mubr.bf16.gmra.mrb[0].mxu0 %v171
  %v526 = vpop.f32.mrb[0].mxu0
  %v527 = vadd.f32 %v98, %v526
  %v528 = vpop.f32.mrb[0].mxu0
  %v529 = vadd.f32 %v102, %v528
  %v530 = vpop.f32.mrb[0].mxu0
  %v531 = vadd.f32 %v98, %v530
  %v532 = vpop.f32.mrb[0].mxu0
  %v533 = vadd.f32 %v102, %v532
  %534 = vmatprep.mubr.bf16.mxu0 %v444
  %535 = vmatmul.mubr.bf16.gmra.mrb[0].mxu0 %v173
  %v536 = vpop.f32.mrb[0].mxu0
  %v537 = vadd.f32 %v98, %v536
  %v538 = vpop.f32.mrb[0].mxu0
  %v539 = vadd.f32 %v102, %v538
  %v540 = vpop.f32.mrb[0].mxu0
  %v541 = vadd.f32 %v98, %v540
  %v542 = vpop.f32.mrb[0].mxu0
  %v543 = vadd.f32 %v102, %v542
  %544 = vmatprep.mubr.bf16.mxu0 %v447
  %545 = vmatmul.mubr.bf16.gmra.mrb[0].mxu0 %v175
  %v546 = vpop.f32.mrb[0].mxu0
  %v547 = vadd.f32 %v98, %v546
  %v548 = vpop.f32.mrb[0].mxu0
  %v549 = vadd.f32 %v102, %v548
  %v550 = vpop.f32.mrb[0].mxu0
  %v551 = vadd.f32 %v98, %v550
  %v552 = vpop.f32.mrb[0].mxu0
  %v553 = vadd.f32 %v102, %v552
  %554 = vmatprep.mubr.bf16.mxu0 %v450
  %555 = vmatmul.mubr.bf16.gmra.mrb[0].mxu0 %v177
  %v556 = vpop.f32.mrb[0].mxu0
  %v557 = vadd.f32 %v98, %v556
  %v558 = vpop.f32.mrb[0].mxu0
  %v559 = vadd.f32 %v102, %v558
  %v560 = vpop.f32.mrb[0].mxu0
  %v561 = vadd.f32 %v98, %v560
  %v562 = vpop.f32.mrb[0].mxu0
  %v563 = vadd.f32 %v102, %v562
  %564 = vdwg.mxu0
  %565 = vmatprep.subr.bf16.mxu0 %v334
  %566 = vmatpush1.bf16.msra.mxu0 %v333
  %567 = vmatprep.subr.bf16.mxu0 %v338
  %568 = vmatpush1.bf16.msra.mxu0 %v337
  %569 = vmatprep.subr.bf16.mxu0 %v342
  %570 = vmatpush1.bf16.msra.mxu0 %v341
  %571 = vmatprep.subr.bf16.mxu0 %v346
  %572 = vmatpush1.bf16.msra.mxu0 %v345
  %573 = vmatprep.subr.bf16.mxu0 %v350
  %574 = vmatpush1.bf16.msra.mxu0 %v349
  %575 = vmatprep.subr.bf16.mxu0 %v354
  %576 = vmatpush1.bf16.msra.mxu0 %v353
  %577 = vmatprep.subr.bf16.mxu0 %v358
  %578 = vmatpush1.bf16.msra.mxu0 %v357
  %579 = vmatprep.subr.bf16.mxu0 %v362
  %580 = vmatpush1.bf16.msra.mxu0 %v361
  %581 = vmatprep.subr.bf16.mxu0 %v366
  %582 = vmatpush1.bf16.msra.mxu0 %v365
  %583 = vmatprep.subr.bf16.mxu0 %v370
  %584 = vmatpush1.bf16.msra.mxu0 %v369
  %585 = vmatprep.subr.bf16.mxu0 %v374
  %586 = vmatpush1.bf16.msra.mxu0 %v373
  %587 = vmatprep.subr.bf16.mxu0 %v378
  %588 = vmatpush1.bf16.msra.mxu0 %v377
  %589 = vmatprep.subr.bf16.mxu0 0
  %590 = vmatpush1.bf16.msra.mxu0 0
  %591 = vmatprep.subr.bf16.mxu0 0
  %592 = vmatpush1.bf16.msra.mxu0 0
  %593 = vmatprep.subr.bf16.mxu0 0
  %594 = vmatpush1.bf16.msra.mxu0 0
  %595 = vmatprep.subr.bf16.mxu0 0
  %596 = vmatpush1.bf16.msra.mxu0 0
  %597 = vmatprep.mubr.bf16.mxu0 %v429
  %598 = vmatmul.mubr.bf16.gmra.mrb[0].mxu0 %v163
  %v599 = vpop.f32.mrb[0].mxu0
  %v600 = vadd.f32 %v106, %v599
  %v601 = vpop.f32.mrb[0].mxu0
  %v602 = vadd.f32 %v110, %v601
  %v603 = vpop.f32.mrb[0].mxu0
  %v604 = vadd.f32 %v106, %v603
  %v605 = vpop.f32.mrb[0].mxu0
  %v606 = vadd.f32 %v110, %v605
  %607 = vmatprep.mubr.bf16.mxu0 %v432
  %608 = vmatmul.mubr.bf16.gmra.mrb[0].mxu0 %v165
  %v609 = vpop.f32.mrb[0].mxu0
  %v610 = vadd.f32 %v106, %v609
  %v611 = vpop.f32.mrb[0].mxu0
  %v612 = vadd.f32 %v110, %v611
  %v613 = vpop.f32.mrb[0].mxu0
  %v614 = vadd.f32 %v106, %v613
  %v615 = vpop.f32.mrb[0].mxu0
  %v616 = vadd.f32 %v110, %v615
  %617 = vmatprep.mubr.bf16.mxu0 %v435
  %618 = vmatmul.mubr.bf16.gmra.mrb[0].mxu0 %v167
  %v619 = vpop.f32.mrb[0].mxu0
  %v620 = vadd.f32 %v106, %v619
  %v621 = vpop.f32.mrb[0].mxu0
  %v622 = vadd.f32 %v110, %v621
  %v623 = vpop.f32.mrb[0].mxu0
  %v624 = vadd.f32 %v106, %v623
  %v625 = vpop.f32.mrb[0].mxu0
  %v626 = vadd.f32 %v110, %v625
  %627 = vmatprep.mubr.bf16.mxu0 %v438
  %628 = vmatmul.mubr.bf16.gmra.mrb[0].mxu0 %v169
  %v629 = vpop.f32.mrb[0].mxu0
  %v630 = vadd.f32 %v106, %v629
  %v631 = vpop.f32.mrb[0].mxu0
  %v632 = vadd.f32 %v110, %v631
  %v633 = vpop.f32.mrb[0].mxu0
  %v634 = vadd.f32 %v106, %v633
  %v635 = vpop.f32.mrb[0].mxu0
  %v636 = vadd.f32 %v110, %v635
  %637 = vmatprep.mubr.bf16.mxu0 %v441
  %638 = vmatmul.mubr.bf16.gmra.mrb[0].mxu0 %v171
  %v639 = vpop.f32.mrb[0].mxu0
  %v640 = vadd.f32 %v106, %v639
  %v641 = vpop.f32.mrb[0].mxu0
  %v642 = vadd.f32 %v110, %v641
  %v643 = vpop.f32.mrb[0].mxu0
  %v644 = vadd.f32 %v106, %v643
  %v645 = vpop.f32.mrb[0].mxu0
  %v646 = vadd.f32 %v110, %v645
  %647 = vmatprep.mubr.bf16.mxu0 %v444
  %648 = vmatmul.mubr.bf16.gmra.mrb[0].mxu0 %v173
  %v649 = vpop.f32.mrb[0].mxu0
  %v650 = vadd.f32 %v106, %v649
  %v651 = vpop.f32.mrb[0].mxu0
  %v652 = vadd.f32 %v110, %v651
  %v653 = vpop.f32.mrb[0].mxu0
  %v654 = vadd.f32 %v106, %v653
  %v655 = vpop.f32.mrb[0].mxu0
  %v656 = vadd.f32 %v110, %v655
  %657 = vmatprep.mubr.bf16.mxu0 %v447
  %658 = vmatmul.mubr.bf16.gmra.mrb[0].mxu0 %v175
  %v659 = vpop.f32.mrb[0].mxu0
  %v660 = vadd.f32 %v106, %v659
  %v661 = vpop.f32.mrb[0].mxu0
  %v662 = vadd.f32 %v110, %v661
  %v663 = vpop.f32.mrb[0].mxu0
  %v664 = vadd.f32 %v106, %v663
  %v665 = vpop.f32.mrb[0].mxu0
  %v666 = vadd.f32 %v110, %v665
  %667 = vmatprep.mubr.bf16.mxu0 %v450
  %668 = vmatmul.mubr.bf16.gmra.mrb[0].mxu0 %v177
  %v669 = vpop.f32.mrb[0].mxu0
  %v670 = vadd.f32 %v106, %v669
  %v671 = vpop.f32.mrb[0].mxu0
  %v672 = vadd.f32 %v110, %v671
  %v673 = vpop.f32.mrb[0].mxu0
  %v674 = vadd.f32 %v106, %v673
  %v675 = vpop.f32.mrb[0].mxu0
  %v676 = vadd.f32 %v110, %v675
  %677 = vdwg.mxu0
  %v678 = vpack.c.bf16 %v491, %v487
  %v679 = vpack.c.bf16 %v493, %v489
  %v680 = vpack.c.bf16 %v604, %v600
  %v681 = vpack.c.bf16 %v606, %v602
  %v682 = vpack.c.bf16 %v501, %v497
  %v683 = vpack.c.bf16 %v503, %v499
  %v684 = vpack.c.bf16 %v614, %v610
  %v685 = vpack.c.bf16 %v616, %v612
  %v686 = vpack.c.bf16 %v511, %v507
  %v687 = vpack.c.bf16 %v513, %v509
  %v688 = vpack.c.bf16 %v624, %v620
  %v689 = vpack.c.bf16 %v626, %v622
  %v690 = vpack.c.bf16 %v521, %v517
  %v691 = vpack.c.bf16 %v523, %v519
  %v692 = vpack.c.bf16 %v634, %v630
  %v693 = vpack.c.bf16 %v636, %v632
  %v694 = vpack.c.bf16 %v531, %v527
  %v695 = vpack.c.bf16 %v533, %v529
  %v696 = vpack.c.bf16 %v644, %v640
  %v697 = vpack.c.bf16 %v646, %v642
  %v698 = vpack.c.bf16 %v541, %v537
  %v699 = vpack.c.bf16 %v543, %v539
  %v700 = vpack.c.bf16 %v654, %v650
  %v701 = vpack.c.bf16 %v656, %v652
  %v702 = vpack.c.bf16 %v551, %v547
  %v703 = vpack.c.bf16 %v553, %v549
  %v704 = vpack.c.bf16 %v664, %v660
  %v705 = vpack.c.bf16 %v666, %v662
  %v706 = vpack.c.bf16 %v561, %v557
  %v707 = vpack.c.bf16 %v563, %v559
  %v708 = vpack.c.bf16 %v674, %v670
  %v709 = vpack.c.bf16 %v676, %v672
  %v710 = vld [vmem:[%s3] sm:$0xff]
  %v711 = vld [vmem:[%s3 + $0x8] sm:$0xff]
  %v712 = vld [vmem:[%s3 + $0x10] sm:$0xff]
  %v713 = vld [vmem:[%s3 + $0x18] sm:$0xff]
  %v714 = vld [vmem:[%s3 + $0x20] sm:$0xff]
  %v715 = vld [vmem:[%s3 + $0x28] sm:$0xff]
  %v716 = vld [vmem:[%s3 + $0x30] sm:$0xff]
  %v717 = vld [vmem:[%s3 + $0x38] sm:$0xff]
  %v718 = vld [vmem:[%s3 + $0x40] sm:$0xff]
  %v719 = vld [vmem:[%s3 + $0x48] sm:$0xff]
  %v720 = vld [vmem:[%s3 + $0x50] sm:$0xff]
  %v721 = vld [vmem:[%s3 + $0x58] sm:$0xff]
  %v722 = vld [vmem:[%s3 + $0x60] sm:$0xff]
  %v723 = vld [vmem:[%s3 + $0x68] sm:$0xff]
  %v724 = vld [vmem:[%s3 + $0x70] sm:$0xff]
  %v725 = vld [vmem:[%s3 + $0x78] sm:$0xff]
  %v726 = vld [vmem:[%s3 + $0x80] sm:$0xff]
  %v727 = vld [vmem:[%s3 + $0x88] sm:$0xff]
  %v728 = vld [vmem:[%s3 + $0x90] sm:$0xff]
  %v729 = vld [vmem:[%s3 + $0x98] sm:$0xff]
  %v730 = vld [vmem:[%s3 + $0xa0] sm:$0xff]
  %v731 = vld [vmem:[%s3 + $0xa8] sm:$0xff]
  %v732 = vld [vmem:[%s3 + $0xb0] sm:$0xff]
  %v733 = vld [vmem:[%s3 + $0xb8] sm:$0xff]
  %v734 = vld [vmem:[%s3 + $0xc0] sm:$0xff]
  %v735 = vld [vmem:[%s3 + $0xc8] sm:$0xff]
  %v736 = vld [vmem:[%s3 + $0xd0] sm:$0xff]
  %v737 = vld [vmem:[%s3 + $0xd8] sm:$0xff]
  %v738 = vld [vmem:[%s3 + $0xe0] sm:$0xff]
  %v739 = vld [vmem:[%s3 + $0xe8] sm:$0xff]
  %v740 = vld [vmem:[%s3 + $0xf0] sm:$0xff]
  %v741 = vld [vmem:[%s3 + $0xf8] sm:$0xff]
  %v742 = vld [vmem:[%s3 + $0x100] sm:$0xff]
  %v743 = vld [vmem:[%s3 + $0x108] sm:$0xff]
  %v744 = vld [vmem:[%s3 + $0x110] sm:$0xff]
  %v745 = vld [vmem:[%s3 + $0x118] sm:$0xff]
  %v746 = vld [vmem:[%s3 + $0x120] sm:$0xff]
  %v747 = vld [vmem:[%s3 + $0x128] sm:$0xff]
  %v748 = vld [vmem:[%s3 + $0x130] sm:$0xff]
  %v749 = vld [vmem:[%s3 + $0x138] sm:$0xff]
  %v750 = vld [vmem:[%s3 + $0x140] sm:$0xff]
  %v751 = vld [vmem:[%s3 + $0x148] sm:$0xff]
  %v752 = vld [vmem:[%s3 + $0x150] sm:$0xff]
  %v753 = vld [vmem:[%s3 + $0x158] sm:$0xff]
  %v754 = vld [vmem:[%s3 + $0x160] sm:$0xff]
  %v755 = vld [vmem:[%s3 + $0x168] sm:$0xff]
  %v756 = vld [vmem:[%s3 + $0x170] sm:$0xff]
  %v757 = vld [vmem:[%s3 + $0x178] sm:$0xff]
  %v758 = vld [vmem:[%s3 + $0x180] sm:$0xff]
  %v759 = vld [vmem:[%s3 + $0x188] sm:$0xff]
  %v760 = vld [vmem:[%s4] sm:$0x3]
  %v762 = vlaneseq
  %v763 = vshrl.u32 %v762, 7
  %v764 = vsub.s32 0, %v763
  %v765 = vrot.slane %v760, %v764
  %v766 = vlaneseq
  %v767 = vshrl.u32 %v766, 7
  %v768 = vsub.s32 1, %v767
  %v769 = vrot.slane %v760, %v768
  %v822 = vunpack.c.l.b16 %v710
  %v823 = vunpack.c.h.b16 %v710
  %v824 = vunpack.c.l.b16 %v711
  %v825 = vunpack.c.h.b16 %v711
  %v826 = vunpack.c.l.b16 %v712
  %v827 = vunpack.c.h.b16 %v712
  %v828 = vunpack.c.l.b16 %v713
  %v829 = vunpack.c.h.b16 %v713
  %v830 = vunpack.c.l.b16 %v714
  %v831 = vunpack.c.h.b16 %v714
  %v832 = vunpack.c.l.b16 %v715
  %v833 = vunpack.c.h.b16 %v715
  %v834 = vunpack.c.l.b16 %v716
  %v835 = vunpack.c.h.b16 %v716
  %v836 = vunpack.c.l.b16 %v717
  %v837 = vunpack.c.h.b16 %v717
  %v838 = vunpack.c.l.b16 %v718
  %v839 = vunpack.c.h.b16 %v718
  %v840 = vunpack.c.l.b16 %v719
  %v841 = vunpack.c.h.b16 %v719
  %v842 = vunpack.c.l.b16 %v720
  %v843 = vunpack.c.h.b16 %v720
  %v844 = vunpack.c.l.b16 %v721
  %v845 = vunpack.c.h.b16 %v721
  %v846 = vunpack.c.l.b16 %v722
  %v847 = vunpack.c.h.b16 %v722
  %v848 = vunpack.c.l.b16 %v723
  %v849 = vunpack.c.h.b16 %v723
  %v850 = vunpack.c.l.b16 %v724
  %v851 = vunpack.c.h.b16 %v724
  %v852 = vunpack.c.l.b16 %v725
  %v853 = vunpack.c.h.b16 %v725
  %v854 = vunpack.c.l.b16 %v726
  %v855 = vunpack.c.h.b16 %v726
  %v856 = vunpack.c.l.b16 %v727
  %v857 = vunpack.c.h.b16 %v727
  %v858 = vunpack.c.l.b16 %v728
  %v859 = vunpack.c.h.b16 %v728
  %v860 = vunpack.c.l.b16 %v729
  %v861 = vunpack.c.h.b16 %v729
  %v862 = vunpack.c.l.b16 %v730
  %v863 = vunpack.c.h.b16 %v730
  %v864 = vunpack.c.l.b16 %v731
  %v865 = vunpack.c.h.b16 %v731
  %v866 = vunpack.c.l.b16 %v732
  %v867 = vunpack.c.h.b16 %v732
  %v868 = vunpack.c.l.b16 %v733
  %v869 = vunpack.c.h.b16 %v733
  %v870 = vunpack.c.l.b16 %v734
  %v871 = vunpack.c.h.b16 %v734
  %v872 = vunpack.c.l.b16 %v735
  %v873 = vunpack.c.h.b16 %v735
  %v874 = vunpack.c.l.b16 %v736
  %v875 = vunpack.c.h.b16 %v736
  %v876 = vunpack.c.l.b16 %v737
  %v877 = vunpack.c.h.b16 %v737
  %v878 = vunpack.c.l.b16 %v738
  %v879 = vunpack.c.h.b16 %v738
  %v880 = vunpack.c.l.b16 %v739
  %v881 = vunpack.c.h.b16 %v739
  %v882 = vunpack.c.l.b16 %v740
  %v883 = vunpack.c.h.b16 %v740
  %v884 = vunpack.c.l.b16 %v741
  %v885 = vunpack.c.h.b16 %v741
  %v886 = vunpack.c.l.b16 %v742
  %v887 = vunpack.c.h.b16 %v742
  %v888 = vunpack.c.l.b16 %v743
  %v889 = vunpack.c.h.b16 %v743
  %v890 = vunpack.c.l.b16 %v744
  %v891 = vunpack.c.h.b16 %v744
  %v892 = vunpack.c.l.b16 %v745
  %v893 = vunpack.c.h.b16 %v745
  %v894 = vunpack.c.l.b16 %v746
  %v895 = vunpack.c.h.b16 %v746
  %v896 = vunpack.c.l.b16 %v747
  %v897 = vunpack.c.h.b16 %v747
  %v898 = vunpack.c.l.b16 %v748
  %v899 = vunpack.c.h.b16 %v748
  %v900 = vunpack.c.l.b16 %v749
  %v901 = vunpack.c.h.b16 %v749
  %v902 = vunpack.c.l.b16 %v750
  %v903 = vunpack.c.h.b16 %v750
  %v904 = vunpack.c.l.b16 %v751
  %v905 = vunpack.c.h.b16 %v751
  %v906 = vunpack.c.l.b16 %v752
  %v907 = vunpack.c.h.b16 %v752
  %v908 = vunpack.c.l.b16 %v753
  %v909 = vunpack.c.h.b16 %v753
  %v910 = vunpack.c.l.b16 %v754
  %v911 = vunpack.c.h.b16 %v754
  %v912 = vunpack.c.l.b16 %v755
  %v913 = vunpack.c.h.b16 %v755
  %v914 = vunpack.c.l.b16 %v756
  %v915 = vunpack.c.h.b16 %v756
  %v916 = vunpack.c.l.b16 %v757
  %v917 = vunpack.c.h.b16 %v757
  %v918 = vunpack.c.l.b16 %v758
  %v919 = vunpack.c.h.b16 %v758
  %v920 = vunpack.c.l.b16 %v759
  %v921 = vunpack.c.h.b16 %v759
  %v922 = vpack.c.b16 %v824, %v822
  %v923 = vpack.c.b16 %v825, %v823
  %v924 = vpack.c.b16 %v828, %v826
  %v925 = vpack.c.b16 %v829, %v827
  %v926 = vpack.c.b16 %v832, %v830
  %v927 = vpack.c.b16 %v833, %v831
  %v928 = vpack.c.b16 %v836, %v834
  %v929 = vpack.c.b16 %v837, %v835
  %v930 = vpack.c.b16 %v840, %v838
  %v931 = vpack.c.b16 %v841, %v839
  %v932 = vpack.c.b16 %v844, %v842
  %v933 = vpack.c.b16 %v845, %v843
  %v934 = vpack.c.b16 %v848, %v846
  %v935 = vpack.c.b16 %v849, %v847
  %v936 = vpack.c.b16 %v852, %v850
  %v937 = vpack.c.b16 %v853, %v851
  %v938 = vpack.c.b16 %v856, %v854
  %v939 = vpack.c.b16 %v857, %v855
  %v940 = vpack.c.b16 %v860, %v858
  %v941 = vpack.c.b16 %v861, %v859
  %v942 = vpack.c.b16 %v864, %v862
  %v943 = vpack.c.b16 %v865, %v863
  %v944 = vpack.c.b16 %v868, %v866
  %v945 = vpack.c.b16 %v869, %v867
  %v946 = vpack.c.b16 %v872, %v870
  %v947 = vpack.c.b16 %v873, %v871
  %v948 = vpack.c.b16 %v876, %v874
  %v949 = vpack.c.b16 %v877, %v875
  %v950 = vpack.c.b16 %v880, %v878
  %v951 = vpack.c.b16 %v881, %v879
  %v952 = vpack.c.b16 %v884, %v882
  %v953 = vpack.c.b16 %v885, %v883
  %v954 = vpack.c.b16 %v888, %v886
  %v955 = vpack.c.b16 %v889, %v887
  %v956 = vpack.c.b16 %v892, %v890
  %v957 = vpack.c.b16 %v893, %v891
  %v958 = vpack.c.b16 %v896, %v894
  %v959 = vpack.c.b16 %v897, %v895
  %v960 = vpack.c.b16 %v900, %v898
  %v961 = vpack.c.b16 %v901, %v899
  %v962 = vpack.c.b16 %v904, %v902
  %v963 = vpack.c.b16 %v905, %v903
  %v964 = vpack.c.b16 %v908, %v906
  %v965 = vpack.c.b16 %v909, %v907
  %v966 = vpack.c.b16 %v912, %v910
  %v967 = vpack.c.b16 %v913, %v911
  %v968 = vpack.c.b16 %v916, %v914
  %v969 = vpack.c.b16 %v917, %v915
  %v970 = vpack.c.b16 %v920, %v918
  %v971 = vpack.c.b16 %v921, %v919
  %vm1022 = vcmask 130048
  %v1024 = vsel %vm1022, %v681, 0
  %v1027 = vsel %vm1022, %v685, 0
  %v1030 = vsel %vm1022, %v689, 0
  %v1033 = vsel %vm1022, %v693, 0
  %v1036 = vsel %vm1022, %v697, 0
  %v1039 = vsel %vm1022, %v701, 0
  %v1042 = vsel %vm1022, %v705, 0
  %v1045 = vsel %vm1022, %v709, 0
  %1047 = vmatprep.subr.bf16.mxu0 %v923
  %1048 = vmatpush1.bf16.msra.mxu0 %v922
  %1049 = vmatprep.subr.bf16.mxu0 %v925
  %1050 = vmatpush1.bf16.msra.mxu0 %v924
  %1051 = vmatprep.subr.bf16.mxu0 %v927
  %1052 = vmatpush1.bf16.msra.mxu0 %v926
  %1053 = vmatprep.subr.bf16.mxu0 %v929
  %1054 = vmatpush1.bf16.msra.mxu0 %v928
  %1055 = vmatprep.subr.bf16.mxu0 %v931
  %1056 = vmatpush1.bf16.msra.mxu0 %v930
  %1057 = vmatprep.subr.bf16.mxu0 %v933
  %1058 = vmatpush1.bf16.msra.mxu0 %v932
  %1059 = vmatprep.subr.bf16.mxu0 %v935
  %1060 = vmatpush1.bf16.msra.mxu0 %v934
  %1061 = vmatprep.subr.bf16.mxu0 %v937
  %1062 = vmatpush1.bf16.msra.mxu0 %v936
  %1063 = vmatprep.subr.bf16.mxu0 %v939
  %1064 = vmatpush1.bf16.msra.mxu0 %v938
  %1065 = vmatprep.subr.bf16.mxu0 %v941
  %1066 = vmatpush1.bf16.msra.mxu0 %v940
  %1067 = vmatprep.subr.bf16.mxu0 %v943
  %1068 = vmatpush1.bf16.msra.mxu0 %v942
  %1069 = vmatprep.subr.bf16.mxu0 %v945
  %1070 = vmatpush1.bf16.msra.mxu0 %v944
  %1071 = vmatprep.subr.bf16.mxu0 %v947
  %1072 = vmatpush1.bf16.msra.mxu0 %v946
  %1073 = vmatprep.subr.bf16.mxu0 %v949
  %1074 = vmatpush1.bf16.msra.mxu0 %v948
  %1075 = vmatprep.subr.bf16.mxu0 %v951
  %1076 = vmatpush1.bf16.msra.mxu0 %v950
  %1077 = vmatprep.subr.bf16.mxu0 %v953
  %1078 = vmatpush1.bf16.msra.mxu0 %v952
  %1079 = vmatprep.mubr.bf16.mxu0 %v679
  %1080 = vmatmul.mubr.bf16.gmra.mrb[0].mxu0 %v678
  %v1081 = vpop.f32.mrb[0].mxu0
  %v1082 = vadd.f32 %v765, %v1081
  %v1083 = vpop.f32.mrb[0].mxu0
  %v1084 = vadd.f32 %v769, %v1083
  %v1085 = vpop.f32.mrb[0].mxu0
  %v1086 = vadd.f32 %v765, %v1085
  %v1087 = vpop.f32.mrb[0].mxu0
  %v1088 = vadd.f32 %v769, %v1087
  %1089 = vmatprep.mubr.bf16.mxu0 %v683
  %1090 = vmatmul.mubr.bf16.gmra.mrb[0].mxu0 %v682
  %v1091 = vpop.f32.mrb[0].mxu0
  %v1092 = vadd.f32 %v765, %v1091
  %v1093 = vpop.f32.mrb[0].mxu0
  %v1094 = vadd.f32 %v769, %v1093
  %v1095 = vpop.f32.mrb[0].mxu0
  %v1096 = vadd.f32 %v765, %v1095
  %v1097 = vpop.f32.mrb[0].mxu0
  %v1098 = vadd.f32 %v769, %v1097
  %1099 = vmatprep.mubr.bf16.mxu0 %v687
  %1100 = vmatmul.mubr.bf16.gmra.mrb[0].mxu0 %v686
  %v1101 = vpop.f32.mrb[0].mxu0
  %v1102 = vadd.f32 %v765, %v1101
  %v1103 = vpop.f32.mrb[0].mxu0
  %v1104 = vadd.f32 %v769, %v1103
  %v1105 = vpop.f32.mrb[0].mxu0
  %v1106 = vadd.f32 %v765, %v1105
  %v1107 = vpop.f32.mrb[0].mxu0
  %v1108 = vadd.f32 %v769, %v1107
  %1109 = vmatprep.mubr.bf16.mxu0 %v691
  %1110 = vmatmul.mubr.bf16.gmra.mrb[0].mxu0 %v690
  %v1111 = vpop.f32.mrb[0].mxu0
  %v1112 = vadd.f32 %v765, %v1111
  %v1113 = vpop.f32.mrb[0].mxu0
  %v1114 = vadd.f32 %v769, %v1113
  %v1115 = vpop.f32.mrb[0].mxu0
  %v1116 = vadd.f32 %v765, %v1115
  %v1117 = vpop.f32.mrb[0].mxu0
  %v1118 = vadd.f32 %v769, %v1117
  %1119 = vmatprep.mubr.bf16.mxu0 %v695
  %1120 = vmatmul.mubr.bf16.gmra.mrb[0].mxu0 %v694
  %v1121 = vpop.f32.mrb[0].mxu0
  %v1122 = vadd.f32 %v765, %v1121
  %v1123 = vpop.f32.mrb[0].mxu0
  %v1124 = vadd.f32 %v769, %v1123
  %v1125 = vpop.f32.mrb[0].mxu0
  %v1126 = vadd.f32 %v765, %v1125
  %v1127 = vpop.f32.mrb[0].mxu0
  %v1128 = vadd.f32 %v769, %v1127
  %1129 = vmatprep.mubr.bf16.mxu0 %v699
  %1130 = vmatmul.mubr.bf16.gmra.mrb[0].mxu0 %v698
  %v1131 = vpop.f32.mrb[0].mxu0
  %v1132 = vadd.f32 %v765, %v1131
  %v1133 = vpop.f32.mrb[0].mxu0
  %v1134 = vadd.f32 %v769, %v1133
  %v1135 = vpop.f32.mrb[0].mxu0
  %v1136 = vadd.f32 %v765, %v1135
  %v1137 = vpop.f32.mrb[0].mxu0
  %v1138 = vadd.f32 %v769, %v1137
  %1139 = vmatprep.mubr.bf16.mxu0 %v703
  %1140 = vmatmul.mubr.bf16.gmra.mrb[0].mxu0 %v702
  %v1141 = vpop.f32.mrb[0].mxu0
  %v1142 = vadd.f32 %v765, %v1141
  %v1143 = vpop.f32.mrb[0].mxu0
  %v1144 = vadd.f32 %v769, %v1143
  %v1145 = vpop.f32.mrb[0].mxu0
  %v1146 = vadd.f32 %v765, %v1145
  %v1147 = vpop.f32.mrb[0].mxu0
  %v1148 = vadd.f32 %v769, %v1147
  %1149 = vmatprep.mubr.bf16.mxu0 %v707
  %1150 = vmatmul.mubr.bf16.gmra.mrb[0].mxu0 %v706
  %v1151 = vpop.f32.mrb[0].mxu0
  %v1152 = vadd.f32 %v765, %v1151
  %v1153 = vpop.f32.mrb[0].mxu0
  %v1154 = vadd.f32 %v769, %v1153
  %v1155 = vpop.f32.mrb[0].mxu0
  %v1156 = vadd.f32 %v765, %v1155
  %v1157 = vpop.f32.mrb[0].mxu0
  %v1158 = vadd.f32 %v769, %v1157
  %1159 = vdwg.mxu0
  %1160 = vmatprep.subr.bf16.mxu0 %v955
  %1161 = vmatpush1.bf16.msra.mxu0 %v954
  %1162 = vmatprep.subr.bf16.mxu0 %v957
  %1163 = vmatpush1.bf16.msra.mxu0 %v956
  %1164 = vmatprep.subr.bf16.mxu0 %v959
  %1165 = vmatpush1.bf16.msra.mxu0 %v958
  %1166 = vmatprep.subr.bf16.mxu0 %v961
  %1167 = vmatpush1.bf16.msra.mxu0 %v960
  %1168 = vmatprep.subr.bf16.mxu0 %v963
  %1169 = vmatpush1.bf16.msra.mxu0 %v962
  %1170 = vmatprep.subr.bf16.mxu0 %v965
  %1171 = vmatpush1.bf16.msra.mxu0 %v964
  %1172 = vmatprep.subr.bf16.mxu0 %v967
  %1173 = vmatpush1.bf16.msra.mxu0 %v966
  %1174 = vmatprep.subr.bf16.mxu0 %v969
  %1175 = vmatpush1.bf16.msra.mxu0 %v968
  %1176 = vmatprep.subr.bf16.mxu0 %v971
  %1177 = vmatpush1.bf16.msra.mxu0 %v970
  %1178 = vmatprep.subr.bf16.mxu0 0
  %1179 = vmatpush1.bf16.msra.mxu0 0
  %1180 = vmatprep.subr.bf16.mxu0 0
  %1181 = vmatpush1.bf16.msra.mxu0 0
  %1182 = vmatprep.subr.bf16.mxu0 0
  %1183 = vmatpush1.bf16.msra.mxu0 0
  %1184 = vmatprep.subr.bf16.mxu0 0
  %1185 = vmatpush1.bf16.msra.mxu0 0
  %1186 = vmatprep.subr.bf16.mxu0 0
  %1187 = vmatpush1.bf16.msra.mxu0 0
  %1188 = vmatprep.subr.bf16.mxu0 0
  %1189 = vmatpush1.bf16.msra.mxu0 0
  %1190 = vmatprep.subr.bf16.mxu0 0
  %1191 = vmatpush1.bf16.msra.mxu0 0
  %1192 = vmatprep.mubr.bf16.mxu0 %v1024
  %1193 = vmatmul.mubr.bf16.gmra.mrb[0].mxu0 %v680
  %v1194 = vpop.f32.mrb[0].mxu0
  %v1195 = vadd.f32 %v1082, %v1194
  %v1196 = vpop.f32.mrb[0].mxu0
  %v1197 = vadd.f32 %v1084, %v1196
  %v1198 = vpop.f32.mrb[0].mxu0
  %v1199 = vadd.f32 %v1086, %v1198
  %v1200 = vpop.f32.mrb[0].mxu0
  %v1201 = vadd.f32 %v1088, %v1200
  %1202 = vmatprep.mubr.bf16.mxu0 %v1027
  %1203 = vmatmul.mubr.bf16.gmra.mrb[0].mxu0 %v684
  %v1204 = vpop.f32.mrb[0].mxu0
  %v1205 = vadd.f32 %v1092, %v1204
  %v1206 = vpop.f32.mrb[0].mxu0
  %v1207 = vadd.f32 %v1094, %v1206
  %v1208 = vpop.f32.mrb[0].mxu0
  %v1209 = vadd.f32 %v1096, %v1208
  %v1210 = vpop.f32.mrb[0].mxu0
  %v1211 = vadd.f32 %v1098, %v1210
  %1212 = vmatprep.mubr.bf16.mxu0 %v1030
  %1213 = vmatmul.mubr.bf16.gmra.mrb[0].mxu0 %v688
  %v1214 = vpop.f32.mrb[0].mxu0
  %v1215 = vadd.f32 %v1102, %v1214
  %v1216 = vpop.f32.mrb[0].mxu0
  %v1217 = vadd.f32 %v1104, %v1216
  %v1218 = vpop.f32.mrb[0].mxu0
  %v1219 = vadd.f32 %v1106, %v1218
  %v1220 = vpop.f32.mrb[0].mxu0
  %v1221 = vadd.f32 %v1108, %v1220
  %1222 = vmatprep.mubr.bf16.mxu0 %v1033
  %1223 = vmatmul.mubr.bf16.gmra.mrb[0].mxu0 %v692
  %v1224 = vpop.f32.mrb[0].mxu0
  %v1225 = vadd.f32 %v1112, %v1224
  %v1226 = vpop.f32.mrb[0].mxu0
  %v1227 = vadd.f32 %v1114, %v1226
  %v1228 = vpop.f32.mrb[0].mxu0
  %v1229 = vadd.f32 %v1116, %v1228
  %v1230 = vpop.f32.mrb[0].mxu0
  %v1231 = vadd.f32 %v1118, %v1230
  %1232 = vmatprep.mubr.bf16.mxu0 %v1036
  %1233 = vmatmul.mubr.bf16.gmra.mrb[0].mxu0 %v696
  %v1234 = vpop.f32.mrb[0].mxu0
  %v1235 = vadd.f32 %v1122, %v1234
  %v1236 = vpop.f32.mrb[0].mxu0
  %v1237 = vadd.f32 %v1124, %v1236
  %v1238 = vpop.f32.mrb[0].mxu0
  %v1239 = vadd.f32 %v1126, %v1238
  %v1240 = vpop.f32.mrb[0].mxu0
  %v1241 = vadd.f32 %v1128, %v1240
  %1242 = vmatprep.mubr.bf16.mxu0 %v1039
  %1243 = vmatmul.mubr.bf16.gmra.mrb[0].mxu0 %v700
  %v1244 = vpop.f32.mrb[0].mxu0
  %v1245 = vadd.f32 %v1132, %v1244
  %v1246 = vpop.f32.mrb[0].mxu0
  %v1247 = vadd.f32 %v1134, %v1246
  %v1248 = vpop.f32.mrb[0].mxu0
  %v1249 = vadd.f32 %v1136, %v1248
  %v1250 = vpop.f32.mrb[0].mxu0
  %v1251 = vadd.f32 %v1138, %v1250
  %1252 = vmatprep.mubr.bf16.mxu0 %v1042
  %1253 = vmatmul.mubr.bf16.gmra.mrb[0].mxu0 %v704
  %v1254 = vpop.f32.mrb[0].mxu0
  %v1255 = vadd.f32 %v1142, %v1254
  %v1256 = vpop.f32.mrb[0].mxu0
  %v1257 = vadd.f32 %v1144, %v1256
  %v1258 = vpop.f32.mrb[0].mxu0
  %v1259 = vadd.f32 %v1146, %v1258
  %v1260 = vpop.f32.mrb[0].mxu0
  %v1261 = vadd.f32 %v1148, %v1260
  %1262 = vmatprep.mubr.bf16.mxu0 %v1045
  %1263 = vmatmul.mubr.bf16.gmra.mrb[0].mxu0 %v708
  %v1264 = vpop.f32.mrb[0].mxu0
  %v1265 = vadd.f32 %v1152, %v1264
  %v1266 = vpop.f32.mrb[0].mxu0
  %v1267 = vadd.f32 %v1154, %v1266
  %v1268 = vpop.f32.mrb[0].mxu0
  %v1269 = vadd.f32 %v1156, %v1268
  %v1270 = vpop.f32.mrb[0].mxu0
  %v1271 = vadd.f32 %v1158, %v1270
  %1272 = vdwg.mxu0
  %v1273 = vtanh.pop %v1195
  %v1274 = vtanh.pop %v1197
  %v1275 = vtanh.pop %v1199
  %v1276 = vtanh.pop %v1201
  %v1277 = vtanh.pop %v1205
  %v1278 = vtanh.pop %v1207
  %v1279 = vtanh.pop %v1209
  %v1280 = vtanh.pop %v1211
  %v1281 = vtanh.pop %v1215
  %v1282 = vtanh.pop %v1217
  %v1283 = vtanh.pop %v1219
  %v1284 = vtanh.pop %v1221
  %v1285 = vtanh.pop %v1225
  %v1286 = vtanh.pop %v1227
  %v1287 = vtanh.pop %v1229
  %v1288 = vtanh.pop %v1231
  %v1289 = vtanh.pop %v1235
  %v1290 = vtanh.pop %v1237
  %v1291 = vtanh.pop %v1239
  %v1292 = vtanh.pop %v1241
  %v1293 = vtanh.pop %v1245
  %v1294 = vtanh.pop %v1247
  %v1295 = vtanh.pop %v1249
  %v1296 = vtanh.pop %v1251
  %v1297 = vtanh.pop %v1255
  %v1298 = vtanh.pop %v1257
  %v1299 = vtanh.pop %v1259
  %v1300 = vtanh.pop %v1261
  %v1301 = vtanh.pop %v1265
  %v1302 = vtanh.pop %v1267
  %v1303 = vtanh.pop %v1269
  %v1304 = vtanh.pop %v1271
  %v1305 = vld [vmem:[%s5] sm:$0x3]
  %v1307 = vlaneseq
  %v1308 = vshrl.u32 %v1307, 7
  %v1309 = vsub.s32 0, %v1308
  %v1310 = vrot.slane %v1305, %v1309
  %v1311 = vlaneseq
  %v1312 = vshrl.u32 %v1311, 7
  %v1313 = vsub.s32 1, %v1312
  %v1314 = vrot.slane %v1305, %v1313
  %v1317 = vmul.f32 %v1273, %v1310
  %v1318 = vmul.f32 %v1274, %v1314
  %v1319 = vmul.f32 %v1275, %v1310
  %v1320 = vmul.f32 %v1276, %v1314
  %v1321 = vmul.f32 %v1277, %v1310
  %v1322 = vmul.f32 %v1278, %v1314
  %v1323 = vmul.f32 %v1279, %v1310
  %v1324 = vmul.f32 %v1280, %v1314
  %v1325 = vmul.f32 %v1281, %v1310
  %v1326 = vmul.f32 %v1282, %v1314
  %v1327 = vmul.f32 %v1283, %v1310
  %v1328 = vmul.f32 %v1284, %v1314
  %v1329 = vmul.f32 %v1285, %v1310
  %v1330 = vmul.f32 %v1286, %v1314
  %v1331 = vmul.f32 %v1287, %v1310
  %v1332 = vmul.f32 %v1288, %v1314
  %v1333 = vmul.f32 %v1289, %v1310
  %v1334 = vmul.f32 %v1290, %v1314
  %v1335 = vmul.f32 %v1291, %v1310
  %v1336 = vmul.f32 %v1292, %v1314
  %v1337 = vmul.f32 %v1293, %v1310
  %v1338 = vmul.f32 %v1294, %v1314
  %v1339 = vmul.f32 %v1295, %v1310
  %v1340 = vmul.f32 %v1296, %v1314
  %v1341 = vmul.f32 %v1297, %v1310
  %v1342 = vmul.f32 %v1298, %v1314
  %v1343 = vmul.f32 %v1299, %v1310
  %v1344 = vmul.f32 %v1300, %v1314
  %v1345 = vmul.f32 %v1301, %v1310
  %v1346 = vmul.f32 %v1302, %v1314
  %v1347 = vmul.f32 %v1303, %v1310
  %v1348 = vmul.f32 %v1304, %v1314
  %vm1349 = vcmask 588800
  %v1350 = vsel %vm1349, %v1318, 0.0
  %v1351 = vadd.f32 %v1317, %v1350
  %1352 = vadd.xlane.f32.xlu0 %v1351
  %v1353 = vpop.xlane.xlu0 %1352
  %v1354 = vsel %vm1349, %v1320, 0.0
  %v1355 = vadd.f32 %v1319, %v1354
  %1356 = vadd.xlane.f32.xlu0 %v1355
  %v1357 = vpop.xlane.xlu0 %1356
  %v1358 = vsel %vm1349, %v1322, 0.0
  %v1359 = vadd.f32 %v1321, %v1358
  %1360 = vadd.xlane.f32.xlu0 %v1359
  %v1361 = vpop.xlane.xlu0 %1360
  %v1362 = vsel %vm1349, %v1324, 0.0
  %v1363 = vadd.f32 %v1323, %v1362
  %1364 = vadd.xlane.f32.xlu0 %v1363
  %v1365 = vpop.xlane.xlu0 %1364
  %v1366 = vsel %vm1349, %v1326, 0.0
  %v1367 = vadd.f32 %v1325, %v1366
  %1368 = vadd.xlane.f32.xlu0 %v1367
  %v1369 = vpop.xlane.xlu0 %1368
  %v1370 = vsel %vm1349, %v1328, 0.0
  %v1371 = vadd.f32 %v1327, %v1370
  %1372 = vadd.xlane.f32.xlu0 %v1371
  %v1373 = vpop.xlane.xlu0 %1372
  %v1374 = vsel %vm1349, %v1330, 0.0
  %v1375 = vadd.f32 %v1329, %v1374
  %1376 = vadd.xlane.f32.xlu0 %v1375
  %v1377 = vpop.xlane.xlu0 %1376
  %v1378 = vsel %vm1349, %v1332, 0.0
  %v1379 = vadd.f32 %v1331, %v1378
  %1380 = vadd.xlane.f32.xlu0 %v1379
  %v1381 = vpop.xlane.xlu0 %1380
  %v1382 = vsel %vm1349, %v1334, 0.0
  %v1383 = vadd.f32 %v1333, %v1382
  %1384 = vadd.xlane.f32.xlu0 %v1383
  %v1385 = vpop.xlane.xlu0 %1384
  %v1386 = vsel %vm1349, %v1336, 0.0
  %v1387 = vadd.f32 %v1335, %v1386
  %1388 = vadd.xlane.f32.xlu0 %v1387
  %v1389 = vpop.xlane.xlu0 %1388
  %v1390 = vsel %vm1349, %v1338, 0.0
  %v1391 = vadd.f32 %v1337, %v1390
  %1392 = vadd.xlane.f32.xlu0 %v1391
  %v1393 = vpop.xlane.xlu0 %1392
  %v1394 = vsel %vm1349, %v1340, 0.0
  %v1395 = vadd.f32 %v1339, %v1394
  %1396 = vadd.xlane.f32.xlu0 %v1395
  %v1397 = vpop.xlane.xlu0 %1396
  %v1398 = vsel %vm1349, %v1342, 0.0
  %v1399 = vadd.f32 %v1341, %v1398
  %1400 = vadd.xlane.f32.xlu0 %v1399
  %v1401 = vpop.xlane.xlu0 %1400
  %v1402 = vsel %vm1349, %v1344, 0.0
  %v1403 = vadd.f32 %v1343, %v1402
  %1404 = vadd.xlane.f32.xlu0 %v1403
  %v1405 = vpop.xlane.xlu0 %1404
  %v1406 = vsel %vm1349, %v1346, 0.0
  %v1407 = vadd.f32 %v1345, %v1406
  %1408 = vadd.xlane.f32.xlu0 %v1407
  %v1409 = vpop.xlane.xlu0 %1408
  %v1410 = vsel %vm1349, %v1348, 0.0
  %v1411 = vadd.f32 %v1347, %v1410
  %1412 = vadd.xlane.f32.xlu0 %v1411
  %v1413 = vpop.xlane.xlu0 %1412
  %v1414 = vld [vmem:[#allocation2] sm:$0x1]
  %v1416 = vlaneseq
  %v1417 = vshrl.u32 %v1416, 7
  %v1418 = vsub.s32 0, %v1417
  %v1419 = vrot.slane %v1414, %v1418
  %1420 = vset.pattern.permute.xlu0 0
  %1421 = vperm.xlu0 %1420, %v1419
  %v1422 = vpop.permute.xlu0 %1421
  %v1424 = vadd.f32 %v1353, %v1422
  %v1425 = vadd.f32 %v1357, %v1422
  %v1426 = vadd.f32 %v1361, %v1422
  %v1427 = vadd.f32 %v1365, %v1422
  %v1428 = vadd.f32 %v1369, %v1422
  %v1429 = vadd.f32 %v1373, %v1422
  %v1430 = vadd.f32 %v1377, %v1422
  %v1431 = vadd.f32 %v1381, %v1422
  %v1432 = vadd.f32 %v1385, %v1422
  %v1433 = vadd.f32 %v1389, %v1422
  %v1434 = vadd.f32 %v1393, %v1422
  %v1435 = vadd.f32 %v1397, %v1422
  %v1436 = vadd.f32 %v1401, %v1422
  %v1437 = vadd.f32 %v1405, %v1422
  %v1438 = vadd.f32 %v1409, %v1422
  %v1439 = vadd.f32 %v1413, %v1422
  %v1440 = vlaneseq
  %v1441 = vand.u32 %v1440, 127
  %vm1442 = vcmp.lt.s32.totalorder %v1441, 30
  %v1459 = vlaneseq
  %v1460 = vshrl.u32 %v1459, 7
  %v1461 = vsub.s32 %v1441, %v1460
  %v1462 = vrot.slane %v1424, %v1461
  %v1463 = vadd.s32 %v1441, 4294967288
  %v1464 = vlaneseq
  %v1465 = vshrl.u32 %v1464, 7
  %v1466 = vsub.s32 %v1463, %v1465
  %v1467 = vrot.slane %v1425, %v1466
  %vm1468 = vcmask 130112
  %v1469 = vsel %vm1468, %v1467, %v1462
  %v1470 = vadd.s32 %v1441, 4294967280
  %v1471 = vlaneseq
  %v1472 = vshrl.u32 %v1471, 7
  %v1473 = vsub.s32 %v1470, %v1472
  %v1474 = vrot.slane %v1426, %v1473
  %vm1475 = vcmask 195712
  %v1476 = vsel %vm1475, %v1474, %v1469
  %v1477 = vadd.s32 %v1441, 4294967272
  %v1478 = vlaneseq
  %v1479 = vshrl.u32 %v1478, 7
  %v1480 = vsub.s32 %v1477, %v1479
  %v1481 = vrot.slane %v1427, %v1480
  %vm1482 = vcmask 261312
  %v1483 = vsel %vm1482, %v1481, %v1476
  %v1484 = vlaneseq
  %v1485 = vshrl.u32 %v1484, 7
  %v1486 = vsub.s32 %v1441, %v1485
  %v1487 = vrot.slane %v1428, %v1486
  %v1488 = vlaneseq
  %v1489 = vshrl.u32 %v1488, 7
  %v1490 = vsub.s32 %v1463, %v1489
  %v1491 = vrot.slane %v1429, %v1490
  %v1492 = vsel %vm1468, %v1491, %v1487
  %v1493 = vlaneseq
  %v1494 = vshrl.u32 %v1493, 7
  %v1495 = vsub.s32 %v1470, %v1494
  %v1496 = vrot.slane %v1430, %v1495
  %v1497 = vsel %vm1475, %v1496, %v1492
  %v1498 = vlaneseq
  %v1499 = vshrl.u32 %v1498, 7
  %v1500 = vsub.s32 %v1477, %v1499
  %v1501 = vrot.slane %v1431, %v1500
  %v1502 = vsel %vm1482, %v1501, %v1497
  %v1503 = vlaneseq
  %v1504 = vshrl.u32 %v1503, 7
  %v1505 = vsub.s32 %v1441, %v1504
  %v1506 = vrot.slane %v1432, %v1505
  %v1507 = vlaneseq
  %v1508 = vshrl.u32 %v1507, 7
  %v1509 = vsub.s32 %v1463, %v1508
  %v1510 = vrot.slane %v1433, %v1509
  %v1511 = vsel %vm1468, %v1510, %v1506
  %v1512 = vlaneseq
  %v1513 = vshrl.u32 %v1512, 7
  %v1514 = vsub.s32 %v1470, %v1513
  %v1515 = vrot.slane %v1434, %v1514
  %v1516 = vsel %vm1475, %v1515, %v1511
  %v1517 = vlaneseq
  %v1518 = vshrl.u32 %v1517, 7
  %v1519 = vsub.s32 %v1477, %v1518
  %v1520 = vrot.slane %v1435, %v1519
  %v1521 = vsel %vm1482, %v1520, %v1516
  %v1522 = vlaneseq
  %v1523 = vshrl.u32 %v1522, 7
  %v1524 = vsub.s32 %v1441, %v1523
  %v1525 = vrot.slane %v1436, %v1524
  %v1526 = vlaneseq
  %v1527 = vshrl.u32 %v1526, 7
  %v1528 = vsub.s32 %v1463, %v1527
  %v1529 = vrot.slane %v1437, %v1528
  %v1530 = vsel %vm1468, %v1529, %v1525
  %v1531 = vlaneseq
  %v1532 = vshrl.u32 %v1531, 7
  %v1533 = vsub.s32 %v1470, %v1532
  %v1534 = vrot.slane %v1438, %v1533
  %v1535 = vsel %vm1475, %v1534, %v1530
  %v1536 = vlaneseq
  %v1537 = vshrl.u32 %v1536, 7
  %v1538 = vsub.s32 %v1477, %v1537
  %v1539 = vrot.slane %v1439, %v1538
  %v1540 = vsel %vm1482, %v1539, %v1535
  %vm1541 = vcmask 1041409
  %v1542 = vsel %vm1541, %v1502, %v1483
  %vm1543 = vcmask 1042434
  %v1544 = vsel %vm1543, %v1521, %v1542
  %vm1545 = vcmask 1043459
  %v1546 = vsel %vm1545, %v1540, %v1544
  %v1548 = vsel %vm1442, %v1546, -1e+09
  %vm1549 = vcmask 257024
  %v1550 = vsel %vm1549, %v1548, -inf
  %1551 = vmax.xlane.f32.xlu0 %v1550
  %v1552 = vpop.xlane.xlu0 %1551
  %v1553 = vsub.f32 %v1548, %v1552
  %v1554 = vmul.f32 %v1553, 1.442695
  %v1555 = vpow.pop %v1554
  %v1556 = vsel %vm1549, %v1555, 0.0
  %1557 = vadd.xlane.f32.xlu0 %v1556
  %v1558 = vpop.xlane.xlu0 %1557
  %v1559 = vrcp.pop %v1558
  %v1560 = vmul.f32 %v1555, %v1559
  %v1563 = vunpack.c.l.s4 1966171168
  %v1564 = vunpack.c.0.s8 %v1563
  %v1565 = vlaneseq
  %v1566 = vshrl.u32 %v1565, 7
  %v1567 = vsub.s32 %v1564, %v1566
  %v1568 = vrot.slane %v1560, %v1567
  %v1569 = vcombine.high %v1568, %v1568
  %v1571 = vunpack.c.l.s4 1966171168
  %v1572 = vunpack.c.0.s8 %v1571
  %v1573 = vlaneseq
  %v1574 = vshrl.u32 %v1573, 7
  %v1575 = vsub.s32 %v1572, %v1574
  %v1576 = vrot.slane %v1568, %v1575
  %v1578 = vunpack.c.l.s4 1966171168
  %v1579 = vunpack.c.0.s8 %v1578
  %v1580 = vlaneseq
  %v1581 = vshrl.u32 %v1580, 7
  %v1582 = vsub.s32 %v1579, %v1581
  %v1583 = vrot.slane %v1569, %v1582
  %v1584 = vcombine.high %v1576, %v1576
  %v1585 = vcombine.high %v1583, %v1583
  %vm1586 = vcmask 261120
  %v1587 = vsel %vm1586, %v1576, 0
  %1589 = vmatprep.subr.mxu0 %v489
  %1590 = vmatpush1.msra.mxu0 %v487
  %1591 = vmatprep.subr.mxu0 %v493
  %1592 = vmatpush1.msra.mxu0 %v491
  %1593 = vmatprep.subr.mxu0 %v499
  %1594 = vmatpush1.msra.mxu0 %v497
  %1595 = vmatprep.subr.mxu0 %v503
  %1596 = vmatpush1.msra.mxu0 %v501
  %1597 = vmatprep.subr.mxu0 0.0
  %1598 = vmatpush1.msra.mxu0 0.0
  %1599 = vmatprep.subr.mxu0 0.0
  %1600 = vmatpush1.msra.mxu0 0.0
  %1601 = vmatprep.subr.mxu0 0.0
  %1602 = vmatpush1.msra.mxu0 0.0
  %1603 = vmatprep.subr.mxu0 0.0
  %1604 = vmatpush1.msra.mxu0 0.0
  %1605 = vmatprep.subr.mxu0 0.0
  %1606 = vmatpush1.msra.mxu0 0.0
  %1607 = vmatprep.subr.mxu0 0.0
  %1608 = vmatpush1.msra.mxu0 0.0
  %1609 = vmatprep.subr.mxu0 0.0
  %1610 = vmatpush1.msra.mxu0 0.0
  %1611 = vmatprep.subr.mxu0 0.0
  %1612 = vmatpush1.msra.mxu0 0.0
  %1613 = vmatprep.subr.mxu0 0.0
  %1614 = vmatpush1.msra.mxu0 0.0
  %1615 = vmatprep.subr.mxu0 0.0
  %1616 = vmatpush1.msra.mxu0 0.0
  %1617 = vmatprep.subr.mxu0 0.0
  %1618 = vmatpush1.msra.mxu0 0.0
  %1619 = vmatprep.subr.mxu0 0.0
  %1620 = vmatpush1.msra.mxu0 0.0
  %1621 = vmatprep.subr.mxu0 0.0
  %1622 = vmatpush1.msra.mxu0 0.0
  %1623 = vmatprep.subr.mxu0 0.0
  %1624 = vmatpush1.msra.mxu0 0.0
  %1625 = vmatprep.subr.mxu0 0.0
  %1626 = vmatpush1.msra.mxu0 0.0
  %1627 = vmatprep.subr.mxu0 0.0
  %1628 = vmatpush1.msra.mxu0 0.0
  %1629 = vmatprep.subr.mxu0 0.0
  %1630 = vmatpush1.msra.mxu0 0.0
  %1631 = vmatprep.subr.mxu0 0.0
  %1632 = vmatpush1.msra.mxu0 0.0
  %1633 = vmatprep.subr.mxu0 0.0
  %1634 = vmatpush1.msra.mxu0 0.0
  %1635 = vmatprep.subr.mxu0 0.0
  %1636 = vmatpush1.msra.mxu0 0.0
  %1637 = vmatprep.subr.mxu0 0.0
  %1638 = vmatpush1.msra.mxu0 0.0
  %1639 = vmatprep.subr.mxu0 0.0
  %1640 = vmatpush1.msra.mxu0 0.0
  %1641 = vmatprep.subr.mxu0 0.0
  %1642 = vmatpush1.msra.mxu0 0.0
  %1643 = vmatprep.subr.mxu0 0.0
  %1644 = vmatpush1.msra.mxu0 0.0
  %1645 = vmatprep.subr.mxu0 0.0
  %1646 = vmatpush1.msra.mxu0 0.0
  %1647 = vmatprep.subr.mxu0 0.0
  %1648 = vmatpush1.msra.mxu0 0.0
  %1649 = vmatprep.subr.mxu0 0.0
  %1650 = vmatpush1.msra.mxu0 0.0
  %1651 = vmatprep.subr.mxu0 0.0
  %1652 = vmatpush1.msra.mxu0 0.0
  %1653 = vmatprep.mubr.f32.mxu0 0.0
  %1654 = vmatmul.mubr.f32.gmra.mrb[0].mxu0 %v1587
  %v1655 = vpop.f32.mrb[0].mxu0
  %v1656 = vadd.f32 0.0, %v1655
  %v1657 = vpop.f32.mrb[0].mxu0
  %v1658 = vadd.f32 0.0, %v1657
  %1659 = vdwg.mxu0
  %1660 = vmatprep.subr.mxu0 %v602
  %1661 = vmatpush1.msra.mxu0 %v600
  %1662 = vmatprep.subr.mxu0 %v606
  %1663 = vmatpush1.msra.mxu0 %v604
  %1664 = vmatprep.subr.mxu0 %v612
  %1665 = vmatpush1.msra.mxu0 %v610
  %1666 = vmatprep.subr.mxu0 %v616
  %1667 = vmatpush1.msra.mxu0 %v614
  %1668 = vmatprep.subr.mxu0 0.0
  %1669 = vmatpush1.msra.mxu0 0.0
  %1670 = vmatprep.subr.mxu0 0.0
  %1671 = vmatpush1.msra.mxu0 0.0
  %1672 = vmatprep.subr.mxu0 0.0
  %1673 = vmatpush1.msra.mxu0 0.0
  %1674 = vmatprep.subr.mxu0 0.0
  %1675 = vmatpush1.msra.mxu0 0.0
  %1676 = vmatprep.subr.mxu0 0.0
  %1677 = vmatpush1.msra.mxu0 0.0
  %1678 = vmatprep.subr.mxu0 0.0
  %1679 = vmatpush1.msra.mxu0 0.0
  %1680 = vmatprep.subr.mxu0 0.0
  %1681 = vmatpush1.msra.mxu0 0.0
  %1682 = vmatprep.subr.mxu0 0.0
  %1683 = vmatpush1.msra.mxu0 0.0
  %1684 = vmatprep.subr.mxu0 0.0
  %1685 = vmatpush1.msra.mxu0 0.0
  %1686 = vmatprep.subr.mxu0 0.0
  %1687 = vmatpush1.msra.mxu0 0.0
  %1688 = vmatprep.subr.mxu0 0.0
  %1689 = vmatpush1.msra.mxu0 0.0
  %1690 = vmatprep.subr.mxu0 0.0
  %1691 = vmatpush1.msra.mxu0 0.0
  %1692 = vmatprep.subr.mxu0 0.0
  %1693 = vmatpush1.msra.mxu0 0.0
  %1694 = vmatprep.subr.mxu0 0.0
  %1695 = vmatpush1.msra.mxu0 0.0
  %1696 = vmatprep.subr.mxu0 0.0
  %1697 = vmatpush1.msra.mxu0 0.0
  %1698 = vmatprep.subr.mxu0 0.0
  %1699 = vmatpush1.msra.mxu0 0.0
  %1700 = vmatprep.subr.mxu0 0.0
  %1701 = vmatpush1.msra.mxu0 0.0
  %1702 = vmatprep.subr.mxu0 0.0
  %1703 = vmatpush1.msra.mxu0 0.0
  %1704 = vmatprep.subr.mxu0 0.0
  %1705 = vmatpush1.msra.mxu0 0.0
  %1706 = vmatprep.subr.mxu0 0.0
  %1707 = vmatpush1.msra.mxu0 0.0
  %1708 = vmatprep.subr.mxu0 0.0
  %1709 = vmatpush1.msra.mxu0 0.0
  %1710 = vmatprep.subr.mxu0 0.0
  %1711 = vmatpush1.msra.mxu0 0.0
  %1712 = vmatprep.subr.mxu0 0.0
  %1713 = vmatpush1.msra.mxu0 0.0
  %1714 = vmatprep.subr.mxu0 0.0
  %1715 = vmatpush1.msra.mxu0 0.0
  %1716 = vmatprep.subr.mxu0 0.0
  %1717 = vmatpush1.msra.mxu0 0.0
  %1718 = vmatprep.subr.mxu0 0.0
  %1719 = vmatpush1.msra.mxu0 0.0
  %1720 = vmatprep.subr.mxu0 0.0
  %1721 = vmatpush1.msra.mxu0 0.0
  %1722 = vmatprep.subr.mxu0 0.0
  %1723 = vmatpush1.msra.mxu0 0.0
  %1724 = vmatprep.mubr.f32.mxu0 0.0
  %1725 = vmatmul.mubr.f32.gmra.mrb[0].mxu0 %v1587
  %v1726 = vpop.f32.mrb[0].mxu0
  %v1727 = vadd.f32 0.0, %v1726
  %v1728 = vpop.f32.mrb[0].mxu0
  %v1729 = vadd.f32 0.0, %v1728
  %1730 = vdwg.mxu0
  %v1731 = vsel %vm1586, %v1583, 0
  %1733 = vmatprep.subr.mxu0 %v509
  %1734 = vmatpush1.msra.mxu0 %v507
  %1735 = vmatprep.subr.mxu0 %v513
  %1736 = vmatpush1.msra.mxu0 %v511
  %1737 = vmatprep.subr.mxu0 %v519
  %1738 = vmatpush1.msra.mxu0 %v517
  %1739 = vmatprep.subr.mxu0 %v523
  %1740 = vmatpush1.msra.mxu0 %v521
  %1741 = vmatprep.subr.mxu0 0.0
  %1742 = vmatpush1.msra.mxu0 0.0
  %1743 = vmatprep.subr.mxu0 0.0
  %1744 = vmatpush1.msra.mxu0 0.0
  %1745 = vmatprep.subr.mxu0 0.0
  %1746 = vmatpush1.msra.mxu0 0.0
  %1747 = vmatprep.subr.mxu0 0.0
  %1748 = vmatpush1.msra.mxu0 0.0
  %1749 = vmatprep.subr.mxu0 0.0
  %1750 = vmatpush1.msra.mxu0 0.0
  %1751 = vmatprep.subr.mxu0 0.0
  %1752 = vmatpush1.msra.mxu0 0.0
  %1753 = vmatprep.subr.mxu0 0.0
  %1754 = vmatpush1.msra.mxu0 0.0
  %1755 = vmatprep.subr.mxu0 0.0
  %1756 = vmatpush1.msra.mxu0 0.0
  %1757 = vmatprep.subr.mxu0 0.0
  %1758 = vmatpush1.msra.mxu0 0.0
  %1759 = vmatprep.subr.mxu0 0.0
  %1760 = vmatpush1.msra.mxu0 0.0
  %1761 = vmatprep.subr.mxu0 0.0
  %1762 = vmatpush1.msra.mxu0 0.0
  %1763 = vmatprep.subr.mxu0 0.0
  %1764 = vmatpush1.msra.mxu0 0.0
  %1765 = vmatprep.subr.mxu0 0.0
  %1766 = vmatpush1.msra.mxu0 0.0
  %1767 = vmatprep.subr.mxu0 0.0
  %1768 = vmatpush1.msra.mxu0 0.0
  %1769 = vmatprep.subr.mxu0 0.0
  %1770 = vmatpush1.msra.mxu0 0.0
  %1771 = vmatprep.subr.mxu0 0.0
  %1772 = vmatpush1.msra.mxu0 0.0
  %1773 = vmatprep.subr.mxu0 0.0
  %1774 = vmatpush1.msra.mxu0 0.0
  %1775 = vmatprep.subr.mxu0 0.0
  %1776 = vmatpush1.msra.mxu0 0.0
  %1777 = vmatprep.subr.mxu0 0.0
  %1778 = vmatpush1.msra.mxu0 0.0
  %1779 = vmatprep.subr.mxu0 0.0
  %1780 = vmatpush1.msra.mxu0 0.0
  %1781 = vmatprep.subr.mxu0 0.0
  %1782 = vmatpush1.msra.mxu0 0.0
  %1783 = vmatprep.subr.mxu0 0.0
  %1784 = vmatpush1.msra.mxu0 0.0
  %1785 = vmatprep.subr.mxu0 0.0
  %1786 = vmatpush1.msra.mxu0 0.0
  %1787 = vmatprep.subr.mxu0 0.0
  %1788 = vmatpush1.msra.mxu0 0.0
  %1789 = vmatprep.subr.mxu0 0.0
  %1790 = vmatpush1.msra.mxu0 0.0
  %1791 = vmatprep.subr.mxu0 0.0
  %1792 = vmatpush1.msra.mxu0 0.0
  %1793 = vmatprep.subr.mxu0 0.0
  %1794 = vmatpush1.msra.mxu0 0.0
  %1795 = vmatprep.subr.mxu0 0.0
  %1796 = vmatpush1.msra.mxu0 0.0
  %1797 = vmatprep.mubr.f32.mxu0 0.0
  %1798 = vmatmul.mubr.f32.gmra.mrb[0].mxu0 %v1731
  %v1799 = vpop.f32.mrb[0].mxu0
  %v1800 = vadd.f32 0.0, %v1799
  %v1801 = vpop.f32.mrb[0].mxu0
  %v1802 = vadd.f32 0.0, %v1801
  %1803 = vdwg.mxu0
  %1804 = vmatprep.subr.mxu0 %v622
  %1805 = vmatpush1.msra.mxu0 %v620
  %1806 = vmatprep.subr.mxu0 %v626
  %1807 = vmatpush1.msra.mxu0 %v624
  %1808 = vmatprep.subr.mxu0 %v632
  %1809 = vmatpush1.msra.mxu0 %v630
  %1810 = vmatprep.subr.mxu0 %v636
  %1811 = vmatpush1.msra.mxu0 %v634
  %1812 = vmatprep.subr.mxu0 0.0
  %1813 = vmatpush1.msra.mxu0 0.0
  %1814 = vmatprep.subr.mxu0 0.0
  %1815 = vmatpush1.msra.mxu0 0.0
  %1816 = vmatprep.subr.mxu0 0.0
  %1817 = vmatpush1.msra.mxu0 0.0
  %1818 = vmatprep.subr.mxu0 0.0
  %1819 = vmatpush1.msra.mxu0 0.0
  %1820 = vmatprep.subr.mxu0 0.0
  %1821 = vmatpush1.msra.mxu0 0.0
  %1822 = vmatprep.subr.mxu0 0.0
  %1823 = vmatpush1.msra.mxu0 0.0
  %1824 = vmatprep.subr.mxu0 0.0
  %1825 = vmatpush1.msra.mxu0 0.0
  %1826 = vmatprep.subr.mxu0 0.0
  %1827 = vmatpush1.msra.mxu0 0.0
  %1828 = vmatprep.subr.mxu0 0.0
  %1829 = vmatpush1.msra.mxu0 0.0
  %1830 = vmatprep.subr.mxu0 0.0
  %1831 = vmatpush1.msra.mxu0 0.0
  %1832 = vmatprep.subr.mxu0 0.0
  %1833 = vmatpush1.msra.mxu0 0.0
  %1834 = vmatprep.subr.mxu0 0.0
  %1835 = vmatpush1.msra.mxu0 0.0
  %1836 = vmatprep.subr.mxu0 0.0
  %1837 = vmatpush1.msra.mxu0 0.0
  %1838 = vmatprep.subr.mxu0 0.0
  %1839 = vmatpush1.msra.mxu0 0.0
  %1840 = vmatprep.subr.mxu0 0.0
  %1841 = vmatpush1.msra.mxu0 0.0
  %1842 = vmatprep.subr.mxu0 0.0
  %1843 = vmatpush1.msra.mxu0 0.0
  %1844 = vmatprep.subr.mxu0 0.0
  %1845 = vmatpush1.msra.mxu0 0.0
  %1846 = vmatprep.subr.mxu0 0.0
  %1847 = vmatpush1.msra.mxu0 0.0
  %1848 = vmatprep.subr.mxu0 0.0
  %1849 = vmatpush1.msra.mxu0 0.0
  %1850 = vmatprep.subr.mxu0 0.0
  %1851 = vmatpush1.msra.mxu0 0.0
  %1852 = vmatprep.subr.mxu0 0.0
  %1853 = vmatpush1.msra.mxu0 0.0
  %1854 = vmatprep.subr.mxu0 0.0
  %1855 = vmatpush1.msra.mxu0 0.0
  %1856 = vmatprep.subr.mxu0 0.0
  %1857 = vmatpush1.msra.mxu0 0.0
  %1858 = vmatprep.subr.mxu0 0.0
  %1859 = vmatpush1.msra.mxu0 0.0
  %1860 = vmatprep.subr.mxu0 0.0
  %1861 = vmatpush1.msra.mxu0 0.0
  %1862 = vmatprep.subr.mxu0 0.0
  %1863 = vmatpush1.msra.mxu0 0.0
  %1864 = vmatprep.subr.mxu0 0.0
  %1865 = vmatpush1.msra.mxu0 0.0
  %1866 = vmatprep.subr.mxu0 0.0
  %1867 = vmatpush1.msra.mxu0 0.0
  %1868 = vmatprep.mubr.f32.mxu0 0.0
  %1869 = vmatmul.mubr.f32.gmra.mrb[0].mxu0 %v1731
  %v1870 = vpop.f32.mrb[0].mxu0
  %v1871 = vadd.f32 0.0, %v1870
  %v1872 = vpop.f32.mrb[0].mxu0
  %v1873 = vadd.f32 0.0, %v1872
  %1874 = vdwg.mxu0
  %v1875 = vsel %vm1586, %v1584, 0
  %1877 = vmatprep.subr.mxu0 %v529
  %1878 = vmatpush1.msra.mxu0 %v527
  %1879 = vmatprep.subr.mxu0 %v533
  %1880 = vmatpush1.msra.mxu0 %v531
  %1881 = vmatprep.subr.mxu0 %v539
  %1882 = vmatpush1.msra.mxu0 %v537
  %1883 = vmatprep.subr.mxu0 %v543
  %1884 = vmatpush1.msra.mxu0 %v541
  %1885 = vmatprep.subr.mxu0 0.0
  %1886 = vmatpush1.msra.mxu0 0.0
  %1887 = vmatprep.subr.mxu0 0.0
  %1888 = vmatpush1.msra.mxu0 0.0
  %1889 = vmatprep.subr.mxu0 0.0
  %1890 = vmatpush1.msra.mxu0 0.0
  %1891 = vmatprep.subr.mxu0 0.0
  %1892 = vmatpush1.msra.mxu0 0.0
  %1893 = vmatprep.subr.mxu0 0.0
  %1894 = vmatpush1.msra.mxu0 0.0
  %1895 = vmatprep.subr.mxu0 0.0
  %1896 = vmatpush1.msra.mxu0 0.0
  %1897 = vmatprep.subr.mxu0 0.0
  %1898 = vmatpush1.msra.mxu0 0.0
  %1899 = vmatprep.subr.mxu0 0.0
  %1900 = vmatpush1.msra.mxu0 0.0
  %1901 = vmatprep.subr.mxu0 0.0
  %1902 = vmatpush1.msra.mxu0 0.0
  %1903 = vmatprep.subr.mxu0 0.0
  %1904 = vmatpush1.msra.mxu0 0.0
  %1905 = vmatprep.subr.mxu0 0.0
  %1906 = vmatpush1.msra.mxu0 0.0
  %1907 = vmatprep.subr.mxu0 0.0
  %1908 = vmatpush1.msra.mxu0 0.0
  %1909 = vmatprep.subr.mxu0 0.0
  %1910 = vmatpush1.msra.mxu0 0.0
  %1911 = vmatprep.subr.mxu0 0.0
  %1912 = vmatpush1.msra.mxu0 0.0
  %1913 = vmatprep.subr.mxu0 0.0
  %1914 = vmatpush1.msra.mxu0 0.0
  %1915 = vmatprep.subr.mxu0 0.0
  %1916 = vmatpush1.msra.mxu0 0.0
  %1917 = vmatprep.subr.mxu0 0.0
  %1918 = vmatpush1.msra.mxu0 0.0
  %1919 = vmatprep.subr.mxu0 0.0
  %1920 = vmatpush1.msra.mxu0 0.0
  %1921 = vmatprep.subr.mxu0 0.0
  %1922 = vmatpush1.msra.mxu0 0.0
  %1923 = vmatprep.subr.mxu0 0.0
  %1924 = vmatpush1.msra.mxu0 0.0
  %1925 = vmatprep.subr.mxu0 0.0
  %1926 = vmatpush1.msra.mxu0 0.0
  %1927 = vmatprep.subr.mxu0 0.0
  %1928 = vmatpush1.msra.mxu0 0.0
  %1929 = vmatprep.subr.mxu0 0.0
  %1930 = vmatpush1.msra.mxu0 0.0
  %1931 = vmatprep.subr.mxu0 0.0
  %1932 = vmatpush1.msra.mxu0 0.0
  %1933 = vmatprep.subr.mxu0 0.0
  %1934 = vmatpush1.msra.mxu0 0.0
  %1935 = vmatprep.subr.mxu0 0.0
  %1936 = vmatpush1.msra.mxu0 0.0
  %1937 = vmatprep.subr.mxu0 0.0
  %1938 = vmatpush1.msra.mxu0 0.0
  %1939 = vmatprep.subr.mxu0 0.0
  %1940 = vmatpush1.msra.mxu0 0.0
  %1941 = vmatprep.mubr.f32.mxu0 0.0
  %1942 = vmatmul.mubr.f32.gmra.mrb[0].mxu0 %v1875
  %v1943 = vpop.f32.mrb[0].mxu0
  %v1944 = vadd.f32 0.0, %v1943
  %v1945 = vpop.f32.mrb[0].mxu0
  %v1946 = vadd.f32 0.0, %v1945
  %1947 = vdwg.mxu0
  %1948 = vmatprep.subr.mxu0 %v642
  %1949 = vmatpush1.msra.mxu0 %v640
  %1950 = vmatprep.subr.mxu0 %v646
  %1951 = vmatpush1.msra.mxu0 %v644
  %1952 = vmatprep.subr.mxu0 %v652
  %1953 = vmatpush1.msra.mxu0 %v650
  %1954 = vmatprep.subr.mxu0 %v656
  %1955 = vmatpush1.msra.mxu0 %v654
  %1956 = vmatprep.subr.mxu0 0.0
  %1957 = vmatpush1.msra.mxu0 0.0
  %1958 = vmatprep.subr.mxu0 0.0
  %1959 = vmatpush1.msra.mxu0 0.0
  %1960 = vmatprep.subr.mxu0 0.0
  %1961 = vmatpush1.msra.mxu0 0.0
  %1962 = vmatprep.subr.mxu0 0.0
  %1963 = vmatpush1.msra.mxu0 0.0
  %1964 = vmatprep.subr.mxu0 0.0
  %1965 = vmatpush1.msra.mxu0 0.0
  %1966 = vmatprep.subr.mxu0 0.0
  %1967 = vmatpush1.msra.mxu0 0.0
  %1968 = vmatprep.subr.mxu0 0.0
  %1969 = vmatpush1.msra.mxu0 0.0
  %1970 = vmatprep.subr.mxu0 0.0
  %1971 = vmatpush1.msra.mxu0 0.0
  %1972 = vmatprep.subr.mxu0 0.0
  %1973 = vmatpush1.msra.mxu0 0.0
  %1974 = vmatprep.subr.mxu0 0.0
  %1975 = vmatpush1.msra.mxu0 0.0
  %1976 = vmatprep.subr.mxu0 0.0
  %1977 = vmatpush1.msra.mxu0 0.0
  %1978 = vmatprep.subr.mxu0 0.0
  %1979 = vmatpush1.msra.mxu0 0.0
  %1980 = vmatprep.subr.mxu0 0.0
  %1981 = vmatpush1.msra.mxu0 0.0
  %1982 = vmatprep.subr.mxu0 0.0
  %1983 = vmatpush1.msra.mxu0 0.0
  %1984 = vmatprep.subr.mxu0 0.0
  %1985 = vmatpush1.msra.mxu0 0.0
  %1986 = vmatprep.subr.mxu0 0.0
  %1987 = vmatpush1.msra.mxu0 0.0
  %1988 = vmatprep.subr.mxu0 0.0
  %1989 = vmatpush1.msra.mxu0 0.0
  %1990 = vmatprep.subr.mxu0 0.0
  %1991 = vmatpush1.msra.mxu0 0.0
  %1992 = vmatprep.subr.mxu0 0.0
  %1993 = vmatpush1.msra.mxu0 0.0
  %1994 = vmatprep.subr.mxu0 0.0
  %1995 = vmatpush1.msra.mxu0 0.0
  %1996 = vmatprep.subr.mxu0 0.0
  %1997 = vmatpush1.msra.mxu0 0.0
  %1998 = vmatprep.subr.mxu0 0.0
  %1999 = vmatpush1.msra.mxu0 0.0
  %2000 = vmatprep.subr.mxu0 0.0
  %2001 = vmatpush1.msra.mxu0 0.0
  %2002 = vmatprep.subr.mxu0 0.0
  %2003 = vmatpush1.msra.mxu0 0.0
  %2004 = vmatprep.subr.mxu0 0.0
  %2005 = vmatpush1.msra.mxu0 0.0
  %2006 = vmatprep.subr.mxu0 0.0
  %2007 = vmatpush1.msra.mxu0 0.0
  %2008 = vmatprep.subr.mxu0 0.0
  %2009 = vmatpush1.msra.mxu0 0.0
  %2010 = vmatprep.subr.mxu0 0.0
  %2011 = vmatpush1.msra.mxu0 0.0
  %2012 = vmatprep.mubr.f32.mxu0 0.0
  %2013 = vmatmul.mubr.f32.gmra.mrb[0].mxu0 %v1875
  %v2014 = vpop.f32.mrb[0].mxu0
  %v2015 = vadd.f32 0.0, %v2014
  %v2016 = vpop.f32.mrb[0].mxu0
  %v2017 = vadd.f32 0.0, %v2016
  %2018 = vdwg.mxu0
  %v2019 = vsel %vm1586, %v1585, 0
  %2021 = vmatprep.subr.mxu0 %v549
  %2022 = vmatpush1.msra.mxu0 %v547
  %2023 = vmatprep.subr.mxu0 %v553
  %2024 = vmatpush1.msra.mxu0 %v551
  %2025 = vmatprep.subr.mxu0 %v559
  %2026 = vmatpush1.msra.mxu0 %v557
  %2027 = vmatprep.subr.mxu0 %v563
  %2028 = vmatpush1.msra.mxu0 %v561
  %2029 = vmatprep.subr.mxu0 0.0
  %2030 = vmatpush1.msra.mxu0 0.0
  %2031 = vmatprep.subr.mxu0 0.0
  %2032 = vmatpush1.msra.mxu0 0.0
  %2033 = vmatprep.subr.mxu0 0.0
  %2034 = vmatpush1.msra.mxu0 0.0
  %2035 = vmatprep.subr.mxu0 0.0
  %2036 = vmatpush1.msra.mxu0 0.0
  %2037 = vmatprep.subr.mxu0 0.0
  %2038 = vmatpush1.msra.mxu0 0.0
  %2039 = vmatprep.subr.mxu0 0.0
  %2040 = vmatpush1.msra.mxu0 0.0
  %2041 = vmatprep.subr.mxu0 0.0
  %2042 = vmatpush1.msra.mxu0 0.0
  %2043 = vmatprep.subr.mxu0 0.0
  %2044 = vmatpush1.msra.mxu0 0.0
  %2045 = vmatprep.subr.mxu0 0.0
  %2046 = vmatpush1.msra.mxu0 0.0
  %2047 = vmatprep.subr.mxu0 0.0
  %2048 = vmatpush1.msra.mxu0 0.0
  %2049 = vmatprep.subr.mxu0 0.0
  %2050 = vmatpush1.msra.mxu0 0.0
  %2051 = vmatprep.subr.mxu0 0.0
  %2052 = vmatpush1.msra.mxu0 0.0
  %2053 = vmatprep.subr.mxu0 0.0
  %2054 = vmatpush1.msra.mxu0 0.0
  %2055 = vmatprep.subr.mxu0 0.0
  %2056 = vmatpush1.msra.mxu0 0.0
  %2057 = vmatprep.subr.mxu0 0.0
  %2058 = vmatpush1.msra.mxu0 0.0
  %2059 = vmatprep.subr.mxu0 0.0
  %2060 = vmatpush1.msra.mxu0 0.0
  %2061 = vmatprep.subr.mxu0 0.0
  %2062 = vmatpush1.msra.mxu0 0.0
  %2063 = vmatprep.subr.mxu0 0.0
  %2064 = vmatpush1.msra.mxu0 0.0
  %2065 = vmatprep.subr.mxu0 0.0
  %2066 = vmatpush1.msra.mxu0 0.0
  %2067 = vmatprep.subr.mxu0 0.0
  %2068 = vmatpush1.msra.mxu0 0.0
  %2069 = vmatprep.subr.mxu0 0.0
  %2070 = vmatpush1.msra.mxu0 0.0
  %2071 = vmatprep.subr.mxu0 0.0
  %2072 = vmatpush1.msra.mxu0 0.0
  %2073 = vmatprep.subr.mxu0 0.0
  %2074 = vmatpush1.msra.mxu0 0.0
  %2075 = vmatprep.subr.mxu0 0.0
  %2076 = vmatpush1.msra.mxu0 0.0
  %2077 = vmatprep.subr.mxu0 0.0
  %2078 = vmatpush1.msra.mxu0 0.0
  %2079 = vmatprep.subr.mxu0 0.0
  %2080 = vmatpush1.msra.mxu0 0.0
  %2081 = vmatprep.subr.mxu0 0.0
  %2082 = vmatpush1.msra.mxu0 0.0
  %2083 = vmatprep.subr.mxu0 0.0
  %2084 = vmatpush1.msra.mxu0 0.0
  %2085 = vmatprep.mubr.f32.mxu0 0.0
  %2086 = vmatmul.mubr.f32.gmra.mrb[0].mxu0 %v2019
  %v2087 = vpop.f32.mrb[0].mxu0
  %v2088 = vadd.f32 0.0, %v2087
  %v2089 = vpop.f32.mrb[0].mxu0
  %v2090 = vadd.f32 0.0, %v2089
  %2091 = vdwg.mxu0
  %2092 = vmatprep.subr.mxu0 %v662
  %2093 = vmatpush1.msra.mxu0 %v660
  %2094 = vmatprep.subr.mxu0 %v666
  %2095 = vmatpush1.msra.mxu0 %v664
  %2096 = vmatprep.subr.mxu0 %v672
  %2097 = vmatpush1.msra.mxu0 %v670
  %2098 = vmatprep.subr.mxu0 %v676
  %2099 = vmatpush1.msra.mxu0 %v674
  %2100 = vmatprep.subr.mxu0 0.0
  %2101 = vmatpush1.msra.mxu0 0.0
  %2102 = vmatprep.subr.mxu0 0.0
  %2103 = vmatpush1.msra.mxu0 0.0
  %2104 = vmatprep.subr.mxu0 0.0
  %2105 = vmatpush1.msra.mxu0 0.0
  %2106 = vmatprep.subr.mxu0 0.0
  %2107 = vmatpush1.msra.mxu0 0.0
  %2108 = vmatprep.subr.mxu0 0.0
  %2109 = vmatpush1.msra.mxu0 0.0
  %2110 = vmatprep.subr.mxu0 0.0
  %2111 = vmatpush1.msra.mxu0 0.0
  %2112 = vmatprep.subr.mxu0 0.0
  %2113 = vmatpush1.msra.mxu0 0.0
  %2114 = vmatprep.subr.mxu0 0.0
  %2115 = vmatpush1.msra.mxu0 0.0
  %2116 = vmatprep.subr.mxu0 0.0
  %2117 = vmatpush1.msra.mxu0 0.0
  %2118 = vmatprep.subr.mxu0 0.0
  %2119 = vmatpush1.msra.mxu0 0.0
  %2120 = vmatprep.subr.mxu0 0.0
  %2121 = vmatpush1.msra.mxu0 0.0
  %2122 = vmatprep.subr.mxu0 0.0
  %2123 = vmatpush1.msra.mxu0 0.0
  %2124 = vmatprep.subr.mxu0 0.0
  %2125 = vmatpush1.msra.mxu0 0.0
  %2126 = vmatprep.subr.mxu0 0.0
  %2127 = vmatpush1.msra.mxu0 0.0
  %2128 = vmatprep.subr.mxu0 0.0
  %2129 = vmatpush1.msra.mxu0 0.0
  %2130 = vmatprep.subr.mxu0 0.0
  %2131 = vmatpush1.msra.mxu0 0.0
  %2132 = vmatprep.subr.mxu0 0.0
  %2133 = vmatpush1.msra.mxu0 0.0
  %2134 = vmatprep.subr.mxu0 0.0
  %2135 = vmatpush1.msra.mxu0 0.0
  %2136 = vmatprep.subr.mxu0 0.0
  %2137 = vmatpush1.msra.mxu0 0.0
  %2138 = vmatprep.subr.mxu0 0.0
  %2139 = vmatpush1.msra.mxu0 0.0
  %2140 = vmatprep.subr.mxu0 0.0
  %2141 = vmatpush1.msra.mxu0 0.0
  %2142 = vmatprep.subr.mxu0 0.0
  %2143 = vmatpush1.msra.mxu0 0.0
  %2144 = vmatprep.subr.mxu0 0.0
  %2145 = vmatpush1.msra.mxu0 0.0
  %2146 = vmatprep.subr.mxu0 0.0
  %2147 = vmatpush1.msra.mxu0 0.0
  %2148 = vmatprep.subr.mxu0 0.0
  %2149 = vmatpush1.msra.mxu0 0.0
  %2150 = vmatprep.subr.mxu0 0.0
  %2151 = vmatpush1.msra.mxu0 0.0
  %2152 = vmatprep.subr.mxu0 0.0
  %2153 = vmatpush1.msra.mxu0 0.0
  %2154 = vmatprep.subr.mxu0 0.0
  %2155 = vmatpush1.msra.mxu0 0.0
  %2156 = vmatprep.mubr.f32.mxu0 0.0
  %2157 = vmatmul.mubr.f32.gmra.mrb[0].mxu0 %v2019
  %v2158 = vpop.f32.mrb[0].mxu0
  %v2159 = vadd.f32 0.0, %v2158
  %v2160 = vpop.f32.mrb[0].mxu0
  %v2161 = vadd.f32 0.0, %v2160
  %2162 = vdwg.mxu0
  %v2179 = vcombine.low %v1656, %v1658
  %v2180 = vcombine.low %v1727, %v1729
  %v2181 = vcombine.low %v1800, %v1802
  %v2182 = vcombine.low %v1871, %v1873
  %v2183 = vcombine.low %v1944, %v1946
  %v2184 = vcombine.low %v2015, %v2017
  %v2185 = vcombine.low %v2088, %v2090
  %v2186 = vcombine.low %v2159, %v2161
  %v2187 = vrot.slane %v2181, 7
  %v2188 = vsel %vm1541, %v2187, %v2179
  %vm2189 = vcmask 1045509
  %v2190 = vsel %vm2189, %v2187, %v2188
  %v2191 = vrot.slane %v2183, 6
  %v2192 = vsel %vm1543, %v2191, %v2190
  %vm2193 = vcmask 1046534
  %v2194 = vsel %vm2193, %v2191, %v2192
  %v2195 = vrot.slane %v2185, 5
  %v2196 = vsel %vm1545, %v2195, %v2194
  %vm2197 = vcmask 1047559
  %v2198 = vsel %vm2197, %v2195, %v2196
  %v2199 = vrot.slane %v2182, 7
  %v2200 = vsel %vm1541, %v2199, %v2180
  %v2201 = vsel %vm2189, %v2199, %v2200
  %v2202 = vrot.slane %v2184, 6
  %v2203 = vsel %vm1543, %v2202, %v2201
  %v2204 = vsel %vm2193, %v2202, %v2203
  %v2205 = vrot.slane %v2186, 5
  %v2206 = vsel %vm1545, %v2205, %v2204
  %v2207 = vsel %vm2197, %v2205, %v2206
  %2210 = vst [vmem:[%s7] sm:$0xff] %v2198
  %vm2211 = vcmask 1043456
  %vm2212 = vcmask 130052
  %vm2213 = vmor %vm2212, %vm2211
  %2214 = vst.msk [vmem:[%s7 + $0x8] sm:$0xff] %vm2213, %v2207
  // Predicated region
  $region30: #{naml_forward.11} parent=0 // pred_check
    _
  $region31: #{naml_forward.11} parent=0 // pred_check_branch
    %2216 = sbr.rel (0) target = $region33
  $region32: #{naml_forward.11} parent=0 // pred_region
    _
  $region33: #{naml_forward.11} parent=0 // pred_fallthru
    _
  // Predicated region
  $region34: #{naml_forward.11} parent=0 // pred_check
    _
  $region35: #{naml_forward.11} parent=0 // pred_check_branch
    %2218 = sbr.rel (0) target = $region37
  $region36: #{naml_forward.11} parent=0 // pred_region
    _
  $region37: #{naml_forward.11} parent=0 // pred_fallthru
    _

// kernel: naml_forward.7
$region0: #{naml_forward.7}
  #allocation0 [shape = 'u32[]', space=smem, size = 0x4, offset = 0x4, fixed_abs, tag = 'smem constant byte address 0x4 - core index']
  #allocation1 [shape = 'u32[144,128]{1,0:T(1,128)}', space=vmem, size = 0x12000, scoped, tag = 'internal scratch']
  #allocation2 [shape = 'f32[1,1]{1,0:T(1,128)S(1)}', space=vmem, size = 0x200, scoped, tag = 'scoped memory for naml_forward.7']
  %s0 = inlined_call_operand.vmem [shape: bf16[6,32,192], index: 0, kind: input, shape index: {}]
  %s1 = inlined_call_operand.vmem [shape: bf16[192,400], index: 1, kind: input, shape index: {}]
  %s2 = inlined_call_operand.vmem [shape: f32[1,400], index: 2, kind: input, shape index: {}]
  %s3 = inlined_call_operand.vmem [shape: bf16[400,200], index: 3, kind: input, shape index: {}]
  %s4 = inlined_call_operand.vmem [shape: f32[1,200], index: 4, kind: input, shape index: {}]
  %s5 = inlined_call_operand.vmem [shape: f32[1,200], index: 5, kind: input, shape index: {}]
  %s6 = inlined_call_operand.<no memory space> [shape: f32[1,1], index: 6, kind: input, shape index: {}]
  %s7 = inlined_call_operand.vmem [shape: f32[6,400], index: 7, kind: output, shape index: {}]
  %s8 = sld [smem:[#allocation0]]
  $region38: #{naml_forward.7} parent=0
    _
  %s10 = ssub.s32 1, %s8
  %s11 = scalar_select 0, %s10, %s8
  %v12 = vstv %s6
  %13 = vst [vmem:[#allocation2] sm:$0x1] %v12
  // Predicated region
  $region2: #{naml_forward.7} parent=0 // pred_check
    _
  $region3: #{naml_forward.7} parent=0 // pred_check_branch
    %15 = sbr.rel (0) target = $region5
  $region4: #{naml_forward.7} parent=0 // pred_region
    _
  $region5: #{naml_forward.7} parent=0 // pred_fallthru
    _
  // Predicated region
  $region6: #{naml_forward.7} parent=0 // pred_check
    _
  $region7: #{naml_forward.7} parent=0 // pred_check_branch
    %17 = sbr.rel (0) target = $region9
  $region8: #{naml_forward.7} parent=0 // pred_region
    _
  $region9: #{naml_forward.7} parent=0 // pred_fallthru
    _
  // Predicated region
  $region10: #{naml_forward.7} parent=0 // pred_check
    _
  $region11: #{naml_forward.7} parent=0 // pred_check_branch
    %19 = sbr.rel (0) target = $region13
  $region12: #{naml_forward.7} parent=0 // pred_region
    _
  $region13: #{naml_forward.7} parent=0 // pred_fallthru
    _
  // Predicated region
  $region14: #{naml_forward.7} parent=0 // pred_check
    _
  $region15: #{naml_forward.7} parent=0 // pred_check_branch
    %21 = sbr.rel (0) target = $region17
  $region16: #{naml_forward.7} parent=0 // pred_region
    _
  $region17: #{naml_forward.7} parent=0 // pred_fallthru
    _
  // Predicated region
  $region18: #{naml_forward.7} parent=0 // pred_check
    _
  $region19: #{naml_forward.7} parent=0 // pred_check_branch
    %23 = sbr.rel (0) target = $region21
  $region20: #{naml_forward.7} parent=0 // pred_region
    _
  $region21: #{naml_forward.7} parent=0 // pred_fallthru
    _
  // Predicated region
  $region22: #{naml_forward.7} parent=0 // pred_check
    _
  $region23: #{naml_forward.7} parent=0 // pred_check_branch
    %25 = sbr.rel (0) target = $region25
  $region24: #{naml_forward.7} parent=0 // pred_region
    _
  $region25: #{naml_forward.7} parent=0 // pred_fallthru
    _
  // Predicated region
  $region26: #{naml_forward.7} parent=0 // pred_check
    _
  $region27: #{naml_forward.7} parent=0 // pred_check_branch
    %27 = sbr.rel (0) target = $region29
  $region28: #{naml_forward.7} parent=0 // pred_region
    _
  $region29: #{naml_forward.7} parent=0 // pred_fallthru
    _
  %v29 = vld [vmem:[%s0] sm:$0xff]
  %v30 = vld [vmem:[%s0 + $0x8] sm:$0xff]
  %v31 = vld [vmem:[%s0 + $0x10] sm:$0xff]
  %v32 = vld [vmem:[%s0 + $0x18] sm:$0xff]
  %v33 = vld [vmem:[%s0 + $0x20] sm:$0xff]
  %v34 = vld [vmem:[%s0 + $0x28] sm:$0xff]
  %v35 = vld [vmem:[%s0 + $0x30] sm:$0xff]
  %v36 = vld [vmem:[%s0 + $0x38] sm:$0xff]
  %v37 = vld [vmem:[%s0 + $0x40] sm:$0xff]
  %v38 = vld [vmem:[%s0 + $0x48] sm:$0xff]
  %v39 = vld [vmem:[%s0 + $0x50] sm:$0xff]
  %v40 = vld [vmem:[%s0 + $0x58] sm:$0xff]
  %v41 = vld [vmem:[%s0 + $0x60] sm:$0xff]
  %v42 = vld [vmem:[%s0 + $0x68] sm:$0xff]
  %v43 = vld [vmem:[%s0 + $0x70] sm:$0xff]
  %v44 = vld [vmem:[%s0 + $0x78] sm:$0xff]
  %v45 = vld [vmem:[%s0 + $0x80] sm:$0xff]
  %v46 = vld [vmem:[%s0 + $0x88] sm:$0xff]
  %v47 = vld [vmem:[%s0 + $0x90] sm:$0xff]
  %v48 = vld [vmem:[%s0 + $0x98] sm:$0xff]
  %v49 = vld [vmem:[%s0 + $0xa0] sm:$0xff]
  %v50 = vld [vmem:[%s0 + $0xa8] sm:$0xff]
  %v51 = vld [vmem:[%s0 + $0xb0] sm:$0xff]
  %v52 = vld [vmem:[%s0 + $0xb8] sm:$0xff]
  %v53 = vld [vmem:[%s1] sm:$0xff]
  %v54 = vld [vmem:[%s1 + $0x8] sm:$0xff]
  %v55 = vld [vmem:[%s1 + $0x10] sm:$0xff]
  %v56 = vld [vmem:[%s1 + $0x18] sm:$0xff]
  %v57 = vld [vmem:[%s1 + $0x20] sm:$0xff]
  %v58 = vld [vmem:[%s1 + $0x28] sm:$0xff]
  %v59 = vld [vmem:[%s1 + $0x30] sm:$0xff]
  %v60 = vld [vmem:[%s1 + $0x38] sm:$0xff]
  %v61 = vld [vmem:[%s1 + $0x40] sm:$0xff]
  %v62 = vld [vmem:[%s1 + $0x48] sm:$0xff]
  %v63 = vld [vmem:[%s1 + $0x50] sm:$0xff]
  %v64 = vld [vmem:[%s1 + $0x58] sm:$0xff]
  %v65 = vld [vmem:[%s1 + $0x60] sm:$0xff]
  %v66 = vld [vmem:[%s1 + $0x68] sm:$0xff]
  %v67 = vld [vmem:[%s1 + $0x70] sm:$0xff]
  %v68 = vld [vmem:[%s1 + $0x78] sm:$0xff]
  %v69 = vld [vmem:[%s1 + $0x80] sm:$0xff]
  %v70 = vld [vmem:[%s1 + $0x88] sm:$0xff]
  %v71 = vld [vmem:[%s1 + $0x90] sm:$0xff]
  %v72 = vld [vmem:[%s1 + $0x98] sm:$0xff]
  %v73 = vld [vmem:[%s1 + $0xa0] sm:$0xff]
  %v74 = vld [vmem:[%s1 + $0xa8] sm:$0xff]
  %v75 = vld [vmem:[%s1 + $0xb0] sm:$0xff]
  %v76 = vld [vmem:[%s1 + $0xb8] sm:$0xff]
  %v77 = vld [vmem:[%s1 + $0xc0] sm:$0xff]
  %v78 = vld [vmem:[%s1 + $0xc8] sm:$0xff]
  %v79 = vld [vmem:[%s1 + $0xd0] sm:$0xff]
  %v80 = vld [vmem:[%s1 + $0xd8] sm:$0xff]
  %v81 = vld [vmem:[%s1 + $0xe0] sm:$0xff]
  %v82 = vld [vmem:[%s1 + $0xe8] sm:$0xff]
  %v83 = vld [vmem:[%s1 + $0xf0] sm:$0xff]
  %v84 = vld [vmem:[%s1 + $0xf8] sm:$0xff]
  %v85 = vld [vmem:[%s1 + $0x100] sm:$0xff]
  %v86 = vld [vmem:[%s1 + $0x108] sm:$0xff]
  %v87 = vld [vmem:[%s1 + $0x110] sm:$0xff]
  %v88 = vld [vmem:[%s1 + $0x118] sm:$0xff]
  %v89 = vld [vmem:[%s1 + $0x120] sm:$0xff]
  %v90 = vld [vmem:[%s1 + $0x128] sm:$0xff]
  %v91 = vld [vmem:[%s1 + $0x130] sm:$0xff]
  %v92 = vld [vmem:[%s1 + $0x138] sm:$0xff]
  %v93 = vld [vmem:[%s1 + $0x140] sm:$0xff]
  %v94 = vld [vmem:[%s1 + $0x148] sm:$0xff]
  %v95 = vld [vmem:[%s1 + $0x150] sm:$0xff]
  %v96 = vld [vmem:[%s1 + $0x158] sm:$0xff]
  %v97 = vld [vmem:[%s1 + $0x160] sm:$0xff]
  %v98 = vld [vmem:[%s1 + $0x168] sm:$0xff]
  %v99 = vld [vmem:[%s1 + $0x170] sm:$0xff]
  %v100 = vld [vmem:[%s1 + $0x178] sm:$0xff]
  %v101 = vld [vmem:[%s2] sm:$0xf]
  %v103 = vlaneseq
  %v104 = vshrl.u32 %v103, 7
  %v105 = vsub.s32 0, %v104
  %v106 = vrot.slane %v101, %v105
  %v107 = vlaneseq
  %v108 = vshrl.u32 %v107, 7
  %v109 = vsub.s32 1, %v108
  %v110 = vrot.slane %v101, %v109
  %v111 = vlaneseq
  %v112 = vshrl.u32 %v111, 7
  %v113 = vsub.s32 2, %v112
  %v114 = vrot.slane %v101, %v113
  %v115 = vlaneseq
  %v116 = vshrl.u32 %v115, 7
  %v117 = vsub.s32 3, %v116
  %v118 = vrot.slane %v101, %v117
  %v147 = vunpack.c.l.b16 %v29
  %v148 = vunpack.c.h.b16 %v29
  %v149 = vunpack.c.l.b16 %v30
  %v150 = vunpack.c.h.b16 %v30
  %v151 = vunpack.c.l.b16 %v31
  %v152 = vunpack.c.h.b16 %v31
  %v153 = vunpack.c.l.b16 %v32
  %v154 = vunpack.c.h.b16 %v32
  %v155 = vunpack.c.l.b16 %v33
  %v156 = vunpack.c.h.b16 %v33
  %v157 = vunpack.c.l.b16 %v34
  %v158 = vunpack.c.h.b16 %v34
  %v159 = vunpack.c.l.b16 %v35
  %v160 = vunpack.c.h.b16 %v35
  %v161 = vunpack.c.l.b16 %v36
  %v162 = vunpack.c.h.b16 %v36
  %v163 = vunpack.c.l.b16 %v37
  %v164 = vunpack.c.h.b16 %v37
  %v165 = vunpack.c.l.b16 %v38
  %v166 = vunpack.c.h.b16 %v38
  %v167 = vunpack.c.l.b16 %v39
  %v168 = vunpack.c.h.b16 %v39
  %v169 = vunpack.c.l.b16 %v40
  %v170 = vunpack.c.h.b16 %v40
  %v171 = vunpack.c.l.b16 %v41
  %v172 = vunpack.c.h.b16 %v41
  %v173 = vunpack.c.l.b16 %v42
  %v174 = vunpack.c.h.b16 %v42
  %v175 = vunpack.c.l.b16 %v43
  %v176 = vunpack.c.h.b16 %v43
  %v177 = vunpack.c.l.b16 %v44
  %v178 = vunpack.c.h.b16 %v44
  %v179 = vunpack.c.l.b16 %v45
  %v180 = vunpack.c.h.b16 %v45
  %v181 = vunpack.c.l.b16 %v46
  %v182 = vunpack.c.h.b16 %v46
  %v183 = vunpack.c.l.b16 %v47
  %v184 = vunpack.c.h.b16 %v47
  %v185 = vunpack.c.l.b16 %v48
  %v186 = vunpack.c.h.b16 %v48
  %v187 = vunpack.c.l.b16 %v49
  %v188 = vunpack.c.h.b16 %v49
  %v189 = vunpack.c.l.b16 %v50
  %v190 = vunpack.c.h.b16 %v50
  %v191 = vunpack.c.l.b16 %v51
  %v192 = vunpack.c.h.b16 %v51
  %v193 = vunpack.c.l.b16 %v52
  %v194 = vunpack.c.h.b16 %v52
  %v195 = vpack.c.b16 %v149, %v147
  %v196 = vpack.c.b16 %v150, %v148
  %v197 = vpack.c.b16 %v153, %v151
  %v198 = vpack.c.b16 %v154, %v152
  %v199 = vpack.c.b16 %v157, %v155
  %v200 = vpack.c.b16 %v158, %v156
  %v201 = vpack.c.b16 %v161, %v159
  %v202 = vpack.c.b16 %v162, %v160
  %v203 = vpack.c.b16 %v165, %v163
  %v204 = vpack.c.b16 %v166, %v164
  %v205 = vpack.c.b16 %v169, %v167
  %v206 = vpack.c.b16 %v170, %v168
  %v207 = vpack.c.b16 %v173, %v171
  %v208 = vpack.c.b16 %v174, %v172
  %v209 = vpack.c.b16 %v177, %v175
  %v210 = vpack.c.b16 %v178, %v176
  %v211 = vpack.c.b16 %v181, %v179
  %v212 = vpack.c.b16 %v182, %v180
  %v213 = vpack.c.b16 %v185, %v183
  %v214 = vpack.c.b16 %v186, %v184
  %v215 = vpack.c.b16 %v189, %v187
  %v216 = vpack.c.b16 %v190, %v188
  %v217 = vpack.c.b16 %v193, %v191
  %v218 = vpack.c.b16 %v194, %v192
  %v279 = vunpack.c.l.b16 %v53
  %v280 = vunpack.c.h.b16 %v53
  %v281 = vunpack.c.l.b16 %v54
  %v282 = vunpack.c.h.b16 %v54
  %v283 = vunpack.c.l.b16 %v55
  %v284 = vunpack.c.h.b16 %v55
  %v285 = vunpack.c.l.b16 %v56
  %v286 = vunpack.c.h.b16 %v56
  %v287 = vunpack.c.l.b16 %v57
  %v288 = vunpack.c.h.b16 %v57
  %v289 = vunpack.c.l.b16 %v58
  %v290 = vunpack.c.h.b16 %v58
  %v291 = vunpack.c.l.b16 %v59
  %v292 = vunpack.c.h.b16 %v59
  %v293 = vunpack.c.l.b16 %v60
  %v294 = vunpack.c.h.b16 %v60
  %v295 = vunpack.c.l.b16 %v61
  %v296 = vunpack.c.h.b16 %v61
  %v297 = vunpack.c.l.b16 %v62
  %v298 = vunpack.c.h.b16 %v62
  %v299 = vunpack.c.l.b16 %v63
  %v300 = vunpack.c.h.b16 %v63
  %v301 = vunpack.c.l.b16 %v64
  %v302 = vunpack.c.h.b16 %v64
  %v303 = vunpack.c.l.b16 %v65
  %v304 = vunpack.c.h.b16 %v65
  %v305 = vunpack.c.l.b16 %v66
  %v306 = vunpack.c.h.b16 %v66
  %v307 = vunpack.c.l.b16 %v67
  %v308 = vunpack.c.h.b16 %v67
  %v309 = vunpack.c.l.b16 %v68
  %v310 = vunpack.c.h.b16 %v68
  %v311 = vunpack.c.l.b16 %v69
  %v312 = vunpack.c.h.b16 %v69
  %v313 = vunpack.c.l.b16 %v70
  %v314 = vunpack.c.h.b16 %v70
  %v315 = vunpack.c.l.b16 %v71
  %v316 = vunpack.c.h.b16 %v71
  %v317 = vunpack.c.l.b16 %v72
  %v318 = vunpack.c.h.b16 %v72
  %v319 = vunpack.c.l.b16 %v73
  %v320 = vunpack.c.h.b16 %v73
  %v321 = vunpack.c.l.b16 %v74
  %v322 = vunpack.c.h.b16 %v74
  %v323 = vunpack.c.l.b16 %v75
  %v324 = vunpack.c.h.b16 %v75
  %v325 = vunpack.c.l.b16 %v76
  %v326 = vunpack.c.h.b16 %v76
  %v327 = vunpack.c.l.b16 %v77
  %v328 = vunpack.c.h.b16 %v77
  %v329 = vunpack.c.l.b16 %v78
  %v330 = vunpack.c.h.b16 %v78
  %v331 = vunpack.c.l.b16 %v79
  %v332 = vunpack.c.h.b16 %v79
  %v333 = vunpack.c.l.b16 %v80
  %v334 = vunpack.c.h.b16 %v80
  %v335 = vunpack.c.l.b16 %v81
  %v336 = vunpack.c.h.b16 %v81
  %v337 = vunpack.c.l.b16 %v82
  %v338 = vunpack.c.h.b16 %v82
  %v339 = vunpack.c.l.b16 %v83
  %v340 = vunpack.c.h.b16 %v83
  %v341 = vunpack.c.l.b16 %v84
  %v342 = vunpack.c.h.b16 %v84
  %v343 = vunpack.c.l.b16 %v85
  %v344 = vunpack.c.h.b16 %v85
  %v345 = vunpack.c.l.b16 %v86
  %v346 = vunpack.c.h.b16 %v86
  %v347 = vunpack.c.l.b16 %v87
  %v348 = vunpack.c.h.b16 %v87
  %v349 = vunpack.c.l.b16 %v88
  %v350 = vunpack.c.h.b16 %v88
  %v351 = vunpack.c.l.b16 %v89
  %v352 = vunpack.c.h.b16 %v89
  %v353 = vunpack.c.l.b16 %v90
  %v354 = vunpack.c.h.b16 %v90
  %v355 = vunpack.c.l.b16 %v91
  %v356 = vunpack.c.h.b16 %v91
  %v357 = vunpack.c.l.b16 %v92
  %v358 = vunpack.c.h.b16 %v92
  %v359 = vunpack.c.l.b16 %v93
  %v360 = vunpack.c.h.b16 %v93
  %v361 = vunpack.c.l.b16 %v94
  %v362 = vunpack.c.h.b16 %v94
  %v363 = vunpack.c.l.b16 %v95
  %v364 = vunpack.c.h.b16 %v95
  %v365 = vunpack.c.l.b16 %v96
  %v366 = vunpack.c.h.b16 %v96
  %v367 = vunpack.c.l.b16 %v97
  %v368 = vunpack.c.h.b16 %v97
  %v369 = vunpack.c.l.b16 %v98
  %v370 = vunpack.c.h.b16 %v98
  %v371 = vunpack.c.l.b16 %v99
  %v372 = vunpack.c.h.b16 %v99
  %v373 = vunpack.c.l.b16 %v100
  %v374 = vunpack.c.h.b16 %v100
  %v375 = vpack.c.b16 %v283, %v279
  %v376 = vpack.c.b16 %v284, %v280
  %v377 = vpack.c.b16 %v285, %v281
  %v378 = vpack.c.b16 %v286, %v282
  %v379 = vpack.c.b16 %v291, %v287
  %v380 = vpack.c.b16 %v292, %v288
  %v381 = vpack.c.b16 %v293, %v289
  %v382 = vpack.c.b16 %v294, %v290
  %v383 = vpack.c.b16 %v299, %v295
  %v384 = vpack.c.b16 %v300, %v296
  %v385 = vpack.c.b16 %v301, %v297
  %v386 = vpack.c.b16 %v302, %v298
  %v387 = vpack.c.b16 %v307, %v303
  %v388 = vpack.c.b16 %v308, %v304
  %v389 = vpack.c.b16 %v309, %v305
  %v390 = vpack.c.b16 %v310, %v306
  %v391 = vpack.c.b16 %v315, %v311
  %v392 = vpack.c.b16 %v316, %v312
  %v393 = vpack.c.b16 %v317, %v313
  %v394 = vpack.c.b16 %v318, %v314
  %v395 = vpack.c.b16 %v323, %v319
  %v396 = vpack.c.b16 %v324, %v320
  %v397 = vpack.c.b16 %v325, %v321
  %v398 = vpack.c.b16 %v326, %v322
  %v399 = vpack.c.b16 %v331, %v327
  %v400 = vpack.c.b16 %v332, %v328
  %v401 = vpack.c.b16 %v333, %v329
  %v402 = vpack.c.b16 %v334, %v330
  %v403 = vpack.c.b16 %v339, %v335
  %v404 = vpack.c.b16 %v340, %v336
  %v405 = vpack.c.b16 %v341, %v337
  %v406 = vpack.c.b16 %v342, %v338
  %v407 = vpack.c.b16 %v347, %v343
  %v408 = vpack.c.b16 %v348, %v344
  %v409 = vpack.c.b16 %v349, %v345
  %v410 = vpack.c.b16 %v350, %v346
  %v411 = vpack.c.b16 %v355, %v351
  %v412 = vpack.c.b16 %v356, %v352
  %v413 = vpack.c.b16 %v357, %v353
  %v414 = vpack.c.b16 %v358, %v354
  %v415 = vpack.c.b16 %v363, %v359
  %v416 = vpack.c.b16 %v364, %v360
  %v417 = vpack.c.b16 %v365, %v361
  %v418 = vpack.c.b16 %v366, %v362
  %v419 = vpack.c.b16 %v371, %v367
  %v420 = vpack.c.b16 %v372, %v368
  %v421 = vpack.c.b16 %v373, %v369
  %v422 = vpack.c.b16 %v374, %v370
  %vm471 = vcmask 523264
  %v473 = vsel %vm471, %v196, 0
  %v476 = vsel %vm471, %v198, 0
  %v479 = vsel %vm471, %v200, 0
  %v482 = vsel %vm471, %v202, 0
  %v485 = vsel %vm471, %v204, 0
  %v488 = vsel %vm471, %v206, 0
  %v491 = vsel %vm471, %v208, 0
  %v494 = vsel %vm471, %v210, 0
  %v497 = vsel %vm471, %v212, 0
  %v500 = vsel %vm471, %v214, 0
  %v503 = vsel %vm471, %v216, 0
  %v506 = vsel %vm471, %v218, 0
  %508 = vmatprep.subr.bf16.mxu0 %v376
  %509 = vmatpush1.bf16.msra.mxu0 %v375
  %510 = vmatprep.subr.bf16.mxu0 %v380
  %511 = vmatpush1.bf16.msra.mxu0 %v379
  %512 = vmatprep.subr.bf16.mxu0 %v384
  %513 = vmatpush1.bf16.msra.mxu0 %v383
  %514 = vmatprep.subr.bf16.mxu0 %v388
  %515 = vmatpush1.bf16.msra.mxu0 %v387
  %516 = vmatprep.subr.bf16.mxu0 %v392
  %517 = vmatpush1.bf16.msra.mxu0 %v391
  %518 = vmatprep.subr.bf16.mxu0 %v396
  %519 = vmatpush1.bf16.msra.mxu0 %v395
  %520 = vmatprep.subr.bf16.mxu0 %v400
  %521 = vmatpush1.bf16.msra.mxu0 %v399
  %522 = vmatprep.subr.bf16.mxu0 %v404
  %523 = vmatpush1.bf16.msra.mxu0 %v403
  %524 = vmatprep.subr.bf16.mxu0 %v408
  %525 = vmatpush1.bf16.msra.mxu0 %v407
  %526 = vmatprep.subr.bf16.mxu0 %v412
  %527 = vmatpush1.bf16.msra.mxu0 %v411
  %528 = vmatprep.subr.bf16.mxu0 %v416
  %529 = vmatpush1.bf16.msra.mxu0 %v415
  %530 = vmatprep.subr.bf16.mxu0 %v420
  %531 = vmatpush1.bf16.msra.mxu0 %v419
  %532 = vmatprep.subr.bf16.mxu0 0
  %533 = vmatpush1.bf16.msra.mxu0 0
  %534 = vmatprep.subr.bf16.mxu0 0
  %535 = vmatpush1.bf16.msra.mxu0 0
  %536 = vmatprep.subr.bf16.mxu0 0
  %537 = vmatpush1.bf16.msra.mxu0 0
  %538 = vmatprep.subr.bf16.mxu0 0
  %539 = vmatpush1.bf16.msra.mxu0 0
  %540 = vmatprep.mubr.bf16.mxu0 %v473
  %541 = vmatmul.mubr.bf16.gmra.mrb[0].mxu0 %v195
  %v542 = vpop.f32.mrb[0].mxu0
  %v543 = vadd.f32 %v106, %v542
  %v544 = vpop.f32.mrb[0].mxu0
  %v545 = vadd.f32 %v110, %v544
  %v546 = vpop.f32.mrb[0].mxu0
  %v547 = vadd.f32 %v106, %v546
  %v548 = vpop.f32.mrb[0].mxu0
  %v549 = vadd.f32 %v110, %v548
  %550 = vmatprep.mubr.bf16.mxu0 %v476
  %551 = vmatmul.mubr.bf16.gmra.mrb[0].mxu0 %v197
  %v552 = vpop.f32.mrb[0].mxu0
  %v553 = vadd.f32 %v106, %v552
  %v554 = vpop.f32.mrb[0].mxu0
  %v555 = vadd.f32 %v110, %v554
  %v556 = vpop.f32.mrb[0].mxu0
  %v557 = vadd.f32 %v106, %v556
  %v558 = vpop.f32.mrb[0].mxu0
  %v559 = vadd.f32 %v110, %v558
  %560 = vmatprep.mubr.bf16.mxu0 %v479
  %561 = vmatmul.mubr.bf16.gmra.mrb[0].mxu0 %v199
  %v562 = vpop.f32.mrb[0].mxu0
  %v563 = vadd.f32 %v106, %v562
  %v564 = vpop.f32.mrb[0].mxu0
  %v565 = vadd.f32 %v110, %v564
  %v566 = vpop.f32.mrb[0].mxu0
  %v567 = vadd.f32 %v106, %v566
  %v568 = vpop.f32.mrb[0].mxu0
  %v569 = vadd.f32 %v110, %v568
  %570 = vmatprep.mubr.bf16.mxu0 %v482
  %571 = vmatmul.mubr.bf16.gmra.mrb[0].mxu0 %v201
  %v572 = vpop.f32.mrb[0].mxu0
  %v573 = vadd.f32 %v106, %v572
  %v574 = vpop.f32.mrb[0].mxu0
  %v575 = vadd.f32 %v110, %v574
  %v576 = vpop.f32.mrb[0].mxu0
  %v577 = vadd.f32 %v106, %v576
  %v578 = vpop.f32.mrb[0].mxu0
  %v579 = vadd.f32 %v110, %v578
  %580 = vmatprep.mubr.bf16.mxu0 %v485
  %581 = vmatmul.mubr.bf16.gmra.mrb[0].mxu0 %v203
  %v582 = vpop.f32.mrb[0].mxu0
  %v583 = vadd.f32 %v106, %v582
  %v584 = vpop.f32.mrb[0].mxu0
  %v585 = vadd.f32 %v110, %v584
  %v586 = vpop.f32.mrb[0].mxu0
  %v587 = vadd.f32 %v106, %v586
  %v588 = vpop.f32.mrb[0].mxu0
  %v589 = vadd.f32 %v110, %v588
  %590 = vmatprep.mubr.bf16.mxu0 %v488
  %591 = vmatmul.mubr.bf16.gmra.mrb[0].mxu0 %v205
  %v592 = vpop.f32.mrb[0].mxu0
  %v593 = vadd.f32 %v106, %v592
  %v594 = vpop.f32.mrb[0].mxu0
  %v595 = vadd.f32 %v110, %v594
  %v596 = vpop.f32.mrb[0].mxu0
  %v597 = vadd.f32 %v106, %v596
  %v598 = vpop.f32.mrb[0].mxu0
  %v599 = vadd.f32 %v110, %v598
  %600 = vmatprep.mubr.bf16.mxu0 %v491
  %601 = vmatmul.mubr.bf16.gmra.mrb[0].mxu0 %v207
  %v602 = vpop.f32.mrb[0].mxu0
  %v603 = vadd.f32 %v106, %v602
  %v604 = vpop.f32.mrb[0].mxu0
  %v605 = vadd.f32 %v110, %v604
  %v606 = vpop.f32.mrb[0].mxu0
  %v607 = vadd.f32 %v106, %v606
  %v608 = vpop.f32.mrb[0].mxu0
  %v609 = vadd.f32 %v110, %v608
  %610 = vmatprep.mubr.bf16.mxu0 %v494
  %611 = vmatmul.mubr.bf16.gmra.mrb[0].mxu0 %v209
  %v612 = vpop.f32.mrb[0].mxu0
  %v613 = vadd.f32 %v106, %v612
  %v614 = vpop.f32.mrb[0].mxu0
  %v615 = vadd.f32 %v110, %v614
  %v616 = vpop.f32.mrb[0].mxu0
  %v617 = vadd.f32 %v106, %v616
  %v618 = vpop.f32.mrb[0].mxu0
  %v619 = vadd.f32 %v110, %v618
  %620 = vmatprep.mubr.bf16.mxu0 %v497
  %621 = vmatmul.mubr.bf16.gmra.mrb[0].mxu0 %v211
  %v622 = vpop.f32.mrb[0].mxu0
  %v623 = vadd.f32 %v106, %v622
  %v624 = vpop.f32.mrb[0].mxu0
  %v625 = vadd.f32 %v110, %v624
  %v626 = vpop.f32.mrb[0].mxu0
  %v627 = vadd.f32 %v106, %v626
  %v628 = vpop.f32.mrb[0].mxu0
  %v629 = vadd.f32 %v110, %v628
  %630 = vmatprep.mubr.bf16.mxu0 %v500
  %631 = vmatmul.mubr.bf16.gmra.mrb[0].mxu0 %v213
  %v632 = vpop.f32.mrb[0].mxu0
  %v633 = vadd.f32 %v106, %v632
  %v634 = vpop.f32.mrb[0].mxu0
  %v635 = vadd.f32 %v110, %v634
  %v636 = vpop.f32.mrb[0].mxu0
  %v637 = vadd.f32 %v106, %v636
  %v638 = vpop.f32.mrb[0].mxu0
  %v639 = vadd.f32 %v110, %v638
  %640 = vmatprep.mubr.bf16.mxu0 %v503
  %641 = vmatmul.mubr.bf16.gmra.mrb[0].mxu0 %v215
  %v642 = vpop.f32.mrb[0].mxu0
  %v643 = vadd.f32 %v106, %v642
  %v644 = vpop.f32.mrb[0].mxu0
  %v645 = vadd.f32 %v110, %v644
  %v646 = vpop.f32.mrb[0].mxu0
  %v647 = vadd.f32 %v106, %v646
  %v648 = vpop.f32.mrb[0].mxu0
  %v649 = vadd.f32 %v110, %v648
  %650 = vmatprep.mubr.bf16.mxu0 %v506
  %651 = vmatmul.mubr.bf16.gmra.mrb[0].mxu0 %v217
  %v652 = vpop.f32.mrb[0].mxu0
  %v653 = vadd.f32 %v106, %v652
  %v654 = vpop.f32.mrb[0].mxu0
  %v655 = vadd.f32 %v110, %v654
  %v656 = vpop.f32.mrb[0].mxu0
  %v657 = vadd.f32 %v106, %v656
  %v658 = vpop.f32.mrb[0].mxu0
  %v659 = vadd.f32 %v110, %v658
  %660 = vdwg.mxu0
  %661 = vmatprep.subr.bf16.mxu0 %v378
  %662 = vmatpush1.bf16.msra.mxu0 %v377
  %663 = vmatprep.subr.bf16.mxu0 %v382
  %664 = vmatpush1.bf16.msra.mxu0 %v381
  %665 = vmatprep.subr.bf16.mxu0 %v386
  %666 = vmatpush1.bf16.msra.mxu0 %v385
  %667 = vmatprep.subr.bf16.mxu0 %v390
  %668 = vmatpush1.bf16.msra.mxu0 %v389
  %669 = vmatprep.subr.bf16.mxu0 %v394
  %670 = vmatpush1.bf16.msra.mxu0 %v393
  %671 = vmatprep.subr.bf16.mxu0 %v398
  %672 = vmatpush1.bf16.msra.mxu0 %v397
  %673 = vmatprep.subr.bf16.mxu0 %v402
  %674 = vmatpush1.bf16.msra.mxu0 %v401
  %675 = vmatprep.subr.bf16.mxu0 %v406
  %676 = vmatpush1.bf16.msra.mxu0 %v405
  %677 = vmatprep.subr.bf16.mxu0 %v410
  %678 = vmatpush1.bf16.msra.mxu0 %v409
  %679 = vmatprep.subr.bf16.mxu0 %v414
  %680 = vmatpush1.bf16.msra.mxu0 %v413
  %681 = vmatprep.subr.bf16.mxu0 %v418
  %682 = vmatpush1.bf16.msra.mxu0 %v417
  %683 = vmatprep.subr.bf16.mxu0 %v422
  %684 = vmatpush1.bf16.msra.mxu0 %v421
  %685 = vmatprep.subr.bf16.mxu0 0
  %686 = vmatpush1.bf16.msra.mxu0 0
  %687 = vmatprep.subr.bf16.mxu0 0
  %688 = vmatpush1.bf16.msra.mxu0 0
  %689 = vmatprep.subr.bf16.mxu0 0
  %690 = vmatpush1.bf16.msra.mxu0 0
  %691 = vmatprep.subr.bf16.mxu0 0
  %692 = vmatpush1.bf16.msra.mxu0 0
  %693 = vmatprep.mubr.bf16.mxu0 %v473
  %694 = vmatmul.mubr.bf16.gmra.mrb[0].mxu0 %v195
  %v695 = vpop.f32.mrb[0].mxu0
  %v696 = vadd.f32 %v114, %v695
  %v697 = vpop.f32.mrb[0].mxu0
  %v698 = vadd.f32 %v118, %v697
  %v699 = vpop.f32.mrb[0].mxu0
  %v700 = vadd.f32 %v114, %v699
  %v701 = vpop.f32.mrb[0].mxu0
  %v702 = vadd.f32 %v118, %v701
  %703 = vmatprep.mubr.bf16.mxu0 %v476
  %704 = vmatmul.mubr.bf16.gmra.mrb[0].mxu0 %v197
  %v705 = vpop.f32.mrb[0].mxu0
  %v706 = vadd.f32 %v114, %v705
  %v707 = vpop.f32.mrb[0].mxu0
  %v708 = vadd.f32 %v118, %v707
  %v709 = vpop.f32.mrb[0].mxu0
  %v710 = vadd.f32 %v114, %v709
  %v711 = vpop.f32.mrb[0].mxu0
  %v712 = vadd.f32 %v118, %v711
  %713 = vmatprep.mubr.bf16.mxu0 %v479
  %714 = vmatmul.mubr.bf16.gmra.mrb[0].mxu0 %v199
  %v715 = vpop.f32.mrb[0].mxu0
  %v716 = vadd.f32 %v114, %v715
  %v717 = vpop.f32.mrb[0].mxu0
  %v718 = vadd.f32 %v118, %v717
  %v719 = vpop.f32.mrb[0].mxu0
  %v720 = vadd.f32 %v114, %v719
  %v721 = vpop.f32.mrb[0].mxu0
  %v722 = vadd.f32 %v118, %v721
  %723 = vmatprep.mubr.bf16.mxu0 %v482
  %724 = vmatmul.mubr.bf16.gmra.mrb[0].mxu0 %v201
  %v725 = vpop.f32.mrb[0].mxu0
  %v726 = vadd.f32 %v114, %v725
  %v727 = vpop.f32.mrb[0].mxu0
  %v728 = vadd.f32 %v118, %v727
  %v729 = vpop.f32.mrb[0].mxu0
  %v730 = vadd.f32 %v114, %v729
  %v731 = vpop.f32.mrb[0].mxu0
  %v732 = vadd.f32 %v118, %v731
  %733 = vmatprep.mubr.bf16.mxu0 %v485
  %734 = vmatmul.mubr.bf16.gmra.mrb[0].mxu0 %v203
  %v735 = vpop.f32.mrb[0].mxu0
  %v736 = vadd.f32 %v114, %v735
  %v737 = vpop.f32.mrb[0].mxu0
  %v738 = vadd.f32 %v118, %v737
  %v739 = vpop.f32.mrb[0].mxu0
  %v740 = vadd.f32 %v114, %v739
  %v741 = vpop.f32.mrb[0].mxu0
  %v742 = vadd.f32 %v118, %v741
  %743 = vmatprep.mubr.bf16.mxu0 %v488
  %744 = vmatmul.mubr.bf16.gmra.mrb[0].mxu0 %v205
  %v745 = vpop.f32.mrb[0].mxu0
  %v746 = vadd.f32 %v114, %v745
  %v747 = vpop.f32.mrb[0].mxu0
  %v748 = vadd.f32 %v118, %v747
  %v749 = vpop.f32.mrb[0].mxu0
  %v750 = vadd.f32 %v114, %v749
  %v751 = vpop.f32.mrb[0].mxu0
  %v752 = vadd.f32 %v118, %v751
  %753 = vmatprep.mubr.bf16.mxu0 %v491
  %754 = vmatmul.mubr.bf16.gmra.mrb[0].mxu0 %v207
  %v755 = vpop.f32.mrb[0].mxu0
  %v756 = vadd.f32 %v114, %v755
  %v757 = vpop.f32.mrb[0].mxu0
  %v758 = vadd.f32 %v118, %v757
  %v759 = vpop.f32.mrb[0].mxu0
  %v760 = vadd.f32 %v114, %v759
  %v761 = vpop.f32.mrb[0].mxu0
  %v762 = vadd.f32 %v118, %v761
  %763 = vmatprep.mubr.bf16.mxu0 %v494
  %764 = vmatmul.mubr.bf16.gmra.mrb[0].mxu0 %v209
  %v765 = vpop.f32.mrb[0].mxu0
  %v766 = vadd.f32 %v114, %v765
  %v767 = vpop.f32.mrb[0].mxu0
  %v768 = vadd.f32 %v118, %v767
  %v769 = vpop.f32.mrb[0].mxu0
  %v770 = vadd.f32 %v114, %v769
  %v771 = vpop.f32.mrb[0].mxu0
  %v772 = vadd.f32 %v118, %v771
  %773 = vmatprep.mubr.bf16.mxu0 %v497
  %774 = vmatmul.mubr.bf16.gmra.mrb[0].mxu0 %v211
  %v775 = vpop.f32.mrb[0].mxu0
  %v776 = vadd.f32 %v114, %v775
  %v777 = vpop.f32.mrb[0].mxu0
  %v778 = vadd.f32 %v118, %v777
  %v779 = vpop.f32.mrb[0].mxu0
  %v780 = vadd.f32 %v114, %v779
  %v781 = vpop.f32.mrb[0].mxu0
  %v782 = vadd.f32 %v118, %v781
  %783 = vmatprep.mubr.bf16.mxu0 %v500
  %784 = vmatmul.mubr.bf16.gmra.mrb[0].mxu0 %v213
  %v785 = vpop.f32.mrb[0].mxu0
  %v786 = vadd.f32 %v114, %v785
  %v787 = vpop.f32.mrb[0].mxu0
  %v788 = vadd.f32 %v118, %v787
  %v789 = vpop.f32.mrb[0].mxu0
  %v790 = vadd.f32 %v114, %v789
  %v791 = vpop.f32.mrb[0].mxu0
  %v792 = vadd.f32 %v118, %v791
  %793 = vmatprep.mubr.bf16.mxu0 %v503
  %794 = vmatmul.mubr.bf16.gmra.mrb[0].mxu0 %v215
  %v795 = vpop.f32.mrb[0].mxu0
  %v796 = vadd.f32 %v114, %v795
  %v797 = vpop.f32.mrb[0].mxu0
  %v798 = vadd.f32 %v118, %v797
  %v799 = vpop.f32.mrb[0].mxu0
  %v800 = vadd.f32 %v114, %v799
  %v801 = vpop.f32.mrb[0].mxu0
  %v802 = vadd.f32 %v118, %v801
  %803 = vmatprep.mubr.bf16.mxu0 %v506
  %804 = vmatmul.mubr.bf16.gmra.mrb[0].mxu0 %v217
  %v805 = vpop.f32.mrb[0].mxu0
  %v806 = vadd.f32 %v114, %v805
  %v807 = vpop.f32.mrb[0].mxu0
  %v808 = vadd.f32 %v118, %v807
  %v809 = vpop.f32.mrb[0].mxu0
  %v810 = vadd.f32 %v114, %v809
  %v811 = vpop.f32.mrb[0].mxu0
  %v812 = vadd.f32 %v118, %v811
  %813 = vdwg.mxu0
  %v814 = vpack.c.bf16 %v547, %v543
  %v815 = vpack.c.bf16 %v549, %v545
  %v816 = vpack.c.bf16 %v700, %v696
  %v817 = vpack.c.bf16 %v702, %v698
  %v818 = vpack.c.bf16 %v557, %v553
  %v819 = vpack.c.bf16 %v559, %v555
  %v820 = vpack.c.bf16 %v710, %v706
  %v821 = vpack.c.bf16 %v712, %v708
  %v822 = vpack.c.bf16 %v567, %v563
  %v823 = vpack.c.bf16 %v569, %v565
  %v824 = vpack.c.bf16 %v720, %v716
  %v825 = vpack.c.bf16 %v722, %v718
  %v826 = vpack.c.bf16 %v577, %v573
  %v827 = vpack.c.bf16 %v579, %v575
  %v828 = vpack.c.bf16 %v730, %v726
  %v829 = vpack.c.bf16 %v732, %v728
  %v830 = vpack.c.bf16 %v587, %v583
  %v831 = vpack.c.bf16 %v589, %v585
  %v832 = vpack.c.bf16 %v740, %v736
  %v833 = vpack.c.bf16 %v742, %v738
  %v834 = vpack.c.bf16 %v597, %v593
  %v835 = vpack.c.bf16 %v599, %v595
  %v836 = vpack.c.bf16 %v750, %v746
  %v837 = vpack.c.bf16 %v752, %v748
  %v838 = vpack.c.bf16 %v607, %v603
  %v839 = vpack.c.bf16 %v609, %v605
  %v840 = vpack.c.bf16 %v760, %v756
  %v841 = vpack.c.bf16 %v762, %v758
  %v842 = vpack.c.bf16 %v617, %v613
  %v843 = vpack.c.bf16 %v619, %v615
  %v844 = vpack.c.bf16 %v770, %v766
  %v845 = vpack.c.bf16 %v772, %v768
  %v846 = vpack.c.bf16 %v627, %v623
  %v847 = vpack.c.bf16 %v629, %v625
  %v848 = vpack.c.bf16 %v780, %v776
  %v849 = vpack.c.bf16 %v782, %v778
  %v850 = vpack.c.bf16 %v637, %v633
  %v851 = vpack.c.bf16 %v639, %v635
  %v852 = vpack.c.bf16 %v790, %v786
  %v853 = vpack.c.bf16 %v792, %v788
  %v854 = vpack.c.bf16 %v647, %v643
  %v855 = vpack.c.bf16 %v649, %v645
  %v856 = vpack.c.bf16 %v800, %v796
  %v857 = vpack.c.bf16 %v802, %v798
  %v858 = vpack.c.bf16 %v657, %v653
  %v859 = vpack.c.bf16 %v659, %v655
  %v860 = vpack.c.bf16 %v810, %v806
  %v861 = vpack.c.bf16 %v812, %v808
  %v862 = vld [vmem:[%s3] sm:$0xff]
  %v863 = vld [vmem:[%s3 + $0x8] sm:$0xff]
  %v864 = vld [vmem:[%s3 + $0x10] sm:$0xff]
  %v865 = vld [vmem:[%s3 + $0x18] sm:$0xff]
  %v866 = vld [vmem:[%s3 + $0x20] sm:$0xff]
  %v867 = vld [vmem:[%s3 + $0x28] sm:$0xff]
  %v868 = vld [vmem:[%s3 + $0x30] sm:$0xff]
  %v869 = vld [vmem:[%s3 + $0x38] sm:$0xff]
  %v870 = vld [vmem:[%s3 + $0x40] sm:$0xff]
  %v871 = vld [vmem:[%s3 + $0x48] sm:$0xff]
  %v872 = vld [vmem:[%s3 + $0x50] sm:$0xff]
  %v873 = vld [vmem:[%s3 + $0x58] sm:$0xff]
  %v874 = vld [vmem:[%s3 + $0x60] sm:$0xff]
  %v875 = vld [vmem:[%s3 + $0x68] sm:$0xff]
  %v876 = vld [vmem:[%s3 + $0x70] sm:$0xff]
  %v877 = vld [vmem:[%s3 + $0x78] sm:$0xff]
  %v878 = vld [vmem:[%s3 + $0x80] sm:$0xff]
  %v879 = vld [vmem:[%s3 + $0x88] sm:$0xff]
  %v880 = vld [vmem:[%s3 + $0x90] sm:$0xff]
  %v881 = vld [vmem:[%s3 + $0x98] sm:$0xff]
  %v882 = vld [vmem:[%s3 + $0xa0] sm:$0xff]
  %v883 = vld [vmem:[%s3 + $0xa8] sm:$0xff]
  %v884 = vld [vmem:[%s3 + $0xb0] sm:$0xff]
  %v885 = vld [vmem:[%s3 + $0xb8] sm:$0xff]
  %v886 = vld [vmem:[%s3 + $0xc0] sm:$0xff]
  %v887 = vld [vmem:[%s3 + $0xc8] sm:$0xff]
  %v888 = vld [vmem:[%s3 + $0xd0] sm:$0xff]
  %v889 = vld [vmem:[%s3 + $0xd8] sm:$0xff]
  %v890 = vld [vmem:[%s3 + $0xe0] sm:$0xff]
  %v891 = vld [vmem:[%s3 + $0xe8] sm:$0xff]
  %v892 = vld [vmem:[%s3 + $0xf0] sm:$0xff]
  %v893 = vld [vmem:[%s3 + $0xf8] sm:$0xff]
  %v894 = vld [vmem:[%s3 + $0x100] sm:$0xff]
  %v895 = vld [vmem:[%s3 + $0x108] sm:$0xff]
  %v896 = vld [vmem:[%s3 + $0x110] sm:$0xff]
  %v897 = vld [vmem:[%s3 + $0x118] sm:$0xff]
  %v898 = vld [vmem:[%s3 + $0x120] sm:$0xff]
  %v899 = vld [vmem:[%s3 + $0x128] sm:$0xff]
  %v900 = vld [vmem:[%s3 + $0x130] sm:$0xff]
  %v901 = vld [vmem:[%s3 + $0x138] sm:$0xff]
  %v902 = vld [vmem:[%s3 + $0x140] sm:$0xff]
  %v903 = vld [vmem:[%s3 + $0x148] sm:$0xff]
  %v904 = vld [vmem:[%s3 + $0x150] sm:$0xff]
  %v905 = vld [vmem:[%s3 + $0x158] sm:$0xff]
  %v906 = vld [vmem:[%s3 + $0x160] sm:$0xff]
  %v907 = vld [vmem:[%s3 + $0x168] sm:$0xff]
  %v908 = vld [vmem:[%s3 + $0x170] sm:$0xff]
  %v909 = vld [vmem:[%s3 + $0x178] sm:$0xff]
  %v910 = vld [vmem:[%s3 + $0x180] sm:$0xff]
  %v911 = vld [vmem:[%s3 + $0x188] sm:$0xff]
  %v912 = vld [vmem:[%s4] sm:$0x3]
  %v914 = vlaneseq
  %v915 = vshrl.u32 %v914, 7
  %v916 = vsub.s32 0, %v915
  %v917 = vrot.slane %v912, %v916
  %v918 = vlaneseq
  %v919 = vshrl.u32 %v918, 7
  %v920 = vsub.s32 1, %v919
  %v921 = vrot.slane %v912, %v920
  %v974 = vunpack.c.l.b16 %v862
  %v975 = vunpack.c.h.b16 %v862
  %v976 = vunpack.c.l.b16 %v863
  %v977 = vunpack.c.h.b16 %v863
  %v978 = vunpack.c.l.b16 %v864
  %v979 = vunpack.c.h.b16 %v864
  %v980 = vunpack.c.l.b16 %v865
  %v981 = vunpack.c.h.b16 %v865
  %v982 = vunpack.c.l.b16 %v866
  %v983 = vunpack.c.h.b16 %v866
  %v984 = vunpack.c.l.b16 %v867
  %v985 = vunpack.c.h.b16 %v867
  %v986 = vunpack.c.l.b16 %v868
  %v987 = vunpack.c.h.b16 %v868
  %v988 = vunpack.c.l.b16 %v869
  %v989 = vunpack.c.h.b16 %v869
  %v990 = vunpack.c.l.b16 %v870
  %v991 = vunpack.c.h.b16 %v870
  %v992 = vunpack.c.l.b16 %v871
  %v993 = vunpack.c.h.b16 %v871
  %v994 = vunpack.c.l.b16 %v872
  %v995 = vunpack.c.h.b16 %v872
  %v996 = vunpack.c.l.b16 %v873
  %v997 = vunpack.c.h.b16 %v873
  %v998 = vunpack.c.l.b16 %v874
  %v999 = vunpack.c.h.b16 %v874
  %v1000 = vunpack.c.l.b16 %v875
  %v1001 = vunpack.c.h.b16 %v875
  %v1002 = vunpack.c.l.b16 %v876
  %v1003 = vunpack.c.h.b16 %v876
  %v1004 = vunpack.c.l.b16 %v877
  %v1005 = vunpack.c.h.b16 %v877
  %v1006 = vunpack.c.l.b16 %v878
  %v1007 = vunpack.c.h.b16 %v878
  %v1008 = vunpack.c.l.b16 %v879
  %v1009 = vunpack.c.h.b16 %v879
  %v1010 = vunpack.c.l.b16 %v880
  %v1011 = vunpack.c.h.b16 %v880
  %v1012 = vunpack.c.l.b16 %v881
  %v1013 = vunpack.c.h.b16 %v881
  %v1014 = vunpack.c.l.b16 %v882
  %v1015 = vunpack.c.h.b16 %v882
  %v1016 = vunpack.c.l.b16 %v883
  %v1017 = vunpack.c.h.b16 %v883
  %v1018 = vunpack.c.l.b16 %v884
  %v1019 = vunpack.c.h.b16 %v884
  %v1020 = vunpack.c.l.b16 %v885
  %v1021 = vunpack.c.h.b16 %v885
  %v1022 = vunpack.c.l.b16 %v886
  %v1023 = vunpack.c.h.b16 %v886
  %v1024 = vunpack.c.l.b16 %v887
  %v1025 = vunpack.c.h.b16 %v887
  %v1026 = vunpack.c.l.b16 %v888
  %v1027 = vunpack.c.h.b16 %v888
  %v1028 = vunpack.c.l.b16 %v889
  %v1029 = vunpack.c.h.b16 %v889
  %v1030 = vunpack.c.l.b16 %v890
  %v1031 = vunpack.c.h.b16 %v890
  %v1032 = vunpack.c.l.b16 %v891
  %v1033 = vunpack.c.h.b16 %v891
  %v1034 = vunpack.c.l.b16 %v892
  %v1035 = vunpack.c.h.b16 %v892
  %v1036 = vunpack.c.l.b16 %v893
  %v1037 = vunpack.c.h.b16 %v893
  %v1038 = vunpack.c.l.b16 %v894
  %v1039 = vunpack.c.h.b16 %v894
  %v1040 = vunpack.c.l.b16 %v895
  %v1041 = vunpack.c.h.b16 %v895
  %v1042 = vunpack.c.l.b16 %v896
  %v1043 = vunpack.c.h.b16 %v896
  %v1044 = vunpack.c.l.b16 %v897
  %v1045 = vunpack.c.h.b16 %v897
  %v1046 = vunpack.c.l.b16 %v898
  %v1047 = vunpack.c.h.b16 %v898
  %v1048 = vunpack.c.l.b16 %v899
  %v1049 = vunpack.c.h.b16 %v899
  %v1050 = vunpack.c.l.b16 %v900
  %v1051 = vunpack.c.h.b16 %v900
  %v1052 = vunpack.c.l.b16 %v901
  %v1053 = vunpack.c.h.b16 %v901
  %v1054 = vunpack.c.l.b16 %v902
  %v1055 = vunpack.c.h.b16 %v902
  %v1056 = vunpack.c.l.b16 %v903
  %v1057 = vunpack.c.h.b16 %v903
  %v1058 = vunpack.c.l.b16 %v904
  %v1059 = vunpack.c.h.b16 %v904
  %v1060 = vunpack.c.l.b16 %v905
  %v1061 = vunpack.c.h.b16 %v905
  %v1062 = vunpack.c.l.b16 %v906
  %v1063 = vunpack.c.h.b16 %v906
  %v1064 = vunpack.c.l.b16 %v907
  %v1065 = vunpack.c.h.b16 %v907
  %v1066 = vunpack.c.l.b16 %v908
  %v1067 = vunpack.c.h.b16 %v908
  %v1068 = vunpack.c.l.b16 %v909
  %v1069 = vunpack.c.h.b16 %v909
  %v1070 = vunpack.c.l.b16 %v910
  %v1071 = vunpack.c.h.b16 %v910
  %v1072 = vunpack.c.l.b16 %v911
  %v1073 = vunpack.c.h.b16 %v911
  %v1074 = vpack.c.b16 %v976, %v974
  %v1075 = vpack.c.b16 %v977, %v975
  %v1076 = vpack.c.b16 %v980, %v978
  %v1077 = vpack.c.b16 %v981, %v979
  %v1078 = vpack.c.b16 %v984, %v982
  %v1079 = vpack.c.b16 %v985, %v983
  %v1080 = vpack.c.b16 %v988, %v986
  %v1081 = vpack.c.b16 %v989, %v987
  %v1082 = vpack.c.b16 %v992, %v990
  %v1083 = vpack.c.b16 %v993, %v991
  %v1084 = vpack.c.b16 %v996, %v994
  %v1085 = vpack.c.b16 %v997, %v995
  %v1086 = vpack.c.b16 %v1000, %v998
  %v1087 = vpack.c.b16 %v1001, %v999
  %v1088 = vpack.c.b16 %v1004, %v1002
  %v1089 = vpack.c.b16 %v1005, %v1003
  %v1090 = vpack.c.b16 %v1008, %v1006
  %v1091 = vpack.c.b16 %v1009, %v1007
  %v1092 = vpack.c.b16 %v1012, %v1010
  %v1093 = vpack.c.b16 %v1013, %v1011
  %v1094 = vpack.c.b16 %v1016, %v1014
  %v1095 = vpack.c.b16 %v1017, %v1015
  %v1096 = vpack.c.b16 %v1020, %v1018
  %v1097 = vpack.c.b16 %v1021, %v1019
  %v1098 = vpack.c.b16 %v1024, %v1022
  %v1099 = vpack.c.b16 %v1025, %v1023
  %v1100 = vpack.c.b16 %v1028, %v1026
  %v1101 = vpack.c.b16 %v1029, %v1027
  %v1102 = vpack.c.b16 %v1032, %v1030
  %v1103 = vpack.c.b16 %v1033, %v1031
  %v1104 = vpack.c.b16 %v1036, %v1034
  %v1105 = vpack.c.b16 %v1037, %v1035
  %v1106 = vpack.c.b16 %v1040, %v1038
  %v1107 = vpack.c.b16 %v1041, %v1039
  %v1108 = vpack.c.b16 %v1044, %v1042
  %v1109 = vpack.c.b16 %v1045, %v1043
  %v1110 = vpack.c.b16 %v1048, %v1046
  %v1111 = vpack.c.b16 %v1049, %v1047
  %v1112 = vpack.c.b16 %v1052, %v1050
  %v1113 = vpack.c.b16 %v1053, %v1051
  %v1114 = vpack.c.b16 %v1056, %v1054
  %v1115 = vpack.c.b16 %v1057, %v1055
  %v1116 = vpack.c.b16 %v1060, %v1058
  %v1117 = vpack.c.b16 %v1061, %v1059
  %v1118 = vpack.c.b16 %v1064, %v1062
  %v1119 = vpack.c.b16 %v1065, %v1063
  %v1120 = vpack.c.b16 %v1068, %v1066
  %v1121 = vpack.c.b16 %v1069, %v1067
  %v1122 = vpack.c.b16 %v1072, %v1070
  %v1123 = vpack.c.b16 %v1073, %v1071
  %vm1174 = vcmask 130048
  %v1176 = vsel %vm1174, %v817, 0
  %v1179 = vsel %vm1174, %v821, 0
  %v1182 = vsel %vm1174, %v825, 0
  %v1185 = vsel %vm1174, %v829, 0
  %v1188 = vsel %vm1174, %v833, 0
  %v1191 = vsel %vm1174, %v837, 0
  %v1194 = vsel %vm1174, %v841, 0
  %v1197 = vsel %vm1174, %v845, 0
  %v1200 = vsel %vm1174, %v849, 0
  %v1203 = vsel %vm1174, %v853, 0
  %v1206 = vsel %vm1174, %v857, 0
  %v1209 = vsel %vm1174, %v861, 0
  %1211 = vmatprep.subr.bf16.mxu0 %v1075
  %1212 = vmatpush1.bf16.msra.mxu0 %v1074
  %1213 = vmatprep.subr.bf16.mxu0 %v1077
  %1214 = vmatpush1.bf16.msra.mxu0 %v1076
  %1215 = vmatprep.subr.bf16.mxu0 %v1079
  %1216 = vmatpush1.bf16.msra.mxu0 %v1078
  %1217 = vmatprep.subr.bf16.mxu0 %v1081
  %1218 = vmatpush1.bf16.msra.mxu0 %v1080
  %1219 = vmatprep.subr.bf16.mxu0 %v1083
  %1220 = vmatpush1.bf16.msra.mxu0 %v1082
  %1221 = vmatprep.subr.bf16.mxu0 %v1085
  %1222 = vmatpush1.bf16.msra.mxu0 %v1084
  %1223 = vmatprep.subr.bf16.mxu0 %v1087
  %1224 = vmatpush1.bf16.msra.mxu0 %v1086
  %1225 = vmatprep.subr.bf16.mxu0 %v1089
  %1226 = vmatpush1.bf16.msra.mxu0 %v1088
  %1227 = vmatprep.subr.bf16.mxu0 %v1091
  %1228 = vmatpush1.bf16.msra.mxu0 %v1090
  %1229 = vmatprep.subr.bf16.mxu0 %v1093
  %1230 = vmatpush1.bf16.msra.mxu0 %v1092
  %1231 = vmatprep.subr.bf16.mxu0 %v1095
  %1232 = vmatpush1.bf16.msra.mxu0 %v1094
  %1233 = vmatprep.subr.bf16.mxu0 %v1097
  %1234 = vmatpush1.bf16.msra.mxu0 %v1096
  %1235 = vmatprep.subr.bf16.mxu0 %v1099
  %1236 = vmatpush1.bf16.msra.mxu0 %v1098
  %1237 = vmatprep.subr.bf16.mxu0 %v1101
  %1238 = vmatpush1.bf16.msra.mxu0 %v1100
  %1239 = vmatprep.subr.bf16.mxu0 %v1103
  %1240 = vmatpush1.bf16.msra.mxu0 %v1102
  %1241 = vmatprep.subr.bf16.mxu0 %v1105
  %1242 = vmatpush1.bf16.msra.mxu0 %v1104
  %1243 = vmatprep.mubr.bf16.mxu0 %v815
  %1244 = vmatmul.mubr.bf16.gmra.mrb[0].mxu0 %v814
  %v1245 = vpop.f32.mrb[0].mxu0
  %v1246 = vadd.f32 %v917, %v1245
  %v1247 = vpop.f32.mrb[0].mxu0
  %v1248 = vadd.f32 %v921, %v1247
  %v1249 = vpop.f32.mrb[0].mxu0
  %v1250 = vadd.f32 %v917, %v1249
  %v1251 = vpop.f32.mrb[0].mxu0
  %v1252 = vadd.f32 %v921, %v1251
  %1253 = vmatprep.mubr.bf16.mxu0 %v819
  %1254 = vmatmul.mubr.bf16.gmra.mrb[0].mxu0 %v818
  %v1255 = vpop.f32.mrb[0].mxu0
  %v1256 = vadd.f32 %v917, %v1255
  %v1257 = vpop.f32.mrb[0].mxu0
  %v1258 = vadd.f32 %v921, %v1257
  %v1259 = vpop.f32.mrb[0].mxu0
  %v1260 = vadd.f32 %v917, %v1259
  %v1261 = vpop.f32.mrb[0].mxu0
  %v1262 = vadd.f32 %v921, %v1261
  %1263 = vmatprep.mubr.bf16.mxu0 %v823
  %1264 = vmatmul.mubr.bf16.gmra.mrb[0].mxu0 %v822
  %v1265 = vpop.f32.mrb[0].mxu0
  %v1266 = vadd.f32 %v917, %v1265
  %v1267 = vpop.f32.mrb[0].mxu0
  %v1268 = vadd.f32 %v921, %v1267
  %v1269 = vpop.f32.mrb[0].mxu0
  %v1270 = vadd.f32 %v917, %v1269
  %v1271 = vpop.f32.mrb[0].mxu0
  %v1272 = vadd.f32 %v921, %v1271
  %1273 = vmatprep.mubr.bf16.mxu0 %v827
  %1274 = vmatmul.mubr.bf16.gmra.mrb[0].mxu0 %v826
  %v1275 = vpop.f32.mrb[0].mxu0
  %v1276 = vadd.f32 %v917, %v1275
  %v1277 = vpop.f32.mrb[0].mxu0
  %v1278 = vadd.f32 %v921, %v1277
  %v1279 = vpop.f32.mrb[0].mxu0
  %v1280 = vadd.f32 %v917, %v1279
  %v1281 = vpop.f32.mrb[0].mxu0
  %v1282 = vadd.f32 %v921, %v1281
  %1283 = vmatprep.mubr.bf16.mxu0 %v831
  %1284 = vmatmul.mubr.bf16.gmra.mrb[0].mxu0 %v830
  %v1285 = vpop.f32.mrb[0].mxu0
  %v1286 = vadd.f32 %v917, %v1285
  %v1287 = vpop.f32.mrb[0].mxu0
  %v1288 = vadd.f32 %v921, %v1287
  %v1289 = vpop.f32.mrb[0].mxu0
  %v1290 = vadd.f32 %v917, %v1289
  %v1291 = vpop.f32.mrb[0].mxu0
  %v1292 = vadd.f32 %v921, %v1291
  %1293 = vmatprep.mubr.bf16.mxu0 %v835
  %1294 = vmatmul.mubr.bf16.gmra.mrb[0].mxu0 %v834
  %v1295 = vpop.f32.mrb[0].mxu0
  %v1296 = vadd.f32 %v917, %v1295
  %v1297 = vpop.f32.mrb[0].mxu0
  %v1298 = vadd.f32 %v921, %v1297
  %v1299 = vpop.f32.mrb[0].mxu0
  %v1300 = vadd.f32 %v917, %v1299
  %v1301 = vpop.f32.mrb[0].mxu0
  %v1302 = vadd.f32 %v921, %v1301
  %1303 = vmatprep.mubr.bf16.mxu0 %v839
  %1304 = vmatmul.mubr.bf16.gmra.mrb[0].mxu0 %v838
  %v1305 = vpop.f32.mrb[0].mxu0
  %v1306 = vadd.f32 %v917, %v1305
  %v1307 = vpop.f32.mrb[0].mxu0
  %v1308 = vadd.f32 %v921, %v1307
  %v1309 = vpop.f32.mrb[0].mxu0
  %v1310 = vadd.f32 %v917, %v1309
  %v1311 = vpop.f32.mrb[0].mxu0
  %v1312 = vadd.f32 %v921, %v1311
  %1313 = vmatprep.mubr.bf16.mxu0 %v843
  %1314 = vmatmul.mubr.bf16.gmra.mrb[0].mxu0 %v842
  %v1315 = vpop.f32.mrb[0].mxu0
  %v1316 = vadd.f32 %v917, %v1315
  %v1317 = vpop.f32.mrb[0].mxu0
  %v1318 = vadd.f32 %v921, %v1317
  %v1319 = vpop.f32.mrb[0].mxu0
  %v1320 = vadd.f32 %v917, %v1319
  %v1321 = vpop.f32.mrb[0].mxu0
  %v1322 = vadd.f32 %v921, %v1321
  %1323 = vmatprep.mubr.bf16.mxu0 %v847
  %1324 = vmatmul.mubr.bf16.gmra.mrb[0].mxu0 %v846
  %v1325 = vpop.f32.mrb[0].mxu0
  %v1326 = vadd.f32 %v917, %v1325
  %v1327 = vpop.f32.mrb[0].mxu0
  %v1328 = vadd.f32 %v921, %v1327
  %v1329 = vpop.f32.mrb[0].mxu0
  %v1330 = vadd.f32 %v917, %v1329
  %v1331 = vpop.f32.mrb[0].mxu0
  %v1332 = vadd.f32 %v921, %v1331
  %1333 = vmatprep.mubr.bf16.mxu0 %v851
  %1334 = vmatmul.mubr.bf16.gmra.mrb[0].mxu0 %v850
  %v1335 = vpop.f32.mrb[0].mxu0
  %v1336 = vadd.f32 %v917, %v1335
  %v1337 = vpop.f32.mrb[0].mxu0
  %v1338 = vadd.f32 %v921, %v1337
  %v1339 = vpop.f32.mrb[0].mxu0
  %v1340 = vadd.f32 %v917, %v1339
  %v1341 = vpop.f32.mrb[0].mxu0
  %v1342 = vadd.f32 %v921, %v1341
  %1343 = vmatprep.mubr.bf16.mxu0 %v855
  %1344 = vmatmul.mubr.bf16.gmra.mrb[0].mxu0 %v854
  %v1345 = vpop.f32.mrb[0].mxu0
  %v1346 = vadd.f32 %v917, %v1345
  %v1347 = vpop.f32.mrb[0].mxu0
  %v1348 = vadd.f32 %v921, %v1347
  %v1349 = vpop.f32.mrb[0].mxu0
  %v1350 = vadd.f32 %v917, %v1349
  %v1351 = vpop.f32.mrb[0].mxu0
  %v1352 = vadd.f32 %v921, %v1351
  %1353 = vmatprep.mubr.bf16.mxu0 %v859
  %1354 = vmatmul.mubr.bf16.gmra.mrb[0].mxu0 %v858
  %v1355 = vpop.f32.mrb[0].mxu0
  %v1356 = vadd.f32 %v917, %v1355
  %v1357 = vpop.f32.mrb[0].mxu0
  %v1358 = vadd.f32 %v921, %v1357
  %v1359 = vpop.f32.mrb[0].mxu0
  %v1360 = vadd.f32 %v917, %v1359
  %v1361 = vpop.f32.mrb[0].mxu0
  %v1362 = vadd.f32 %v921, %v1361
  %1363 = vdwg.mxu0
  %1364 = vmatprep.subr.bf16.mxu0 %v1107
  %1365 = vmatpush1.bf16.msra.mxu0 %v1106
  %1366 = vmatprep.subr.bf16.mxu0 %v1109
  %1367 = vmatpush1.bf16.msra.mxu0 %v1108
  %1368 = vmatprep.subr.bf16.mxu0 %v1111
  %1369 = vmatpush1.bf16.msra.mxu0 %v1110
  %1370 = vmatprep.subr.bf16.mxu0 %v1113
  %1371 = vmatpush1.bf16.msra.mxu0 %v1112
  %1372 = vmatprep.subr.bf16.mxu0 %v1115
  %1373 = vmatpush1.bf16.msra.mxu0 %v1114
  %1374 = vmatprep.subr.bf16.mxu0 %v1117
  %1375 = vmatpush1.bf16.msra.mxu0 %v1116
  %1376 = vmatprep.subr.bf16.mxu0 %v1119
  %1377 = vmatpush1.bf16.msra.mxu0 %v1118
  %1378 = vmatprep.subr.bf16.mxu0 %v1121
  %1379 = vmatpush1.bf16.msra.mxu0 %v1120
  %1380 = vmatprep.subr.bf16.mxu0 %v1123
  %1381 = vmatpush1.bf16.msra.mxu0 %v1122
  %1382 = vmatprep.subr.bf16.mxu0 0
  %1383 = vmatpush1.bf16.msra.mxu0 0
  %1384 = vmatprep.subr.bf16.mxu0 0
  %1385 = vmatpush1.bf16.msra.mxu0 0
  %1386 = vmatprep.subr.bf16.mxu0 0
  %1387 = vmatpush1.bf16.msra.mxu0 0
  %1388 = vmatprep.subr.bf16.mxu0 0
  %1389 = vmatpush1.bf16.msra.mxu0 0
  %1390 = vmatprep.subr.bf16.mxu0 0
  %1391 = vmatpush1.bf16.msra.mxu0 0
  %1392 = vmatprep.subr.bf16.mxu0 0
  %1393 = vmatpush1.bf16.msra.mxu0 0
  %1394 = vmatprep.subr.bf16.mxu0 0
  %1395 = vmatpush1.bf16.msra.mxu0 0
  %1396 = vmatprep.mubr.bf16.mxu0 %v1176
  %1397 = vmatmul.mubr.bf16.gmra.mrb[0].mxu0 %v816
  %v1398 = vpop.f32.mrb[0].mxu0
  %v1399 = vadd.f32 %v1246, %v1398
  %v1400 = vpop.f32.mrb[0].mxu0
  %v1401 = vadd.f32 %v1248, %v1400
  %v1402 = vpop.f32.mrb[0].mxu0
  %v1403 = vadd.f32 %v1250, %v1402
  %v1404 = vpop.f32.mrb[0].mxu0
  %v1405 = vadd.f32 %v1252, %v1404
  %1406 = vmatprep.mubr.bf16.mxu0 %v1179
  %1407 = vmatmul.mubr.bf16.gmra.mrb[0].mxu0 %v820
  %v1408 = vpop.f32.mrb[0].mxu0
  %v1409 = vadd.f32 %v1256, %v1408
  %v1410 = vpop.f32.mrb[0].mxu0
  %v1411 = vadd.f32 %v1258, %v1410
  %v1412 = vpop.f32.mrb[0].mxu0
  %v1413 = vadd.f32 %v1260, %v1412
  %v1414 = vpop.f32.mrb[0].mxu0
  %v1415 = vadd.f32 %v1262, %v1414
  %1416 = vmatprep.mubr.bf16.mxu0 %v1182
  %1417 = vmatmul.mubr.bf16.gmra.mrb[0].mxu0 %v824
  %v1418 = vpop.f32.mrb[0].mxu0
  %v1419 = vadd.f32 %v1266, %v1418
  %v1420 = vpop.f32.mrb[0].mxu0
  %v1421 = vadd.f32 %v1268, %v1420
  %v1422 = vpop.f32.mrb[0].mxu0
  %v1423 = vadd.f32 %v1270, %v1422
  %v1424 = vpop.f32.mrb[0].mxu0
  %v1425 = vadd.f32 %v1272, %v1424
  %1426 = vmatprep.mubr.bf16.mxu0 %v1185
  %1427 = vmatmul.mubr.bf16.gmra.mrb[0].mxu0 %v828
  %v1428 = vpop.f32.mrb[0].mxu0
  %v1429 = vadd.f32 %v1276, %v1428
  %v1430 = vpop.f32.mrb[0].mxu0
  %v1431 = vadd.f32 %v1278, %v1430
  %v1432 = vpop.f32.mrb[0].mxu0
  %v1433 = vadd.f32 %v1280, %v1432
  %v1434 = vpop.f32.mrb[0].mxu0
  %v1435 = vadd.f32 %v1282, %v1434
  %1436 = vmatprep.mubr.bf16.mxu0 %v1188
  %1437 = vmatmul.mubr.bf16.gmra.mrb[0].mxu0 %v832
  %v1438 = vpop.f32.mrb[0].mxu0
  %v1439 = vadd.f32 %v1286, %v1438
  %v1440 = vpop.f32.mrb[0].mxu0
  %v1441 = vadd.f32 %v1288, %v1440
  %v1442 = vpop.f32.mrb[0].mxu0
  %v1443 = vadd.f32 %v1290, %v1442
  %v1444 = vpop.f32.mrb[0].mxu0
  %v1445 = vadd.f32 %v1292, %v1444
  %1446 = vmatprep.mubr.bf16.mxu0 %v1191
  %1447 = vmatmul.mubr.bf16.gmra.mrb[0].mxu0 %v836
  %v1448 = vpop.f32.mrb[0].mxu0
  %v1449 = vadd.f32 %v1296, %v1448
  %v1450 = vpop.f32.mrb[0].mxu0
  %v1451 = vadd.f32 %v1298, %v1450
  %v1452 = vpop.f32.mrb[0].mxu0
  %v1453 = vadd.f32 %v1300, %v1452
  %v1454 = vpop.f32.mrb[0].mxu0
  %v1455 = vadd.f32 %v1302, %v1454
  %1456 = vmatprep.mubr.bf16.mxu0 %v1194
  %1457 = vmatmul.mubr.bf16.gmra.mrb[0].mxu0 %v840
  %v1458 = vpop.f32.mrb[0].mxu0
  %v1459 = vadd.f32 %v1306, %v1458
  %v1460 = vpop.f32.mrb[0].mxu0
  %v1461 = vadd.f32 %v1308, %v1460
  %v1462 = vpop.f32.mrb[0].mxu0
  %v1463 = vadd.f32 %v1310, %v1462
  %v1464 = vpop.f32.mrb[0].mxu0
  %v1465 = vadd.f32 %v1312, %v1464
  %1466 = vmatprep.mubr.bf16.mxu0 %v1197
  %1467 = vmatmul.mubr.bf16.gmra.mrb[0].mxu0 %v844
  %v1468 = vpop.f32.mrb[0].mxu0
  %v1469 = vadd.f32 %v1316, %v1468
  %v1470 = vpop.f32.mrb[0].mxu0
  %v1471 = vadd.f32 %v1318, %v1470
  %v1472 = vpop.f32.mrb[0].mxu0
  %v1473 = vadd.f32 %v1320, %v1472
  %v1474 = vpop.f32.mrb[0].mxu0
  %v1475 = vadd.f32 %v1322, %v1474
  %1476 = vmatprep.mubr.bf16.mxu0 %v1200
  %1477 = vmatmul.mubr.bf16.gmra.mrb[0].mxu0 %v848
  %v1478 = vpop.f32.mrb[0].mxu0
  %v1479 = vadd.f32 %v1326, %v1478
  %v1480 = vpop.f32.mrb[0].mxu0
  %v1481 = vadd.f32 %v1328, %v1480
  %v1482 = vpop.f32.mrb[0].mxu0
  %v1483 = vadd.f32 %v1330, %v1482
  %v1484 = vpop.f32.mrb[0].mxu0
  %v1485 = vadd.f32 %v1332, %v1484
  %1486 = vmatprep.mubr.bf16.mxu0 %v1203
  %1487 = vmatmul.mubr.bf16.gmra.mrb[0].mxu0 %v852
  %v1488 = vpop.f32.mrb[0].mxu0
  %v1489 = vadd.f32 %v1336, %v1488
  %v1490 = vpop.f32.mrb[0].mxu0
  %v1491 = vadd.f32 %v1338, %v1490
  %v1492 = vpop.f32.mrb[0].mxu0
  %v1493 = vadd.f32 %v1340, %v1492
  %v1494 = vpop.f32.mrb[0].mxu0
  %v1495 = vadd.f32 %v1342, %v1494
  %1496 = vmatprep.mubr.bf16.mxu0 %v1206
  %1497 = vmatmul.mubr.bf16.gmra.mrb[0].mxu0 %v856
  %v1498 = vpop.f32.mrb[0].mxu0
  %v1499 = vadd.f32 %v1346, %v1498
  %v1500 = vpop.f32.mrb[0].mxu0
  %v1501 = vadd.f32 %v1348, %v1500
  %v1502 = vpop.f32.mrb[0].mxu0
  %v1503 = vadd.f32 %v1350, %v1502
  %v1504 = vpop.f32.mrb[0].mxu0
  %v1505 = vadd.f32 %v1352, %v1504
  %1506 = vmatprep.mubr.bf16.mxu0 %v1209
  %1507 = vmatmul.mubr.bf16.gmra.mrb[0].mxu0 %v860
  %v1508 = vpop.f32.mrb[0].mxu0
  %v1509 = vadd.f32 %v1356, %v1508
  %v1510 = vpop.f32.mrb[0].mxu0
  %v1511 = vadd.f32 %v1358, %v1510
  %v1512 = vpop.f32.mrb[0].mxu0
  %v1513 = vadd.f32 %v1360, %v1512
  %v1514 = vpop.f32.mrb[0].mxu0
  %v1515 = vadd.f32 %v1362, %v1514
  %1516 = vdwg.mxu0
  %v1517 = vtanh.pop %v1399
  %v1518 = vtanh.pop %v1401
  %v1519 = vtanh.pop %v1403
  %v1520 = vtanh.pop %v1405
  %v1521 = vtanh.pop %v1409
  %v1522 = vtanh.pop %v1411
  %v1523 = vtanh.pop %v1413
  %v1524 = vtanh.pop %v1415
  %v1525 = vtanh.pop %v1419
  %v1526 = vtanh.pop %v1421
  %v1527 = vtanh.pop %v1423
  %v1528 = vtanh.pop %v1425
  %v1529 = vtanh.pop %v1429
  %v1530 = vtanh.pop %v1431
  %v1531 = vtanh.pop %v1433
  %v1532 = vtanh.pop %v1435
  %v1533 = vtanh.pop %v1439
  %v1534 = vtanh.pop %v1441
  %v1535 = vtanh.pop %v1443
  %v1536 = vtanh.pop %v1445
  %v1537 = vtanh.pop %v1449
  %v1538 = vtanh.pop %v1451
  %v1539 = vtanh.pop %v1453
  %v1540 = vtanh.pop %v1455
  %v1541 = vtanh.pop %v1459
  %v1542 = vtanh.pop %v1461
  %v1543 = vtanh.pop %v1463
  %v1544 = vtanh.pop %v1465
  %v1545 = vtanh.pop %v1469
  %v1546 = vtanh.pop %v1471
  %v1547 = vtanh.pop %v1473
  %v1548 = vtanh.pop %v1475
  %v1549 = vtanh.pop %v1479
  %v1550 = vtanh.pop %v1481
  %v1551 = vtanh.pop %v1483
  %v1552 = vtanh.pop %v1485
  %v1553 = vtanh.pop %v1489
  %v1554 = vtanh.pop %v1491
  %v1555 = vtanh.pop %v1493
  %v1556 = vtanh.pop %v1495
  %v1557 = vtanh.pop %v1499
  %v1558 = vtanh.pop %v1501
  %v1559 = vtanh.pop %v1503
  %v1560 = vtanh.pop %v1505
  %v1561 = vtanh.pop %v1509
  %v1562 = vtanh.pop %v1511
  %v1563 = vtanh.pop %v1513
  %v1564 = vtanh.pop %v1515
  %v1565 = vld [vmem:[%s5] sm:$0x3]
  %v1567 = vlaneseq
  %v1568 = vshrl.u32 %v1567, 7
  %v1569 = vsub.s32 0, %v1568
  %v1570 = vrot.slane %v1565, %v1569
  %v1571 = vlaneseq
  %v1572 = vshrl.u32 %v1571, 7
  %v1573 = vsub.s32 1, %v1572
  %v1574 = vrot.slane %v1565, %v1573
  %v1577 = vmul.f32 %v1517, %v1570
  %v1578 = vmul.f32 %v1518, %v1574
  %v1579 = vmul.f32 %v1519, %v1570
  %v1580 = vmul.f32 %v1520, %v1574
  %v1581 = vmul.f32 %v1521, %v1570
  %v1582 = vmul.f32 %v1522, %v1574
  %v1583 = vmul.f32 %v1523, %v1570
  %v1584 = vmul.f32 %v1524, %v1574
  %v1585 = vmul.f32 %v1525, %v1570
  %v1586 = vmul.f32 %v1526, %v1574
  %v1587 = vmul.f32 %v1527, %v1570
  %v1588 = vmul.f32 %v1528, %v1574
  %v1589 = vmul.f32 %v1529, %v1570
  %v1590 = vmul.f32 %v1530, %v1574
  %v1591 = vmul.f32 %v1531, %v1570
  %v1592 = vmul.f32 %v1532, %v1574
  %v1593 = vmul.f32 %v1533, %v1570
  %v1594 = vmul.f32 %v1534, %v1574
  %v1595 = vmul.f32 %v1535, %v1570
  %v1596 = vmul.f32 %v1536, %v1574
  %v1597 = vmul.f32 %v1537, %v1570
  %v1598 = vmul.f32 %v1538, %v1574
  %v1599 = vmul.f32 %v1539, %v1570
  %v1600 = vmul.f32 %v1540, %v1574
  %v1601 = vmul.f32 %v1541, %v1570
  %v1602 = vmul.f32 %v1542, %v1574
  %v1603 = vmul.f32 %v1543, %v1570
  %v1604 = vmul.f32 %v1544, %v1574
  %v1605 = vmul.f32 %v1545, %v1570
  %v1606 = vmul.f32 %v1546, %v1574
  %v1607 = vmul.f32 %v1547, %v1570
  %v1608 = vmul.f32 %v1548, %v1574
  %v1609 = vmul.f32 %v1549, %v1570
  %v1610 = vmul.f32 %v1550, %v1574
  %v1611 = vmul.f32 %v1551, %v1570
  %v1612 = vmul.f32 %v1552, %v1574
  %v1613 = vmul.f32 %v1553, %v1570
  %v1614 = vmul.f32 %v1554, %v1574
  %v1615 = vmul.f32 %v1555, %v1570
  %v1616 = vmul.f32 %v1556, %v1574
  %v1617 = vmul.f32 %v1557, %v1570
  %v1618 = vmul.f32 %v1558, %v1574
  %v1619 = vmul.f32 %v1559, %v1570
  %v1620 = vmul.f32 %v1560, %v1574
  %v1621 = vmul.f32 %v1561, %v1570
  %v1622 = vmul.f32 %v1562, %v1574
  %v1623 = vmul.f32 %v1563, %v1570
  %v1624 = vmul.f32 %v1564, %v1574
  %vm1625 = vcmask 588800
  %v1626 = vsel %vm1625, %v1578, 0.0
  %v1627 = vadd.f32 %v1577, %v1626
  %1628 = vadd.xlane.f32.xlu0 %v1627
  %v1629 = vpop.xlane.xlu0 %1628
  %v1630 = vsel %vm1625, %v1580, 0.0
  %v1631 = vadd.f32 %v1579, %v1630
  %1632 = vadd.xlane.f32.xlu0 %v1631
  %v1633 = vpop.xlane.xlu0 %1632
  %v1634 = vsel %vm1625, %v1582, 0.0
  %v1635 = vadd.f32 %v1581, %v1634
  %1636 = vadd.xlane.f32.xlu0 %v1635
  %v1637 = vpop.xlane.xlu0 %1636
  %v1638 = vsel %vm1625, %v1584, 0.0
  %v1639 = vadd.f32 %v1583, %v1638
  %1640 = vadd.xlane.f32.xlu0 %v1639
  %v1641 = vpop.xlane.xlu0 %1640
  %v1642 = vsel %vm1625, %v1586, 0.0
  %v1643 = vadd.f32 %v1585, %v1642
  %1644 = vadd.xlane.f32.xlu0 %v1643
  %v1645 = vpop.xlane.xlu0 %1644
  %v1646 = vsel %vm1625, %v1588, 0.0
  %v1647 = vadd.f32 %v1587, %v1646
  %1648 = vadd.xlane.f32.xlu0 %v1647
  %v1649 = vpop.xlane.xlu0 %1648
  %v1650 = vsel %vm1625, %v1590, 0.0
  %v1651 = vadd.f32 %v1589, %v1650
  %1652 = vadd.xlane.f32.xlu0 %v1651
  %v1653 = vpop.xlane.xlu0 %1652
  %v1654 = vsel %vm1625, %v1592, 0.0
  %v1655 = vadd.f32 %v1591, %v1654
  %1656 = vadd.xlane.f32.xlu0 %v1655
  %v1657 = vpop.xlane.xlu0 %1656
  %v1658 = vsel %vm1625, %v1594, 0.0
  %v1659 = vadd.f32 %v1593, %v1658
  %1660 = vadd.xlane.f32.xlu0 %v1659
  %v1661 = vpop.xlane.xlu0 %1660
  %v1662 = vsel %vm1625, %v1596, 0.0
  %v1663 = vadd.f32 %v1595, %v1662
  %1664 = vadd.xlane.f32.xlu0 %v1663
  %v1665 = vpop.xlane.xlu0 %1664
  %v1666 = vsel %vm1625, %v1598, 0.0
  %v1667 = vadd.f32 %v1597, %v1666
  %1668 = vadd.xlane.f32.xlu0 %v1667
  %v1669 = vpop.xlane.xlu0 %1668
  %v1670 = vsel %vm1625, %v1600, 0.0
  %v1671 = vadd.f32 %v1599, %v1670
  %1672 = vadd.xlane.f32.xlu0 %v1671
  %v1673 = vpop.xlane.xlu0 %1672
  %v1674 = vsel %vm1625, %v1602, 0.0
  %v1675 = vadd.f32 %v1601, %v1674
  %1676 = vadd.xlane.f32.xlu0 %v1675
  %v1677 = vpop.xlane.xlu0 %1676
  %v1678 = vsel %vm1625, %v1604, 0.0
  %v1679 = vadd.f32 %v1603, %v1678
  %1680 = vadd.xlane.f32.xlu0 %v1679
  %v1681 = vpop.xlane.xlu0 %1680
  %v1682 = vsel %vm1625, %v1606, 0.0
  %v1683 = vadd.f32 %v1605, %v1682
  %1684 = vadd.xlane.f32.xlu0 %v1683
  %v1685 = vpop.xlane.xlu0 %1684
  %v1686 = vsel %vm1625, %v1608, 0.0
  %v1687 = vadd.f32 %v1607, %v1686
  %1688 = vadd.xlane.f32.xlu0 %v1687
  %v1689 = vpop.xlane.xlu0 %1688
  %v1690 = vsel %vm1625, %v1610, 0.0
  %v1691 = vadd.f32 %v1609, %v1690
  %1692 = vadd.xlane.f32.xlu0 %v1691
  %v1693 = vpop.xlane.xlu0 %1692
  %v1694 = vsel %vm1625, %v1612, 0.0
  %v1695 = vadd.f32 %v1611, %v1694
  %1696 = vadd.xlane.f32.xlu0 %v1695
  %v1697 = vpop.xlane.xlu0 %1696
  %v1698 = vsel %vm1625, %v1614, 0.0
  %v1699 = vadd.f32 %v1613, %v1698
  %1700 = vadd.xlane.f32.xlu0 %v1699
  %v1701 = vpop.xlane.xlu0 %1700
  %v1702 = vsel %vm1625, %v1616, 0.0
  %v1703 = vadd.f32 %v1615, %v1702
  %1704 = vadd.xlane.f32.xlu0 %v1703
  %v1705 = vpop.xlane.xlu0 %1704
  %v1706 = vsel %vm1625, %v1618, 0.0
  %v1707 = vadd.f32 %v1617, %v1706
  %1708 = vadd.xlane.f32.xlu0 %v1707
  %v1709 = vpop.xlane.xlu0 %1708
  %v1710 = vsel %vm1625, %v1620, 0.0
  %v1711 = vadd.f32 %v1619, %v1710
  %1712 = vadd.xlane.f32.xlu0 %v1711
  %v1713 = vpop.xlane.xlu0 %1712
  %v1714 = vsel %vm1625, %v1622, 0.0
  %v1715 = vadd.f32 %v1621, %v1714
  %1716 = vadd.xlane.f32.xlu0 %v1715
  %v1717 = vpop.xlane.xlu0 %1716
  %v1718 = vsel %vm1625, %v1624, 0.0
  %v1719 = vadd.f32 %v1623, %v1718
  %1720 = vadd.xlane.f32.xlu0 %v1719
  %v1721 = vpop.xlane.xlu0 %1720
  %v1722 = vld [vmem:[#allocation2] sm:$0x1]
  %v1724 = vlaneseq
  %v1725 = vshrl.u32 %v1724, 7
  %v1726 = vsub.s32 0, %v1725
  %v1727 = vrot.slane %v1722, %v1726
  %1728 = vset.pattern.permute.xlu0 0
  %1729 = vperm.xlu0 %1728, %v1727
  %v1730 = vpop.permute.xlu0 %1729
  %v1732 = vadd.f32 %v1629, %v1730
  %v1733 = vadd.f32 %v1633, %v1730
  %v1734 = vadd.f32 %v1637, %v1730
  %v1735 = vadd.f32 %v1641, %v1730
  %v1736 = vadd.f32 %v1645, %v1730
  %v1737 = vadd.f32 %v1649, %v1730
  %v1738 = vadd.f32 %v1653, %v1730
  %v1739 = vadd.f32 %v1657, %v1730
  %v1740 = vadd.f32 %v1661, %v1730
  %v1741 = vadd.f32 %v1665, %v1730
  %v1742 = vadd.f32 %v1669, %v1730
  %v1743 = vadd.f32 %v1673, %v1730
  %v1744 = vadd.f32 %v1677, %v1730
  %v1745 = vadd.f32 %v1681, %v1730
  %v1746 = vadd.f32 %v1685, %v1730
  %v1747 = vadd.f32 %v1689, %v1730
  %v1748 = vadd.f32 %v1693, %v1730
  %v1749 = vadd.f32 %v1697, %v1730
  %v1750 = vadd.f32 %v1701, %v1730
  %v1751 = vadd.f32 %v1705, %v1730
  %v1752 = vadd.f32 %v1709, %v1730
  %v1753 = vadd.f32 %v1713, %v1730
  %v1754 = vadd.f32 %v1717, %v1730
  %v1755 = vadd.f32 %v1721, %v1730
  %v1756 = vlaneseq
  %v1757 = vand.u32 %v1756, 127
  %vm1758 = vcmp.lt.s32.totalorder %v1757, 30
  %v1783 = vlaneseq
  %v1784 = vshrl.u32 %v1783, 7
  %v1785 = vsub.s32 %v1757, %v1784
  %v1786 = vrot.slane %v1732, %v1785
  %v1787 = vadd.s32 %v1757, 4294967288
  %v1788 = vlaneseq
  %v1789 = vshrl.u32 %v1788, 7
  %v1790 = vsub.s32 %v1787, %v1789
  %v1791 = vrot.slane %v1733, %v1790
  %vm1792 = vcmask 130112
  %v1793 = vsel %vm1792, %v1791, %v1786
  %v1794 = vadd.s32 %v1757, 4294967280
  %v1795 = vlaneseq
  %v1796 = vshrl.u32 %v1795, 7
  %v1797 = vsub.s32 %v1794, %v1796
  %v1798 = vrot.slane %v1734, %v1797
  %vm1799 = vcmask 195712
  %v1800 = vsel %vm1799, %v1798, %v1793
  %v1801 = vadd.s32 %v1757, 4294967272
  %v1802 = vlaneseq
  %v1803 = vshrl.u32 %v1802, 7
  %v1804 = vsub.s32 %v1801, %v1803
  %v1805 = vrot.slane %v1735, %v1804
  %vm1806 = vcmask 261312
  %v1807 = vsel %vm1806, %v1805, %v1800
  %v1808 = vlaneseq
  %v1809 = vshrl.u32 %v1808, 7
  %v1810 = vsub.s32 %v1757, %v1809
  %v1811 = vrot.slane %v1736, %v1810
  %v1812 = vlaneseq
  %v1813 = vshrl.u32 %v1812, 7
  %v1814 = vsub.s32 %v1787, %v1813
  %v1815 = vrot.slane %v1737, %v1814
  %v1816 = vsel %vm1792, %v1815, %v1811
  %v1817 = vlaneseq
  %v1818 = vshrl.u32 %v1817, 7
  %v1819 = vsub.s32 %v1794, %v1818
  %v1820 = vrot.slane %v1738, %v1819
  %v1821 = vsel %vm1799, %v1820, %v1816
  %v1822 = vlaneseq
  %v1823 = vshrl.u32 %v1822, 7
  %v1824 = vsub.s32 %v1801, %v1823
  %v1825 = vrot.slane %v1739, %v1824
  %v1826 = vsel %vm1806, %v1825, %v1821
  %v1827 = vlaneseq
  %v1828 = vshrl.u32 %v1827, 7
  %v1829 = vsub.s32 %v1757, %v1828
  %v1830 = vrot.slane %v1740, %v1829
  %v1831 = vlaneseq
  %v1832 = vshrl.u32 %v1831, 7
  %v1833 = vsub.s32 %v1787, %v1832
  %v1834 = vrot.slane %v1741, %v1833
  %v1835 = vsel %vm1792, %v1834, %v1830
  %v1836 = vlaneseq
  %v1837 = vshrl.u32 %v1836, 7
  %v1838 = vsub.s32 %v1794, %v1837
  %v1839 = vrot.slane %v1742, %v1838
  %v1840 = vsel %vm1799, %v1839, %v1835
  %v1841 = vlaneseq
  %v1842 = vshrl.u32 %v1841, 7
  %v1843 = vsub.s32 %v1801, %v1842
  %v1844 = vrot.slane %v1743, %v1843
  %v1845 = vsel %vm1806, %v1844, %v1840
  %v1846 = vlaneseq
  %v1847 = vshrl.u32 %v1846, 7
  %v1848 = vsub.s32 %v1757, %v1847
  %v1849 = vrot.slane %v1744, %v1848
  %v1850 = vlaneseq
  %v1851 = vshrl.u32 %v1850, 7
  %v1852 = vsub.s32 %v1787, %v1851
  %v1853 = vrot.slane %v1745, %v1852
  %v1854 = vsel %vm1792, %v1853, %v1849
  %v1855 = vlaneseq
  %v1856 = vshrl.u32 %v1855, 7
  %v1857 = vsub.s32 %v1794, %v1856
  %v1858 = vrot.slane %v1746, %v1857
  %v1859 = vsel %vm1799, %v1858, %v1854
  %v1860 = vlaneseq
  %v1861 = vshrl.u32 %v1860, 7
  %v1862 = vsub.s32 %v1801, %v1861
  %v1863 = vrot.slane %v1747, %v1862
  %v1864 = vsel %vm1806, %v1863, %v1859
  %v1865 = vlaneseq
  %v1866 = vshrl.u32 %v1865, 7
  %v1867 = vsub.s32 %v1757, %v1866
  %v1868 = vrot.slane %v1748, %v1867
  %v1869 = vlaneseq
  %v1870 = vshrl.u32 %v1869, 7
  %v1871 = vsub.s32 %v1787, %v1870
  %v1872 = vrot.slane %v1749, %v1871
  %v1873 = vsel %vm1792, %v1872, %v1868
  %v1874 = vlaneseq
  %v1875 = vshrl.u32 %v1874, 7
  %v1876 = vsub.s32 %v1794, %v1875
  %v1877 = vrot.slane %v1750, %v1876
  %v1878 = vsel %vm1799, %v1877, %v1873
  %v1879 = vlaneseq
  %v1880 = vshrl.u32 %v1879, 7
  %v1881 = vsub.s32 %v1801, %v1880
  %v1882 = vrot.slane %v1751, %v1881
  %v1883 = vsel %vm1806, %v1882, %v1878
  %v1884 = vlaneseq
  %v1885 = vshrl.u32 %v1884, 7
  %v1886 = vsub.s32 %v1757, %v1885
  %v1887 = vrot.slane %v1752, %v1886
  %v1888 = vlaneseq
  %v1889 = vshrl.u32 %v1888, 7
  %v1890 = vsub.s32 %v1787, %v1889
  %v1891 = vrot.slane %v1753, %v1890
  %v1892 = vsel %vm1792, %v1891, %v1887
  %v1893 = vlaneseq
  %v1894 = vshrl.u32 %v1893, 7
  %v1895 = vsub.s32 %v1794, %v1894
  %v1896 = vrot.slane %v1754, %v1895
  %v1897 = vsel %vm1799, %v1896, %v1892
  %v1898 = vlaneseq
  %v1899 = vshrl.u32 %v1898, 7
  %v1900 = vsub.s32 %v1801, %v1899
  %v1901 = vrot.slane %v1755, %v1900
  %v1902 = vsel %vm1806, %v1901, %v1897
  %vm1903 = vcmask 1041409
  %v1904 = vsel %vm1903, %v1826, %v1807
  %vm1905 = vcmask 1042434
  %v1906 = vsel %vm1905, %v1845, %v1904
  %vm1907 = vcmask 1043459
  %v1908 = vsel %vm1907, %v1864, %v1906
  %vm1909 = vcmask 1044484
  %v1910 = vsel %vm1909, %v1883, %v1908
  %vm1911 = vcmask 1045509
  %v1912 = vsel %vm1911, %v1902, %v1910
  %v1914 = vsel %vm1758, %v1912, -1e+09
  %vm1915 = vcmask 259072
  %v1916 = vsel %vm1915, %v1914, -inf
  %1917 = vmax.xlane.f32.xlu0 %v1916
  %v1918 = vpop.xlane.xlu0 %1917
  %v1919 = vsub.f32 %v1914, %v1918
  %v1920 = vmul.f32 %v1919, 1.442695
  %v1921 = vpow.pop %v1920
  %v1922 = vsel %vm1915, %v1921, 0.0
  %1923 = vadd.xlane.f32.xlu0 %v1922
  %v1924 = vpop.xlane.xlu0 %1923
  %v1925 = vrcp.pop %v1924
  %v1926 = vmul.f32 %v1921, %v1925
  %v1928 = vcombine.high %v1926, %v1926
  %v1930 = vunpack.c.l.s4 1966171168
  %v1931 = vunpack.c.0.s8 %v1930
  %v1932 = vlaneseq
  %v1933 = vshrl.u32 %v1932, 7
  %v1934 = vsub.s32 %v1931, %v1933
  %v1935 = vrot.slane %v1926, %v1934
  %v1937 = vunpack.c.l.s4 1966171168
  %v1938 = vunpack.c.0.s8 %v1937
  %v1939 = vlaneseq
  %v1940 = vshrl.u32 %v1939, 7
  %v1941 = vsub.s32 %v1938, %v1940
  %v1942 = vrot.slane %v1928, %v1941
  %v1943 = vcombine.high %v1935, %v1935
  %v1944 = vcombine.high %v1942, %v1942
  %v1946 = vunpack.c.l.s4 1966171168
  %v1947 = vunpack.c.0.s8 %v1946
  %v1948 = vlaneseq
  %v1949 = vshrl.u32 %v1948, 7
  %v1950 = vsub.s32 %v1947, %v1949
  %v1951 = vrot.slane %v1935, %v1950
  %v1953 = vunpack.c.l.s4 1966171168
  %v1954 = vunpack.c.0.s8 %v1953
  %v1955 = vlaneseq
  %v1956 = vshrl.u32 %v1955, 7
  %v1957 = vsub.s32 %v1954, %v1956
  %v1958 = vrot.slane %v1942, %v1957
  %v1960 = vunpack.c.l.s4 1966171168
  %v1961 = vunpack.c.0.s8 %v1960
  %v1962 = vlaneseq
  %v1963 = vshrl.u32 %v1962, 7
  %v1964 = vsub.s32 %v1961, %v1963
  %v1965 = vrot.slane %v1943, %v1964
  %v1967 = vunpack.c.l.s4 1966171168
  %v1968 = vunpack.c.0.s8 %v1967
  %v1969 = vlaneseq
  %v1970 = vshrl.u32 %v1969, 7
  %v1971 = vsub.s32 %v1968, %v1970
  %v1972 = vrot.slane %v1944, %v1971
  %v1973 = vcombine.high %v1951, %v1951
  %v1974 = vcombine.high %v1965, %v1965
  %vm1975 = vcmask 261120
  %v1976 = vsel %vm1975, %v1951, 0
  %1978 = vmatprep.subr.mxu0 %v545
  %1979 = vmatpush1.msra.mxu0 %v543
  %1980 = vmatprep.subr.mxu0 %v549
  %1981 = vmatpush1.msra.mxu0 %v547
  %1982 = vmatprep.subr.mxu0 %v555
  %1983 = vmatpush1.msra.mxu0 %v553
  %1984 = vmatprep.subr.mxu0 %v559
  %1985 = vmatpush1.msra.mxu0 %v557
  %1986 = vmatprep.subr.mxu0 0.0
  %1987 = vmatpush1.msra.mxu0 0.0
  %1988 = vmatprep.subr.mxu0 0.0
  %1989 = vmatpush1.msra.mxu0 0.0
  %1990 = vmatprep.subr.mxu0 0.0
  %1991 = vmatpush1.msra.mxu0 0.0
  %1992 = vmatprep.subr.mxu0 0.0
  %1993 = vmatpush1.msra.mxu0 0.0
  %1994 = vmatprep.subr.mxu0 0.0
  %1995 = vmatpush1.msra.mxu0 0.0
  %1996 = vmatprep.subr.mxu0 0.0
  %1997 = vmatpush1.msra.mxu0 0.0
  %1998 = vmatprep.subr.mxu0 0.0
  %1999 = vmatpush1.msra.mxu0 0.0
  %2000 = vmatprep.subr.mxu0 0.0
  %2001 = vmatpush1.msra.mxu0 0.0
  %2002 = vmatprep.subr.mxu0 0.0
  %2003 = vmatpush1.msra.mxu0 0.0
  %2004 = vmatprep.subr.mxu0 0.0
  %2005 = vmatpush1.msra.mxu0 0.0
  %2006 = vmatprep.subr.mxu0 0.0
  %2007 = vmatpush1.msra.mxu0 0.0
  %2008 = vmatprep.subr.mxu0 0.0
  %2009 = vmatpush1.msra.mxu0 0.0
  %2010 = vmatprep.subr.mxu0 0.0
  %2011 = vmatpush1.msra.mxu0 0.0
  %2012 = vmatprep.subr.mxu0 0.0
  %2013 = vmatpush1.msra.mxu0 0.0
  %2014 = vmatprep.subr.mxu0 0.0
  %2015 = vmatpush1.msra.mxu0 0.0
  %2016 = vmatprep.subr.mxu0 0.0
  %2017 = vmatpush1.msra.mxu0 0.0
  %2018 = vmatprep.subr.mxu0 0.0
  %2019 = vmatpush1.msra.mxu0 0.0
  %2020 = vmatprep.subr.mxu0 0.0
  %2021 = vmatpush1.msra.mxu0 0.0
  %2022 = vmatprep.subr.mxu0 0.0
  %2023 = vmatpush1.msra.mxu0 0.0
  %2024 = vmatprep.subr.mxu0 0.0
  %2025 = vmatpush1.msra.mxu0 0.0
  %2026 = vmatprep.subr.mxu0 0.0
  %2027 = vmatpush1.msra.mxu0 0.0
  %2028 = vmatprep.subr.mxu0 0.0
  %2029 = vmatpush1.msra.mxu0 0.0
  %2030 = vmatprep.subr.mxu0 0.0
  %2031 = vmatpush1.msra.mxu0 0.0
  %2032 = vmatprep.subr.mxu0 0.0
  %2033 = vmatpush1.msra.mxu0 0.0
  %2034 = vmatprep.subr.mxu0 0.0
  %2035 = vmatpush1.msra.mxu0 0.0
  %2036 = vmatprep.subr.mxu0 0.0
  %2037 = vmatpush1.msra.mxu0 0.0
  %2038 = vmatprep.subr.mxu0 0.0
  %2039 = vmatpush1.msra.mxu0 0.0
  %2040 = vmatprep.subr.mxu0 0.0
  %2041 = vmatpush1.msra.mxu0 0.0
  %2042 = vmatprep.mubr.f32.mxu0 0.0
  %2043 = vmatmul.mubr.f32.gmra.mrb[0].mxu0 %v1976
  %v2044 = vpop.f32.mrb[0].mxu0
  %v2045 = vadd.f32 0.0, %v2044
  %v2046 = vpop.f32.mrb[0].mxu0
  %v2047 = vadd.f32 0.0, %v2046
  %2048 = vdwg.mxu0
  %2049 = vmatprep.subr.mxu0 %v698
  %2050 = vmatpush1.msra.mxu0 %v696
  %2051 = vmatprep.subr.mxu0 %v702
  %2052 = vmatpush1.msra.mxu0 %v700
  %2053 = vmatprep.subr.mxu0 %v708
  %2054 = vmatpush1.msra.mxu0 %v706
  %2055 = vmatprep.subr.mxu0 %v712
  %2056 = vmatpush1.msra.mxu0 %v710
  %2057 = vmatprep.subr.mxu0 0.0
  %2058 = vmatpush1.msra.mxu0 0.0
  %2059 = vmatprep.subr.mxu0 0.0
  %2060 = vmatpush1.msra.mxu0 0.0
  %2061 = vmatprep.subr.mxu0 0.0
  %2062 = vmatpush1.msra.mxu0 0.0
  %2063 = vmatprep.subr.mxu0 0.0
  %2064 = vmatpush1.msra.mxu0 0.0
  %2065 = vmatprep.subr.mxu0 0.0
  %2066 = vmatpush1.msra.mxu0 0.0
  %2067 = vmatprep.subr.mxu0 0.0
  %2068 = vmatpush1.msra.mxu0 0.0
  %2069 = vmatprep.subr.mxu0 0.0
  %2070 = vmatpush1.msra.mxu0 0.0
  %2071 = vmatprep.subr.mxu0 0.0
  %2072 = vmatpush1.msra.mxu0 0.0
  %2073 = vmatprep.subr.mxu0 0.0
  %2074 = vmatpush1.msra.mxu0 0.0
  %2075 = vmatprep.subr.mxu0 0.0
  %2076 = vmatpush1.msra.mxu0 0.0
  %2077 = vmatprep.subr.mxu0 0.0
  %2078 = vmatpush1.msra.mxu0 0.0
  %2079 = vmatprep.subr.mxu0 0.0
  %2080 = vmatpush1.msra.mxu0 0.0
  %2081 = vmatprep.subr.mxu0 0.0
  %2082 = vmatpush1.msra.mxu0 0.0
  %2083 = vmatprep.subr.mxu0 0.0
  %2084 = vmatpush1.msra.mxu0 0.0
  %2085 = vmatprep.subr.mxu0 0.0
  %2086 = vmatpush1.msra.mxu0 0.0
  %2087 = vmatprep.subr.mxu0 0.0
  %2088 = vmatpush1.msra.mxu0 0.0
  %2089 = vmatprep.subr.mxu0 0.0
  %2090 = vmatpush1.msra.mxu0 0.0
  %2091 = vmatprep.subr.mxu0 0.0
  %2092 = vmatpush1.msra.mxu0 0.0
  %2093 = vmatprep.subr.mxu0 0.0
  %2094 = vmatpush1.msra.mxu0 0.0
  %2095 = vmatprep.subr.mxu0 0.0
  %2096 = vmatpush1.msra.mxu0 0.0
  %2097 = vmatprep.subr.mxu0 0.0
  %2098 = vmatpush1.msra.mxu0 0.0
  %2099 = vmatprep.subr.mxu0 0.0
  %2100 = vmatpush1.msra.mxu0 0.0
  %2101 = vmatprep.subr.mxu0 0.0
  %2102 = vmatpush1.msra.mxu0 0.0
  %2103 = vmatprep.subr.mxu0 0.0
  %2104 = vmatpush1.msra.mxu0 0.0
  %2105 = vmatprep.subr.mxu0 0.0
  %2106 = vmatpush1.msra.mxu0 0.0
  %2107 = vmatprep.subr.mxu0 0.0
  %2108 = vmatpush1.msra.mxu0 0.0
  %2109 = vmatprep.subr.mxu0 0.0
  %2110 = vmatpush1.msra.mxu0 0.0
  %2111 = vmatprep.subr.mxu0 0.0
  %2112 = vmatpush1.msra.mxu0 0.0
  %2113 = vmatprep.mubr.f32.mxu0 0.0
  %2114 = vmatmul.mubr.f32.gmra.mrb[0].mxu0 %v1976
  %v2115 = vpop.f32.mrb[0].mxu0
  %v2116 = vadd.f32 0.0, %v2115
  %v2117 = vpop.f32.mrb[0].mxu0
  %v2118 = vadd.f32 0.0, %v2117
  %2119 = vdwg.mxu0
  %v2120 = vsel %vm1975, %v1965, 0
  %2122 = vmatprep.subr.mxu0 %v565
  %2123 = vmatpush1.msra.mxu0 %v563
  %2124 = vmatprep.subr.mxu0 %v569
  %2125 = vmatpush1.msra.mxu0 %v567
  %2126 = vmatprep.subr.mxu0 %v575
  %2127 = vmatpush1.msra.mxu0 %v573
  %2128 = vmatprep.subr.mxu0 %v579
  %2129 = vmatpush1.msra.mxu0 %v577
  %2130 = vmatprep.subr.mxu0 0.0
  %2131 = vmatpush1.msra.mxu0 0.0
  %2132 = vmatprep.subr.mxu0 0.0
  %2133 = vmatpush1.msra.mxu0 0.0
  %2134 = vmatprep.subr.mxu0 0.0
  %2135 = vmatpush1.msra.mxu0 0.0
  %2136 = vmatprep.subr.mxu0 0.0
  %2137 = vmatpush1.msra.mxu0 0.0
  %2138 = vmatprep.subr.mxu0 0.0
  %2139 = vmatpush1.msra.mxu0 0.0
  %2140 = vmatprep.subr.mxu0 0.0
  %2141 = vmatpush1.msra.mxu0 0.0
  %2142 = vmatprep.subr.mxu0 0.0
  %2143 = vmatpush1.msra.mxu0 0.0
  %2144 = vmatprep.subr.mxu0 0.0
  %2145 = vmatpush1.msra.mxu0 0.0
  %2146 = vmatprep.subr.mxu0 0.0
  %2147 = vmatpush1.msra.mxu0 0.0
  %2148 = vmatprep.subr.mxu0 0.0
  %2149 = vmatpush1.msra.mxu0 0.0
  %2150 = vmatprep.subr.mxu0 0.0
  %2151 = vmatpush1.msra.mxu0 0.0
  %2152 = vmatprep.subr.mxu0 0.0
  %2153 = vmatpush1.msra.mxu0 0.0
  %2154 = vmatprep.subr.mxu0 0.0
  %2155 = vmatpush1.msra.mxu0 0.0
  %2156 = vmatprep.subr.mxu0 0.0
  %2157 = vmatpush1.msra.mxu0 0.0
  %2158 = vmatprep.subr.mxu0 0.0
  %2159 = vmatpush1.msra.mxu0 0.0
  %2160 = vmatprep.subr.mxu0 0.0
  %2161 = vmatpush1.msra.mxu0 0.0
  %2162 = vmatprep.subr.mxu0 0.0
  %2163 = vmatpush1.msra.mxu0 0.0
  %2164 = vmatprep.subr.mxu0 0.0
  %2165 = vmatpush1.msra.mxu0 0.0
  %2166 = vmatprep.subr.mxu0 0.0
  %2167 = vmatpush1.msra.mxu0 0.0
  %2168 = vmatprep.subr.mxu0 0.0
  %2169 = vmatpush1.msra.mxu0 0.0
  %2170 = vmatprep.subr.mxu0 0.0
  %2171 = vmatpush1.msra.mxu0 0.0
  %2172 = vmatprep.subr.mxu0 0.0
  %2173 = vmatpush1.msra.mxu0 0.0
  %2174 = vmatprep.subr.mxu0 0.0
  %2175 = vmatpush1.msra.mxu0 0.0
  %2176 = vmatprep.subr.mxu0 0.0
  %2177 = vmatpush1.msra.mxu0 0.0
  %2178 = vmatprep.subr.mxu0 0.0
  %2179 = vmatpush1.msra.mxu0 0.0
  %2180 = vmatprep.subr.mxu0 0.0
  %2181 = vmatpush1.msra.mxu0 0.0
  %2182 = vmatprep.subr.mxu0 0.0
  %2183 = vmatpush1.msra.mxu0 0.0
  %2184 = vmatprep.subr.mxu0 0.0
  %2185 = vmatpush1.msra.mxu0 0.0
  %2186 = vmatprep.mubr.f32.mxu0 0.0
  %2187 = vmatmul.mubr.f32.gmra.mrb[0].mxu0 %v2120
  %v2188 = vpop.f32.mrb[0].mxu0
  %v2189 = vadd.f32 0.0, %v2188
  %v2190 = vpop.f32.mrb[0].mxu0
  %v2191 = vadd.f32 0.0, %v2190
  %2192 = vdwg.mxu0
  %2193 = vmatprep.subr.mxu0 %v718
  %2194 = vmatpush1.msra.mxu0 %v716
  %2195 = vmatprep.subr.mxu0 %v722
  %2196 = vmatpush1.msra.mxu0 %v720
  %2197 = vmatprep.subr.mxu0 %v728
  %2198 = vmatpush1.msra.mxu0 %v726
  %2199 = vmatprep.subr.mxu0 %v732
  %2200 = vmatpush1.msra.mxu0 %v730
  %2201 = vmatprep.subr.mxu0 0.0
  %2202 = vmatpush1.msra.mxu0 0.0
  %2203 = vmatprep.subr.mxu0 0.0
  %2204 = vmatpush1.msra.mxu0 0.0
  %2205 = vmatprep.subr.mxu0 0.0
  %2206 = vmatpush1.msra.mxu0 0.0
  %2207 = vmatprep.subr.mxu0 0.0
  %2208 = vmatpush1.msra.mxu0 0.0
  %2209 = vmatprep.subr.mxu0 0.0
  %2210 = vmatpush1.msra.mxu0 0.0
  %2211 = vmatprep.subr.mxu0 0.0
  %2212 = vmatpush1.msra.mxu0 0.0
  %2213 = vmatprep.subr.mxu0 0.0
  %2214 = vmatpush1.msra.mxu0 0.0
  %2215 = vmatprep.subr.mxu0 0.0
  %2216 = vmatpush1.msra.mxu0 0.0
  %2217 = vmatprep.subr.mxu0 0.0
  %2218 = vmatpush1.msra.mxu0 0.0
  %2219 = vmatprep.subr.mxu0 0.0
  %2220 = vmatpush1.msra.mxu0 0.0
  %2221 = vmatprep.subr.mxu0 0.0
  %2222 = vmatpush1.msra.mxu0 0.0
  %2223 = vmatprep.subr.mxu0 0.0
  %2224 = vmatpush1.msra.mxu0 0.0
  %2225 = vmatprep.subr.mxu0 0.0
  %2226 = vmatpush1.msra.mxu0 0.0
  %2227 = vmatprep.subr.mxu0 0.0
  %2228 = vmatpush1.msra.mxu0 0.0
  %2229 = vmatprep.subr.mxu0 0.0
  %2230 = vmatpush1.msra.mxu0 0.0
  %2231 = vmatprep.subr.mxu0 0.0
  %2232 = vmatpush1.msra.mxu0 0.0
  %2233 = vmatprep.subr.mxu0 0.0
  %2234 = vmatpush1.msra.mxu0 0.0
  %2235 = vmatprep.subr.mxu0 0.0
  %2236 = vmatpush1.msra.mxu0 0.0
  %2237 = vmatprep.subr.mxu0 0.0
  %2238 = vmatpush1.msra.mxu0 0.0
  %2239 = vmatprep.subr.mxu0 0.0
  %2240 = vmatpush1.msra.mxu0 0.0
  %2241 = vmatprep.subr.mxu0 0.0
  %2242 = vmatpush1.msra.mxu0 0.0
  %2243 = vmatprep.subr.mxu0 0.0
  %2244 = vmatpush1.msra.mxu0 0.0
  %2245 = vmatprep.subr.mxu0 0.0
  %2246 = vmatpush1.msra.mxu0 0.0
  %2247 = vmatprep.subr.mxu0 0.0
  %2248 = vmatpush1.msra.mxu0 0.0
  %2249 = vmatprep.subr.mxu0 0.0
  %2250 = vmatpush1.msra.mxu0 0.0
  %2251 = vmatprep.subr.mxu0 0.0
  %2252 = vmatpush1.msra.mxu0 0.0
  %2253 = vmatprep.subr.mxu0 0.0
  %2254 = vmatpush1.msra.mxu0 0.0
  %2255 = vmatprep.subr.mxu0 0.0
  %2256 = vmatpush1.msra.mxu0 0.0
  %2257 = vmatprep.mubr.f32.mxu0 0.0
  %2258 = vmatmul.mubr.f32.gmra.mrb[0].mxu0 %v2120
  %v2259 = vpop.f32.mrb[0].mxu0
  %v2260 = vadd.f32 0.0, %v2259
  %v2261 = vpop.f32.mrb[0].mxu0
  %v2262 = vadd.f32 0.0, %v2261
  %2263 = vdwg.mxu0
  %v2264 = vsel %vm1975, %v1973, 0
  %2266 = vmatprep.subr.mxu0 %v585
  %2267 = vmatpush1.msra.mxu0 %v583
  %2268 = vmatprep.subr.mxu0 %v589
  %2269 = vmatpush1.msra.mxu0 %v587
  %2270 = vmatprep.subr.mxu0 %v595
  %2271 = vmatpush1.msra.mxu0 %v593
  %2272 = vmatprep.subr.mxu0 %v599
  %2273 = vmatpush1.msra.mxu0 %v597
  %2274 = vmatprep.subr.mxu0 0.0
  %2275 = vmatpush1.msra.mxu0 0.0
  %2276 = vmatprep.subr.mxu0 0.0
  %2277 = vmatpush1.msra.mxu0 0.0
  %2278 = vmatprep.subr.mxu0 0.0
  %2279 = vmatpush1.msra.mxu0 0.0
  %2280 = vmatprep.subr.mxu0 0.0
  %2281 = vmatpush1.msra.mxu0 0.0
  %2282 = vmatprep.subr.mxu0 0.0
  %2283 = vmatpush1.msra.mxu0 0.0
  %2284 = vmatprep.subr.mxu0 0.0
  %2285 = vmatpush1.msra.mxu0 0.0
  %2286 = vmatprep.subr.mxu0 0.0
  %2287 = vmatpush1.msra.mxu0 0.0
  %2288 = vmatprep.subr.mxu0 0.0
  %2289 = vmatpush1.msra.mxu0 0.0
  %2290 = vmatprep.subr.mxu0 0.0
  %2291 = vmatpush1.msra.mxu0 0.0
  %2292 = vmatprep.subr.mxu0 0.0
  %2293 = vmatpush1.msra.mxu0 0.0
  %2294 = vmatprep.subr.mxu0 0.0
  %2295 = vmatpush1.msra.mxu0 0.0
  %2296 = vmatprep.subr.mxu0 0.0
  %2297 = vmatpush1.msra.mxu0 0.0
  %2298 = vmatprep.subr.mxu0 0.0
  %2299 = vmatpush1.msra.mxu0 0.0
  %2300 = vmatprep.subr.mxu0 0.0
  %2301 = vmatpush1.msra.mxu0 0.0
  %2302 = vmatprep.subr.mxu0 0.0
  %2303 = vmatpush1.msra.mxu0 0.0
  %2304 = vmatprep.subr.mxu0 0.0
  %2305 = vmatpush1.msra.mxu0 0.0
  %2306 = vmatprep.subr.mxu0 0.0
  %2307 = vmatpush1.msra.mxu0 0.0
  %2308 = vmatprep.subr.mxu0 0.0
  %2309 = vmatpush1.msra.mxu0 0.0
  %2310 = vmatprep.subr.mxu0 0.0
  %2311 = vmatpush1.msra.mxu0 0.0
  %2312 = vmatprep.subr.mxu0 0.0
  %2313 = vmatpush1.msra.mxu0 0.0
  %2314 = vmatprep.subr.mxu0 0.0
  %2315 = vmatpush1.msra.mxu0 0.0
  %2316 = vmatprep.subr.mxu0 0.0
  %2317 = vmatpush1.msra.mxu0 0.0
  %2318 = vmatprep.subr.mxu0 0.0
  %2319 = vmatpush1.msra.mxu0 0.0
  %2320 = vmatprep.subr.mxu0 0.0
  %2321 = vmatpush1.msra.mxu0 0.0
  %2322 = vmatprep.subr.mxu0 0.0
  %2323 = vmatpush1.msra.mxu0 0.0
  %2324 = vmatprep.subr.mxu0 0.0
  %2325 = vmatpush1.msra.mxu0 0.0
  %2326 = vmatprep.subr.mxu0 0.0
  %2327 = vmatpush1.msra.mxu0 0.0
  %2328 = vmatprep.subr.mxu0 0.0
  %2329 = vmatpush1.msra.mxu0 0.0
  %2330 = vmatprep.mubr.f32.mxu0 0.0
  %2331 = vmatmul.mubr.f32.gmra.mrb[0].mxu0 %v2264
  %v2332 = vpop.f32.mrb[0].mxu0
  %v2333 = vadd.f32 0.0, %v2332
  %v2334 = vpop.f32.mrb[0].mxu0
  %v2335 = vadd.f32 0.0, %v2334
  %2336 = vdwg.mxu0
  %2337 = vmatprep.subr.mxu0 %v738
  %2338 = vmatpush1.msra.mxu0 %v736
  %2339 = vmatprep.subr.mxu0 %v742
  %2340 = vmatpush1.msra.mxu0 %v740
  %2341 = vmatprep.subr.mxu0 %v748
  %2342 = vmatpush1.msra.mxu0 %v746
  %2343 = vmatprep.subr.mxu0 %v752
  %2344 = vmatpush1.msra.mxu0 %v750
  %2345 = vmatprep.subr.mxu0 0.0
  %2346 = vmatpush1.msra.mxu0 0.0
  %2347 = vmatprep.subr.mxu0 0.0
  %2348 = vmatpush1.msra.mxu0 0.0
  %2349 = vmatprep.subr.mxu0 0.0
  %2350 = vmatpush1.msra.mxu0 0.0
  %2351 = vmatprep.subr.mxu0 0.0
  %2352 = vmatpush1.msra.mxu0 0.0
  %2353 = vmatprep.subr.mxu0 0.0
  %2354 = vmatpush1.msra.mxu0 0.0
  %2355 = vmatprep.subr.mxu0 0.0
  %2356 = vmatpush1.msra.mxu0 0.0
  %2357 = vmatprep.subr.mxu0 0.0
  %2358 = vmatpush1.msra.mxu0 0.0
  %2359 = vmatprep.subr.mxu0 0.0
  %2360 = vmatpush1.msra.mxu0 0.0
  %2361 = vmatprep.subr.mxu0 0.0
  %2362 = vmatpush1.msra.mxu0 0.0
  %2363 = vmatprep.subr.mxu0 0.0
  %2364 = vmatpush1.msra.mxu0 0.0
  %2365 = vmatprep.subr.mxu0 0.0
  %2366 = vmatpush1.msra.mxu0 0.0
  %2367 = vmatprep.subr.mxu0 0.0
  %2368 = vmatpush1.msra.mxu0 0.0
  %2369 = vmatprep.subr.mxu0 0.0
  %2370 = vmatpush1.msra.mxu0 0.0
  %2371 = vmatprep.subr.mxu0 0.0
  %2372 = vmatpush1.msra.mxu0 0.0
  %2373 = vmatprep.subr.mxu0 0.0
  %2374 = vmatpush1.msra.mxu0 0.0
  %2375 = vmatprep.subr.mxu0 0.0
  %2376 = vmatpush1.msra.mxu0 0.0
  %2377 = vmatprep.subr.mxu0 0.0
  %2378 = vmatpush1.msra.mxu0 0.0
  %2379 = vmatprep.subr.mxu0 0.0
  %2380 = vmatpush1.msra.mxu0 0.0
  %2381 = vmatprep.subr.mxu0 0.0
  %2382 = vmatpush1.msra.mxu0 0.0
  %2383 = vmatprep.subr.mxu0 0.0
  %2384 = vmatpush1.msra.mxu0 0.0
  %2385 = vmatprep.subr.mxu0 0.0
  %2386 = vmatpush1.msra.mxu0 0.0
  %2387 = vmatprep.subr.mxu0 0.0
  %2388 = vmatpush1.msra.mxu0 0.0
  %2389 = vmatprep.subr.mxu0 0.0
  %2390 = vmatpush1.msra.mxu0 0.0
  %2391 = vmatprep.subr.mxu0 0.0
  %2392 = vmatpush1.msra.mxu0 0.0
  %2393 = vmatprep.subr.mxu0 0.0
  %2394 = vmatpush1.msra.mxu0 0.0
  %2395 = vmatprep.subr.mxu0 0.0
  %2396 = vmatpush1.msra.mxu0 0.0
  %2397 = vmatprep.subr.mxu0 0.0
  %2398 = vmatpush1.msra.mxu0 0.0
  %2399 = vmatprep.subr.mxu0 0.0
  %2400 = vmatpush1.msra.mxu0 0.0
  %2401 = vmatprep.mubr.f32.mxu0 0.0
  %2402 = vmatmul.mubr.f32.gmra.mrb[0].mxu0 %v2264
  %v2403 = vpop.f32.mrb[0].mxu0
  %v2404 = vadd.f32 0.0, %v2403
  %v2405 = vpop.f32.mrb[0].mxu0
  %v2406 = vadd.f32 0.0, %v2405
  %2407 = vdwg.mxu0
  %v2408 = vsel %vm1975, %v1974, 0
  %2410 = vmatprep.subr.mxu0 %v605
  %2411 = vmatpush1.msra.mxu0 %v603
  %2412 = vmatprep.subr.mxu0 %v609
  %2413 = vmatpush1.msra.mxu0 %v607
  %2414 = vmatprep.subr.mxu0 %v615
  %2415 = vmatpush1.msra.mxu0 %v613
  %2416 = vmatprep.subr.mxu0 %v619
  %2417 = vmatpush1.msra.mxu0 %v617
  %2418 = vmatprep.subr.mxu0 0.0
  %2419 = vmatpush1.msra.mxu0 0.0
  %2420 = vmatprep.subr.mxu0 0.0
  %2421 = vmatpush1.msra.mxu0 0.0
  %2422 = vmatprep.subr.mxu0 0.0
  %2423 = vmatpush1.msra.mxu0 0.0
  %2424 = vmatprep.subr.mxu0 0.0
  %2425 = vmatpush1.msra.mxu0 0.0
  %2426 = vmatprep.subr.mxu0 0.0
  %2427 = vmatpush1.msra.mxu0 0.0
  %2428 = vmatprep.subr.mxu0 0.0
  %2429 = vmatpush1.msra.mxu0 0.0
  %2430 = vmatprep.subr.mxu0 0.0
  %2431 = vmatpush1.msra.mxu0 0.0
  %2432 = vmatprep.subr.mxu0 0.0
  %2433 = vmatpush1.msra.mxu0 0.0
  %2434 = vmatprep.subr.mxu0 0.0
  %2435 = vmatpush1.msra.mxu0 0.0
  %2436 = vmatprep.subr.mxu0 0.0
  %2437 = vmatpush1.msra.mxu0 0.0
  %2438 = vmatprep.subr.mxu0 0.0
  %2439 = vmatpush1.msra.mxu0 0.0
  %2440 = vmatprep.subr.mxu0 0.0
  %2441 = vmatpush1.msra.mxu0 0.0
  %2442 = vmatprep.subr.mxu0 0.0
  %2443 = vmatpush1.msra.mxu0 0.0
  %2444 = vmatprep.subr.mxu0 0.0
  %2445 = vmatpush1.msra.mxu0 0.0
  %2446 = vmatprep.subr.mxu0 0.0
  %2447 = vmatpush1.msra.mxu0 0.0
  %2448 = vmatprep.subr.mxu0 0.0
  %2449 = vmatpush1.msra.mxu0 0.0
  %2450 = vmatprep.subr.mxu0 0.0
  %2451 = vmatpush1.msra.mxu0 0.0
  %2452 = vmatprep.subr.mxu0 0.0
  %2453 = vmatpush1.msra.mxu0 0.0
  %2454 = vmatprep.subr.mxu0 0.0
  %2455 = vmatpush1.msra.mxu0 0.0
  %2456 = vmatprep.subr.mxu0 0.0
  %2457 = vmatpush1.msra.mxu0 0.0
  %2458 = vmatprep.subr.mxu0 0.0
  %2459 = vmatpush1.msra.mxu0 0.0
  %2460 = vmatprep.subr.mxu0 0.0
  %2461 = vmatpush1.msra.mxu0 0.0
  %2462 = vmatprep.subr.mxu0 0.0
  %2463 = vmatpush1.msra.mxu0 0.0
  %2464 = vmatprep.subr.mxu0 0.0
  %2465 = vmatpush1.msra.mxu0 0.0
  %2466 = vmatprep.subr.mxu0 0.0
  %2467 = vmatpush1.msra.mxu0 0.0
  %2468 = vmatprep.subr.mxu0 0.0
  %2469 = vmatpush1.msra.mxu0 0.0
  %2470 = vmatprep.subr.mxu0 0.0
  %2471 = vmatpush1.msra.mxu0 0.0
  %2472 = vmatprep.subr.mxu0 0.0
  %2473 = vmatpush1.msra.mxu0 0.0
  %2474 = vmatprep.mubr.f32.mxu0 0.0
  %2475 = vmatmul.mubr.f32.gmra.mrb[0].mxu0 %v2408
  %v2476 = vpop.f32.mrb[0].mxu0
  %v2477 = vadd.f32 0.0, %v2476
  %v2478 = vpop.f32.mrb[0].mxu0
  %v2479 = vadd.f32 0.0, %v2478
  %2480 = vdwg.mxu0
  %2481 = vmatprep.subr.mxu0 %v758
  %2482 = vmatpush1.msra.mxu0 %v756
  %2483 = vmatprep.subr.mxu0 %v762
  %2484 = vmatpush1.msra.mxu0 %v760
  %2485 = vmatprep.subr.mxu0 %v768
  %2486 = vmatpush1.msra.mxu0 %v766
  %2487 = vmatprep.subr.mxu0 %v772
  %2488 = vmatpush1.msra.mxu0 %v770
  %2489 = vmatprep.subr.mxu0 0.0
  %2490 = vmatpush1.msra.mxu0 0.0
  %2491 = vmatprep.subr.mxu0 0.0
  %2492 = vmatpush1.msra.mxu0 0.0
  %2493 = vmatprep.subr.mxu0 0.0
  %2494 = vmatpush1.msra.mxu0 0.0
  %2495 = vmatprep.subr.mxu0 0.0
  %2496 = vmatpush1.msra.mxu0 0.0
  %2497 = vmatprep.subr.mxu0 0.0
  %2498 = vmatpush1.msra.mxu0 0.0
  %2499 = vmatprep.subr.mxu0 0.0
  %2500 = vmatpush1.msra.mxu0 0.0
  %2501 = vmatprep.subr.mxu0 0.0
  %2502 = vmatpush1.msra.mxu0 0.0
  %2503 = vmatprep.subr.mxu0 0.0
  %2504 = vmatpush1.msra.mxu0 0.0
  %2505 = vmatprep.subr.mxu0 0.0
  %2506 = vmatpush1.msra.mxu0 0.0
  %2507 = vmatprep.subr.mxu0 0.0
  %2508 = vmatpush1.msra.mxu0 0.0
  %2509 = vmatprep.subr.mxu0 0.0
  %2510 = vmatpush1.msra.mxu0 0.0
  %2511 = vmatprep.subr.mxu0 0.0
  %2512 = vmatpush1.msra.mxu0 0.0
  %2513 = vmatprep.subr.mxu0 0.0
  %2514 = vmatpush1.msra.mxu0 0.0
  %2515 = vmatprep.subr.mxu0 0.0
  %2516 = vmatpush1.msra.mxu0 0.0
  %2517 = vmatprep.subr.mxu0 0.0
  %2518 = vmatpush1.msra.mxu0 0.0
  %2519 = vmatprep.subr.mxu0 0.0
  %2520 = vmatpush1.msra.mxu0 0.0
  %2521 = vmatprep.subr.mxu0 0.0
  %2522 = vmatpush1.msra.mxu0 0.0
  %2523 = vmatprep.subr.mxu0 0.0
  %2524 = vmatpush1.msra.mxu0 0.0
  %2525 = vmatprep.subr.mxu0 0.0
  %2526 = vmatpush1.msra.mxu0 0.0
  %2527 = vmatprep.subr.mxu0 0.0
  %2528 = vmatpush1.msra.mxu0 0.0
  %2529 = vmatprep.subr.mxu0 0.0
  %2530 = vmatpush1.msra.mxu0 0.0
  %2531 = vmatprep.subr.mxu0 0.0
  %2532 = vmatpush1.msra.mxu0 0.0
  %2533 = vmatprep.subr.mxu0 0.0
  %2534 = vmatpush1.msra.mxu0 0.0
  %2535 = vmatprep.subr.mxu0 0.0
  %2536 = vmatpush1.msra.mxu0 0.0
  %2537 = vmatprep.subr.mxu0 0.0
  %2538 = vmatpush1.msra.mxu0 0.0
  %2539 = vmatprep.subr.mxu0 0.0
  %2540 = vmatpush1.msra.mxu0 0.0
  %2541 = vmatprep.subr.mxu0 0.0
  %2542 = vmatpush1.msra.mxu0 0.0
  %2543 = vmatprep.subr.mxu0 0.0
  %2544 = vmatpush1.msra.mxu0 0.0
  %2545 = vmatprep.mubr.f32.mxu0 0.0
  %2546 = vmatmul.mubr.f32.gmra.mrb[0].mxu0 %v2408
  %v2547 = vpop.f32.mrb[0].mxu0
  %v2548 = vadd.f32 0.0, %v2547
  %v2549 = vpop.f32.mrb[0].mxu0
  %v2550 = vadd.f32 0.0, %v2549
  %2551 = vdwg.mxu0
  %v2552 = vsel %vm1975, %v1958, 0
  %2554 = vmatprep.subr.mxu0 %v625
  %2555 = vmatpush1.msra.mxu0 %v623
  %2556 = vmatprep.subr.mxu0 %v629
  %2557 = vmatpush1.msra.mxu0 %v627
  %2558 = vmatprep.subr.mxu0 %v635
  %2559 = vmatpush1.msra.mxu0 %v633
  %2560 = vmatprep.subr.mxu0 %v639
  %2561 = vmatpush1.msra.mxu0 %v637
  %2562 = vmatprep.subr.mxu0 0.0
  %2563 = vmatpush1.msra.mxu0 0.0
  %2564 = vmatprep.subr.mxu0 0.0
  %2565 = vmatpush1.msra.mxu0 0.0
  %2566 = vmatprep.subr.mxu0 0.0
  %2567 = vmatpush1.msra.mxu0 0.0
  %2568 = vmatprep.subr.mxu0 0.0
  %2569 = vmatpush1.msra.mxu0 0.0
  %2570 = vmatprep.subr.mxu0 0.0
  %2571 = vmatpush1.msra.mxu0 0.0
  %2572 = vmatprep.subr.mxu0 0.0
  %2573 = vmatpush1.msra.mxu0 0.0
  %2574 = vmatprep.subr.mxu0 0.0
  %2575 = vmatpush1.msra.mxu0 0.0
  %2576 = vmatprep.subr.mxu0 0.0
  %2577 = vmatpush1.msra.mxu0 0.0
  %2578 = vmatprep.subr.mxu0 0.0
  %2579 = vmatpush1.msra.mxu0 0.0
  %2580 = vmatprep.subr.mxu0 0.0
  %2581 = vmatpush1.msra.mxu0 0.0
  %2582 = vmatprep.subr.mxu0 0.0
  %2583 = vmatpush1.msra.mxu0 0.0
  %2584 = vmatprep.subr.mxu0 0.0
  %2585 = vmatpush1.msra.mxu0 0.0
  %2586 = vmatprep.subr.mxu0 0.0
  %2587 = vmatpush1.msra.mxu0 0.0
  %2588 = vmatprep.subr.mxu0 0.0
  %2589 = vmatpush1.msra.mxu0 0.0
  %2590 = vmatprep.subr.mxu0 0.0
  %2591 = vmatpush1.msra.mxu0 0.0
  %2592 = vmatprep.subr.mxu0 0.0
  %2593 = vmatpush1.msra.mxu0 0.0
  %2594 = vmatprep.subr.mxu0 0.0
  %2595 = vmatpush1.msra.mxu0 0.0
  %2596 = vmatprep.subr.mxu0 0.0
  %2597 = vmatpush1.msra.mxu0 0.0
  %2598 = vmatprep.subr.mxu0 0.0
  %2599 = vmatpush1.msra.mxu0 0.0
  %2600 = vmatprep.subr.mxu0 0.0
  %2601 = vmatpush1.msra.mxu0 0.0
  %2602 = vmatprep.subr.mxu0 0.0
  %2603 = vmatpush1.msra.mxu0 0.0
  %2604 = vmatprep.subr.mxu0 0.0
  %2605 = vmatpush1.msra.mxu0 0.0
  %2606 = vmatprep.subr.mxu0 0.0
  %2607 = vmatpush1.msra.mxu0 0.0
  %2608 = vmatprep.subr.mxu0 0.0
  %2609 = vmatpush1.msra.mxu0 0.0
  %2610 = vmatprep.subr.mxu0 0.0
  %2611 = vmatpush1.msra.mxu0 0.0
  %2612 = vmatprep.subr.mxu0 0.0
  %2613 = vmatpush1.msra.mxu0 0.0
  %2614 = vmatprep.subr.mxu0 0.0
  %2615 = vmatpush1.msra.mxu0 0.0
  %2616 = vmatprep.subr.mxu0 0.0
  %2617 = vmatpush1.msra.mxu0 0.0
  %2618 = vmatprep.mubr.f32.mxu0 0.0
  %2619 = vmatmul.mubr.f32.gmra.mrb[0].mxu0 %v2552
  %v2620 = vpop.f32.mrb[0].mxu0
  %v2621 = vadd.f32 0.0, %v2620
  %v2622 = vpop.f32.mrb[0].mxu0
  %v2623 = vadd.f32 0.0, %v2622
  %2624 = vdwg.mxu0
  %2625 = vmatprep.subr.mxu0 %v778
  %2626 = vmatpush1.msra.mxu0 %v776
  %2627 = vmatprep.subr.mxu0 %v782
  %2628 = vmatpush1.msra.mxu0 %v780
  %2629 = vmatprep.subr.mxu0 %v788
  %2630 = vmatpush1.msra.mxu0 %v786
  %2631 = vmatprep.subr.mxu0 %v792
  %2632 = vmatpush1.msra.mxu0 %v790
  %2633 = vmatprep.subr.mxu0 0.0
  %2634 = vmatpush1.msra.mxu0 0.0
  %2635 = vmatprep.subr.mxu0 0.0
  %2636 = vmatpush1.msra.mxu0 0.0
  %2637 = vmatprep.subr.mxu0 0.0
  %2638 = vmatpush1.msra.mxu0 0.0
  %2639 = vmatprep.subr.mxu0 0.0
  %2640 = vmatpush1.msra.mxu0 0.0
  %2641 = vmatprep.subr.mxu0 0.0
  %2642 = vmatpush1.msra.mxu0 0.0
  %2643 = vmatprep.subr.mxu0 0.0
  %2644 = vmatpush1.msra.mxu0 0.0
  %2645 = vmatprep.subr.mxu0 0.0
  %2646 = vmatpush1.msra.mxu0 0.0
  %2647 = vmatprep.subr.mxu0 0.0
  %2648 = vmatpush1.msra.mxu0 0.0
  %2649 = vmatprep.subr.mxu0 0.0
  %2650 = vmatpush1.msra.mxu0 0.0
  %2651 = vmatprep.subr.mxu0 0.0
  %2652 = vmatpush1.msra.mxu0 0.0
  %2653 = vmatprep.subr.mxu0 0.0
  %2654 = vmatpush1.msra.mxu0 0.0
  %2655 = vmatprep.subr.mxu0 0.0
  %2656 = vmatpush1.msra.mxu0 0.0
  %2657 = vmatprep.subr.mxu0 0.0
  %2658 = vmatpush1.msra.mxu0 0.0
  %2659 = vmatprep.subr.mxu0 0.0
  %2660 = vmatpush1.msra.mxu0 0.0
  %2661 = vmatprep.subr.mxu0 0.0
  %2662 = vmatpush1.msra.mxu0 0.0
  %2663 = vmatprep.subr.mxu0 0.0
  %2664 = vmatpush1.msra.mxu0 0.0
  %2665 = vmatprep.subr.mxu0 0.0
  %2666 = vmatpush1.msra.mxu0 0.0
  %2667 = vmatprep.subr.mxu0 0.0
  %2668 = vmatpush1.msra.mxu0 0.0
  %2669 = vmatprep.subr.mxu0 0.0
  %2670 = vmatpush1.msra.mxu0 0.0
  %2671 = vmatprep.subr.mxu0 0.0
  %2672 = vmatpush1.msra.mxu0 0.0
  %2673 = vmatprep.subr.mxu0 0.0
  %2674 = vmatpush1.msra.mxu0 0.0
  %2675 = vmatprep.subr.mxu0 0.0
  %2676 = vmatpush1.msra.mxu0 0.0
  %2677 = vmatprep.subr.mxu0 0.0
  %2678 = vmatpush1.msra.mxu0 0.0
  %2679 = vmatprep.subr.mxu0 0.0
  %2680 = vmatpush1.msra.mxu0 0.0
  %2681 = vmatprep.subr.mxu0 0.0
  %2682 = vmatpush1.msra.mxu0 0.0
  %2683 = vmatprep.subr.mxu0 0.0
  %2684 = vmatpush1.msra.mxu0 0.0
  %2685 = vmatprep.subr.mxu0 0.0
  %2686 = vmatpush1.msra.mxu0 0.0
  %2687 = vmatprep.subr.mxu0 0.0
  %2688 = vmatpush1.msra.mxu0 0.0
  %2689 = vmatprep.mubr.f32.mxu0 0.0
  %2690 = vmatmul.mubr.f32.gmra.mrb[0].mxu0 %v2552
  %v2691 = vpop.f32.mrb[0].mxu0
  %v2692 = vadd.f32 0.0, %v2691
  %v2693 = vpop.f32.mrb[0].mxu0
  %v2694 = vadd.f32 0.0, %v2693
  %2695 = vdwg.mxu0
  %v2696 = vsel %vm1975, %v1972, 0
  %2698 = vmatprep.subr.mxu0 %v645
  %2699 = vmatpush1.msra.mxu0 %v643
  %2700 = vmatprep.subr.mxu0 %v649
  %2701 = vmatpush1.msra.mxu0 %v647
  %2702 = vmatprep.subr.mxu0 %v655
  %2703 = vmatpush1.msra.mxu0 %v653
  %2704 = vmatprep.subr.mxu0 %v659
  %2705 = vmatpush1.msra.mxu0 %v657
  %2706 = vmatprep.subr.mxu0 0.0
  %2707 = vmatpush1.msra.mxu0 0.0
  %2708 = vmatprep.subr.mxu0 0.0
  %2709 = vmatpush1.msra.mxu0 0.0
  %2710 = vmatprep.subr.mxu0 0.0
  %2711 = vmatpush1.msra.mxu0 0.0
  %2712 = vmatprep.subr.mxu0 0.0
  %2713 = vmatpush1.msra.mxu0 0.0
  %2714 = vmatprep.subr.mxu0 0.0
  %2715 = vmatpush1.msra.mxu0 0.0
  %2716 = vmatprep.subr.mxu0 0.0
  %2717 = vmatpush1.msra.mxu0 0.0
  %2718 = vmatprep.subr.mxu0 0.0
  %2719 = vmatpush1.msra.mxu0 0.0
  %2720 = vmatprep.subr.mxu0 0.0
  %2721 = vmatpush1.msra.mxu0 0.0
  %2722 = vmatprep.subr.mxu0 0.0
  %2723 = vmatpush1.msra.mxu0 0.0
  %2724 = vmatprep.subr.mxu0 0.0
  %2725 = vmatpush1.msra.mxu0 0.0
  %2726 = vmatprep.subr.mxu0 0.0
  %2727 = vmatpush1.msra.mxu0 0.0
  %2728 = vmatprep.subr.mxu0 0.0
  %2729 = vmatpush1.msra.mxu0 0.0
  %2730 = vmatprep.subr.mxu0 0.0
  %2731 = vmatpush1.msra.mxu0 0.0
  %2732 = vmatprep.subr.mxu0 0.0
  %2733 = vmatpush1.msra.mxu0 0.0
  %2734 = vmatprep.subr.mxu0 0.0
  %2735 = vmatpush1.msra.mxu0 0.0
  %2736 = vmatprep.subr.mxu0 0.0
  %2737 = vmatpush1.msra.mxu0 0.0
  %2738 = vmatprep.subr.mxu0 0.0
  %2739 = vmatpush1.msra.mxu0 0.0
  %2740 = vmatprep.subr.mxu0 0.0
  %2741 = vmatpush1.msra.mxu0 0.0
  %2742 = vmatprep.subr.mxu0 0.0
  %2743 = vmatpush1.msra.mxu0 0.0
  %2744 = vmatprep.subr.mxu0 0.0
  %2745 = vmatpush1.msra.mxu0 0.0
  %2746 = vmatprep.subr.mxu0 0.0
  %2747 = vmatpush1.msra.mxu0 0.0
  %2748 = vmatprep.subr.mxu0 0.0
  %2749 = vmatpush1.msra.mxu0 0.0
  %2750 = vmatprep.subr.mxu0 0.0
  %2751 = vmatpush1.msra.mxu0 0.0
  %2752 = vmatprep.subr.mxu0 0.0
  %2753 = vmatpush1.msra.mxu0 0.0
  %2754 = vmatprep.subr.mxu0 0.0
  %2755 = vmatpush1.msra.mxu0 0.0
  %2756 = vmatprep.subr.mxu0 0.0
  %2757 = vmatpush1.msra.mxu0 0.0
  %2758 = vmatprep.subr.mxu0 0.0
  %2759 = vmatpush1.msra.mxu0 0.0
  %2760 = vmatprep.subr.mxu0 0.0
  %2761 = vmatpush1.msra.mxu0 0.0
  %2762 = vmatprep.mubr.f32.mxu0 0.0
  %2763 = vmatmul.mubr.f32.gmra.mrb[0].mxu0 %v2696
  %v2764 = vpop.f32.mrb[0].mxu0
  %v2765 = vadd.f32 0.0, %v2764
  %v2766 = vpop.f32.mrb[0].mxu0
  %v2767 = vadd.f32 0.0, %v2766
  %2768 = vdwg.mxu0
  %2769 = vmatprep.subr.mxu0 %v798
  %2770 = vmatpush1.msra.mxu0 %v796
  %2771 = vmatprep.subr.mxu0 %v802
  %2772 = vmatpush1.msra.mxu0 %v800
  %2773 = vmatprep.subr.mxu0 %v808
  %2774 = vmatpush1.msra.mxu0 %v806
  %2775 = vmatprep.subr.mxu0 %v812
  %2776 = vmatpush1.msra.mxu0 %v810
  %2777 = vmatprep.subr.mxu0 0.0
  %2778 = vmatpush1.msra.mxu0 0.0
  %2779 = vmatprep.subr.mxu0 0.0
  %2780 = vmatpush1.msra.mxu0 0.0
  %2781 = vmatprep.subr.mxu0 0.0
  %2782 = vmatpush1.msra.mxu0 0.0
  %2783 = vmatprep.subr.mxu0 0.0
  %2784 = vmatpush1.msra.mxu0 0.0
  %2785 = vmatprep.subr.mxu0 0.0
  %2786 = vmatpush1.msra.mxu0 0.0
  %2787 = vmatprep.subr.mxu0 0.0
  %2788 = vmatpush1.msra.mxu0 0.0
  %2789 = vmatprep.subr.mxu0 0.0
  %2790 = vmatpush1.msra.mxu0 0.0
  %2791 = vmatprep.subr.mxu0 0.0
  %2792 = vmatpush1.msra.mxu0 0.0
  %2793 = vmatprep.subr.mxu0 0.0
  %2794 = vmatpush1.msra.mxu0 0.0
  %2795 = vmatprep.subr.mxu0 0.0
  %2796 = vmatpush1.msra.mxu0 0.0
  %2797 = vmatprep.subr.mxu0 0.0
  %2798 = vmatpush1.msra.mxu0 0.0
  %2799 = vmatprep.subr.mxu0 0.0
  %2800 = vmatpush1.msra.mxu0 0.0
  %2801 = vmatprep.subr.mxu0 0.0
  %2802 = vmatpush1.msra.mxu0 0.0
  %2803 = vmatprep.subr.mxu0 0.0
  %2804 = vmatpush1.msra.mxu0 0.0
  %2805 = vmatprep.subr.mxu0 0.0
  %2806 = vmatpush1.msra.mxu0 0.0
  %2807 = vmatprep.subr.mxu0 0.0
  %2808 = vmatpush1.msra.mxu0 0.0
  %2809 = vmatprep.subr.mxu0 0.0
  %2810 = vmatpush1.msra.mxu0 0.0
  %2811 = vmatprep.subr.mxu0 0.0
  %2812 = vmatpush1.msra.mxu0 0.0
  %2813 = vmatprep.subr.mxu0 0.0
  %2814 = vmatpush1.msra.mxu0 0.0
  %2815 = vmatprep.subr.mxu0 0.0
  %2816 = vmatpush1.msra.mxu0 0.0
  %2817 = vmatprep.subr.mxu0 0.0
  %2818 = vmatpush1.msra.mxu0 0.0
  %2819 = vmatprep.subr.mxu0 0.0
  %2820 = vmatpush1.msra.mxu0 0.0
  %2821 = vmatprep.subr.mxu0 0.0
  %2822 = vmatpush1.msra.mxu0 0.0
  %2823 = vmatprep.subr.mxu0 0.0
  %2824 = vmatpush1.msra.mxu0 0.0
  %2825 = vmatprep.subr.mxu0 0.0
  %2826 = vmatpush1.msra.mxu0 0.0
  %2827 = vmatprep.subr.mxu0 0.0
  %2828 = vmatpush1.msra.mxu0 0.0
  %2829 = vmatprep.subr.mxu0 0.0
  %2830 = vmatpush1.msra.mxu0 0.0
  %2831 = vmatprep.subr.mxu0 0.0
  %2832 = vmatpush1.msra.mxu0 0.0
  %2833 = vmatprep.mubr.f32.mxu0 0.0
  %2834 = vmatmul.mubr.f32.gmra.mrb[0].mxu0 %v2696
  %v2835 = vpop.f32.mrb[0].mxu0
  %v2836 = vadd.f32 0.0, %v2835
  %v2837 = vpop.f32.mrb[0].mxu0
  %v2838 = vadd.f32 0.0, %v2837
  %2839 = vdwg.mxu0
  %v2864 = vrot.slane %v2189, 7
  %v2865 = vsel %vm1903, %v2864, %v2045
  %v2866 = vrot.slane %v2333, 6
  %v2867 = vsel %vm1905, %v2866, %v2865
  %v2868 = vrot.slane %v2477, 5
  %v2869 = vsel %vm1907, %v2868, %v2867
  %v2870 = vrot.slane %v2621, 4
  %v2871 = vsel %vm1909, %v2870, %v2869
  %v2872 = vrot.slane %v2765, 3
  %v2873 = vsel %vm1911, %v2872, %v2871
  %v2874 = vrot.slane %v2191, 7
  %v2875 = vsel %vm1903, %v2874, %v2047
  %v2876 = vrot.slane %v2335, 6
  %v2877 = vsel %vm1905, %v2876, %v2875
  %v2878 = vrot.slane %v2479, 5
  %v2879 = vsel %vm1907, %v2878, %v2877
  %v2880 = vrot.slane %v2623, 4
  %v2881 = vsel %vm1909, %v2880, %v2879
  %v2882 = vrot.slane %v2767, 3
  %v2883 = vsel %vm1911, %v2882, %v2881
  %v2884 = vrot.slane %v2260, 7
  %v2885 = vsel %vm1903, %v2884, %v2116
  %v2886 = vrot.slane %v2404, 6
  %v2887 = vsel %vm1905, %v2886, %v2885
  %v2888 = vrot.slane %v2548, 5
  %v2889 = vsel %vm1907, %v2888, %v2887
  %v2890 = vrot.slane %v2692, 4
  %v2891 = vsel %vm1909, %v2890, %v2889
  %v2892 = vrot.slane %v2836, 3
  %v2893 = vsel %vm1911, %v2892, %v2891
  %v2894 = vrot.slane %v2262, 7
  %v2895 = vsel %vm1903, %v2894, %v2118
  %v2896 = vrot.slane %v2406, 6
  %v2897 = vsel %vm1905, %v2896, %v2895
  %v2898 = vrot.slane %v2550, 5
  %v2899 = vsel %vm1907, %v2898, %v2897
  %v2900 = vrot.slane %v2694, 4
  %v2901 = vsel %vm1909, %v2900, %v2899
  %v2902 = vrot.slane %v2838, 3
  %v2903 = vsel %vm1911, %v2902, %v2901
  %2908 = vst [vmem:[%s7] sm:$0x3f] %v2873
  %2909 = vst [vmem:[%s7 + $0x8] sm:$0x3f] %v2883
  %2910 = vst [vmem:[%s7 + $0x10] sm:$0x3f] %v2893
  %vm2911 = vcmask 128000
  %2912 = vst.msk [vmem:[%s7 + $0x18] sm:$0x3f] %vm2911, %v2903
  // Predicated region
  $region30: #{naml_forward.7} parent=0 // pred_check
    _
  $region31: #{naml_forward.7} parent=0 // pred_check_branch
    %2914 = sbr.rel (0) target = $region33
  $region32: #{naml_forward.7} parent=0 // pred_region
    _
  $region33: #{naml_forward.7} parent=0 // pred_fallthru
    _
  // Predicated region
  $region34: #{naml_forward.7} parent=0 // pred_check
    _
  $region35: #{naml_forward.7} parent=0 // pred_check_branch
    %2916 = sbr.rel (0) target = $region37
  $region36: #{naml_forward.7} parent=0 // pred_region
    _
  $region37: #{naml_forward.7} parent=0 // pred_fallthru
    _

// kernel: naml_forward.9
$region0: #{naml_forward.9}
  #allocation0 [shape = 'u32[]', space=smem, size = 0x4, offset = 0x4, fixed_abs, tag = 'smem constant byte address 0x4 - core index']
  #allocation1 [shape = 'u32[144,128]{1,0:T(1,128)}', space=vmem, size = 0x12000, scoped, tag = 'internal scratch']
  #allocation2 [shape = 'f32[1,1]{1,0:T(1,128)S(1)}', space=vmem, size = 0x200, scoped, tag = 'scoped memory for naml_forward.9']
  %s0 = inlined_call_operand.vmem [shape: f32[6,4,400], index: 0, kind: input, shape index: {}]
  %s1 = inlined_call_operand.vmem [shape: bf16[400,200], index: 1, kind: input, shape index: {}]
  %s2 = inlined_call_operand.vmem [shape: f32[1,200], index: 2, kind: input, shape index: {}]
  %s3 = inlined_call_operand.vmem [shape: f32[1,200], index: 3, kind: input, shape index: {}]
  %s4 = inlined_call_operand.<no memory space> [shape: f32[1,1], index: 4, kind: input, shape index: {}]
  %s5 = inlined_call_operand.vmem [shape: f32[6,400], index: 5, kind: output, shape index: {}]
  %s6 = sld [smem:[#allocation0]]
  $region30: #{naml_forward.9} parent=0
    _
  %s8 = ssub.s32 1, %s6
  %s9 = scalar_select 0, %s8, %s6
  %v10 = vstv %s4
  %11 = vst [vmem:[#allocation2] sm:$0x1] %v10
  // Predicated region
  $region2: #{naml_forward.9} parent=0 // pred_check
    _
  $region3: #{naml_forward.9} parent=0 // pred_check_branch
    %13 = sbr.rel (0) target = $region5
  $region4: #{naml_forward.9} parent=0 // pred_region
    _
  $region5: #{naml_forward.9} parent=0 // pred_fallthru
    _
  // Predicated region
  $region6: #{naml_forward.9} parent=0 // pred_check
    _
  $region7: #{naml_forward.9} parent=0 // pred_check_branch
    %15 = sbr.rel (0) target = $region9
  $region8: #{naml_forward.9} parent=0 // pred_region
    _
  $region9: #{naml_forward.9} parent=0 // pred_fallthru
    _
  // Predicated region
  $region10: #{naml_forward.9} parent=0 // pred_check
    _
  $region11: #{naml_forward.9} parent=0 // pred_check_branch
    %17 = sbr.rel (0) target = $region13
  $region12: #{naml_forward.9} parent=0 // pred_region
    _
  $region13: #{naml_forward.9} parent=0 // pred_fallthru
    _
  // Predicated region
  $region14: #{naml_forward.9} parent=0 // pred_check
    _
  $region15: #{naml_forward.9} parent=0 // pred_check_branch
    %19 = sbr.rel (0) target = $region17
  $region16: #{naml_forward.9} parent=0 // pred_region
    _
  $region17: #{naml_forward.9} parent=0 // pred_fallthru
    _
  // Predicated region
  $region18: #{naml_forward.9} parent=0 // pred_check
    _
  $region19: #{naml_forward.9} parent=0 // pred_check_branch
    %21 = sbr.rel (0) target = $region21
  $region20: #{naml_forward.9} parent=0 // pred_region
    _
  $region21: #{naml_forward.9} parent=0 // pred_fallthru
    _
  %v23 = vld [vmem:[%s0] sm:$0xff]
  %v24 = vld [vmem:[%s0 + $0x8] sm:$0xff]
  %v25 = vld [vmem:[%s0 + $0x10] sm:$0xff]
  %v26 = vld [vmem:[%s0 + $0x18] sm:$0xff]
  %v27 = vld [vmem:[%s0 + $0x20] sm:$0xff]
  %v28 = vld [vmem:[%s0 + $0x28] sm:$0xff]
  %v29 = vld [vmem:[%s0 + $0x30] sm:$0xff]
  %v30 = vld [vmem:[%s0 + $0x38] sm:$0xff]
  %v31 = vld [vmem:[%s0 + $0x40] sm:$0xff]
  %v32 = vld [vmem:[%s0 + $0x48] sm:$0xff]
  %v33 = vld [vmem:[%s0 + $0x50] sm:$0xff]
  %v34 = vld [vmem:[%s0 + $0x58] sm:$0xff]
  %v47 = vcombine.low %v23, %v25
  %v48 = vcombine.high %v23, %v25
  %v49 = vcombine.low %v24, %v26
  %v50 = vcombine.high %v24, %v26
  %v51 = vcombine.low %v27, %v29
  %v52 = vcombine.high %v27, %v29
  %v53 = vcombine.low %v28, %v30
  %v54 = vcombine.high %v28, %v30
  %v55 = vcombine.low %v31, %v33
  %v56 = vcombine.high %v31, %v33
  %v57 = vcombine.low %v32, %v34
  %v58 = vcombine.high %v32, %v34
  %v71 = vpack.c.bf16 %v51, %v47
  %v72 = vpack.c.bf16 %v52, %v48
  %v73 = vpack.c.bf16 %v53, %v49
  %v74 = vpack.c.bf16 %v54, %v50
  %v75 = vpack.c.bf16 %v55, %v55
  %v76 = vpack.c.bf16 %v56, %v56
  %v77 = vpack.c.bf16 %v57, %v57
  %v78 = vpack.c.bf16 %v58, %v58
  %v79 = vld [vmem:[%s1] sm:$0xff]
  %v80 = vld [vmem:[%s1 + $0x8] sm:$0xff]
  %v81 = vld [vmem:[%s1 + $0x10] sm:$0xff]
  %v82 = vld [vmem:[%s1 + $0x18] sm:$0xff]
  %v83 = vld [vmem:[%s1 + $0x20] sm:$0xff]
  %v84 = vld [vmem:[%s1 + $0x28] sm:$0xff]
  %v85 = vld [vmem:[%s1 + $0x30] sm:$0xff]
  %v86 = vld [vmem:[%s1 + $0x38] sm:$0xff]
  %v87 = vld [vmem:[%s1 + $0x40] sm:$0xff]
  %v88 = vld [vmem:[%s1 + $0x48] sm:$0xff]
  %v89 = vld [vmem:[%s1 + $0x50] sm:$0xff]
  %v90 = vld [vmem:[%s1 + $0x58] sm:$0xff]
  %v91 = vld [vmem:[%s1 + $0x60] sm:$0xff]
  %v92 = vld [vmem:[%s1 + $0x68] sm:$0xff]
  %v93 = vld [vmem:[%s1 + $0x70] sm:$0xff]
  %v94 = vld [vmem:[%s1 + $0x78] sm:$0xff]
  %v95 = vld [vmem:[%s1 + $0x80] sm:$0xff]
  %v96 = vld [vmem:[%s1 + $0x88] sm:$0xff]
  %v97 = vld [vmem:[%s1 + $0x90] sm:$0xff]
  %v98 = vld [vmem:[%s1 + $0x98] sm:$0xff]
  %v99 = vld [vmem:[%s1 + $0xa0] sm:$0xff]
  %v100 = vld [vmem:[%s1 + $0xa8] sm:$0xff]
  %v101 = vld [vmem:[%s1 + $0xb0] sm:$0xff]
  %v102 = vld [vmem:[%s1 + $0xb8] sm:$0xff]
  %v103 = vld [vmem:[%s1 + $0xc0] sm:$0xff]
  %v104 = vld [vmem:[%s1 + $0xc8] sm:$0xff]
  %v105 = vld [vmem:[%s1 + $0xd0] sm:$0xff]
  %v106 = vld [vmem:[%s1 + $0xd8] sm:$0xff]
  %v107 = vld [vmem:[%s1 + $0xe0] sm:$0xff]
  %v108 = vld [vmem:[%s1 + $0xe8] sm:$0xff]
  %v109 = vld [vmem:[%s1 + $0xf0] sm:$0xff]
  %v110 = vld [vmem:[%s1 + $0xf8] sm:$0xff]
  %v111 = vld [vmem:[%s1 + $0x100] sm:$0xff]
  %v112 = vld [vmem:[%s1 + $0x108] sm:$0xff]
  %v113 = vld [vmem:[%s1 + $0x110] sm:$0xff]
  %v114 = vld [vmem:[%s1 + $0x118] sm:$0xff]
  %v115 = vld [vmem:[%s1 + $0x120] sm:$0xff]
  %v116 = vld [vmem:[%s1 + $0x128] sm:$0xff]
  %v117 = vld [vmem:[%s1 + $0x130] sm:$0xff]
  %v118 = vld [vmem:[%s1 + $0x138] sm:$0xff]
  %v119 = vld [vmem:[%s1 + $0x140] sm:$0xff]
  %v120 = vld [vmem:[%s1 + $0x148] sm:$0xff]
  %v121 = vld [vmem:[%s1 + $0x150] sm:$0xff]
  %v122 = vld [vmem:[%s1 + $0x158] sm:$0xff]
  %v123 = vld [vmem:[%s1 + $0x160] sm:$0xff]
  %v124 = vld [vmem:[%s1 + $0x168] sm:$0xff]
  %v125 = vld [vmem:[%s1 + $0x170] sm:$0xff]
  %v126 = vld [vmem:[%s1 + $0x178] sm:$0xff]
  %v127 = vld [vmem:[%s1 + $0x180] sm:$0xff]
  %v128 = vld [vmem:[%s1 + $0x188] sm:$0xff]
  %v129 = vld [vmem:[%s2] sm:$0x3]
  %v131 = vlaneseq
  %v132 = vshrl.u32 %v131, 7
  %v133 = vsub.s32 0, %v132
  %v134 = vrot.slane %v129, %v133
  %v135 = vlaneseq
  %v136 = vshrl.u32 %v135, 7
  %v137 = vsub.s32 1, %v136
  %v138 = vrot.slane %v129, %v137
  %v191 = vunpack.c.l.b16 %v79
  %v192 = vunpack.c.h.b16 %v79
  %v193 = vunpack.c.l.b16 %v80
  %v194 = vunpack.c.h.b16 %v80
  %v195 = vunpack.c.l.b16 %v81
  %v196 = vunpack.c.h.b16 %v81
  %v197 = vunpack.c.l.b16 %v82
  %v198 = vunpack.c.h.b16 %v82
  %v199 = vunpack.c.l.b16 %v83
  %v200 = vunpack.c.h.b16 %v83
  %v201 = vunpack.c.l.b16 %v84
  %v202 = vunpack.c.h.b16 %v84
  %v203 = vunpack.c.l.b16 %v85
  %v204 = vunpack.c.h.b16 %v85
  %v205 = vunpack.c.l.b16 %v86
  %v206 = vunpack.c.h.b16 %v86
  %v207 = vunpack.c.l.b16 %v87
  %v208 = vunpack.c.h.b16 %v87
  %v209 = vunpack.c.l.b16 %v88
  %v210 = vunpack.c.h.b16 %v88
  %v211 = vunpack.c.l.b16 %v89
  %v212 = vunpack.c.h.b16 %v89
  %v213 = vunpack.c.l.b16 %v90
  %v214 = vunpack.c.h.b16 %v90
  %v215 = vunpack.c.l.b16 %v91
  %v216 = vunpack.c.h.b16 %v91
  %v217 = vunpack.c.l.b16 %v92
  %v218 = vunpack.c.h.b16 %v92
  %v219 = vunpack.c.l.b16 %v93
  %v220 = vunpack.c.h.b16 %v93
  %v221 = vunpack.c.l.b16 %v94
  %v222 = vunpack.c.h.b16 %v94
  %v223 = vunpack.c.l.b16 %v95
  %v224 = vunpack.c.h.b16 %v95
  %v225 = vunpack.c.l.b16 %v96
  %v226 = vunpack.c.h.b16 %v96
  %v227 = vunpack.c.l.b16 %v97
  %v228 = vunpack.c.h.b16 %v97
  %v229 = vunpack.c.l.b16 %v98
  %v230 = vunpack.c.h.b16 %v98
  %v231 = vunpack.c.l.b16 %v99
  %v232 = vunpack.c.h.b16 %v99
  %v233 = vunpack.c.l.b16 %v100
  %v234 = vunpack.c.h.b16 %v100
  %v235 = vunpack.c.l.b16 %v101
  %v236 = vunpack.c.h.b16 %v101
  %v237 = vunpack.c.l.b16 %v102
  %v238 = vunpack.c.h.b16 %v102
  %v239 = vunpack.c.l.b16 %v103
  %v240 = vunpack.c.h.b16 %v103
  %v241 = vunpack.c.l.b16 %v104
  %v242 = vunpack.c.h.b16 %v104
  %v243 = vunpack.c.l.b16 %v105
  %v244 = vunpack.c.h.b16 %v105
  %v245 = vunpack.c.l.b16 %v106
  %v246 = vunpack.c.h.b16 %v106
  %v247 = vunpack.c.l.b16 %v107
  %v248 = vunpack.c.h.b16 %v107
  %v249 = vunpack.c.l.b16 %v108
  %v250 = vunpack.c.h.b16 %v108
  %v251 = vunpack.c.l.b16 %v109
  %v252 = vunpack.c.h.b16 %v109
  %v253 = vunpack.c.l.b16 %v110
  %v254 = vunpack.c.h.b16 %v110
  %v255 = vunpack.c.l.b16 %v111
  %v256 = vunpack.c.h.b16 %v111
  %v257 = vunpack.c.l.b16 %v112
  %v258 = vunpack.c.h.b16 %v112
  %v259 = vunpack.c.l.b16 %v113
  %v260 = vunpack.c.h.b16 %v113
  %v261 = vunpack.c.l.b16 %v114
  %v262 = vunpack.c.h.b16 %v114
  %v263 = vunpack.c.l.b16 %v115
  %v264 = vunpack.c.h.b16 %v115
  %v265 = vunpack.c.l.b16 %v116
  %v266 = vunpack.c.h.b16 %v116
  %v267 = vunpack.c.l.b16 %v117
  %v268 = vunpack.c.h.b16 %v117
  %v269 = vunpack.c.l.b16 %v118
  %v270 = vunpack.c.h.b16 %v118
  %v271 = vunpack.c.l.b16 %v119
  %v272 = vunpack.c.h.b16 %v119
  %v273 = vunpack.c.l.b16 %v120
  %v274 = vunpack.c.h.b16 %v120
  %v275 = vunpack.c.l.b16 %v121
  %v276 = vunpack.c.h.b16 %v121
  %v277 = vunpack.c.l.b16 %v122
  %v278 = vunpack.c.h.b16 %v122
  %v279 = vunpack.c.l.b16 %v123
  %v280 = vunpack.c.h.b16 %v123
  %v281 = vunpack.c.l.b16 %v124
  %v282 = vunpack.c.h.b16 %v124
  %v283 = vunpack.c.l.b16 %v125
  %v284 = vunpack.c.h.b16 %v125
  %v285 = vunpack.c.l.b16 %v126
  %v286 = vunpack.c.h.b16 %v126
  %v287 = vunpack.c.l.b16 %v127
  %v288 = vunpack.c.h.b16 %v127
  %v289 = vunpack.c.l.b16 %v128
  %v290 = vunpack.c.h.b16 %v128
  %v291 = vpack.c.b16 %v193, %v191
  %v292 = vpack.c.b16 %v194, %v192
  %v293 = vpack.c.b16 %v197, %v195
  %v294 = vpack.c.b16 %v198, %v196
  %v295 = vpack.c.b16 %v201, %v199
  %v296 = vpack.c.b16 %v202, %v200
  %v297 = vpack.c.b16 %v205, %v203
  %v298 = vpack.c.b16 %v206, %v204
  %v299 = vpack.c.b16 %v209, %v207
  %v300 = vpack.c.b16 %v210, %v208
  %v301 = vpack.c.b16 %v213, %v211
  %v302 = vpack.c.b16 %v214, %v212
  %v303 = vpack.c.b16 %v217, %v215
  %v304 = vpack.c.b16 %v218, %v216
  %v305 = vpack.c.b16 %v221, %v219
  %v306 = vpack.c.b16 %v222, %v220
  %v307 = vpack.c.b16 %v225, %v223
  %v308 = vpack.c.b16 %v226, %v224
  %v309 = vpack.c.b16 %v229, %v227
  %v310 = vpack.c.b16 %v230, %v228
  %v311 = vpack.c.b16 %v233, %v231
  %v312 = vpack.c.b16 %v234, %v232
  %v313 = vpack.c.b16 %v237, %v235
  %v314 = vpack.c.b16 %v238, %v236
  %v315 = vpack.c.b16 %v241, %v239
  %v316 = vpack.c.b16 %v242, %v240
  %v317 = vpack.c.b16 %v245, %v243
  %v318 = vpack.c.b16 %v246, %v244
  %v319 = vpack.c.b16 %v249, %v247
  %v320 = vpack.c.b16 %v250, %v248
  %v321 = vpack.c.b16 %v253, %v251
  %v322 = vpack.c.b16 %v254, %v252
  %v323 = vpack.c.b16 %v257, %v255
  %v324 = vpack.c.b16 %v258, %v256
  %v325 = vpack.c.b16 %v261, %v259
  %v326 = vpack.c.b16 %v262, %v260
  %v327 = vpack.c.b16 %v265, %v263
  %v328 = vpack.c.b16 %v266, %v264
  %v329 = vpack.c.b16 %v269, %v267
  %v330 = vpack.c.b16 %v270, %v268
  %v331 = vpack.c.b16 %v273, %v271
  %v332 = vpack.c.b16 %v274, %v272
  %v333 = vpack.c.b16 %v277, %v275
  %v334 = vpack.c.b16 %v278, %v276
  %v335 = vpack.c.b16 %v281, %v279
  %v336 = vpack.c.b16 %v282, %v280
  %v337 = vpack.c.b16 %v285, %v283
  %v338 = vpack.c.b16 %v286, %v284
  %v339 = vpack.c.b16 %v289, %v287
  %v340 = vpack.c.b16 %v290, %v288
  %vm391 = vcmask 130048
  %v393 = vsel %vm391, %v74, 0
  %v396 = vsel %vm391, %v78, 0
  %398 = vmatprep.subr.bf16.mxu0 %v292
  %399 = vmatpush1.bf16.msra.mxu0 %v291
  %400 = vmatprep.subr.bf16.mxu0 %v294
  %401 = vmatpush1.bf16.msra.mxu0 %v293
  %402 = vmatprep.subr.bf16.mxu0 %v296
  %403 = vmatpush1.bf16.msra.mxu0 %v295
  %404 = vmatprep.subr.bf16.mxu0 %v298
  %405 = vmatpush1.bf16.msra.mxu0 %v297
  %406 = vmatprep.subr.bf16.mxu0 %v300
  %407 = vmatpush1.bf16.msra.mxu0 %v299
  %408 = vmatprep.subr.bf16.mxu0 %v302
  %409 = vmatpush1.bf16.msra.mxu0 %v301
  %410 = vmatprep.subr.bf16.mxu0 %v304
  %411 = vmatpush1.bf16.msra.mxu0 %v303
  %412 = vmatprep.subr.bf16.mxu0 %v306
  %413 = vmatpush1.bf16.msra.mxu0 %v305
  %414 = vmatprep.subr.bf16.mxu0 %v308
  %415 = vmatpush1.bf16.msra.mxu0 %v307
  %416 = vmatprep.subr.bf16.mxu0 %v310
  %417 = vmatpush1.bf16.msra.mxu0 %v309
  %418 = vmatprep.subr.bf16.mxu0 %v312
  %419 = vmatpush1.bf16.msra.mxu0 %v311
  %420 = vmatprep.subr.bf16.mxu0 %v314
  %421 = vmatpush1.bf16.msra.mxu0 %v313
  %422 = vmatprep.subr.bf16.mxu0 %v316
  %423 = vmatpush1.bf16.msra.mxu0 %v315
  %424 = vmatprep.subr.bf16.mxu0 %v318
  %425 = vmatpush1.bf16.msra.mxu0 %v317
  %426 = vmatprep.subr.bf16.mxu0 %v320
  %427 = vmatpush1.bf16.msra.mxu0 %v319
  %428 = vmatprep.subr.bf16.mxu0 %v322
  %429 = vmatpush1.bf16.msra.mxu0 %v321
  %430 = vmatprep.mubr.bf16.mxu0 %v72
  %431 = vmatmul.mubr.bf16.gmra.mrb[0].mxu0 %v71
  %v432 = vpop.f32.mrb[0].mxu0
  %v433 = vadd.f32 %v134, %v432
  %v434 = vpop.f32.mrb[0].mxu0
  %v435 = vadd.f32 %v138, %v434
  %v436 = vpop.f32.mrb[0].mxu0
  %v437 = vadd.f32 %v134, %v436
  %v438 = vpop.f32.mrb[0].mxu0
  %v439 = vadd.f32 %v138, %v438
  %440 = vmatprep.mubr.bf16.mxu0 %v76
  %441 = vmatmul.mubr.bf16.gmra.mrb[0].mxu0 %v75
  %v442 = vpop.f32.mrb[0].mxu0
  %v443 = vadd.f32 %v134, %v442
  %v444 = vpop.f32.mrb[0].mxu0
  %v445 = vadd.f32 %v138, %v444
  %v446 = vpop.f32.mrb[0].mxu0
  %v447 = vpop.f32.mrb[0].mxu0
  %448 = vdwg.mxu0
  %449 = vmatprep.subr.bf16.mxu0 %v324
  %450 = vmatpush1.bf16.msra.mxu0 %v323
  %451 = vmatprep.subr.bf16.mxu0 %v326
  %452 = vmatpush1.bf16.msra.mxu0 %v325
  %453 = vmatprep.subr.bf16.mxu0 %v328
  %454 = vmatpush1.bf16.msra.mxu0 %v327
  %455 = vmatprep.subr.bf16.mxu0 %v330
  %456 = vmatpush1.bf16.msra.mxu0 %v329
  %457 = vmatprep.subr.bf16.mxu0 %v332
  %458 = vmatpush1.bf16.msra.mxu0 %v331
  %459 = vmatprep.subr.bf16.mxu0 %v334
  %460 = vmatpush1.bf16.msra.mxu0 %v333
  %461 = vmatprep.subr.bf16.mxu0 %v336
  %462 = vmatpush1.bf16.msra.mxu0 %v335
  %463 = vmatprep.subr.bf16.mxu0 %v338
  %464 = vmatpush1.bf16.msra.mxu0 %v337
  %465 = vmatprep.subr.bf16.mxu0 %v340
  %466 = vmatpush1.bf16.msra.mxu0 %v339
  %467 = vmatprep.subr.bf16.mxu0 0
  %468 = vmatpush1.bf16.msra.mxu0 0
  %469 = vmatprep.subr.bf16.mxu0 0
  %470 = vmatpush1.bf16.msra.mxu0 0
  %471 = vmatprep.subr.bf16.mxu0 0
  %472 = vmatpush1.bf16.msra.mxu0 0
  %473 = vmatprep.subr.bf16.mxu0 0
  %474 = vmatpush1.bf16.msra.mxu0 0
  %475 = vmatprep.subr.bf16.mxu0 0
  %476 = vmatpush1.bf16.msra.mxu0 0
  %477 = vmatprep.subr.bf16.mxu0 0
  %478 = vmatpush1.bf16.msra.mxu0 0
  %479 = vmatprep.subr.bf16.mxu0 0
  %480 = vmatpush1.bf16.msra.mxu0 0
  %481 = vmatprep.mubr.bf16.mxu0 %v393
  %482 = vmatmul.mubr.bf16.gmra.mrb[0].mxu0 %v73
  %v483 = vpop.f32.mrb[0].mxu0
  %v484 = vadd.f32 %v433, %v483
  %v485 = vpop.f32.mrb[0].mxu0
  %v486 = vadd.f32 %v435, %v485
  %v487 = vpop.f32.mrb[0].mxu0
  %v488 = vadd.f32 %v437, %v487
  %v489 = vpop.f32.mrb[0].mxu0
  %v490 = vadd.f32 %v439, %v489
  %491 = vmatprep.mubr.bf16.mxu0 %v396
  %492 = vmatmul.mubr.bf16.gmra.mrb[0].mxu0 %v77
  %v493 = vpop.f32.mrb[0].mxu0
  %v494 = vadd.f32 %v443, %v493
  %v495 = vpop.f32.mrb[0].mxu0
  %v496 = vadd.f32 %v445, %v495
  %v497 = vpop.f32.mrb[0].mxu0
  %v498 = vpop.f32.mrb[0].mxu0
  %499 = vdwg.mxu0
  %v500 = vtanh.pop %v484
  %v501 = vtanh.pop %v486
  %v502 = vtanh.pop %v488
  %v503 = vtanh.pop %v490
  %v504 = vtanh.pop %v494
  %v505 = vtanh.pop %v496
  %v512 = vcombine.low %v500, %v501
  %v513 = vcombine.high %v500, %v501
  %v514 = vcombine.low %v502, %v503
  %v515 = vcombine.high %v502, %v503
  %v516 = vcombine.low %v504, %v505
  %v517 = vcombine.high %v504, %v505
  %v524 = vld [vmem:[%s3] sm:$0x3]
  %v526 = vlaneseq
  %v527 = vshrl.u32 %v526, 7
  %v528 = vsub.s32 0, %v527
  %v529 = vrot.slane %v524, %v528
  %v530 = vlaneseq
  %v531 = vshrl.u32 %v530, 7
  %v532 = vsub.s32 1, %v531
  %v533 = vrot.slane %v524, %v532
  %v534 = vcombine.low %v529, %v533
  %v536 = vmul.f32 %v512, %v534
  %v537 = vmul.f32 %v513, %v534
  %v538 = vmul.f32 %v514, %v534
  %v539 = vmul.f32 %v515, %v534
  %v540 = vmul.f32 %v516, %v534
  %v541 = vmul.f32 %v517, %v534
  %v548 = vcombine.high %v536, %v536
  %v549 = vcombine.high %v537, %v537
  %v550 = vcombine.high %v538, %v538
  %v551 = vcombine.high %v539, %v539
  %v552 = vcombine.high %v540, %v540
  %v553 = vcombine.high %v541, %v541
  %vm560 = vcmask 1043456
  %v561 = vsel %vm560, %v536, 0.0
  %vm562 = vcmask 584704
  %v563 = vsel %vm562, %v548, 0.0
  %v564 = vadd.f32 %v561, %v563
  %565 = vadd.xlane.f32.xlu0 %v564
  %v566 = vpop.xlane.xlu0 %565
  %v567 = vsel %vm560, %v537, 0.0
  %v568 = vsel %vm562, %v549, 0.0
  %v569 = vadd.f32 %v567, %v568
  %570 = vadd.xlane.f32.xlu0 %v569
  %v571 = vpop.xlane.xlu0 %570
  %v572 = vsel %vm560, %v538, 0.0
  %v573 = vsel %vm562, %v550, 0.0
  %v574 = vadd.f32 %v572, %v573
  %575 = vadd.xlane.f32.xlu0 %v574
  %v576 = vpop.xlane.xlu0 %575
  %v577 = vsel %vm560, %v539, 0.0
  %v578 = vsel %vm562, %v551, 0.0
  %v579 = vadd.f32 %v577, %v578
  %580 = vadd.xlane.f32.xlu0 %v579
  %v581 = vpop.xlane.xlu0 %580
  %v582 = vsel %vm560, %v540, 0.0
  %v583 = vsel %vm562, %v552, 0.0
  %v584 = vadd.f32 %v582, %v583
  %585 = vadd.xlane.f32.xlu0 %v584
  %v586 = vpop.xlane.xlu0 %585
  %v587 = vsel %vm560, %v541, 0.0
  %v588 = vsel %vm562, %v553, 0.0
  %v589 = vadd.f32 %v587, %v588
  %590 = vadd.xlane.f32.xlu0 %v589
  %v591 = vpop.xlane.xlu0 %590
  %v592 = vld [vmem:[#allocation2] sm:$0x1]
  %v594 = vlaneseq
  %v595 = vshrl.u32 %v594, 7
  %v596 = vsub.s32 0, %v595
  %v597 = vrot.slane %v592, %v596
  %598 = vset.pattern.permute.xlu0 0
  %599 = vperm.xlu0 %598, %v597
  %v600 = vpop.permute.xlu0 %599
  %v602 = vadd.f32 %v566, %v600
  %v603 = vadd.f32 %v571, %v600
  %v604 = vadd.f32 %v576, %v600
  %v605 = vadd.f32 %v581, %v600
  %v606 = vadd.f32 %v586, %v600
  %v607 = vadd.f32 %v591, %v600
  %v614 = vlaneseq
  %v615 = vand.u32 %v614, 127
  %v616 = vlaneseq
  %v617 = vshrl.u32 %v616, 7
  %v618 = vsub.s32 %v615, %v617
  %v619 = vrot.slane %v602, %v618
  %v620 = vlaneseq
  %v621 = vshrl.u32 %v620, 7
  %v622 = vsub.s32 %v615, %v621
  %v623 = vrot.slane %v603, %v622
  %v624 = vlaneseq
  %v625 = vshrl.u32 %v624, 7
  %v626 = vsub.s32 %v615, %v625
  %v627 = vrot.slane %v604, %v626
  %v628 = vlaneseq
  %v629 = vshrl.u32 %v628, 7
  %v630 = vsub.s32 %v615, %v629
  %v631 = vrot.slane %v605, %v630
  %v632 = vlaneseq
  %v633 = vshrl.u32 %v632, 7
  %v634 = vsub.s32 %v615, %v633
  %v635 = vrot.slane %v606, %v634
  %v636 = vlaneseq
  %v637 = vshrl.u32 %v636, 7
  %v638 = vsub.s32 %v615, %v637
  %v639 = vrot.slane %v607, %v638
  %vm640 = vcmask 1041409
  %v641 = vsel %vm640, %v623, %v619
  %vm642 = vcmask 1042434
  %v643 = vsel %vm642, %v627, %v641
  %vm644 = vcmask 1043459
  %v645 = vsel %vm644, %v631, %v643
  %vm646 = vcmask 1044484
  %v647 = vsel %vm646, %v635, %v645
  %vm648 = vcmask 1045509
  %v649 = vsel %vm648, %v639, %v647
  %vm651 = vcmask 29696
  %v652 = vsel %vm651, %v649, -inf
  %653 = vmax.xlane.f32.xlu0 %v652
  %v654 = vpop.xlane.xlu0 %653
  %v656 = vlaneseq
  %v657 = vshrl.u32 %v656, 7
  %v658 = vsub.s32 0, %v657
  %v659 = vrot.slane %v654, %v658
  %v660 = vlaneseq
  %v661 = vshrl.u32 %v660, 7
  %v662 = vsub.s32 1, %v661
  %v663 = vrot.slane %v654, %v662
  %v664 = vlaneseq
  %v665 = vshrl.u32 %v664, 7
  %v666 = vsub.s32 2, %v665
  %v667 = vrot.slane %v654, %v666
  %v668 = vlaneseq
  %v669 = vshrl.u32 %v668, 7
  %v670 = vsub.s32 3, %v669
  %v671 = vrot.slane %v654, %v670
  %v672 = vlaneseq
  %v673 = vshrl.u32 %v672, 7
  %v674 = vsub.s32 4, %v673
  %v675 = vrot.slane %v654, %v674
  %v676 = vlaneseq
  %v677 = vshrl.u32 %v676, 7
  %v678 = vsub.s32 5, %v677
  %v679 = vrot.slane %v654, %v678
  %v686 = vsub.f32 %v602, %v659
  %v687 = vsub.f32 %v603, %v663
  %v688 = vsub.f32 %v604, %v667
  %v689 = vsub.f32 %v605, %v671
  %v690 = vsub.f32 %v606, %v675
  %v691 = vsub.f32 %v607, %v679
  %v692 = vmul.f32 %v686, 1.442695
  %v693 = vpow.pop %v692
  %v694 = vmul.f32 %v687, 1.442695
  %v695 = vpow.pop %v694
  %v696 = vmul.f32 %v688, 1.442695
  %v697 = vpow.pop %v696
  %v698 = vmul.f32 %v689, 1.442695
  %v699 = vpow.pop %v698
  %v700 = vmul.f32 %v690, 1.442695
  %v701 = vpow.pop %v700
  %v702 = vmul.f32 %v691, 1.442695
  %v703 = vpow.pop %v702
  %710 = vset.pattern.permute.xlu0 0
  %711 = vperm.xlu0 %710, %v693
  %v712 = vpop.permute.xlu0 %711
  %713 = vset.pattern.permute.xlu0 0
  %714 = vperm.xlu0 %713, %v695
  %v715 = vpop.permute.xlu0 %714
  %716 = vset.pattern.permute.xlu0 0
  %717 = vperm.xlu0 %716, %v697
  %v718 = vpop.permute.xlu0 %717
  %719 = vset.pattern.permute.xlu0 0
  %720 = vperm.xlu0 %719, %v699
  %v721 = vpop.permute.xlu0 %720
  %722 = vset.pattern.permute.xlu0 0
  %723 = vperm.xlu0 %722, %v701
  %v724 = vpop.permute.xlu0 %723
  %725 = vset.pattern.permute.xlu0 0
  %726 = vperm.xlu0 %725, %v703
  %v727 = vpop.permute.xlu0 %726
  %v728 = vlaneseq
  %v729 = vshrl.u32 %v728, 7
  %v730 = vsub.s32 %v615, %v729
  %v731 = vrot.slane %v712, %v730
  %v732 = vlaneseq
  %v733 = vshrl.u32 %v732, 7
  %v734 = vsub.s32 %v615, %v733
  %v735 = vrot.slane %v715, %v734
  %v736 = vlaneseq
  %v737 = vshrl.u32 %v736, 7
  %v738 = vsub.s32 %v615, %v737
  %v739 = vrot.slane %v718, %v738
  %v740 = vlaneseq
  %v741 = vshrl.u32 %v740, 7
  %v742 = vsub.s32 %v615, %v741
  %v743 = vrot.slane %v721, %v742
  %v744 = vlaneseq
  %v745 = vshrl.u32 %v744, 7
  %v746 = vsub.s32 %v615, %v745
  %v747 = vrot.slane %v724, %v746
  %v748 = vlaneseq
  %v749 = vshrl.u32 %v748, 7
  %v750 = vsub.s32 %v615, %v749
  %v751 = vrot.slane %v727, %v750
  %v752 = vsel %vm640, %v735, %v731
  %v753 = vsel %vm642, %v739, %v752
  %v754 = vsel %vm644, %v743, %v753
  %v755 = vsel %vm646, %v747, %v754
  %v756 = vsel %vm648, %v751, %v755
  %v758 = vsel %vm651, %v756, 0.0
  %759 = vadd.xlane.f32.xlu0 %v758
  %v760 = vpop.xlane.xlu0 %759
  %v761 = vrcp.pop %v760
  %v763 = vlaneseq
  %v764 = vshrl.u32 %v763, 7
  %v765 = vsub.s32 0, %v764
  %v766 = vrot.slane %v761, %v765
  %v767 = vlaneseq
  %v768 = vshrl.u32 %v767, 7
  %v769 = vsub.s32 1, %v768
  %v770 = vrot.slane %v761, %v769
  %v771 = vlaneseq
  %v772 = vshrl.u32 %v771, 7
  %v773 = vsub.s32 2, %v772
  %v774 = vrot.slane %v761, %v773
  %v775 = vlaneseq
  %v776 = vshrl.u32 %v775, 7
  %v777 = vsub.s32 3, %v776
  %v778 = vrot.slane %v761, %v777
  %v779 = vlaneseq
  %v780 = vshrl.u32 %v779, 7
  %v781 = vsub.s32 4, %v780
  %v782 = vrot.slane %v761, %v781
  %v783 = vlaneseq
  %v784 = vshrl.u32 %v783, 7
  %v785 = vsub.s32 5, %v784
  %v786 = vrot.slane %v761, %v785
  %v793 = vmul.f32 %v693, %v766
  %v794 = vmul.f32 %v695, %v770
  %v795 = vmul.f32 %v697, %v774
  %v796 = vmul.f32 %v699, %v778
  %v797 = vmul.f32 %v701, %v782
  %v798 = vmul.f32 %v703, %v786
  %800 = vset.pattern.permute.xlu0 0
  %801 = vperm.xlu0 %800, %v793
  %v802 = vpop.permute.xlu0 %801
  %v803 = vlaneseq
  %v804 = vshrl.u32 %v803, 7
  %v805 = vsub.s32 %v615, %v804
  %v806 = vrot.slane %v802, %v805
  %v807 = vcombine.high %v23, %v23
  %v808 = vcombine.high %v24, %v24
  %vm809 = vcmask 31744
  %v810 = vsel %vm809, %v806, 0
  %v812 = vsel %vm560, %v23, 0
  %v814 = vsel %vm560, %v807, 0
  %v816 = vsel %vm560, %v24, 0
  %v818 = vsel %vm560, %v808, 0
  %820 = vmatprep.subr.mxu0 %v814
  %821 = vmatpush1.msra.mxu0 %v812
  %822 = vmatprep.subr.mxu0 0.0
  %823 = vmatpush1.msra.mxu0 0.0
  %824 = vmatprep.subr.mxu0 0.0
  %825 = vmatpush1.msra.mxu0 0.0
  %826 = vmatprep.subr.mxu0 0.0
  %827 = vmatpush1.msra.mxu0 0.0
  %828 = vmatprep.subr.mxu0 0.0
  %829 = vmatpush1.msra.mxu0 0.0
  %830 = vmatprep.subr.mxu0 0.0
  %831 = vmatpush1.msra.mxu0 0.0
  %832 = vmatprep.subr.mxu0 0.0
  %833 = vmatpush1.msra.mxu0 0.0
  %834 = vmatprep.subr.mxu0 0.0
  %835 = vmatpush1.msra.mxu0 0.0
  %836 = vmatprep.subr.mxu0 0.0
  %837 = vmatpush1.msra.mxu0 0.0
  %838 = vmatprep.subr.mxu0 0.0
  %839 = vmatpush1.msra.mxu0 0.0
  %840 = vmatprep.subr.mxu0 0.0
  %841 = vmatpush1.msra.mxu0 0.0
  %842 = vmatprep.subr.mxu0 0.0
  %843 = vmatpush1.msra.mxu0 0.0
  %844 = vmatprep.subr.mxu0 0.0
  %845 = vmatpush1.msra.mxu0 0.0
  %846 = vmatprep.subr.mxu0 0.0
  %847 = vmatpush1.msra.mxu0 0.0
  %848 = vmatprep.subr.mxu0 0.0
  %849 = vmatpush1.msra.mxu0 0.0
  %850 = vmatprep.subr.mxu0 0.0
  %851 = vmatpush1.msra.mxu0 0.0
  %852 = vmatprep.subr.mxu0 0.0
  %853 = vmatpush1.msra.mxu0 0.0
  %854 = vmatprep.subr.mxu0 0.0
  %855 = vmatpush1.msra.mxu0 0.0
  %856 = vmatprep.subr.mxu0 0.0
  %857 = vmatpush1.msra.mxu0 0.0
  %858 = vmatprep.subr.mxu0 0.0
  %859 = vmatpush1.msra.mxu0 0.0
  %860 = vmatprep.subr.mxu0 0.0
  %861 = vmatpush1.msra.mxu0 0.0
  %862 = vmatprep.subr.mxu0 0.0
  %863 = vmatpush1.msra.mxu0 0.0
  %864 = vmatprep.subr.mxu0 0.0
  %865 = vmatpush1.msra.mxu0 0.0
  %866 = vmatprep.subr.mxu0 0.0
  %867 = vmatpush1.msra.mxu0 0.0
  %868 = vmatprep.subr.mxu0 0.0
  %869 = vmatpush1.msra.mxu0 0.0
  %870 = vmatprep.subr.mxu0 0.0
  %871 = vmatpush1.msra.mxu0 0.0
  %872 = vmatprep.subr.mxu0 0.0
  %873 = vmatpush1.msra.mxu0 0.0
  %874 = vmatprep.subr.mxu0 0.0
  %875 = vmatpush1.msra.mxu0 0.0
  %876 = vmatprep.subr.mxu0 0.0
  %877 = vmatpush1.msra.mxu0 0.0
  %878 = vmatprep.subr.mxu0 0.0
  %879 = vmatpush1.msra.mxu0 0.0
  %880 = vmatprep.subr.mxu0 0.0
  %881 = vmatpush1.msra.mxu0 0.0
  %882 = vmatprep.subr.mxu0 0.0
  %883 = vmatpush1.msra.mxu0 0.0
  %884 = vmatprep.mubr.f32.mxu0 0.0
  %885 = vmatmul.mubr.f32.gmra.mrb[0].mxu0 %v810
  %v886 = vpop.f32.mrb[0].mxu0
  %v887 = vadd.f32 0.0, %v886
  %v888 = vpop.f32.mrb[0].mxu0
  %v889 = vadd.f32 0.0, %v888
  %890 = vdwg.mxu0
  %891 = vmatprep.subr.mxu0 %v818
  %892 = vmatpush1.msra.mxu0 %v816
  %893 = vmatprep.subr.mxu0 0.0
  %894 = vmatpush1.msra.mxu0 0.0
  %895 = vmatprep.subr.mxu0 0.0
  %896 = vmatpush1.msra.mxu0 0.0
  %897 = vmatprep.subr.mxu0 0.0
  %898 = vmatpush1.msra.mxu0 0.0
  %899 = vmatprep.subr.mxu0 0.0
  %900 = vmatpush1.msra.mxu0 0.0
  %901 = vmatprep.subr.mxu0 0.0
  %902 = vmatpush1.msra.mxu0 0.0
  %903 = vmatprep.subr.mxu0 0.0
  %904 = vmatpush1.msra.mxu0 0.0
  %905 = vmatprep.subr.mxu0 0.0
  %906 = vmatpush1.msra.mxu0 0.0
  %907 = vmatprep.subr.mxu0 0.0
  %908 = vmatpush1.msra.mxu0 0.0
  %909 = vmatprep.subr.mxu0 0.0
  %910 = vmatpush1.msra.mxu0 0.0
  %911 = vmatprep.subr.mxu0 0.0
  %912 = vmatpush1.msra.mxu0 0.0
  %913 = vmatprep.subr.mxu0 0.0
  %914 = vmatpush1.msra.mxu0 0.0
  %915 = vmatprep.subr.mxu0 0.0
  %916 = vmatpush1.msra.mxu0 0.0
  %917 = vmatprep.subr.mxu0 0.0
  %918 = vmatpush1.msra.mxu0 0.0
  %919 = vmatprep.subr.mxu0 0.0
  %920 = vmatpush1.msra.mxu0 0.0
  %921 = vmatprep.subr.mxu0 0.0
  %922 = vmatpush1.msra.mxu0 0.0
  %923 = vmatprep.subr.mxu0 0.0
  %924 = vmatpush1.msra.mxu0 0.0
  %925 = vmatprep.subr.mxu0 0.0
  %926 = vmatpush1.msra.mxu0 0.0
  %927 = vmatprep.subr.mxu0 0.0
  %928 = vmatpush1.msra.mxu0 0.0
  %929 = vmatprep.subr.mxu0 0.0
  %930 = vmatpush1.msra.mxu0 0.0
  %931 = vmatprep.subr.mxu0 0.0
  %932 = vmatpush1.msra.mxu0 0.0
  %933 = vmatprep.subr.mxu0 0.0
  %934 = vmatpush1.msra.mxu0 0.0
  %935 = vmatprep.subr.mxu0 0.0
  %936 = vmatpush1.msra.mxu0 0.0
  %937 = vmatprep.subr.mxu0 0.0
  %938 = vmatpush1.msra.mxu0 0.0
  %939 = vmatprep.subr.mxu0 0.0
  %940 = vmatpush1.msra.mxu0 0.0
  %941 = vmatprep.subr.mxu0 0.0
  %942 = vmatpush1.msra.mxu0 0.0
  %943 = vmatprep.subr.mxu0 0.0
  %944 = vmatpush1.msra.mxu0 0.0
  %945 = vmatprep.subr.mxu0 0.0
  %946 = vmatpush1.msra.mxu0 0.0
  %947 = vmatprep.subr.mxu0 0.0
  %948 = vmatpush1.msra.mxu0 0.0
  %949 = vmatprep.subr.mxu0 0.0
  %950 = vmatpush1.msra.mxu0 0.0
  %951 = vmatprep.subr.mxu0 0.0
  %952 = vmatpush1.msra.mxu0 0.0
  %953 = vmatprep.subr.mxu0 0.0
  %954 = vmatpush1.msra.mxu0 0.0
  %955 = vmatprep.mubr.f32.mxu0 0.0
  %956 = vmatmul.mubr.f32.gmra.mrb[0].mxu0 %v810
  %v957 = vpop.f32.mrb[0].mxu0
  %v958 = vadd.f32 0.0, %v957
  %v959 = vpop.f32.mrb[0].mxu0
  %v960 = vadd.f32 0.0, %v959
  %961 = vdwg.mxu0
  %963 = vset.pattern.permute.xlu0 0
  %964 = vperm.xlu0 %963, %v794
  %v965 = vpop.permute.xlu0 %964
  %v966 = vlaneseq
  %v967 = vshrl.u32 %v966, 7
  %v968 = vsub.s32 %v615, %v967
  %v969 = vrot.slane %v965, %v968
  %v970 = vcombine.high %v25, %v25
  %v971 = vcombine.high %v26, %v26
  %v972 = vsel %vm809, %v969, 0
  %v974 = vsel %vm560, %v25, 0
  %v976 = vsel %vm560, %v970, 0
  %v978 = vsel %vm560, %v26, 0
  %v980 = vsel %vm560, %v971, 0
  %982 = vmatprep.subr.mxu0 %v976
  %983 = vmatpush1.msra.mxu0 %v974
  %984 = vmatprep.subr.mxu0 0.0
  %985 = vmatpush1.msra.mxu0 0.0
  %986 = vmatprep.subr.mxu0 0.0
  %987 = vmatpush1.msra.mxu0 0.0
  %988 = vmatprep.subr.mxu0 0.0
  %989 = vmatpush1.msra.mxu0 0.0
  %990 = vmatprep.subr.mxu0 0.0
  %991 = vmatpush1.msra.mxu0 0.0
  %992 = vmatprep.subr.mxu0 0.0
  %993 = vmatpush1.msra.mxu0 0.0
  %994 = vmatprep.subr.mxu0 0.0
  %995 = vmatpush1.msra.mxu0 0.0
  %996 = vmatprep.subr.mxu0 0.0
  %997 = vmatpush1.msra.mxu0 0.0
  %998 = vmatprep.subr.mxu0 0.0
  %999 = vmatpush1.msra.mxu0 0.0
  %1000 = vmatprep.subr.mxu0 0.0
  %1001 = vmatpush1.msra.mxu0 0.0
  %1002 = vmatprep.subr.mxu0 0.0
  %1003 = vmatpush1.msra.mxu0 0.0
  %1004 = vmatprep.subr.mxu0 0.0
  %1005 = vmatpush1.msra.mxu0 0.0
  %1006 = vmatprep.subr.mxu0 0.0
  %1007 = vmatpush1.msra.mxu0 0.0
  %1008 = vmatprep.subr.mxu0 0.0
  %1009 = vmatpush1.msra.mxu0 0.0
  %1010 = vmatprep.subr.mxu0 0.0
  %1011 = vmatpush1.msra.mxu0 0.0
  %1012 = vmatprep.subr.mxu0 0.0
  %1013 = vmatpush1.msra.mxu0 0.0
  %1014 = vmatprep.subr.mxu0 0.0
  %1015 = vmatpush1.msra.mxu0 0.0
  %1016 = vmatprep.subr.mxu0 0.0
  %1017 = vmatpush1.msra.mxu0 0.0
  %1018 = vmatprep.subr.mxu0 0.0
  %1019 = vmatpush1.msra.mxu0 0.0
  %1020 = vmatprep.subr.mxu0 0.0
  %1021 = vmatpush1.msra.mxu0 0.0
  %1022 = vmatprep.subr.mxu0 0.0
  %1023 = vmatpush1.msra.mxu0 0.0
  %1024 = vmatprep.subr.mxu0 0.0
  %1025 = vmatpush1.msra.mxu0 0.0
  %1026 = vmatprep.subr.mxu0 0.0
  %1027 = vmatpush1.msra.mxu0 0.0
  %1028 = vmatprep.subr.mxu0 0.0
  %1029 = vmatpush1.msra.mxu0 0.0
  %1030 = vmatprep.subr.mxu0 0.0
  %1031 = vmatpush1.msra.mxu0 0.0
  %1032 = vmatprep.subr.mxu0 0.0
  %1033 = vmatpush1.msra.mxu0 0.0
  %1034 = vmatprep.subr.mxu0 0.0
  %1035 = vmatpush1.msra.mxu0 0.0
  %1036 = vmatprep.subr.mxu0 0.0
  %1037 = vmatpush1.msra.mxu0 0.0
  %1038 = vmatprep.subr.mxu0 0.0
  %1039 = vmatpush1.msra.mxu0 0.0
  %1040 = vmatprep.subr.mxu0 0.0
  %1041 = vmatpush1.msra.mxu0 0.0
  %1042 = vmatprep.subr.mxu0 0.0
  %1043 = vmatpush1.msra.mxu0 0.0
  %1044 = vmatprep.subr.mxu0 0.0
  %1045 = vmatpush1.msra.mxu0 0.0
  %1046 = vmatprep.mubr.f32.mxu0 0.0
  %1047 = vmatmul.mubr.f32.gmra.mrb[0].mxu0 %v972
  %v1048 = vpop.f32.mrb[0].mxu0
  %v1049 = vadd.f32 0.0, %v1048
  %v1050 = vpop.f32.mrb[0].mxu0
  %v1051 = vadd.f32 0.0, %v1050
  %1052 = vdwg.mxu0
  %1053 = vmatprep.subr.mxu0 %v980
  %1054 = vmatpush1.msra.mxu0 %v978
  %1055 = vmatprep.subr.mxu0 0.0
  %1056 = vmatpush1.msra.mxu0 0.0
  %1057 = vmatprep.subr.mxu0 0.0
  %1058 = vmatpush1.msra.mxu0 0.0
  %1059 = vmatprep.subr.mxu0 0.0
  %1060 = vmatpush1.msra.mxu0 0.0
  %1061 = vmatprep.subr.mxu0 0.0
  %1062 = vmatpush1.msra.mxu0 0.0
  %1063 = vmatprep.subr.mxu0 0.0
  %1064 = vmatpush1.msra.mxu0 0.0
  %1065 = vmatprep.subr.mxu0 0.0
  %1066 = vmatpush1.msra.mxu0 0.0
  %1067 = vmatprep.subr.mxu0 0.0
  %1068 = vmatpush1.msra.mxu0 0.0
  %1069 = vmatprep.subr.mxu0 0.0
  %1070 = vmatpush1.msra.mxu0 0.0
  %1071 = vmatprep.subr.mxu0 0.0
  %1072 = vmatpush1.msra.mxu0 0.0
  %1073 = vmatprep.subr.mxu0 0.0
  %1074 = vmatpush1.msra.mxu0 0.0
  %1075 = vmatprep.subr.mxu0 0.0
  %1076 = vmatpush1.msra.mxu0 0.0
  %1077 = vmatprep.subr.mxu0 0.0
  %1078 = vmatpush1.msra.mxu0 0.0
  %1079 = vmatprep.subr.mxu0 0.0
  %1080 = vmatpush1.msra.mxu0 0.0
  %1081 = vmatprep.subr.mxu0 0.0
  %1082 = vmatpush1.msra.mxu0 0.0
  %1083 = vmatprep.subr.mxu0 0.0
  %1084 = vmatpush1.msra.mxu0 0.0
  %1085 = vmatprep.subr.mxu0 0.0
  %1086 = vmatpush1.msra.mxu0 0.0
  %1087 = vmatprep.subr.mxu0 0.0
  %1088 = vmatpush1.msra.mxu0 0.0
  %1089 = vmatprep.subr.mxu0 0.0
  %1090 = vmatpush1.msra.mxu0 0.0
  %1091 = vmatprep.subr.mxu0 0.0
  %1092 = vmatpush1.msra.mxu0 0.0
  %1093 = vmatprep.subr.mxu0 0.0
  %1094 = vmatpush1.msra.mxu0 0.0
  %1095 = vmatprep.subr.mxu0 0.0
  %1096 = vmatpush1.msra.mxu0 0.0
  %1097 = vmatprep.subr.mxu0 0.0
  %1098 = vmatpush1.msra.mxu0 0.0
  %1099 = vmatprep.subr.mxu0 0.0
  %1100 = vmatpush1.msra.mxu0 0.0
  %1101 = vmatprep.subr.mxu0 0.0
  %1102 = vmatpush1.msra.mxu0 0.0
  %1103 = vmatprep.subr.mxu0 0.0
  %1104 = vmatpush1.msra.mxu0 0.0
  %1105 = vmatprep.subr.mxu0 0.0
  %1106 = vmatpush1.msra.mxu0 0.0
  %1107 = vmatprep.subr.mxu0 0.0
  %1108 = vmatpush1.msra.mxu0 0.0
  %1109 = vmatprep.subr.mxu0 0.0
  %1110 = vmatpush1.msra.mxu0 0.0
  %1111 = vmatprep.subr.mxu0 0.0
  %1112 = vmatpush1.msra.mxu0 0.0
  %1113 = vmatprep.subr.mxu0 0.0
  %1114 = vmatpush1.msra.mxu0 0.0
  %1115 = vmatprep.subr.mxu0 0.0
  %1116 = vmatpush1.msra.mxu0 0.0
  %1117 = vmatprep.mubr.f32.mxu0 0.0
  %1118 = vmatmul.mubr.f32.gmra.mrb[0].mxu0 %v972
  %v1119 = vpop.f32.mrb[0].mxu0
  %v1120 = vadd.f32 0.0, %v1119
  %v1121 = vpop.f32.mrb[0].mxu0
  %v1122 = vadd.f32 0.0, %v1121
  %1123 = vdwg.mxu0
  %1125 = vset.pattern.permute.xlu0 0
  %1126 = vperm.xlu0 %1125, %v795
  %v1127 = vpop.permute.xlu0 %1126
  %v1128 = vlaneseq
  %v1129 = vshrl.u32 %v1128, 7
  %v1130 = vsub.s32 %v615, %v1129
  %v1131 = vrot.slane %v1127, %v1130
  %v1132 = vcombine.high %v27, %v27
  %v1133 = vcombine.high %v28, %v28
  %v1134 = vsel %vm809, %v1131, 0
  %v1136 = vsel %vm560, %v27, 0
  %v1138 = vsel %vm560, %v1132, 0
  %v1140 = vsel %vm560, %v28, 0
  %v1142 = vsel %vm560, %v1133, 0
  %1144 = vmatprep.subr.mxu0 %v1138
  %1145 = vmatpush1.msra.mxu0 %v1136
  %1146 = vmatprep.subr.mxu0 0.0
  %1147 = vmatpush1.msra.mxu0 0.0
  %1148 = vmatprep.subr.mxu0 0.0
  %1149 = vmatpush1.msra.mxu0 0.0
  %1150 = vmatprep.subr.mxu0 0.0
  %1151 = vmatpush1.msra.mxu0 0.0
  %1152 = vmatprep.subr.mxu0 0.0
  %1153 = vmatpush1.msra.mxu0 0.0
  %1154 = vmatprep.subr.mxu0 0.0
  %1155 = vmatpush1.msra.mxu0 0.0
  %1156 = vmatprep.subr.mxu0 0.0
  %1157 = vmatpush1.msra.mxu0 0.0
  %1158 = vmatprep.subr.mxu0 0.0
  %1159 = vmatpush1.msra.mxu0 0.0
  %1160 = vmatprep.subr.mxu0 0.0
  %1161 = vmatpush1.msra.mxu0 0.0
  %1162 = vmatprep.subr.mxu0 0.0
  %1163 = vmatpush1.msra.mxu0 0.0
  %1164 = vmatprep.subr.mxu0 0.0
  %1165 = vmatpush1.msra.mxu0 0.0
  %1166 = vmatprep.subr.mxu0 0.0
  %1167 = vmatpush1.msra.mxu0 0.0
  %1168 = vmatprep.subr.mxu0 0.0
  %1169 = vmatpush1.msra.mxu0 0.0
  %1170 = vmatprep.subr.mxu0 0.0
  %1171 = vmatpush1.msra.mxu0 0.0
  %1172 = vmatprep.subr.mxu0 0.0
  %1173 = vmatpush1.msra.mxu0 0.0
  %1174 = vmatprep.subr.mxu0 0.0
  %1175 = vmatpush1.msra.mxu0 0.0
  %1176 = vmatprep.subr.mxu0 0.0
  %1177 = vmatpush1.msra.mxu0 0.0
  %1178 = vmatprep.subr.mxu0 0.0
  %1179 = vmatpush1.msra.mxu0 0.0
  %1180 = vmatprep.subr.mxu0 0.0
  %1181 = vmatpush1.msra.mxu0 0.0
  %1182 = vmatprep.subr.mxu0 0.0
  %1183 = vmatpush1.msra.mxu0 0.0
  %1184 = vmatprep.subr.mxu0 0.0
  %1185 = vmatpush1.msra.mxu0 0.0
  %1186 = vmatprep.subr.mxu0 0.0
  %1187 = vmatpush1.msra.mxu0 0.0
  %1188 = vmatprep.subr.mxu0 0.0
  %1189 = vmatpush1.msra.mxu0 0.0
  %1190 = vmatprep.subr.mxu0 0.0
  %1191 = vmatpush1.msra.mxu0 0.0
  %1192 = vmatprep.subr.mxu0 0.0
  %1193 = vmatpush1.msra.mxu0 0.0
  %1194 = vmatprep.subr.mxu0 0.0
  %1195 = vmatpush1.msra.mxu0 0.0
  %1196 = vmatprep.subr.mxu0 0.0
  %1197 = vmatpush1.msra.mxu0 0.0
  %1198 = vmatprep.subr.mxu0 0.0
  %1199 = vmatpush1.msra.mxu0 0.0
  %1200 = vmatprep.subr.mxu0 0.0
  %1201 = vmatpush1.msra.mxu0 0.0
  %1202 = vmatprep.subr.mxu0 0.0
  %1203 = vmatpush1.msra.mxu0 0.0
  %1204 = vmatprep.subr.mxu0 0.0
  %1205 = vmatpush1.msra.mxu0 0.0
  %1206 = vmatprep.subr.mxu0 0.0
  %1207 = vmatpush1.msra.mxu0 0.0
  %1208 = vmatprep.mubr.f32.mxu0 0.0
  %1209 = vmatmul.mubr.f32.gmra.mrb[0].mxu0 %v1134
  %v1210 = vpop.f32.mrb[0].mxu0
  %v1211 = vadd.f32 0.0, %v1210
  %v1212 = vpop.f32.mrb[0].mxu0
  %v1213 = vadd.f32 0.0, %v1212
  %1214 = vdwg.mxu0
  %1215 = vmatprep.subr.mxu0 %v1142
  %1216 = vmatpush1.msra.mxu0 %v1140
  %1217 = vmatprep.subr.mxu0 0.0
  %1218 = vmatpush1.msra.mxu0 0.0
  %1219 = vmatprep.subr.mxu0 0.0
  %1220 = vmatpush1.msra.mxu0 0.0
  %1221 = vmatprep.subr.mxu0 0.0
  %1222 = vmatpush1.msra.mxu0 0.0
  %1223 = vmatprep.subr.mxu0 0.0
  %1224 = vmatpush1.msra.mxu0 0.0
  %1225 = vmatprep.subr.mxu0 0.0
  %1226 = vmatpush1.msra.mxu0 0.0
  %1227 = vmatprep.subr.mxu0 0.0
  %1228 = vmatpush1.msra.mxu0 0.0
  %1229 = vmatprep.subr.mxu0 0.0
  %1230 = vmatpush1.msra.mxu0 0.0
  %1231 = vmatprep.subr.mxu0 0.0
  %1232 = vmatpush1.msra.mxu0 0.0
  %1233 = vmatprep.subr.mxu0 0.0
  %1234 = vmatpush1.msra.mxu0 0.0
  %1235 = vmatprep.subr.mxu0 0.0
  %1236 = vmatpush1.msra.mxu0 0.0
  %1237 = vmatprep.subr.mxu0 0.0
  %1238 = vmatpush1.msra.mxu0 0.0
  %1239 = vmatprep.subr.mxu0 0.0
  %1240 = vmatpush1.msra.mxu0 0.0
  %1241 = vmatprep.subr.mxu0 0.0
  %1242 = vmatpush1.msra.mxu0 0.0
  %1243 = vmatprep.subr.mxu0 0.0
  %1244 = vmatpush1.msra.mxu0 0.0
  %1245 = vmatprep.subr.mxu0 0.0
  %1246 = vmatpush1.msra.mxu0 0.0
  %1247 = vmatprep.subr.mxu0 0.0
  %1248 = vmatpush1.msra.mxu0 0.0
  %1249 = vmatprep.subr.mxu0 0.0
  %1250 = vmatpush1.msra.mxu0 0.0
  %1251 = vmatprep.subr.mxu0 0.0
  %1252 = vmatpush1.msra.mxu0 0.0
  %1253 = vmatprep.subr.mxu0 0.0
  %1254 = vmatpush1.msra.mxu0 0.0
  %1255 = vmatprep.subr.mxu0 0.0
  %1256 = vmatpush1.msra.mxu0 0.0
  %1257 = vmatprep.subr.mxu0 0.0
  %1258 = vmatpush1.msra.mxu0 0.0
  %1259 = vmatprep.subr.mxu0 0.0
  %1260 = vmatpush1.msra.mxu0 0.0
  %1261 = vmatprep.subr.mxu0 0.0
  %1262 = vmatpush1.msra.mxu0 0.0
  %1263 = vmatprep.subr.mxu0 0.0
  %1264 = vmatpush1.msra.mxu0 0.0
  %1265 = vmatprep.subr.mxu0 0.0
  %1266 = vmatpush1.msra.mxu0 0.0
  %1267 = vmatprep.subr.mxu0 0.0
  %1268 = vmatpush1.msra.mxu0 0.0
  %1269 = vmatprep.subr.mxu0 0.0
  %1270 = vmatpush1.msra.mxu0 0.0
  %1271 = vmatprep.subr.mxu0 0.0
  %1272 = vmatpush1.msra.mxu0 0.0
  %1273 = vmatprep.subr.mxu0 0.0
  %1274 = vmatpush1.msra.mxu0 0.0
  %1275 = vmatprep.subr.mxu0 0.0
  %1276 = vmatpush1.msra.mxu0 0.0
  %1277 = vmatprep.subr.mxu0 0.0
  %1278 = vmatpush1.msra.mxu0 0.0
  %1279 = vmatprep.mubr.f32.mxu0 0.0
  %1280 = vmatmul.mubr.f32.gmra.mrb[0].mxu0 %v1134
  %v1281 = vpop.f32.mrb[0].mxu0
  %v1282 = vadd.f32 0.0, %v1281
  %v1283 = vpop.f32.mrb[0].mxu0
  %v1284 = vadd.f32 0.0, %v1283
  %1285 = vdwg.mxu0
  %1287 = vset.pattern.permute.xlu0 0
  %1288 = vperm.xlu0 %1287, %v796
  %v1289 = vpop.permute.xlu0 %1288
  %v1290 = vlaneseq
  %v1291 = vshrl.u32 %v1290, 7
  %v1292 = vsub.s32 %v615, %v1291
  %v1293 = vrot.slane %v1289, %v1292
  %v1294 = vcombine.high %v29, %v29
  %v1295 = vcombine.high %v30, %v30
  %v1296 = vsel %vm809, %v1293, 0
  %v1298 = vsel %vm560, %v29, 0
  %v1300 = vsel %vm560, %v1294, 0
  %v1302 = vsel %vm560, %v30, 0
  %v1304 = vsel %vm560, %v1295, 0
  %1306 = vmatprep.subr.mxu0 %v1300
  %1307 = vmatpush1.msra.mxu0 %v1298
  %1308 = vmatprep.subr.mxu0 0.0
  %1309 = vmatpush1.msra.mxu0 0.0
  %1310 = vmatprep.subr.mxu0 0.0
  %1311 = vmatpush1.msra.mxu0 0.0
  %1312 = vmatprep.subr.mxu0 0.0
  %1313 = vmatpush1.msra.mxu0 0.0
  %1314 = vmatprep.subr.mxu0 0.0
  %1315 = vmatpush1.msra.mxu0 0.0
  %1316 = vmatprep.subr.mxu0 0.0
  %1317 = vmatpush1.msra.mxu0 0.0
  %1318 = vmatprep.subr.mxu0 0.0
  %1319 = vmatpush1.msra.mxu0 0.0
  %1320 = vmatprep.subr.mxu0 0.0
  %1321 = vmatpush1.msra.mxu0 0.0
  %1322 = vmatprep.subr.mxu0 0.0
  %1323 = vmatpush1.msra.mxu0 0.0
  %1324 = vmatprep.subr.mxu0 0.0
  %1325 = vmatpush1.msra.mxu0 0.0
  %1326 = vmatprep.subr.mxu0 0.0
  %1327 = vmatpush1.msra.mxu0 0.0
  %1328 = vmatprep.subr.mxu0 0.0
  %1329 = vmatpush1.msra.mxu0 0.0
  %1330 = vmatprep.subr.mxu0 0.0
  %1331 = vmatpush1.msra.mxu0 0.0
  %1332 = vmatprep.subr.mxu0 0.0
  %1333 = vmatpush1.msra.mxu0 0.0
  %1334 = vmatprep.subr.mxu0 0.0
  %1335 = vmatpush1.msra.mxu0 0.0
  %1336 = vmatprep.subr.mxu0 0.0
  %1337 = vmatpush1.msra.mxu0 0.0
  %1338 = vmatprep.subr.mxu0 0.0
  %1339 = vmatpush1.msra.mxu0 0.0
  %1340 = vmatprep.subr.mxu0 0.0
  %1341 = vmatpush1.msra.mxu0 0.0
  %1342 = vmatprep.subr.mxu0 0.0
  %1343 = vmatpush1.msra.mxu0 0.0
  %1344 = vmatprep.subr.mxu0 0.0
  %1345 = vmatpush1.msra.mxu0 0.0
  %1346 = vmatprep.subr.mxu0 0.0
  %1347 = vmatpush1.msra.mxu0 0.0
  %1348 = vmatprep.subr.mxu0 0.0
  %1349 = vmatpush1.msra.mxu0 0.0
  %1350 = vmatprep.subr.mxu0 0.0
  %1351 = vmatpush1.msra.mxu0 0.0
  %1352 = vmatprep.subr.mxu0 0.0
  %1353 = vmatpush1.msra.mxu0 0.0
  %1354 = vmatprep.subr.mxu0 0.0
  %1355 = vmatpush1.msra.mxu0 0.0
  %1356 = vmatprep.subr.mxu0 0.0
  %1357 = vmatpush1.msra.mxu0 0.0
  %1358 = vmatprep.subr.mxu0 0.0
  %1359 = vmatpush1.msra.mxu0 0.0
  %1360 = vmatprep.subr.mxu0 0.0
  %1361 = vmatpush1.msra.mxu0 0.0
  %1362 = vmatprep.subr.mxu0 0.0
  %1363 = vmatpush1.msra.mxu0 0.0
  %1364 = vmatprep.subr.mxu0 0.0
  %1365 = vmatpush1.msra.mxu0 0.0
  %1366 = vmatprep.subr.mxu0 0.0
  %1367 = vmatpush1.msra.mxu0 0.0
  %1368 = vmatprep.subr.mxu0 0.0
  %1369 = vmatpush1.msra.mxu0 0.0
  %1370 = vmatprep.mubr.f32.mxu0 0.0
  %1371 = vmatmul.mubr.f32.gmra.mrb[0].mxu0 %v1296
  %v1372 = vpop.f32.mrb[0].mxu0
  %v1373 = vadd.f32 0.0, %v1372
  %v1374 = vpop.f32.mrb[0].mxu0
  %v1375 = vadd.f32 0.0, %v1374
  %1376 = vdwg.mxu0
  %1377 = vmatprep.subr.mxu0 %v1304
  %1378 = vmatpush1.msra.mxu0 %v1302
  %1379 = vmatprep.subr.mxu0 0.0
  %1380 = vmatpush1.msra.mxu0 0.0
  %1381 = vmatprep.subr.mxu0 0.0
  %1382 = vmatpush1.msra.mxu0 0.0
  %1383 = vmatprep.subr.mxu0 0.0
  %1384 = vmatpush1.msra.mxu0 0.0
  %1385 = vmatprep.subr.mxu0 0.0
  %1386 = vmatpush1.msra.mxu0 0.0
  %1387 = vmatprep.subr.mxu0 0.0
  %1388 = vmatpush1.msra.mxu0 0.0
  %1389 = vmatprep.subr.mxu0 0.0
  %1390 = vmatpush1.msra.mxu0 0.0
  %1391 = vmatprep.subr.mxu0 0.0
  %1392 = vmatpush1.msra.mxu0 0.0
  %1393 = vmatprep.subr.mxu0 0.0
  %1394 = vmatpush1.msra.mxu0 0.0
  %1395 = vmatprep.subr.mxu0 0.0
  %1396 = vmatpush1.msra.mxu0 0.0
  %1397 = vmatprep.subr.mxu0 0.0
  %1398 = vmatpush1.msra.mxu0 0.0
  %1399 = vmatprep.subr.mxu0 0.0
  %1400 = vmatpush1.msra.mxu0 0.0
  %1401 = vmatprep.subr.mxu0 0.0
  %1402 = vmatpush1.msra.mxu0 0.0
  %1403 = vmatprep.subr.mxu0 0.0
  %1404 = vmatpush1.msra.mxu0 0.0
  %1405 = vmatprep.subr.mxu0 0.0
  %1406 = vmatpush1.msra.mxu0 0.0
  %1407 = vmatprep.subr.mxu0 0.0
  %1408 = vmatpush1.msra.mxu0 0.0
  %1409 = vmatprep.subr.mxu0 0.0
  %1410 = vmatpush1.msra.mxu0 0.0
  %1411 = vmatprep.subr.mxu0 0.0
  %1412 = vmatpush1.msra.mxu0 0.0
  %1413 = vmatprep.subr.mxu0 0.0
  %1414 = vmatpush1.msra.mxu0 0.0
  %1415 = vmatprep.subr.mxu0 0.0
  %1416 = vmatpush1.msra.mxu0 0.0
  %1417 = vmatprep.subr.mxu0 0.0
  %1418 = vmatpush1.msra.mxu0 0.0
  %1419 = vmatprep.subr.mxu0 0.0
  %1420 = vmatpush1.msra.mxu0 0.0
  %1421 = vmatprep.subr.mxu0 0.0
  %1422 = vmatpush1.msra.mxu0 0.0
  %1423 = vmatprep.subr.mxu0 0.0
  %1424 = vmatpush1.msra.mxu0 0.0
  %1425 = vmatprep.subr.mxu0 0.0
  %1426 = vmatpush1.msra.mxu0 0.0
  %1427 = vmatprep.subr.mxu0 0.0
  %1428 = vmatpush1.msra.mxu0 0.0
  %1429 = vmatprep.subr.mxu0 0.0
  %1430 = vmatpush1.msra.mxu0 0.0
  %1431 = vmatprep.subr.mxu0 0.0
  %1432 = vmatpush1.msra.mxu0 0.0
  %1433 = vmatprep.subr.mxu0 0.0
  %1434 = vmatpush1.msra.mxu0 0.0
  %1435 = vmatprep.subr.mxu0 0.0
  %1436 = vmatpush1.msra.mxu0 0.0
  %1437 = vmatprep.subr.mxu0 0.0
  %1438 = vmatpush1.msra.mxu0 0.0
  %1439 = vmatprep.subr.mxu0 0.0
  %1440 = vmatpush1.msra.mxu0 0.0
  %1441 = vmatprep.mubr.f32.mxu0 0.0
  %1442 = vmatmul.mubr.f32.gmra.mrb[0].mxu0 %v1296
  %v1443 = vpop.f32.mrb[0].mxu0
  %v1444 = vadd.f32 0.0, %v1443
  %v1445 = vpop.f32.mrb[0].mxu0
  %v1446 = vadd.f32 0.0, %v1445
  %1447 = vdwg.mxu0
  %1449 = vset.pattern.permute.xlu0 0
  %1450 = vperm.xlu0 %1449, %v797
  %v1451 = vpop.permute.xlu0 %1450
  %v1452 = vlaneseq
  %v1453 = vshrl.u32 %v1452, 7
  %v1454 = vsub.s32 %v615, %v1453
  %v1455 = vrot.slane %v1451, %v1454
  %v1456 = vcombine.high %v31, %v31
  %v1457 = vcombine.high %v32, %v32
  %v1458 = vsel %vm809, %v1455, 0
  %v1460 = vsel %vm560, %v31, 0
  %v1462 = vsel %vm560, %v1456, 0
  %v1464 = vsel %vm560, %v32, 0
  %v1466 = vsel %vm560, %v1457, 0
  %1468 = vmatprep.subr.mxu0 %v1462
  %1469 = vmatpush1.msra.mxu0 %v1460
  %1470 = vmatprep.subr.mxu0 0.0
  %1471 = vmatpush1.msra.mxu0 0.0
  %1472 = vmatprep.subr.mxu0 0.0
  %1473 = vmatpush1.msra.mxu0 0.0
  %1474 = vmatprep.subr.mxu0 0.0
  %1475 = vmatpush1.msra.mxu0 0.0
  %1476 = vmatprep.subr.mxu0 0.0
  %1477 = vmatpush1.msra.mxu0 0.0
  %1478 = vmatprep.subr.mxu0 0.0
  %1479 = vmatpush1.msra.mxu0 0.0
  %1480 = vmatprep.subr.mxu0 0.0
  %1481 = vmatpush1.msra.mxu0 0.0
  %1482 = vmatprep.subr.mxu0 0.0
  %1483 = vmatpush1.msra.mxu0 0.0
  %1484 = vmatprep.subr.mxu0 0.0
  %1485 = vmatpush1.msra.mxu0 0.0
  %1486 = vmatprep.subr.mxu0 0.0
  %1487 = vmatpush1.msra.mxu0 0.0
  %1488 = vmatprep.subr.mxu0 0.0
  %1489 = vmatpush1.msra.mxu0 0.0
  %1490 = vmatprep.subr.mxu0 0.0
  %1491 = vmatpush1.msra.mxu0 0.0
  %1492 = vmatprep.subr.mxu0 0.0
  %1493 = vmatpush1.msra.mxu0 0.0
  %1494 = vmatprep.subr.mxu0 0.0
  %1495 = vmatpush1.msra.mxu0 0.0
  %1496 = vmatprep.subr.mxu0 0.0
  %1497 = vmatpush1.msra.mxu0 0.0
  %1498 = vmatprep.subr.mxu0 0.0
  %1499 = vmatpush1.msra.mxu0 0.0
  %1500 = vmatprep.subr.mxu0 0.0
  %1501 = vmatpush1.msra.mxu0 0.0
  %1502 = vmatprep.subr.mxu0 0.0
  %1503 = vmatpush1.msra.mxu0 0.0
  %1504 = vmatprep.subr.mxu0 0.0
  %1505 = vmatpush1.msra.mxu0 0.0
  %1506 = vmatprep.subr.mxu0 0.0
  %1507 = vmatpush1.msra.mxu0 0.0
  %1508 = vmatprep.subr.mxu0 0.0
  %1509 = vmatpush1.msra.mxu0 0.0
  %1510 = vmatprep.subr.mxu0 0.0
  %1511 = vmatpush1.msra.mxu0 0.0
  %1512 = vmatprep.subr.mxu0 0.0
  %1513 = vmatpush1.msra.mxu0 0.0
  %1514 = vmatprep.subr.mxu0 0.0
  %1515 = vmatpush1.msra.mxu0 0.0
  %1516 = vmatprep.subr.mxu0 0.0
  %1517 = vmatpush1.msra.mxu0 0.0
  %1518 = vmatprep.subr.mxu0 0.0
  %1519 = vmatpush1.msra.mxu0 0.0
  %1520 = vmatprep.subr.mxu0 0.0
  %1521 = vmatpush1.msra.mxu0 0.0
  %1522 = vmatprep.subr.mxu0 0.0
  %1523 = vmatpush1.msra.mxu0 0.0
  %1524 = vmatprep.subr.mxu0 0.0
  %1525 = vmatpush1.msra.mxu0 0.0
  %1526 = vmatprep.subr.mxu0 0.0
  %1527 = vmatpush1.msra.mxu0 0.0
  %1528 = vmatprep.subr.mxu0 0.0
  %1529 = vmatpush1.msra.mxu0 0.0
  %1530 = vmatprep.subr.mxu0 0.0
  %1531 = vmatpush1.msra.mxu0 0.0
  %1532 = vmatprep.mubr.f32.mxu0 0.0
  %1533 = vmatmul.mubr.f32.gmra.mrb[0].mxu0 %v1458
  %v1534 = vpop.f32.mrb[0].mxu0
  %v1535 = vadd.f32 0.0, %v1534
  %v1536 = vpop.f32.mrb[0].mxu0
  %v1537 = vadd.f32 0.0, %v1536
  %1538 = vdwg.mxu0
  %1539 = vmatprep.subr.mxu0 %v1466
  %1540 = vmatpush1.msra.mxu0 %v1464
  %1541 = vmatprep.subr.mxu0 0.0
  %1542 = vmatpush1.msra.mxu0 0.0
  %1543 = vmatprep.subr.mxu0 0.0
  %1544 = vmatpush1.msra.mxu0 0.0
  %1545 = vmatprep.subr.mxu0 0.0
  %1546 = vmatpush1.msra.mxu0 0.0
  %1547 = vmatprep.subr.mxu0 0.0
  %1548 = vmatpush1.msra.mxu0 0.0
  %1549 = vmatprep.subr.mxu0 0.0
  %1550 = vmatpush1.msra.mxu0 0.0
  %1551 = vmatprep.subr.mxu0 0.0
  %1552 = vmatpush1.msra.mxu0 0.0
  %1553 = vmatprep.subr.mxu0 0.0
  %1554 = vmatpush1.msra.mxu0 0.0
  %1555 = vmatprep.subr.mxu0 0.0
  %1556 = vmatpush1.msra.mxu0 0.0
  %1557 = vmatprep.subr.mxu0 0.0
  %1558 = vmatpush1.msra.mxu0 0.0
  %1559 = vmatprep.subr.mxu0 0.0
  %1560 = vmatpush1.msra.mxu0 0.0
  %1561 = vmatprep.subr.mxu0 0.0
  %1562 = vmatpush1.msra.mxu0 0.0
  %1563 = vmatprep.subr.mxu0 0.0
  %1564 = vmatpush1.msra.mxu0 0.0
  %1565 = vmatprep.subr.mxu0 0.0
  %1566 = vmatpush1.msra.mxu0 0.0
  %1567 = vmatprep.subr.mxu0 0.0
  %1568 = vmatpush1.msra.mxu0 0.0
  %1569 = vmatprep.subr.mxu0 0.0
  %1570 = vmatpush1.msra.mxu0 0.0
  %1571 = vmatprep.subr.mxu0 0.0
  %1572 = vmatpush1.msra.mxu0 0.0
  %1573 = vmatprep.subr.mxu0 0.0
  %1574 = vmatpush1.msra.mxu0 0.0
  %1575 = vmatprep.subr.mxu0 0.0
  %1576 = vmatpush1.msra.mxu0 0.0
  %1577 = vmatprep.subr.mxu0 0.0
  %1578 = vmatpush1.msra.mxu0 0.0
  %1579 = vmatprep.subr.mxu0 0.0
  %1580 = vmatpush1.msra.mxu0 0.0
  %1581 = vmatprep.subr.mxu0 0.0
  %1582 = vmatpush1.msra.mxu0 0.0
  %1583 = vmatprep.subr.mxu0 0.0
  %1584 = vmatpush1.msra.mxu0 0.0
  %1585 = vmatprep.subr.mxu0 0.0
  %1586 = vmatpush1.msra.mxu0 0.0
  %1587 = vmatprep.subr.mxu0 0.0
  %1588 = vmatpush1.msra.mxu0 0.0
  %1589 = vmatprep.subr.mxu0 0.0
  %1590 = vmatpush1.msra.mxu0 0.0
  %1591 = vmatprep.subr.mxu0 0.0
  %1592 = vmatpush1.msra.mxu0 0.0
  %1593 = vmatprep.subr.mxu0 0.0
  %1594 = vmatpush1.msra.mxu0 0.0
  %1595 = vmatprep.subr.mxu0 0.0
  %1596 = vmatpush1.msra.mxu0 0.0
  %1597 = vmatprep.subr.mxu0 0.0
  %1598 = vmatpush1.msra.mxu0 0.0
  %1599 = vmatprep.subr.mxu0 0.0
  %1600 = vmatpush1.msra.mxu0 0.0
  %1601 = vmatprep.subr.mxu0 0.0
  %1602 = vmatpush1.msra.mxu0 0.0
  %1603 = vmatprep.mubr.f32.mxu0 0.0
  %1604 = vmatmul.mubr.f32.gmra.mrb[0].mxu0 %v1458
  %v1605 = vpop.f32.mrb[0].mxu0
  %v1606 = vadd.f32 0.0, %v1605
  %v1607 = vpop.f32.mrb[0].mxu0
  %v1608 = vadd.f32 0.0, %v1607
  %1609 = vdwg.mxu0
  %1611 = vset.pattern.permute.xlu0 0
  %1612 = vperm.xlu0 %1611, %v798
  %v1613 = vpop.permute.xlu0 %1612
  %v1614 = vlaneseq
  %v1615 = vshrl.u32 %v1614, 7
  %v1616 = vsub.s32 %v615, %v1615
  %v1617 = vrot.slane %v1613, %v1616
  %v1618 = vcombine.high %v33, %v33
  %v1619 = vcombine.high %v34, %v34
  %v1620 = vsel %vm809, %v1617, 0
  %v1622 = vsel %vm560, %v33, 0
  %v1624 = vsel %vm560, %v1618, 0
  %v1626 = vsel %vm560, %v34, 0
  %v1628 = vsel %vm560, %v1619, 0
  %1630 = vmatprep.subr.mxu0 %v1624
  %1631 = vmatpush1.msra.mxu0 %v1622
  %1632 = vmatprep.subr.mxu0 0.0
  %1633 = vmatpush1.msra.mxu0 0.0
  %1634 = vmatprep.subr.mxu0 0.0
  %1635 = vmatpush1.msra.mxu0 0.0
  %1636 = vmatprep.subr.mxu0 0.0
  %1637 = vmatpush1.msra.mxu0 0.0
  %1638 = vmatprep.subr.mxu0 0.0
  %1639 = vmatpush1.msra.mxu0 0.0
  %1640 = vmatprep.subr.mxu0 0.0
  %1641 = vmatpush1.msra.mxu0 0.0
  %1642 = vmatprep.subr.mxu0 0.0
  %1643 = vmatpush1.msra.mxu0 0.0
  %1644 = vmatprep.subr.mxu0 0.0
  %1645 = vmatpush1.msra.mxu0 0.0
  %1646 = vmatprep.subr.mxu0 0.0
  %1647 = vmatpush1.msra.mxu0 0.0
  %1648 = vmatprep.subr.mxu0 0.0
  %1649 = vmatpush1.msra.mxu0 0.0
  %1650 = vmatprep.subr.mxu0 0.0
  %1651 = vmatpush1.msra.mxu0 0.0
  %1652 = vmatprep.subr.mxu0 0.0
  %1653 = vmatpush1.msra.mxu0 0.0
  %1654 = vmatprep.subr.mxu0 0.0
  %1655 = vmatpush1.msra.mxu0 0.0
  %1656 = vmatprep.subr.mxu0 0.0
  %1657 = vmatpush1.msra.mxu0 0.0
  %1658 = vmatprep.subr.mxu0 0.0
  %1659 = vmatpush1.msra.mxu0 0.0
  %1660 = vmatprep.subr.mxu0 0.0
  %1661 = vmatpush1.msra.mxu0 0.0
  %1662 = vmatprep.subr.mxu0 0.0
  %1663 = vmatpush1.msra.mxu0 0.0
  %1664 = vmatprep.subr.mxu0 0.0
  %1665 = vmatpush1.msra.mxu0 0.0
  %1666 = vmatprep.subr.mxu0 0.0
  %1667 = vmatpush1.msra.mxu0 0.0
  %1668 = vmatprep.subr.mxu0 0.0
  %1669 = vmatpush1.msra.mxu0 0.0
  %1670 = vmatprep.subr.mxu0 0.0
  %1671 = vmatpush1.msra.mxu0 0.0
  %1672 = vmatprep.subr.mxu0 0.0
  %1673 = vmatpush1.msra.mxu0 0.0
  %1674 = vmatprep.subr.mxu0 0.0
  %1675 = vmatpush1.msra.mxu0 0.0
  %1676 = vmatprep.subr.mxu0 0.0
  %1677 = vmatpush1.msra.mxu0 0.0
  %1678 = vmatprep.subr.mxu0 0.0
  %1679 = vmatpush1.msra.mxu0 0.0
  %1680 = vmatprep.subr.mxu0 0.0
  %1681 = vmatpush1.msra.mxu0 0.0
  %1682 = vmatprep.subr.mxu0 0.0
  %1683 = vmatpush1.msra.mxu0 0.0
  %1684 = vmatprep.subr.mxu0 0.0
  %1685 = vmatpush1.msra.mxu0 0.0
  %1686 = vmatprep.subr.mxu0 0.0
  %1687 = vmatpush1.msra.mxu0 0.0
  %1688 = vmatprep.subr.mxu0 0.0
  %1689 = vmatpush1.msra.mxu0 0.0
  %1690 = vmatprep.subr.mxu0 0.0
  %1691 = vmatpush1.msra.mxu0 0.0
  %1692 = vmatprep.subr.mxu0 0.0
  %1693 = vmatpush1.msra.mxu0 0.0
  %1694 = vmatprep.mubr.f32.mxu0 0.0
  %1695 = vmatmul.mubr.f32.gmra.mrb[0].mxu0 %v1620
  %v1696 = vpop.f32.mrb[0].mxu0
  %v1697 = vadd.f32 0.0, %v1696
  %v1698 = vpop.f32.mrb[0].mxu0
  %v1699 = vadd.f32 0.0, %v1698
  %1700 = vdwg.mxu0
  %1701 = vmatprep.subr.mxu0 %v1628
  %1702 = vmatpush1.msra.mxu0 %v1626
  %1703 = vmatprep.subr.mxu0 0.0
  %1704 = vmatpush1.msra.mxu0 0.0
  %1705 = vmatprep.subr.mxu0 0.0
  %1706 = vmatpush1.msra.mxu0 0.0
  %1707 = vmatprep.subr.mxu0 0.0
  %1708 = vmatpush1.msra.mxu0 0.0
  %1709 = vmatprep.subr.mxu0 0.0
  %1710 = vmatpush1.msra.mxu0 0.0
  %1711 = vmatprep.subr.mxu0 0.0
  %1712 = vmatpush1.msra.mxu0 0.0
  %1713 = vmatprep.subr.mxu0 0.0
  %1714 = vmatpush1.msra.mxu0 0.0
  %1715 = vmatprep.subr.mxu0 0.0
  %1716 = vmatpush1.msra.mxu0 0.0
  %1717 = vmatprep.subr.mxu0 0.0
  %1718 = vmatpush1.msra.mxu0 0.0
  %1719 = vmatprep.subr.mxu0 0.0
  %1720 = vmatpush1.msra.mxu0 0.0
  %1721 = vmatprep.subr.mxu0 0.0
  %1722 = vmatpush1.msra.mxu0 0.0
  %1723 = vmatprep.subr.mxu0 0.0
  %1724 = vmatpush1.msra.mxu0 0.0
  %1725 = vmatprep.subr.mxu0 0.0
  %1726 = vmatpush1.msra.mxu0 0.0
  %1727 = vmatprep.subr.mxu0 0.0
  %1728 = vmatpush1.msra.mxu0 0.0
  %1729 = vmatprep.subr.mxu0 0.0
  %1730 = vmatpush1.msra.mxu0 0.0
  %1731 = vmatprep.subr.mxu0 0.0
  %1732 = vmatpush1.msra.mxu0 0.0
  %1733 = vmatprep.subr.mxu0 0.0
  %1734 = vmatpush1.msra.mxu0 0.0
  %1735 = vmatprep.subr.mxu0 0.0
  %1736 = vmatpush1.msra.mxu0 0.0
  %1737 = vmatprep.subr.mxu0 0.0
  %1738 = vmatpush1.msra.mxu0 0.0
  %1739 = vmatprep.subr.mxu0 0.0
  %1740 = vmatpush1.msra.mxu0 0.0
  %1741 = vmatprep.subr.mxu0 0.0
  %1742 = vmatpush1.msra.mxu0 0.0
  %1743 = vmatprep.subr.mxu0 0.0
  %1744 = vmatpush1.msra.mxu0 0.0
  %1745 = vmatprep.subr.mxu0 0.0
  %1746 = vmatpush1.msra.mxu0 0.0
  %1747 = vmatprep.subr.mxu0 0.0
  %1748 = vmatpush1.msra.mxu0 0.0
  %1749 = vmatprep.subr.mxu0 0.0
  %1750 = vmatpush1.msra.mxu0 0.0
  %1751 = vmatprep.subr.mxu0 0.0
  %1752 = vmatpush1.msra.mxu0 0.0
  %1753 = vmatprep.subr.mxu0 0.0
  %1754 = vmatpush1.msra.mxu0 0.0
  %1755 = vmatprep.subr.mxu0 0.0
  %1756 = vmatpush1.msra.mxu0 0.0
  %1757 = vmatprep.subr.mxu0 0.0
  %1758 = vmatpush1.msra.mxu0 0.0
  %1759 = vmatprep.subr.mxu0 0.0
  %1760 = vmatpush1.msra.mxu0 0.0
  %1761 = vmatprep.subr.mxu0 0.0
  %1762 = vmatpush1.msra.mxu0 0.0
  %1763 = vmatprep.subr.mxu0 0.0
  %1764 = vmatpush1.msra.mxu0 0.0
  %1765 = vmatprep.mubr.f32.mxu0 0.0
  %1766 = vmatmul.mubr.f32.gmra.mrb[0].mxu0 %v1620
  %v1767 = vpop.f32.mrb[0].mxu0
  %v1768 = vadd.f32 0.0, %v1767
  %v1769 = vpop.f32.mrb[0].mxu0
  %v1770 = vadd.f32 0.0, %v1769
  %1771 = vdwg.mxu0
  %v1796 = vrot.slane %v1049, 7
  %v1797 = vsel %vm640, %v1796, %v887
  %v1798 = vrot.slane %v1211, 6
  %v1799 = vsel %vm642, %v1798, %v1797
  %v1800 = vrot.slane %v1373, 5
  %v1801 = vsel %vm644, %v1800, %v1799
  %v1802 = vrot.slane %v1535, 4
  %v1803 = vsel %vm646, %v1802, %v1801
  %v1804 = vrot.slane %v1697, 3
  %v1805 = vsel %vm648, %v1804, %v1803
  %v1806 = vrot.slane %v1051, 7
  %v1807 = vsel %vm640, %v1806, %v889
  %v1808 = vrot.slane %v1213, 6
  %v1809 = vsel %vm642, %v1808, %v1807
  %v1810 = vrot.slane %v1375, 5
  %v1811 = vsel %vm644, %v1810, %v1809
  %v1812 = vrot.slane %v1537, 4
  %v1813 = vsel %vm646, %v1812, %v1811
  %v1814 = vrot.slane %v1699, 3
  %v1815 = vsel %vm648, %v1814, %v1813
  %v1816 = vrot.slane %v1120, 7
  %v1817 = vsel %vm640, %v1816, %v958
  %v1818 = vrot.slane %v1282, 6
  %v1819 = vsel %vm642, %v1818, %v1817
  %v1820 = vrot.slane %v1444, 5
  %v1821 = vsel %vm644, %v1820, %v1819
  %v1822 = vrot.slane %v1606, 4
  %v1823 = vsel %vm646, %v1822, %v1821
  %v1824 = vrot.slane %v1768, 3
  %v1825 = vsel %vm648, %v1824, %v1823
  %v1826 = vrot.slane %v1122, 7
  %v1827 = vsel %vm640, %v1826, %v960
  %v1828 = vrot.slane %v1284, 6
  %v1829 = vsel %vm642, %v1828, %v1827
  %v1830 = vrot.slane %v1446, 5
  %v1831 = vsel %vm644, %v1830, %v1829
  %v1832 = vrot.slane %v1608, 4
  %v1833 = vsel %vm646, %v1832, %v1831
  %v1834 = vrot.slane %v1770, 3
  %v1835 = vsel %vm648, %v1834, %v1833
  %1840 = vst [vmem:[%s5] sm:$0x3f] %v1805
  %1841 = vst [vmem:[%s5 + $0x8] sm:$0x3f] %v1815
  %1842 = vst [vmem:[%s5 + $0x10] sm:$0x3f] %v1825
  %vm1843 = vcmask 128000
  %1844 = vst.msk [vmem:[%s5 + $0x18] sm:$0x3f] %vm1843, %v1835
  // Predicated region
  $region22: #{naml_forward.9} parent=0 // pred_check
    _
  $region23: #{naml_forward.9} parent=0 // pred_check_branch
    %1846 = sbr.rel (0) target = $region25
  $region24: #{naml_forward.9} parent=0 // pred_region
    _
  $region25: #{naml_forward.9} parent=0 // pred_fallthru
    _
  // Predicated region
  $region26: #{naml_forward.9} parent=0 // pred_check
    _
  $region27: #{naml_forward.9} parent=0 // pred_check_branch
    %1848 = sbr.rel (0) target = $region29
  $region28: #{naml_forward.9} parent=0 // pred_region
    _
  $region29: #{naml_forward.9} parent=0 // pred_fallthru
    _

// kernel: naml_forward.13
$region0: #{naml_forward.13}
  #allocation0 [shape = 'u32[]', space=smem, size = 0x4, offset = 0x4, fixed_abs, tag = 'smem constant byte address 0x4 - core index']
  #allocation1 [shape = 'u32[144,128]{1,0:T(1,128)}', space=vmem, size = 0x12000, scoped, tag = 'internal scratch']
  #allocation2 [shape = 'f32[1,1]{1,0:T(1,128)S(1)}', space=vmem, size = 0x200, scoped, tag = 'scoped memory for naml_forward.13']
  %s0 = inlined_call_operand.vmem [shape: f32[4,4,400], index: 0, kind: input, shape index: {}]
  %s1 = inlined_call_operand.vmem [shape: bf16[400,200], index: 1, kind: input, shape index: {}]
  %s2 = inlined_call_operand.vmem [shape: f32[1,200], index: 2, kind: input, shape index: {}]
  %s3 = inlined_call_operand.vmem [shape: f32[1,200], index: 3, kind: input, shape index: {}]
  %s4 = inlined_call_operand.<no memory space> [shape: f32[1,1], index: 4, kind: input, shape index: {}]
  %s5 = inlined_call_operand.vmem [shape: f32[4,400], index: 5, kind: output, shape index: {}]
  %s6 = sld [smem:[#allocation0]]
  $region30: #{naml_forward.13} parent=0
    _
  %s8 = ssub.s32 1, %s6
  %s9 = scalar_select 0, %s8, %s6
  %v10 = vstv %s4
  %11 = vst [vmem:[#allocation2] sm:$0x1] %v10
  // Predicated region
  $region2: #{naml_forward.13} parent=0 // pred_check
    _
  $region3: #{naml_forward.13} parent=0 // pred_check_branch
    %13 = sbr.rel (0) target = $region5
  $region4: #{naml_forward.13} parent=0 // pred_region
    _
  $region5: #{naml_forward.13} parent=0 // pred_fallthru
    _
  // Predicated region
  $region6: #{naml_forward.13} parent=0 // pred_check
    _
  $region7: #{naml_forward.13} parent=0 // pred_check_branch
    %15 = sbr.rel (0) target = $region9
  $region8: #{naml_forward.13} parent=0 // pred_region
    _
  $region9: #{naml_forward.13} parent=0 // pred_fallthru
    _
  // Predicated region
  $region10: #{naml_forward.13} parent=0 // pred_check
    _
  $region11: #{naml_forward.13} parent=0 // pred_check_branch
    %17 = sbr.rel (0) target = $region13
  $region12: #{naml_forward.13} parent=0 // pred_region
    _
  $region13: #{naml_forward.13} parent=0 // pred_fallthru
    _
  // Predicated region
  $region14: #{naml_forward.13} parent=0 // pred_check
    _
  $region15: #{naml_forward.13} parent=0 // pred_check_branch
    %19 = sbr.rel (0) target = $region17
  $region16: #{naml_forward.13} parent=0 // pred_region
    _
  $region17: #{naml_forward.13} parent=0 // pred_fallthru
    _
  // Predicated region
  $region18: #{naml_forward.13} parent=0 // pred_check
    _
  $region19: #{naml_forward.13} parent=0 // pred_check_branch
    %21 = sbr.rel (0) target = $region21
  $region20: #{naml_forward.13} parent=0 // pred_region
    _
  $region21: #{naml_forward.13} parent=0 // pred_fallthru
    _
  %v23 = vld [vmem:[%s0] sm:$0xff]
  %v24 = vld [vmem:[%s0 + $0x8] sm:$0xff]
  %v25 = vld [vmem:[%s0 + $0x10] sm:$0xff]
  %v26 = vld [vmem:[%s0 + $0x18] sm:$0xff]
  %v27 = vld [vmem:[%s0 + $0x20] sm:$0xff]
  %v28 = vld [vmem:[%s0 + $0x28] sm:$0xff]
  %v29 = vld [vmem:[%s0 + $0x30] sm:$0xff]
  %v30 = vld [vmem:[%s0 + $0x38] sm:$0xff]
  %v39 = vcombine.low %v23, %v25
  %v40 = vcombine.high %v23, %v25
  %v41 = vcombine.low %v24, %v26
  %v42 = vcombine.high %v24, %v26
  %v43 = vcombine.low %v27, %v29
  %v44 = vcombine.high %v27, %v29
  %v45 = vcombine.low %v28, %v30
  %v46 = vcombine.high %v28, %v30
  %v55 = vpack.c.bf16 %v43, %v39
  %v56 = vpack.c.bf16 %v44, %v40
  %v57 = vpack.c.bf16 %v45, %v41
  %v58 = vpack.c.bf16 %v46, %v42
  %v59 = vld [vmem:[%s1] sm:$0xff]
  %v60 = vld [vmem:[%s1 + $0x8] sm:$0xff]
  %v61 = vld [vmem:[%s1 + $0x10] sm:$0xff]
  %v62 = vld [vmem:[%s1 + $0x18] sm:$0xff]
  %v63 = vld [vmem:[%s1 + $0x20] sm:$0xff]
  %v64 = vld [vmem:[%s1 + $0x28] sm:$0xff]
  %v65 = vld [vmem:[%s1 + $0x30] sm:$0xff]
  %v66 = vld [vmem:[%s1 + $0x38] sm:$0xff]
  %v67 = vld [vmem:[%s1 + $0x40] sm:$0xff]
  %v68 = vld [vmem:[%s1 + $0x48] sm:$0xff]
  %v69 = vld [vmem:[%s1 + $0x50] sm:$0xff]
  %v70 = vld [vmem:[%s1 + $0x58] sm:$0xff]
  %v71 = vld [vmem:[%s1 + $0x60] sm:$0xff]
  %v72 = vld [vmem:[%s1 + $0x68] sm:$0xff]
  %v73 = vld [vmem:[%s1 + $0x70] sm:$0xff]
  %v74 = vld [vmem:[%s1 + $0x78] sm:$0xff]
  %v75 = vld [vmem:[%s1 + $0x80] sm:$0xff]
  %v76 = vld [vmem:[%s1 + $0x88] sm:$0xff]
  %v77 = vld [vmem:[%s1 + $0x90] sm:$0xff]
  %v78 = vld [vmem:[%s1 + $0x98] sm:$0xff]
  %v79 = vld [vmem:[%s1 + $0xa0] sm:$0xff]
  %v80 = vld [vmem:[%s1 + $0xa8] sm:$0xff]
  %v81 = vld [vmem:[%s1 + $0xb0] sm:$0xff]
  %v82 = vld [vmem:[%s1 + $0xb8] sm:$0xff]
  %v83 = vld [vmem:[%s1 + $0xc0] sm:$0xff]
  %v84 = vld [vmem:[%s1 + $0xc8] sm:$0xff]
  %v85 = vld [vmem:[%s1 + $0xd0] sm:$0xff]
  %v86 = vld [vmem:[%s1 + $0xd8] sm:$0xff]
  %v87 = vld [vmem:[%s1 + $0xe0] sm:$0xff]
  %v88 = vld [vmem:[%s1 + $0xe8] sm:$0xff]
  %v89 = vld [vmem:[%s1 + $0xf0] sm:$0xff]
  %v90 = vld [vmem:[%s1 + $0xf8] sm:$0xff]
  %v91 = vld [vmem:[%s1 + $0x100] sm:$0xff]
  %v92 = vld [vmem:[%s1 + $0x108] sm:$0xff]
  %v93 = vld [vmem:[%s1 + $0x110] sm:$0xff]
  %v94 = vld [vmem:[%s1 + $0x118] sm:$0xff]
  %v95 = vld [vmem:[%s1 + $0x120] sm:$0xff]
  %v96 = vld [vmem:[%s1 + $0x128] sm:$0xff]
  %v97 = vld [vmem:[%s1 + $0x130] sm:$0xff]
  %v98 = vld [vmem:[%s1 + $0x138] sm:$0xff]
  %v99 = vld [vmem:[%s1 + $0x140] sm:$0xff]
  %v100 = vld [vmem:[%s1 + $0x148] sm:$0xff]
  %v101 = vld [vmem:[%s1 + $0x150] sm:$0xff]
  %v102 = vld [vmem:[%s1 + $0x158] sm:$0xff]
  %v103 = vld [vmem:[%s1 + $0x160] sm:$0xff]
  %v104 = vld [vmem:[%s1 + $0x168] sm:$0xff]
  %v105 = vld [vmem:[%s1 + $0x170] sm:$0xff]
  %v106 = vld [vmem:[%s1 + $0x178] sm:$0xff]
  %v107 = vld [vmem:[%s1 + $0x180] sm:$0xff]
  %v108 = vld [vmem:[%s1 + $0x188] sm:$0xff]
  %v109 = vld [vmem:[%s2] sm:$0x3]
  %v111 = vlaneseq
  %v112 = vshrl.u32 %v111, 7
  %v113 = vsub.s32 0, %v112
  %v114 = vrot.slane %v109, %v113
  %v115 = vlaneseq
  %v116 = vshrl.u32 %v115, 7
  %v117 = vsub.s32 1, %v116
  %v118 = vrot.slane %v109, %v117
  %v171 = vunpack.c.l.b16 %v59
  %v172 = vunpack.c.h.b16 %v59
  %v173 = vunpack.c.l.b16 %v60
  %v174 = vunpack.c.h.b16 %v60
  %v175 = vunpack.c.l.b16 %v61
  %v176 = vunpack.c.h.b16 %v61
  %v177 = vunpack.c.l.b16 %v62
  %v178 = vunpack.c.h.b16 %v62
  %v179 = vunpack.c.l.b16 %v63
  %v180 = vunpack.c.h.b16 %v63
  %v181 = vunpack.c.l.b16 %v64
  %v182 = vunpack.c.h.b16 %v64
  %v183 = vunpack.c.l.b16 %v65
  %v184 = vunpack.c.h.b16 %v65
  %v185 = vunpack.c.l.b16 %v66
  %v186 = vunpack.c.h.b16 %v66
  %v187 = vunpack.c.l.b16 %v67
  %v188 = vunpack.c.h.b16 %v67
  %v189 = vunpack.c.l.b16 %v68
  %v190 = vunpack.c.h.b16 %v68
  %v191 = vunpack.c.l.b16 %v69
  %v192 = vunpack.c.h.b16 %v69
  %v193 = vunpack.c.l.b16 %v70
  %v194 = vunpack.c.h.b16 %v70
  %v195 = vunpack.c.l.b16 %v71
  %v196 = vunpack.c.h.b16 %v71
  %v197 = vunpack.c.l.b16 %v72
  %v198 = vunpack.c.h.b16 %v72
  %v199 = vunpack.c.l.b16 %v73
  %v200 = vunpack.c.h.b16 %v73
  %v201 = vunpack.c.l.b16 %v74
  %v202 = vunpack.c.h.b16 %v74
  %v203 = vunpack.c.l.b16 %v75
  %v204 = vunpack.c.h.b16 %v75
  %v205 = vunpack.c.l.b16 %v76
  %v206 = vunpack.c.h.b16 %v76
  %v207 = vunpack.c.l.b16 %v77
  %v208 = vunpack.c.h.b16 %v77
  %v209 = vunpack.c.l.b16 %v78
  %v210 = vunpack.c.h.b16 %v78
  %v211 = vunpack.c.l.b16 %v79
  %v212 = vunpack.c.h.b16 %v79
  %v213 = vunpack.c.l.b16 %v80
  %v214 = vunpack.c.h.b16 %v80
  %v215 = vunpack.c.l.b16 %v81
  %v216 = vunpack.c.h.b16 %v81
  %v217 = vunpack.c.l.b16 %v82
  %v218 = vunpack.c.h.b16 %v82
  %v219 = vunpack.c.l.b16 %v83
  %v220 = vunpack.c.h.b16 %v83
  %v221 = vunpack.c.l.b16 %v84
  %v222 = vunpack.c.h.b16 %v84
  %v223 = vunpack.c.l.b16 %v85
  %v224 = vunpack.c.h.b16 %v85
  %v225 = vunpack.c.l.b16 %v86
  %v226 = vunpack.c.h.b16 %v86
  %v227 = vunpack.c.l.b16 %v87
  %v228 = vunpack.c.h.b16 %v87
  %v229 = vunpack.c.l.b16 %v88
  %v230 = vunpack.c.h.b16 %v88
  %v231 = vunpack.c.l.b16 %v89
  %v232 = vunpack.c.h.b16 %v89
  %v233 = vunpack.c.l.b16 %v90
  %v234 = vunpack.c.h.b16 %v90
  %v235 = vunpack.c.l.b16 %v91
  %v236 = vunpack.c.h.b16 %v91
  %v237 = vunpack.c.l.b16 %v92
  %v238 = vunpack.c.h.b16 %v92
  %v239 = vunpack.c.l.b16 %v93
  %v240 = vunpack.c.h.b16 %v93
  %v241 = vunpack.c.l.b16 %v94
  %v242 = vunpack.c.h.b16 %v94
  %v243 = vunpack.c.l.b16 %v95
  %v244 = vunpack.c.h.b16 %v95
  %v245 = vunpack.c.l.b16 %v96
  %v246 = vunpack.c.h.b16 %v96
  %v247 = vunpack.c.l.b16 %v97
  %v248 = vunpack.c.h.b16 %v97
  %v249 = vunpack.c.l.b16 %v98
  %v250 = vunpack.c.h.b16 %v98
  %v251 = vunpack.c.l.b16 %v99
  %v252 = vunpack.c.h.b16 %v99
  %v253 = vunpack.c.l.b16 %v100
  %v254 = vunpack.c.h.b16 %v100
  %v255 = vunpack.c.l.b16 %v101
  %v256 = vunpack.c.h.b16 %v101
  %v257 = vunpack.c.l.b16 %v102
  %v258 = vunpack.c.h.b16 %v102
  %v259 = vunpack.c.l.b16 %v103
  %v260 = vunpack.c.h.b16 %v103
  %v261 = vunpack.c.l.b16 %v104
  %v262 = vunpack.c.h.b16 %v104
  %v263 = vunpack.c.l.b16 %v105
  %v264 = vunpack.c.h.b16 %v105
  %v265 = vunpack.c.l.b16 %v106
  %v266 = vunpack.c.h.b16 %v106
  %v267 = vunpack.c.l.b16 %v107
  %v268 = vunpack.c.h.b16 %v107
  %v269 = vunpack.c.l.b16 %v108
  %v270 = vunpack.c.h.b16 %v108
  %v271 = vpack.c.b16 %v173, %v171
  %v272 = vpack.c.b16 %v174, %v172
  %v273 = vpack.c.b16 %v177, %v175
  %v274 = vpack.c.b16 %v178, %v176
  %v275 = vpack.c.b16 %v181, %v179
  %v276 = vpack.c.b16 %v182, %v180
  %v277 = vpack.c.b16 %v185, %v183
  %v278 = vpack.c.b16 %v186, %v184
  %v279 = vpack.c.b16 %v189, %v187
  %v280 = vpack.c.b16 %v190, %v188
  %v281 = vpack.c.b16 %v193, %v191
  %v282 = vpack.c.b16 %v194, %v192
  %v283 = vpack.c.b16 %v197, %v195
  %v284 = vpack.c.b16 %v198, %v196
  %v285 = vpack.c.b16 %v201, %v199
  %v286 = vpack.c.b16 %v202, %v200
  %v287 = vpack.c.b16 %v205, %v203
  %v288 = vpack.c.b16 %v206, %v204
  %v289 = vpack.c.b16 %v209, %v207
  %v290 = vpack.c.b16 %v210, %v208
  %v291 = vpack.c.b16 %v213, %v211
  %v292 = vpack.c.b16 %v214, %v212
  %v293 = vpack.c.b16 %v217, %v215
  %v294 = vpack.c.b16 %v218, %v216
  %v295 = vpack.c.b16 %v221, %v219
  %v296 = vpack.c.b16 %v222, %v220
  %v297 = vpack.c.b16 %v225, %v223
  %v298 = vpack.c.b16 %v226, %v224
  %v299 = vpack.c.b16 %v229, %v227
  %v300 = vpack.c.b16 %v230, %v228
  %v301 = vpack.c.b16 %v233, %v231
  %v302 = vpack.c.b16 %v234, %v232
  %v303 = vpack.c.b16 %v237, %v235
  %v304 = vpack.c.b16 %v238, %v236
  %v305 = vpack.c.b16 %v241, %v239
  %v306 = vpack.c.b16 %v242, %v240
  %v307 = vpack.c.b16 %v245, %v243
  %v308 = vpack.c.b16 %v246, %v244
  %v309 = vpack.c.b16 %v249, %v247
  %v310 = vpack.c.b16 %v250, %v248
  %v311 = vpack.c.b16 %v253, %v251
  %v312 = vpack.c.b16 %v254, %v252
  %v313 = vpack.c.b16 %v257, %v255
  %v314 = vpack.c.b16 %v258, %v256
  %v315 = vpack.c.b16 %v261, %v259
  %v316 = vpack.c.b16 %v262, %v260
  %v317 = vpack.c.b16 %v265, %v263
  %v318 = vpack.c.b16 %v266, %v264
  %v319 = vpack.c.b16 %v269, %v267
  %v320 = vpack.c.b16 %v270, %v268
  %vm371 = vcmask 130048
  %v373 = vsel %vm371, %v58, 0
  %375 = vmatprep.subr.bf16.mxu0 %v272
  %376 = vmatpush1.bf16.msra.mxu0 %v271
  %377 = vmatprep.subr.bf16.mxu0 %v274
  %378 = vmatpush1.bf16.msra.mxu0 %v273
  %379 = vmatprep.subr.bf16.mxu0 %v276
  %380 = vmatpush1.bf16.msra.mxu0 %v275
  %381 = vmatprep.subr.bf16.mxu0 %v278
  %382 = vmatpush1.bf16.msra.mxu0 %v277
  %383 = vmatprep.subr.bf16.mxu0 %v280
  %384 = vmatpush1.bf16.msra.mxu0 %v279
  %385 = vmatprep.subr.bf16.mxu0 %v282
  %386 = vmatpush1.bf16.msra.mxu0 %v281
  %387 = vmatprep.subr.bf16.mxu0 %v284
  %388 = vmatpush1.bf16.msra.mxu0 %v283
  %389 = vmatprep.subr.bf16.mxu0 %v286
  %390 = vmatpush1.bf16.msra.mxu0 %v285
  %391 = vmatprep.subr.bf16.mxu0 %v288
  %392 = vmatpush1.bf16.msra.mxu0 %v287
  %393 = vmatprep.subr.bf16.mxu0 %v290
  %394 = vmatpush1.bf16.msra.mxu0 %v289
  %395 = vmatprep.subr.bf16.mxu0 %v292
  %396 = vmatpush1.bf16.msra.mxu0 %v291
  %397 = vmatprep.subr.bf16.mxu0 %v294
  %398 = vmatpush1.bf16.msra.mxu0 %v293
  %399 = vmatprep.subr.bf16.mxu0 %v296
  %400 = vmatpush1.bf16.msra.mxu0 %v295
  %401 = vmatprep.subr.bf16.mxu0 %v298
  %402 = vmatpush1.bf16.msra.mxu0 %v297
  %403 = vmatprep.subr.bf16.mxu0 %v300
  %404 = vmatpush1.bf16.msra.mxu0 %v299
  %405 = vmatprep.subr.bf16.mxu0 %v302
  %406 = vmatpush1.bf16.msra.mxu0 %v301
  %407 = vmatprep.mubr.bf16.mxu0 %v56
  %408 = vmatmul.mubr.bf16.gmra.mrb[0].mxu0 %v55
  %v409 = vpop.f32.mrb[0].mxu0
  %v410 = vadd.f32 %v114, %v409
  %v411 = vpop.f32.mrb[0].mxu0
  %v412 = vadd.f32 %v118, %v411
  %v413 = vpop.f32.mrb[0].mxu0
  %v414 = vadd.f32 %v114, %v413
  %v415 = vpop.f32.mrb[0].mxu0
  %v416 = vadd.f32 %v118, %v415
  %417 = vdwg.mxu0
  %418 = vmatprep.subr.bf16.mxu0 %v304
  %419 = vmatpush1.bf16.msra.mxu0 %v303
  %420 = vmatprep.subr.bf16.mxu0 %v306
  %421 = vmatpush1.bf16.msra.mxu0 %v305
  %422 = vmatprep.subr.bf16.mxu0 %v308
  %423 = vmatpush1.bf16.msra.mxu0 %v307
  %424 = vmatprep.subr.bf16.mxu0 %v310
  %425 = vmatpush1.bf16.msra.mxu0 %v309
  %426 = vmatprep.subr.bf16.mxu0 %v312
  %427 = vmatpush1.bf16.msra.mxu0 %v311
  %428 = vmatprep.subr.bf16.mxu0 %v314
  %429 = vmatpush1.bf16.msra.mxu0 %v313
  %430 = vmatprep.subr.bf16.mxu0 %v316
  %431 = vmatpush1.bf16.msra.mxu0 %v315
  %432 = vmatprep.subr.bf16.mxu0 %v318
  %433 = vmatpush1.bf16.msra.mxu0 %v317
  %434 = vmatprep.subr.bf16.mxu0 %v320
  %435 = vmatpush1.bf16.msra.mxu0 %v319
  %436 = vmatprep.subr.bf16.mxu0 0
  %437 = vmatpush1.bf16.msra.mxu0 0
  %438 = vmatprep.subr.bf16.mxu0 0
  %439 = vmatpush1.bf16.msra.mxu0 0
  %440 = vmatprep.subr.bf16.mxu0 0
  %441 = vmatpush1.bf16.msra.mxu0 0
  %442 = vmatprep.subr.bf16.mxu0 0
  %443 = vmatpush1.bf16.msra.mxu0 0
  %444 = vmatprep.subr.bf16.mxu0 0
  %445 = vmatpush1.bf16.msra.mxu0 0
  %446 = vmatprep.subr.bf16.mxu0 0
  %447 = vmatpush1.bf16.msra.mxu0 0
  %448 = vmatprep.subr.bf16.mxu0 0
  %449 = vmatpush1.bf16.msra.mxu0 0
  %450 = vmatprep.mubr.bf16.mxu0 %v373
  %451 = vmatmul.mubr.bf16.gmra.mrb[0].mxu0 %v57
  %v452 = vpop.f32.mrb[0].mxu0
  %v453 = vadd.f32 %v410, %v452
  %v454 = vpop.f32.mrb[0].mxu0
  %v455 = vadd.f32 %v412, %v454
  %v456 = vpop.f32.mrb[0].mxu0
  %v457 = vadd.f32 %v414, %v456
  %v458 = vpop.f32.mrb[0].mxu0
  %v459 = vadd.f32 %v416, %v458
  %460 = vdwg.mxu0
  %v461 = vtanh.pop %v453
  %v462 = vtanh.pop %v455
  %v463 = vtanh.pop %v457
  %v464 = vtanh.pop %v459
  %v469 = vcombine.low %v461, %v462
  %v470 = vcombine.high %v461, %v462
  %v471 = vcombine.low %v463, %v464
  %v472 = vcombine.high %v463, %v464
  %v477 = vld [vmem:[%s3] sm:$0x3]
  %v479 = vlaneseq
  %v480 = vshrl.u32 %v479, 7
  %v481 = vsub.s32 0, %v480
  %v482 = vrot.slane %v477, %v481
  %v483 = vlaneseq
  %v484 = vshrl.u32 %v483, 7
  %v485 = vsub.s32 1, %v484
  %v486 = vrot.slane %v477, %v485
  %v487 = vcombine.low %v482, %v486
  %v489 = vmul.f32 %v469, %v487
  %v490 = vmul.f32 %v470, %v487
  %v491 = vmul.f32 %v471, %v487
  %v492 = vmul.f32 %v472, %v487
  %v497 = vcombine.high %v489, %v489
  %v498 = vcombine.high %v490, %v490
  %v499 = vcombine.high %v491, %v491
  %v500 = vcombine.high %v492, %v492
  %vm505 = vcmask 1043456
  %v506 = vsel %vm505, %v489, 0.0
  %vm507 = vcmask 584704
  %v508 = vsel %vm507, %v497, 0.0
  %v509 = vadd.f32 %v506, %v508
  %510 = vadd.xlane.f32.xlu0 %v509
  %v511 = vpop.xlane.xlu0 %510
  %v512 = vsel %vm505, %v490, 0.0
  %v513 = vsel %vm507, %v498, 0.0
  %v514 = vadd.f32 %v512, %v513
  %515 = vadd.xlane.f32.xlu0 %v514
  %v516 = vpop.xlane.xlu0 %515
  %v517 = vsel %vm505, %v491, 0.0
  %v518 = vsel %vm507, %v499, 0.0
  %v519 = vadd.f32 %v517, %v518
  %520 = vadd.xlane.f32.xlu0 %v519
  %v521 = vpop.xlane.xlu0 %520
  %v522 = vsel %vm505, %v492, 0.0
  %v523 = vsel %vm507, %v500, 0.0
  %v524 = vadd.f32 %v522, %v523
  %525 = vadd.xlane.f32.xlu0 %v524
  %v526 = vpop.xlane.xlu0 %525
  %v527 = vld [vmem:[#allocation2] sm:$0x1]
  %v529 = vlaneseq
  %v530 = vshrl.u32 %v529, 7
  %v531 = vsub.s32 0, %v530
  %v532 = vrot.slane %v527, %v531
  %533 = vset.pattern.permute.xlu0 0
  %534 = vperm.xlu0 %533, %v532
  %v535 = vpop.permute.xlu0 %534
  %v537 = vadd.f32 %v511, %v535
  %v538 = vadd.f32 %v516, %v535
  %v539 = vadd.f32 %v521, %v535
  %v540 = vadd.f32 %v526, %v535
  %v545 = vlaneseq
  %v546 = vand.u32 %v545, 127
  %v547 = vlaneseq
  %v548 = vshrl.u32 %v547, 7
  %v549 = vsub.s32 %v546, %v548
  %v550 = vrot.slane %v537, %v549
  %v551 = vlaneseq
  %v552 = vshrl.u32 %v551, 7
  %v553 = vsub.s32 %v546, %v552
  %v554 = vrot.slane %v538, %v553
  %v555 = vlaneseq
  %v556 = vshrl.u32 %v555, 7
  %v557 = vsub.s32 %v546, %v556
  %v558 = vrot.slane %v539, %v557
  %v559 = vlaneseq
  %v560 = vshrl.u32 %v559, 7
  %v561 = vsub.s32 %v546, %v560
  %v562 = vrot.slane %v540, %v561
  %vm563 = vcmask 1041409
  %v564 = vsel %vm563, %v554, %v550
  %vm565 = vcmask 1042434
  %v566 = vsel %vm565, %v558, %v564
  %vm567 = vcmask 1043459
  %v568 = vsel %vm567, %v562, %v566
  %vm570 = vcmask 27648
  %v571 = vsel %vm570, %v568, -inf
  %572 = vmax.xlane.f32.xlu0 %v571
  %v573 = vpop.xlane.xlu0 %572
  %v575 = vlaneseq
  %v576 = vshrl.u32 %v575, 7
  %v577 = vsub.s32 0, %v576
  %v578 = vrot.slane %v573, %v577
  %v579 = vlaneseq
  %v580 = vshrl.u32 %v579, 7
  %v581 = vsub.s32 1, %v580
  %v582 = vrot.slane %v573, %v581
  %v583 = vlaneseq
  %v584 = vshrl.u32 %v583, 7
  %v585 = vsub.s32 2, %v584
  %v586 = vrot.slane %v573, %v585
  %v587 = vlaneseq
  %v588 = vshrl.u32 %v587, 7
  %v589 = vsub.s32 3, %v588
  %v590 = vrot.slane %v573, %v589
  %v595 = vsub.f32 %v537, %v578
  %v596 = vsub.f32 %v538, %v582
  %v597 = vsub.f32 %v539, %v586
  %v598 = vsub.f32 %v540, %v590
  %v599 = vmul.f32 %v595, 1.442695
  %v600 = vpow.pop %v599
  %v601 = vmul.f32 %v596, 1.442695
  %v602 = vpow.pop %v601
  %v603 = vmul.f32 %v597, 1.442695
  %v604 = vpow.pop %v603
  %v605 = vmul.f32 %v598, 1.442695
  %v606 = vpow.pop %v605
  %611 = vset.pattern.permute.xlu0 0
  %612 = vperm.xlu0 %611, %v600
  %v613 = vpop.permute.xlu0 %612
  %614 = vset.pattern.permute.xlu0 0
  %615 = vperm.xlu0 %614, %v602
  %v616 = vpop.permute.xlu0 %615
  %617 = vset.pattern.permute.xlu0 0
  %618 = vperm.xlu0 %617, %v604
  %v619 = vpop.permute.xlu0 %618
  %620 = vset.pattern.permute.xlu0 0
  %621 = vperm.xlu0 %620, %v606
  %v622 = vpop.permute.xlu0 %621
  %v623 = vlaneseq
  %v624 = vshrl.u32 %v623, 7
  %v625 = vsub.s32 %v546, %v624
  %v626 = vrot.slane %v613, %v625
  %v627 = vlaneseq
  %v628 = vshrl.u32 %v627, 7
  %v629 = vsub.s32 %v546, %v628
  %v630 = vrot.slane %v616, %v629
  %v631 = vlaneseq
  %v632 = vshrl.u32 %v631, 7
  %v633 = vsub.s32 %v546, %v632
  %v634 = vrot.slane %v619, %v633
  %v635 = vlaneseq
  %v636 = vshrl.u32 %v635, 7
  %v637 = vsub.s32 %v546, %v636
  %v638 = vrot.slane %v622, %v637
  %v639 = vsel %vm563, %v630, %v626
  %v640 = vsel %vm565, %v634, %v639
  %v641 = vsel %vm567, %v638, %v640
  %v643 = vsel %vm570, %v641, 0.0
  %644 = vadd.xlane.f32.xlu0 %v643
  %v645 = vpop.xlane.xlu0 %644
  %v646 = vrcp.pop %v645
  %v648 = vlaneseq
  %v649 = vshrl.u32 %v648, 7
  %v650 = vsub.s32 0, %v649
  %v651 = vrot.slane %v646, %v650
  %v652 = vlaneseq
  %v653 = vshrl.u32 %v652, 7
  %v654 = vsub.s32 1, %v653
  %v655 = vrot.slane %v646, %v654
  %v656 = vlaneseq
  %v657 = vshrl.u32 %v656, 7
  %v658 = vsub.s32 2, %v657
  %v659 = vrot.slane %v646, %v658
  %v660 = vlaneseq
  %v661 = vshrl.u32 %v660, 7
  %v662 = vsub.s32 3, %v661
  %v663 = vrot.slane %v646, %v662
  %v668 = vmul.f32 %v600, %v651
  %v669 = vmul.f32 %v602, %v655
  %v670 = vmul.f32 %v604, %v659
  %v671 = vmul.f32 %v606, %v663
  %673 = vset.pattern.permute.xlu0 0
  %674 = vperm.xlu0 %673, %v668
  %v675 = vpop.permute.xlu0 %674
  %v676 = vlaneseq
  %v677 = vshrl.u32 %v676, 7
  %v678 = vsub.s32 %v546, %v677
  %v679 = vrot.slane %v675, %v678
  %v680 = vcombine.high %v23, %v23
  %v681 = vcombine.high %v24, %v24
  %vm682 = vcmask 31744
  %v683 = vsel %vm682, %v679, 0
  %v685 = vsel %vm505, %v23, 0
  %v687 = vsel %vm505, %v680, 0
  %v689 = vsel %vm505, %v24, 0
  %v691 = vsel %vm505, %v681, 0
  %693 = vmatprep.subr.mxu0 %v687
  %694 = vmatpush1.msra.mxu0 %v685
  %695 = vmatprep.subr.mxu0 0.0
  %696 = vmatpush1.msra.mxu0 0.0
  %697 = vmatprep.subr.mxu0 0.0
  %698 = vmatpush1.msra.mxu0 0.0
  %699 = vmatprep.subr.mxu0 0.0
  %700 = vmatpush1.msra.mxu0 0.0
  %701 = vmatprep.subr.mxu0 0.0
  %702 = vmatpush1.msra.mxu0 0.0
  %703 = vmatprep.subr.mxu0 0.0
  %704 = vmatpush1.msra.mxu0 0.0
  %705 = vmatprep.subr.mxu0 0.0
  %706 = vmatpush1.msra.mxu0 0.0
  %707 = vmatprep.subr.mxu0 0.0
  %708 = vmatpush1.msra.mxu0 0.0
  %709 = vmatprep.subr.mxu0 0.0
  %710 = vmatpush1.msra.mxu0 0.0
  %711 = vmatprep.subr.mxu0 0.0
  %712 = vmatpush1.msra.mxu0 0.0
  %713 = vmatprep.subr.mxu0 0.0
  %714 = vmatpush1.msra.mxu0 0.0
  %715 = vmatprep.subr.mxu0 0.0
  %716 = vmatpush1.msra.mxu0 0.0
  %717 = vmatprep.subr.mxu0 0.0
  %718 = vmatpush1.msra.mxu0 0.0
  %719 = vmatprep.subr.mxu0 0.0
  %720 = vmatpush1.msra.mxu0 0.0
  %721 = vmatprep.subr.mxu0 0.0
  %722 = vmatpush1.msra.mxu0 0.0
  %723 = vmatprep.subr.mxu0 0.0
  %724 = vmatpush1.msra.mxu0 0.0
  %725 = vmatprep.subr.mxu0 0.0
  %726 = vmatpush1.msra.mxu0 0.0
  %727 = vmatprep.subr.mxu0 0.0
  %728 = vmatpush1.msra.mxu0 0.0
  %729 = vmatprep.subr.mxu0 0.0
  %730 = vmatpush1.msra.mxu0 0.0
  %731 = vmatprep.subr.mxu0 0.0
  %732 = vmatpush1.msra.mxu0 0.0
  %733 = vmatprep.subr.mxu0 0.0
  %734 = vmatpush1.msra.mxu0 0.0
  %735 = vmatprep.subr.mxu0 0.0
  %736 = vmatpush1.msra.mxu0 0.0
  %737 = vmatprep.subr.mxu0 0.0
  %738 = vmatpush1.msra.mxu0 0.0
  %739 = vmatprep.subr.mxu0 0.0
  %740 = vmatpush1.msra.mxu0 0.0
  %741 = vmatprep.subr.mxu0 0.0
  %742 = vmatpush1.msra.mxu0 0.0
  %743 = vmatprep.subr.mxu0 0.0
  %744 = vmatpush1.msra.mxu0 0.0
  %745 = vmatprep.subr.mxu0 0.0
  %746 = vmatpush1.msra.mxu0 0.0
  %747 = vmatprep.subr.mxu0 0.0
  %748 = vmatpush1.msra.mxu0 0.0
  %749 = vmatprep.subr.mxu0 0.0
  %750 = vmatpush1.msra.mxu0 0.0
  %751 = vmatprep.subr.mxu0 0.0
  %752 = vmatpush1.msra.mxu0 0.0
  %753 = vmatprep.subr.mxu0 0.0
  %754 = vmatpush1.msra.mxu0 0.0
  %755 = vmatprep.subr.mxu0 0.0
  %756 = vmatpush1.msra.mxu0 0.0
  %757 = vmatprep.mubr.f32.mxu0 0.0
  %758 = vmatmul.mubr.f32.gmra.mrb[0].mxu0 %v683
  %v759 = vpop.f32.mrb[0].mxu0
  %v760 = vadd.f32 0.0, %v759
  %v761 = vpop.f32.mrb[0].mxu0
  %v762 = vadd.f32 0.0, %v761
  %763 = vdwg.mxu0
  %764 = vmatprep.subr.mxu0 %v691
  %765 = vmatpush1.msra.mxu0 %v689
  %766 = vmatprep.subr.mxu0 0.0
  %767 = vmatpush1.msra.mxu0 0.0
  %768 = vmatprep.subr.mxu0 0.0
  %769 = vmatpush1.msra.mxu0 0.0
  %770 = vmatprep.subr.mxu0 0.0
  %771 = vmatpush1.msra.mxu0 0.0
  %772 = vmatprep.subr.mxu0 0.0
  %773 = vmatpush1.msra.mxu0 0.0
  %774 = vmatprep.subr.mxu0 0.0
  %775 = vmatpush1.msra.mxu0 0.0
  %776 = vmatprep.subr.mxu0 0.0
  %777 = vmatpush1.msra.mxu0 0.0
  %778 = vmatprep.subr.mxu0 0.0
  %779 = vmatpush1.msra.mxu0 0.0
  %780 = vmatprep.subr.mxu0 0.0
  %781 = vmatpush1.msra.mxu0 0.0
  %782 = vmatprep.subr.mxu0 0.0
  %783 = vmatpush1.msra.mxu0 0.0
  %784 = vmatprep.subr.mxu0 0.0
  %785 = vmatpush1.msra.mxu0 0.0
  %786 = vmatprep.subr.mxu0 0.0
  %787 = vmatpush1.msra.mxu0 0.0
  %788 = vmatprep.subr.mxu0 0.0
  %789 = vmatpush1.msra.mxu0 0.0
  %790 = vmatprep.subr.mxu0 0.0
  %791 = vmatpush1.msra.mxu0 0.0
  %792 = vmatprep.subr.mxu0 0.0
  %793 = vmatpush1.msra.mxu0 0.0
  %794 = vmatprep.subr.mxu0 0.0
  %795 = vmatpush1.msra.mxu0 0.0
  %796 = vmatprep.subr.mxu0 0.0
  %797 = vmatpush1.msra.mxu0 0.0
  %798 = vmatprep.subr.mxu0 0.0
  %799 = vmatpush1.msra.mxu0 0.0
  %800 = vmatprep.subr.mxu0 0.0
  %801 = vmatpush1.msra.mxu0 0.0
  %802 = vmatprep.subr.mxu0 0.0
  %803 = vmatpush1.msra.mxu0 0.0
  %804 = vmatprep.subr.mxu0 0.0
  %805 = vmatpush1.msra.mxu0 0.0
  %806 = vmatprep.subr.mxu0 0.0
  %807 = vmatpush1.msra.mxu0 0.0
  %808 = vmatprep.subr.mxu0 0.0
  %809 = vmatpush1.msra.mxu0 0.0
  %810 = vmatprep.subr.mxu0 0.0
  %811 = vmatpush1.msra.mxu0 0.0
  %812 = vmatprep.subr.mxu0 0.0
  %813 = vmatpush1.msra.mxu0 0.0
  %814 = vmatprep.subr.mxu0 0.0
  %815 = vmatpush1.msra.mxu0 0.0
  %816 = vmatprep.subr.mxu0 0.0
  %817 = vmatpush1.msra.mxu0 0.0
  %818 = vmatprep.subr.mxu0 0.0
  %819 = vmatpush1.msra.mxu0 0.0
  %820 = vmatprep.subr.mxu0 0.0
  %821 = vmatpush1.msra.mxu0 0.0
  %822 = vmatprep.subr.mxu0 0.0
  %823 = vmatpush1.msra.mxu0 0.0
  %824 = vmatprep.subr.mxu0 0.0
  %825 = vmatpush1.msra.mxu0 0.0
  %826 = vmatprep.subr.mxu0 0.0
  %827 = vmatpush1.msra.mxu0 0.0
  %828 = vmatprep.mubr.f32.mxu0 0.0
  %829 = vmatmul.mubr.f32.gmra.mrb[0].mxu0 %v683
  %v830 = vpop.f32.mrb[0].mxu0
  %v831 = vadd.f32 0.0, %v830
  %v832 = vpop.f32.mrb[0].mxu0
  %v833 = vadd.f32 0.0, %v832
  %834 = vdwg.mxu0
  %836 = vset.pattern.permute.xlu0 0
  %837 = vperm.xlu0 %836, %v669
  %v838 = vpop.permute.xlu0 %837
  %v839 = vlaneseq
  %v840 = vshrl.u32 %v839, 7
  %v841 = vsub.s32 %v546, %v840
  %v842 = vrot.slane %v838, %v841
  %v843 = vcombine.high %v25, %v25
  %v844 = vcombine.high %v26, %v26
  %v845 = vsel %vm682, %v842, 0
  %v847 = vsel %vm505, %v25, 0
  %v849 = vsel %vm505, %v843, 0
  %v851 = vsel %vm505, %v26, 0
  %v853 = vsel %vm505, %v844, 0
  %855 = vmatprep.subr.mxu0 %v849
  %856 = vmatpush1.msra.mxu0 %v847
  %857 = vmatprep.subr.mxu0 0.0
  %858 = vmatpush1.msra.mxu0 0.0
  %859 = vmatprep.subr.mxu0 0.0
  %860 = vmatpush1.msra.mxu0 0.0
  %861 = vmatprep.subr.mxu0 0.0
  %862 = vmatpush1.msra.mxu0 0.0
  %863 = vmatprep.subr.mxu0 0.0
  %864 = vmatpush1.msra.mxu0 0.0
  %865 = vmatprep.subr.mxu0 0.0
  %866 = vmatpush1.msra.mxu0 0.0
  %867 = vmatprep.subr.mxu0 0.0
  %868 = vmatpush1.msra.mxu0 0.0
  %869 = vmatprep.subr.mxu0 0.0
  %870 = vmatpush1.msra.mxu0 0.0
  %871 = vmatprep.subr.mxu0 0.0
  %872 = vmatpush1.msra.mxu0 0.0
  %873 = vmatprep.subr.mxu0 0.0
  %874 = vmatpush1.msra.mxu0 0.0
  %875 = vmatprep.subr.mxu0 0.0
  %876 = vmatpush1.msra.mxu0 0.0
  %877 = vmatprep.subr.mxu0 0.0
  %878 = vmatpush1.msra.mxu0 0.0
  %879 = vmatprep.subr.mxu0 0.0
  %880 = vmatpush1.msra.mxu0 0.0
  %881 = vmatprep.subr.mxu0 0.0
  %882 = vmatpush1.msra.mxu0 0.0
  %883 = vmatprep.subr.mxu0 0.0
  %884 = vmatpush1.msra.mxu0 0.0
  %885 = vmatprep.subr.mxu0 0.0
  %886 = vmatpush1.msra.mxu0 0.0
  %887 = vmatprep.subr.mxu0 0.0
  %888 = vmatpush1.msra.mxu0 0.0
  %889 = vmatprep.subr.mxu0 0.0
  %890 = vmatpush1.msra.mxu0 0.0
  %891 = vmatprep.subr.mxu0 0.0
  %892 = vmatpush1.msra.mxu0 0.0
  %893 = vmatprep.subr.mxu0 0.0
  %894 = vmatpush1.msra.mxu0 0.0
  %895 = vmatprep.subr.mxu0 0.0
  %896 = vmatpush1.msra.mxu0 0.0
  %897 = vmatprep.subr.mxu0 0.0
  %898 = vmatpush1.msra.mxu0 0.0
  %899 = vmatprep.subr.mxu0 0.0
  %900 = vmatpush1.msra.mxu0 0.0
  %901 = vmatprep.subr.mxu0 0.0
  %902 = vmatpush1.msra.mxu0 0.0
  %903 = vmatprep.subr.mxu0 0.0
  %904 = vmatpush1.msra.mxu0 0.0
  %905 = vmatprep.subr.mxu0 0.0
  %906 = vmatpush1.msra.mxu0 0.0
  %907 = vmatprep.subr.mxu0 0.0
  %908 = vmatpush1.msra.mxu0 0.0
  %909 = vmatprep.subr.mxu0 0.0
  %910 = vmatpush1.msra.mxu0 0.0
  %911 = vmatprep.subr.mxu0 0.0
  %912 = vmatpush1.msra.mxu0 0.0
  %913 = vmatprep.subr.mxu0 0.0
  %914 = vmatpush1.msra.mxu0 0.0
  %915 = vmatprep.subr.mxu0 0.0
  %916 = vmatpush1.msra.mxu0 0.0
  %917 = vmatprep.subr.mxu0 0.0
  %918 = vmatpush1.msra.mxu0 0.0
  %919 = vmatprep.mubr.f32.mxu0 0.0
  %920 = vmatmul.mubr.f32.gmra.mrb[0].mxu0 %v845
  %v921 = vpop.f32.mrb[0].mxu0
  %v922 = vadd.f32 0.0, %v921
  %v923 = vpop.f32.mrb[0].mxu0
  %v924 = vadd.f32 0.0, %v923
  %925 = vdwg.mxu0
  %926 = vmatprep.subr.mxu0 %v853
  %927 = vmatpush1.msra.mxu0 %v851
  %928 = vmatprep.subr.mxu0 0.0
  %929 = vmatpush1.msra.mxu0 0.0
  %930 = vmatprep.subr.mxu0 0.0
  %931 = vmatpush1.msra.mxu0 0.0
  %932 = vmatprep.subr.mxu0 0.0
  %933 = vmatpush1.msra.mxu0 0.0
  %934 = vmatprep.subr.mxu0 0.0
  %935 = vmatpush1.msra.mxu0 0.0
  %936 = vmatprep.subr.mxu0 0.0
  %937 = vmatpush1.msra.mxu0 0.0
  %938 = vmatprep.subr.mxu0 0.0
  %939 = vmatpush1.msra.mxu0 0.0
  %940 = vmatprep.subr.mxu0 0.0
  %941 = vmatpush1.msra.mxu0 0.0
  %942 = vmatprep.subr.mxu0 0.0
  %943 = vmatpush1.msra.mxu0 0.0
  %944 = vmatprep.subr.mxu0 0.0
  %945 = vmatpush1.msra.mxu0 0.0
  %946 = vmatprep.subr.mxu0 0.0
  %947 = vmatpush1.msra.mxu0 0.0
  %948 = vmatprep.subr.mxu0 0.0
  %949 = vmatpush1.msra.mxu0 0.0
  %950 = vmatprep.subr.mxu0 0.0
  %951 = vmatpush1.msra.mxu0 0.0
  %952 = vmatprep.subr.mxu0 0.0
  %953 = vmatpush1.msra.mxu0 0.0
  %954 = vmatprep.subr.mxu0 0.0
  %955 = vmatpush1.msra.mxu0 0.0
  %956 = vmatprep.subr.mxu0 0.0
  %957 = vmatpush1.msra.mxu0 0.0
  %958 = vmatprep.subr.mxu0 0.0
  %959 = vmatpush1.msra.mxu0 0.0
  %960 = vmatprep.subr.mxu0 0.0
  %961 = vmatpush1.msra.mxu0 0.0
  %962 = vmatprep.subr.mxu0 0.0
  %963 = vmatpush1.msra.mxu0 0.0
  %964 = vmatprep.subr.mxu0 0.0
  %965 = vmatpush1.msra.mxu0 0.0
  %966 = vmatprep.subr.mxu0 0.0
  %967 = vmatpush1.msra.mxu0 0.0
  %968 = vmatprep.subr.mxu0 0.0
  %969 = vmatpush1.msra.mxu0 0.0
  %970 = vmatprep.subr.mxu0 0.0
  %971 = vmatpush1.msra.mxu0 0.0
  %972 = vmatprep.subr.mxu0 0.0
  %973 = vmatpush1.msra.mxu0 0.0
  %974 = vmatprep.subr.mxu0 0.0
  %975 = vmatpush1.msra.mxu0 0.0
  %976 = vmatprep.subr.mxu0 0.0
  %977 = vmatpush1.msra.mxu0 0.0
  %978 = vmatprep.subr.mxu0 0.0
  %979 = vmatpush1.msra.mxu0 0.0
  %980 = vmatprep.subr.mxu0 0.0
  %981 = vmatpush1.msra.mxu0 0.0
  %982 = vmatprep.subr.mxu0 0.0
  %983 = vmatpush1.msra.mxu0 0.0
  %984 = vmatprep.subr.mxu0 0.0
  %985 = vmatpush1.msra.mxu0 0.0
  %986 = vmatprep.subr.mxu0 0.0
  %987 = vmatpush1.msra.mxu0 0.0
  %988 = vmatprep.subr.mxu0 0.0
  %989 = vmatpush1.msra.mxu0 0.0
  %990 = vmatprep.mubr.f32.mxu0 0.0
  %991 = vmatmul.mubr.f32.gmra.mrb[0].mxu0 %v845
  %v992 = vpop.f32.mrb[0].mxu0
  %v993 = vadd.f32 0.0, %v992
  %v994 = vpop.f32.mrb[0].mxu0
  %v995 = vadd.f32 0.0, %v994
  %996 = vdwg.mxu0
  %998 = vset.pattern.permute.xlu0 0
  %999 = vperm.xlu0 %998, %v670
  %v1000 = vpop.permute.xlu0 %999
  %v1001 = vlaneseq
  %v1002 = vshrl.u32 %v1001, 7
  %v1003 = vsub.s32 %v546, %v1002
  %v1004 = vrot.slane %v1000, %v1003
  %v1005 = vcombine.high %v27, %v27
  %v1006 = vcombine.high %v28, %v28
  %v1007 = vsel %vm682, %v1004, 0
  %v1009 = vsel %vm505, %v27, 0
  %v1011 = vsel %vm505, %v1005, 0
  %v1013 = vsel %vm505, %v28, 0
  %v1015 = vsel %vm505, %v1006, 0
  %1017 = vmatprep.subr.mxu0 %v1011
  %1018 = vmatpush1.msra.mxu0 %v1009
  %1019 = vmatprep.subr.mxu0 0.0
  %1020 = vmatpush1.msra.mxu0 0.0
  %1021 = vmatprep.subr.mxu0 0.0
  %1022 = vmatpush1.msra.mxu0 0.0
  %1023 = vmatprep.subr.mxu0 0.0
  %1024 = vmatpush1.msra.mxu0 0.0
  %1025 = vmatprep.subr.mxu0 0.0
  %1026 = vmatpush1.msra.mxu0 0.0
  %1027 = vmatprep.subr.mxu0 0.0
  %1028 = vmatpush1.msra.mxu0 0.0
  %1029 = vmatprep.subr.mxu0 0.0
  %1030 = vmatpush1.msra.mxu0 0.0
  %1031 = vmatprep.subr.mxu0 0.0
  %1032 = vmatpush1.msra.mxu0 0.0
  %1033 = vmatprep.subr.mxu0 0.0
  %1034 = vmatpush1.msra.mxu0 0.0
  %1035 = vmatprep.subr.mxu0 0.0
  %1036 = vmatpush1.msra.mxu0 0.0
  %1037 = vmatprep.subr.mxu0 0.0
  %1038 = vmatpush1.msra.mxu0 0.0
  %1039 = vmatprep.subr.mxu0 0.0
  %1040 = vmatpush1.msra.mxu0 0.0
  %1041 = vmatprep.subr.mxu0 0.0
  %1042 = vmatpush1.msra.mxu0 0.0
  %1043 = vmatprep.subr.mxu0 0.0
  %1044 = vmatpush1.msra.mxu0 0.0
  %1045 = vmatprep.subr.mxu0 0.0
  %1046 = vmatpush1.msra.mxu0 0.0
  %1047 = vmatprep.subr.mxu0 0.0
  %1048 = vmatpush1.msra.mxu0 0.0
  %1049 = vmatprep.subr.mxu0 0.0
  %1050 = vmatpush1.msra.mxu0 0.0
  %1051 = vmatprep.subr.mxu0 0.0
  %1052 = vmatpush1.msra.mxu0 0.0
  %1053 = vmatprep.subr.mxu0 0.0
  %1054 = vmatpush1.msra.mxu0 0.0
  %1055 = vmatprep.subr.mxu0 0.0
  %1056 = vmatpush1.msra.mxu0 0.0
  %1057 = vmatprep.subr.mxu0 0.0
  %1058 = vmatpush1.msra.mxu0 0.0
  %1059 = vmatprep.subr.mxu0 0.0
  %1060 = vmatpush1.msra.mxu0 0.0
  %1061 = vmatprep.subr.mxu0 0.0
  %1062 = vmatpush1.msra.mxu0 0.0
  %1063 = vmatprep.subr.mxu0 0.0
  %1064 = vmatpush1.msra.mxu0 0.0
  %1065 = vmatprep.subr.mxu0 0.0
  %1066 = vmatpush1.msra.mxu0 0.0
  %1067 = vmatprep.subr.mxu0 0.0
  %1068 = vmatpush1.msra.mxu0 0.0
  %1069 = vmatprep.subr.mxu0 0.0
  %1070 = vmatpush1.msra.mxu0 0.0
  %1071 = vmatprep.subr.mxu0 0.0
  %1072 = vmatpush1.msra.mxu0 0.0
  %1073 = vmatprep.subr.mxu0 0.0
  %1074 = vmatpush1.msra.mxu0 0.0
  %1075 = vmatprep.subr.mxu0 0.0
  %1076 = vmatpush1.msra.mxu0 0.0
  %1077 = vmatprep.subr.mxu0 0.0
  %1078 = vmatpush1.msra.mxu0 0.0
  %1079 = vmatprep.subr.mxu0 0.0
  %1080 = vmatpush1.msra.mxu0 0.0
  %1081 = vmatprep.mubr.f32.mxu0 0.0
  %1082 = vmatmul.mubr.f32.gmra.mrb[0].mxu0 %v1007
  %v1083 = vpop.f32.mrb[0].mxu0
  %v1084 = vadd.f32 0.0, %v1083
  %v1085 = vpop.f32.mrb[0].mxu0
  %v1086 = vadd.f32 0.0, %v1085
  %1087 = vdwg.mxu0
  %1088 = vmatprep.subr.mxu0 %v1015
  %1089 = vmatpush1.msra.mxu0 %v1013
  %1090 = vmatprep.subr.mxu0 0.0
  %1091 = vmatpush1.msra.mxu0 0.0
  %1092 = vmatprep.subr.mxu0 0.0
  %1093 = vmatpush1.msra.mxu0 0.0
  %1094 = vmatprep.subr.mxu0 0.0
  %1095 = vmatpush1.msra.mxu0 0.0
  %1096 = vmatprep.subr.mxu0 0.0
  %1097 = vmatpush1.msra.mxu0 0.0
  %1098 = vmatprep.subr.mxu0 0.0
  %1099 = vmatpush1.msra.mxu0 0.0
  %1100 = vmatprep.subr.mxu0 0.0
  %1101 = vmatpush1.msra.mxu0 0.0
  %1102 = vmatprep.subr.mxu0 0.0
  %1103 = vmatpush1.msra.mxu0 0.0
  %1104 = vmatprep.subr.mxu0 0.0
  %1105 = vmatpush1.msra.mxu0 0.0
  %1106 = vmatprep.subr.mxu0 0.0
  %1107 = vmatpush1.msra.mxu0 0.0
  %1108 = vmatprep.subr.mxu0 0.0
  %1109 = vmatpush1.msra.mxu0 0.0
  %1110 = vmatprep.subr.mxu0 0.0
  %1111 = vmatpush1.msra.mxu0 0.0
  %1112 = vmatprep.subr.mxu0 0.0
  %1113 = vmatpush1.msra.mxu0 0.0
  %1114 = vmatprep.subr.mxu0 0.0
  %1115 = vmatpush1.msra.mxu0 0.0
  %1116 = vmatprep.subr.mxu0 0.0
  %1117 = vmatpush1.msra.mxu0 0.0
  %1118 = vmatprep.subr.mxu0 0.0
  %1119 = vmatpush1.msra.mxu0 0.0
  %1120 = vmatprep.subr.mxu0 0.0
  %1121 = vmatpush1.msra.mxu0 0.0
  %1122 = vmatprep.subr.mxu0 0.0
  %1123 = vmatpush1.msra.mxu0 0.0
  %1124 = vmatprep.subr.mxu0 0.0
  %1125 = vmatpush1.msra.mxu0 0.0
  %1126 = vmatprep.subr.mxu0 0.0
  %1127 = vmatpush1.msra.mxu0 0.0
  %1128 = vmatprep.subr.mxu0 0.0
  %1129 = vmatpush1.msra.mxu0 0.0
  %1130 = vmatprep.subr.mxu0 0.0
  %1131 = vmatpush1.msra.mxu0 0.0
  %1132 = vmatprep.subr.mxu0 0.0
  %1133 = vmatpush1.msra.mxu0 0.0
  %1134 = vmatprep.subr.mxu0 0.0
  %1135 = vmatpush1.msra.mxu0 0.0
  %1136 = vmatprep.subr.mxu0 0.0
  %1137 = vmatpush1.msra.mxu0 0.0
  %1138 = vmatprep.subr.mxu0 0.0
  %1139 = vmatpush1.msra.mxu0 0.0
  %1140 = vmatprep.subr.mxu0 0.0
  %1141 = vmatpush1.msra.mxu0 0.0
  %1142 = vmatprep.subr.mxu0 0.0
  %1143 = vmatpush1.msra.mxu0 0.0
  %1144 = vmatprep.subr.mxu0 0.0
  %1145 = vmatpush1.msra.mxu0 0.0
  %1146 = vmatprep.subr.mxu0 0.0
  %1147 = vmatpush1.msra.mxu0 0.0
  %1148 = vmatprep.subr.mxu0 0.0
  %1149 = vmatpush1.msra.mxu0 0.0
  %1150 = vmatprep.subr.mxu0 0.0
  %1151 = vmatpush1.msra.mxu0 0.0
  %1152 = vmatprep.mubr.f32.mxu0 0.0
  %1153 = vmatmul.mubr.f32.gmra.mrb[0].mxu0 %v1007
  %v1154 = vpop.f32.mrb[0].mxu0
  %v1155 = vadd.f32 0.0, %v1154
  %v1156 = vpop.f32.mrb[0].mxu0
  %v1157 = vadd.f32 0.0, %v1156
  %1158 = vdwg.mxu0
  %1160 = vset.pattern.permute.xlu0 0
  %1161 = vperm.xlu0 %1160, %v671
  %v1162 = vpop.permute.xlu0 %1161
  %v1163 = vlaneseq
  %v1164 = vshrl.u32 %v1163, 7
  %v1165 = vsub.s32 %v546, %v1164
  %v1166 = vrot.slane %v1162, %v1165
  %v1167 = vcombine.high %v29, %v29
  %v1168 = vcombine.high %v30, %v30
  %v1169 = vsel %vm682, %v1166, 0
  %v1171 = vsel %vm505, %v29, 0
  %v1173 = vsel %vm505, %v1167, 0
  %v1175 = vsel %vm505, %v30, 0
  %v1177 = vsel %vm505, %v1168, 0
  %1179 = vmatprep.subr.mxu0 %v1173
  %1180 = vmatpush1.msra.mxu0 %v1171
  %1181 = vmatprep.subr.mxu0 0.0
  %1182 = vmatpush1.msra.mxu0 0.0
  %1183 = vmatprep.subr.mxu0 0.0
  %1184 = vmatpush1.msra.mxu0 0.0
  %1185 = vmatprep.subr.mxu0 0.0
  %1186 = vmatpush1.msra.mxu0 0.0
  %1187 = vmatprep.subr.mxu0 0.0
  %1188 = vmatpush1.msra.mxu0 0.0
  %1189 = vmatprep.subr.mxu0 0.0
  %1190 = vmatpush1.msra.mxu0 0.0
  %1191 = vmatprep.subr.mxu0 0.0
  %1192 = vmatpush1.msra.mxu0 0.0
  %1193 = vmatprep.subr.mxu0 0.0
  %1194 = vmatpush1.msra.mxu0 0.0
  %1195 = vmatprep.subr.mxu0 0.0
  %1196 = vmatpush1.msra.mxu0 0.0
  %1197 = vmatprep.subr.mxu0 0.0
  %1198 = vmatpush1.msra.mxu0 0.0
  %1199 = vmatprep.subr.mxu0 0.0
  %1200 = vmatpush1.msra.mxu0 0.0
  %1201 = vmatprep.subr.mxu0 0.0
  %1202 = vmatpush1.msra.mxu0 0.0
  %1203 = vmatprep.subr.mxu0 0.0
  %1204 = vmatpush1.msra.mxu0 0.0
  %1205 = vmatprep.subr.mxu0 0.0
  %1206 = vmatpush1.msra.mxu0 0.0
  %1207 = vmatprep.subr.mxu0 0.0
  %1208 = vmatpush1.msra.mxu0 0.0
  %1209 = vmatprep.subr.mxu0 0.0
  %1210 = vmatpush1.msra.mxu0 0.0
  %1211 = vmatprep.subr.mxu0 0.0
  %1212 = vmatpush1.msra.mxu0 0.0
  %1213 = vmatprep.subr.mxu0 0.0
  %1214 = vmatpush1.msra.mxu0 0.0
  %1215 = vmatprep.subr.mxu0 0.0
  %1216 = vmatpush1.msra.mxu0 0.0
  %1217 = vmatprep.subr.mxu0 0.0
  %1218 = vmatpush1.msra.mxu0 0.0
  %1219 = vmatprep.subr.mxu0 0.0
  %1220 = vmatpush1.msra.mxu0 0.0
  %1221 = vmatprep.subr.mxu0 0.0
  %1222 = vmatpush1.msra.mxu0 0.0
  %1223 = vmatprep.subr.mxu0 0.0
  %1224 = vmatpush1.msra.mxu0 0.0
  %1225 = vmatprep.subr.mxu0 0.0
  %1226 = vmatpush1.msra.mxu0 0.0
  %1227 = vmatprep.subr.mxu0 0.0
  %1228 = vmatpush1.msra.mxu0 0.0
  %1229 = vmatprep.subr.mxu0 0.0
  %1230 = vmatpush1.msra.mxu0 0.0
  %1231 = vmatprep.subr.mxu0 0.0
  %1232 = vmatpush1.msra.mxu0 0.0
  %1233 = vmatprep.subr.mxu0 0.0
  %1234 = vmatpush1.msra.mxu0 0.0
  %1235 = vmatprep.subr.mxu0 0.0
  %1236 = vmatpush1.msra.mxu0 0.0
  %1237 = vmatprep.subr.mxu0 0.0
  %1238 = vmatpush1.msra.mxu0 0.0
  %1239 = vmatprep.subr.mxu0 0.0
  %1240 = vmatpush1.msra.mxu0 0.0
  %1241 = vmatprep.subr.mxu0 0.0
  %1242 = vmatpush1.msra.mxu0 0.0
  %1243 = vmatprep.mubr.f32.mxu0 0.0
  %1244 = vmatmul.mubr.f32.gmra.mrb[0].mxu0 %v1169
  %v1245 = vpop.f32.mrb[0].mxu0
  %v1246 = vadd.f32 0.0, %v1245
  %v1247 = vpop.f32.mrb[0].mxu0
  %v1248 = vadd.f32 0.0, %v1247
  %1249 = vdwg.mxu0
  %1250 = vmatprep.subr.mxu0 %v1177
  %1251 = vmatpush1.msra.mxu0 %v1175
  %1252 = vmatprep.subr.mxu0 0.0
  %1253 = vmatpush1.msra.mxu0 0.0
  %1254 = vmatprep.subr.mxu0 0.0
  %1255 = vmatpush1.msra.mxu0 0.0
  %1256 = vmatprep.subr.mxu0 0.0
  %1257 = vmatpush1.msra.mxu0 0.0
  %1258 = vmatprep.subr.mxu0 0.0
  %1259 = vmatpush1.msra.mxu0 0.0
  %1260 = vmatprep.subr.mxu0 0.0
  %1261 = vmatpush1.msra.mxu0 0.0
  %1262 = vmatprep.subr.mxu0 0.0
  %1263 = vmatpush1.msra.mxu0 0.0
  %1264 = vmatprep.subr.mxu0 0.0
  %1265 = vmatpush1.msra.mxu0 0.0
  %1266 = vmatprep.subr.mxu0 0.0
  %1267 = vmatpush1.msra.mxu0 0.0
  %1268 = vmatprep.subr.mxu0 0.0
  %1269 = vmatpush1.msra.mxu0 0.0
  %1270 = vmatprep.subr.mxu0 0.0
  %1271 = vmatpush1.msra.mxu0 0.0
  %1272 = vmatprep.subr.mxu0 0.0
  %1273 = vmatpush1.msra.mxu0 0.0
  %1274 = vmatprep.subr.mxu0 0.0
  %1275 = vmatpush1.msra.mxu0 0.0
  %1276 = vmatprep.subr.mxu0 0.0
  %1277 = vmatpush1.msra.mxu0 0.0
  %1278 = vmatprep.subr.mxu0 0.0
  %1279 = vmatpush1.msra.mxu0 0.0
  %1280 = vmatprep.subr.mxu0 0.0
  %1281 = vmatpush1.msra.mxu0 0.0
  %1282 = vmatprep.subr.mxu0 0.0
  %1283 = vmatpush1.msra.mxu0 0.0
  %1284 = vmatprep.subr.mxu0 0.0
  %1285 = vmatpush1.msra.mxu0 0.0
  %1286 = vmatprep.subr.mxu0 0.0
  %1287 = vmatpush1.msra.mxu0 0.0
  %1288 = vmatprep.subr.mxu0 0.0
  %1289 = vmatpush1.msra.mxu0 0.0
  %1290 = vmatprep.subr.mxu0 0.0
  %1291 = vmatpush1.msra.mxu0 0.0
  %1292 = vmatprep.subr.mxu0 0.0
  %1293 = vmatpush1.msra.mxu0 0.0
  %1294 = vmatprep.subr.mxu0 0.0
  %1295 = vmatpush1.msra.mxu0 0.0
  %1296 = vmatprep.subr.mxu0 0.0
  %1297 = vmatpush1.msra.mxu0 0.0
  %1298 = vmatprep.subr.mxu0 0.0
  %1299 = vmatpush1.msra.mxu0 0.0
  %1300 = vmatprep.subr.mxu0 0.0
  %1301 = vmatpush1.msra.mxu0 0.0
  %1302 = vmatprep.subr.mxu0 0.0
  %1303 = vmatpush1.msra.mxu0 0.0
  %1304 = vmatprep.subr.mxu0 0.0
  %1305 = vmatpush1.msra.mxu0 0.0
  %1306 = vmatprep.subr.mxu0 0.0
  %1307 = vmatpush1.msra.mxu0 0.0
  %1308 = vmatprep.subr.mxu0 0.0
  %1309 = vmatpush1.msra.mxu0 0.0
  %1310 = vmatprep.subr.mxu0 0.0
  %1311 = vmatpush1.msra.mxu0 0.0
  %1312 = vmatprep.subr.mxu0 0.0
  %1313 = vmatpush1.msra.mxu0 0.0
  %1314 = vmatprep.mubr.f32.mxu0 0.0
  %1315 = vmatmul.mubr.f32.gmra.mrb[0].mxu0 %v1169
  %v1316 = vpop.f32.mrb[0].mxu0
  %v1317 = vadd.f32 0.0, %v1316
  %v1318 = vpop.f32.mrb[0].mxu0
  %v1319 = vadd.f32 0.0, %v1318
  %1320 = vdwg.mxu0
  %v1337 = vcombine.low %v760, %v762
  %v1338 = vcombine.low %v831, %v833
  %v1339 = vcombine.low %v922, %v924
  %v1340 = vcombine.low %v993, %v995
  %v1341 = vcombine.low %v1084, %v1086
  %v1342 = vcombine.low %v1155, %v1157
  %v1343 = vcombine.low %v1246, %v1248
  %v1344 = vcombine.low %v1317, %v1319
  %v1345 = vrot.slane %v1339, 7
  %v1346 = vsel %vm563, %v1345, %v1337
  %vm1347 = vcmask 1045509
  %v1348 = vsel %vm1347, %v1345, %v1346
  %v1349 = vrot.slane %v1341, 6
  %v1350 = vsel %vm565, %v1349, %v1348
  %vm1351 = vcmask 1046534
  %v1352 = vsel %vm1351, %v1349, %v1350
  %v1353 = vrot.slane %v1343, 5
  %v1354 = vsel %vm567, %v1353, %v1352
  %vm1355 = vcmask 1047559
  %v1356 = vsel %vm1355, %v1353, %v1354
  %v1357 = vrot.slane %v1340, 7
  %v1358 = vsel %vm563, %v1357, %v1338
  %v1359 = vsel %vm1347, %v1357, %v1358
  %v1360 = vrot.slane %v1342, 6
  %v1361 = vsel %vm565, %v1360, %v1359
  %v1362 = vsel %vm1351, %v1360, %v1361
  %v1363 = vrot.slane %v1344, 5
  %v1364 = vsel %vm567, %v1363, %v1362
  %v1365 = vsel %vm1355, %v1363, %v1364
  %1368 = vst [vmem:[%s5] sm:$0xff] %v1356
  %vm1369 = vcmask 130052
  %vm1370 = vmor %vm1369, %vm505
  %1371 = vst.msk [vmem:[%s5 + $0x8] sm:$0xff] %vm1370, %v1365
  // Predicated region
  $region22: #{naml_forward.13} parent=0 // pred_check
    _
  $region23: #{naml_forward.13} parent=0 // pred_check_branch
    %1373 = sbr.rel (0) target = $region25
  $region24: #{naml_forward.13} parent=0 // pred_region
    _
  $region25: #{naml_forward.13} parent=0 // pred_fallthru
    _
  // Predicated region
  $region26: #{naml_forward.13} parent=0 // pred_check
    _
  $region27: #{naml_forward.13} parent=0 // pred_check_branch
    %1375 = sbr.rel (0) target = $region29
  $region28: #{naml_forward.13} parent=0 // pred_region
    _
  $region29: #{naml_forward.13} parent=0 // pred_fallthru
    _

// kernel: naml_forward.10
$region0: #{naml_forward.10}
  #allocation0 [shape = 'u32[]', space=smem, size = 0x4, offset = 0x4, fixed_abs, tag = 'smem constant byte address 0x4 - core index']
  #allocation1 [shape = 'u32[144,128]{1,0:T(1,128)}', space=vmem, size = 0x12000, scoped, tag = 'internal scratch']
  #allocation2 [shape = 'f32[1,1]{1,0:T(1,128)S(1)}', space=vmem, size = 0x200, scoped, tag = 'scoped memory for naml_forward.10']
  %s0 = inlined_call_operand.vmem [shape: f32[2,3,400], index: 0, kind: input, shape index: {}]
  %s1 = inlined_call_operand.vmem [shape: bf16[400,200], index: 1, kind: input, shape index: {}]
  %s2 = inlined_call_operand.vmem [shape: f32[1,200], index: 2, kind: input, shape index: {}]
  %s3 = inlined_call_operand.vmem [shape: f32[1,200], index: 3, kind: input, shape index: {}]
  %s4 = inlined_call_operand.<no memory space> [shape: f32[1,1], index: 4, kind: input, shape index: {}]
  %s5 = inlined_call_operand.vmem [shape: f32[2,400], index: 5, kind: output, shape index: {}]
  %s6 = sld [smem:[#allocation0]]
  $region30: #{naml_forward.10} parent=0
    _
  %s8 = ssub.s32 1, %s6
  %s9 = scalar_select 0, %s8, %s6
  %v10 = vstv %s4
  %11 = vst [vmem:[#allocation2] sm:$0x1] %v10
  // Predicated region
  $region2: #{naml_forward.10} parent=0 // pred_check
    _
  $region3: #{naml_forward.10} parent=0 // pred_check_branch
    %13 = sbr.rel (0) target = $region5
  $region4: #{naml_forward.10} parent=0 // pred_region
    _
  $region5: #{naml_forward.10} parent=0 // pred_fallthru
    _
  // Predicated region
  $region6: #{naml_forward.10} parent=0 // pred_check
    _
  $region7: #{naml_forward.10} parent=0 // pred_check_branch
    %15 = sbr.rel (0) target = $region9
  $region8: #{naml_forward.10} parent=0 // pred_region
    _
  $region9: #{naml_forward.10} parent=0 // pred_fallthru
    _
  // Predicated region
  $region10: #{naml_forward.10} parent=0 // pred_check
    _
  $region11: #{naml_forward.10} parent=0 // pred_check_branch
    %17 = sbr.rel (0) target = $region13
  $region12: #{naml_forward.10} parent=0 // pred_region
    _
  $region13: #{naml_forward.10} parent=0 // pred_fallthru
    _
  // Predicated region
  $region14: #{naml_forward.10} parent=0 // pred_check
    _
  $region15: #{naml_forward.10} parent=0 // pred_check_branch
    %19 = sbr.rel (0) target = $region17
  $region16: #{naml_forward.10} parent=0 // pred_region
    _
  $region17: #{naml_forward.10} parent=0 // pred_fallthru
    _
  // Predicated region
  $region18: #{naml_forward.10} parent=0 // pred_check
    _
  $region19: #{naml_forward.10} parent=0 // pred_check_branch
    %21 = sbr.rel (0) target = $region21
  $region20: #{naml_forward.10} parent=0 // pred_region
    _
  $region21: #{naml_forward.10} parent=0 // pred_fallthru
    _
  %v23 = vld [vmem:[%s0] sm:$0x77]
  %v24 = vld [vmem:[%s0 + $0x8] sm:$0x77]
  %v25 = vld [vmem:[%s0 + $0x10] sm:$0x77]
  %v26 = vld [vmem:[%s0 + $0x18] sm:$0x77]
  %v32 = vunpack.c.l.s4 1966171168
  %v33 = vunpack.c.0.s8 %v32
  %v34 = vlaneseq
  %v35 = vshrl.u32 %v34, 7
  %v36 = vsub.s32 %v33, %v35
  %v37 = vrot.slane %v23, %v36
  %v39 = vunpack.c.l.s4 1966171168
  %v40 = vunpack.c.0.s8 %v39
  %v41 = vlaneseq
  %v42 = vshrl.u32 %v41, 7
  %v43 = vsub.s32 %v40, %v42
  %v44 = vrot.slane %v24, %v43
  %v45 = vcombine.low %v37, %v44
  %v46 = vcombine.high %v37, %v44
  %v48 = vunpack.c.l.s4 1966171168
  %v49 = vunpack.c.0.s8 %v48
  %v50 = vlaneseq
  %v51 = vshrl.u32 %v50, 7
  %v52 = vsub.s32 %v49, %v51
  %v53 = vrot.slane %v45, %v52
  %v55 = vunpack.c.l.s4 1966171168
  %v56 = vunpack.c.0.s8 %v55
  %v57 = vlaneseq
  %v58 = vshrl.u32 %v57, 7
  %v59 = vsub.s32 %v56, %v58
  %v60 = vrot.slane %v46, %v59
  %v61 = vcombine.high %v53, %v53
  %v63 = vunpack.c.l.s4 1966171168
  %v64 = vunpack.c.0.s8 %v63
  %v65 = vlaneseq
  %v66 = vshrl.u32 %v65, 7
  %v67 = vsub.s32 %v64, %v66
  %v68 = vrot.slane %v25, %v67
  %v70 = vunpack.c.l.s4 1966171168
  %v71 = vunpack.c.0.s8 %v70
  %v72 = vlaneseq
  %v73 = vshrl.u32 %v72, 7
  %v74 = vsub.s32 %v71, %v73
  %v75 = vrot.slane %v26, %v74
  %v76 = vcombine.low %v68, %v75
  %v77 = vcombine.high %v68, %v75
  %v79 = vunpack.c.l.s4 1966171168
  %v80 = vunpack.c.0.s8 %v79
  %v81 = vlaneseq
  %v82 = vshrl.u32 %v81, 7
  %v83 = vsub.s32 %v80, %v82
  %v84 = vrot.slane %v76, %v83
  %v86 = vunpack.c.l.s4 1966171168
  %v87 = vunpack.c.0.s8 %v86
  %v88 = vlaneseq
  %v89 = vshrl.u32 %v88, 7
  %v90 = vsub.s32 %v87, %v89
  %v91 = vrot.slane %v77, %v90
  %v92 = vcombine.high %v84, %v84
  %v93 = vcombine.low %v53, %v60
  %v94 = vcombine.low %v61, %v84
  %v95 = vcombine.low %v91, %v92
  %v97 = vunpack.c.l.s4 1966171168
  %v98 = vunpack.c.0.s8 %v97
  %v99 = vlaneseq
  %v100 = vshrl.u32 %v99, 7
  %v101 = vsub.s32 %v98, %v100
  %v102 = vrot.slane %v93, %v101
  %v104 = vunpack.c.l.s4 1966171168
  %v105 = vunpack.c.0.s8 %v104
  %v106 = vlaneseq
  %v107 = vshrl.u32 %v106, 7
  %v108 = vsub.s32 %v105, %v107
  %v109 = vrot.slane %v94, %v108
  %v111 = vunpack.c.l.s4 1966171168
  %v112 = vunpack.c.0.s8 %v111
  %v113 = vlaneseq
  %v114 = vshrl.u32 %v113, 7
  %v115 = vsub.s32 %v112, %v114
  %v116 = vrot.slane %v95, %v115
  %v117 = vcombine.low %v102, %v109
  %v118 = vcombine.high %v102, %v109
  %v119 = vcombine.high %v116, %v116
  %v121 = vunpack.c.l.s4 1966171168
  %v122 = vunpack.c.0.s8 %v121
  %v123 = vlaneseq
  %v124 = vshrl.u32 %v123, 7
  %v125 = vsub.s32 %v122, %v124
  %v126 = vrot.slane %v117, %v125
  %v128 = vunpack.c.l.s4 1966171168
  %v129 = vunpack.c.0.s8 %v128
  %v130 = vlaneseq
  %v131 = vshrl.u32 %v130, 7
  %v132 = vsub.s32 %v129, %v131
  %v133 = vrot.slane %v118, %v132
  %v135 = vunpack.c.l.s4 1966171168
  %v136 = vunpack.c.0.s8 %v135
  %v137 = vlaneseq
  %v138 = vshrl.u32 %v137, 7
  %v139 = vsub.s32 %v136, %v138
  %v140 = vrot.slane %v116, %v139
  %v142 = vunpack.c.l.s4 1966171168
  %v143 = vunpack.c.0.s8 %v142
  %v144 = vlaneseq
  %v145 = vshrl.u32 %v144, 7
  %v146 = vsub.s32 %v143, %v145
  %v147 = vrot.slane %v119, %v146
  %v148 = vcombine.low %v126, %v140
  %v149 = vcombine.high %v126, %v140
  %v150 = vcombine.low %v133, %v147
  %v151 = vcombine.high %v133, %v147
  %v156 = vpack.c.bf16 %v148, %v148
  %v157 = vpack.c.bf16 %v150, %v150
  %v158 = vpack.c.bf16 %v149, %v149
  %v159 = vpack.c.bf16 %v151, %v151
  %v160 = vld [vmem:[%s1] sm:$0xff]
  %v161 = vld [vmem:[%s1 + $0x8] sm:$0xff]
  %v162 = vld [vmem:[%s1 + $0x10] sm:$0xff]
  %v163 = vld [vmem:[%s1 + $0x18] sm:$0xff]
  %v164 = vld [vmem:[%s1 + $0x20] sm:$0xff]
  %v165 = vld [vmem:[%s1 + $0x28] sm:$0xff]
  %v166 = vld [vmem:[%s1 + $0x30] sm:$0xff]
  %v167 = vld [vmem:[%s1 + $0x38] sm:$0xff]
  %v168 = vld [vmem:[%s1 + $0x40] sm:$0xff]
  %v169 = vld [vmem:[%s1 + $0x48] sm:$0xff]
  %v170 = vld [vmem:[%s1 + $0x50] sm:$0xff]
  %v171 = vld [vmem:[%s1 + $0x58] sm:$0xff]
  %v172 = vld [vmem:[%s1 + $0x60] sm:$0xff]
  %v173 = vld [vmem:[%s1 + $0x68] sm:$0xff]
  %v174 = vld [vmem:[%s1 + $0x70] sm:$0xff]
  %v175 = vld [vmem:[%s1 + $0x78] sm:$0xff]
  %v176 = vld [vmem:[%s1 + $0x80] sm:$0xff]
  %v177 = vld [vmem:[%s1 + $0x88] sm:$0xff]
  %v178 = vld [vmem:[%s1 + $0x90] sm:$0xff]
  %v179 = vld [vmem:[%s1 + $0x98] sm:$0xff]
  %v180 = vld [vmem:[%s1 + $0xa0] sm:$0xff]
  %v181 = vld [vmem:[%s1 + $0xa8] sm:$0xff]
  %v182 = vld [vmem:[%s1 + $0xb0] sm:$0xff]
  %v183 = vld [vmem:[%s1 + $0xb8] sm:$0xff]
  %v184 = vld [vmem:[%s1 + $0xc0] sm:$0xff]
  %v185 = vld [vmem:[%s1 + $0xc8] sm:$0xff]
  %v186 = vld [vmem:[%s1 + $0xd0] sm:$0xff]
  %v187 = vld [vmem:[%s1 + $0xd8] sm:$0xff]
  %v188 = vld [vmem:[%s1 + $0xe0] sm:$0xff]
  %v189 = vld [vmem:[%s1 + $0xe8] sm:$0xff]
  %v190 = vld [vmem:[%s1 + $0xf0] sm:$0xff]
  %v191 = vld [vmem:[%s1 + $0xf8] sm:$0xff]
  %v192 = vld [vmem:[%s1 + $0x100] sm:$0xff]
  %v193 = vld [vmem:[%s1 + $0x108] sm:$0xff]
  %v194 = vld [vmem:[%s1 + $0x110] sm:$0xff]
  %v195 = vld [vmem:[%s1 + $0x118] sm:$0xff]
  %v196 = vld [vmem:[%s1 + $0x120] sm:$0xff]
  %v197 = vld [vmem:[%s1 + $0x128] sm:$0xff]
  %v198 = vld [vmem:[%s1 + $0x130] sm:$0xff]
  %v199 = vld [vmem:[%s1 + $0x138] sm:$0xff]
  %v200 = vld [vmem:[%s1 + $0x140] sm:$0xff]
  %v201 = vld [vmem:[%s1 + $0x148] sm:$0xff]
  %v202 = vld [vmem:[%s1 + $0x150] sm:$0xff]
  %v203 = vld [vmem:[%s1 + $0x158] sm:$0xff]
  %v204 = vld [vmem:[%s1 + $0x160] sm:$0xff]
  %v205 = vld [vmem:[%s1 + $0x168] sm:$0xff]
  %v206 = vld [vmem:[%s1 + $0x170] sm:$0xff]
  %v207 = vld [vmem:[%s1 + $0x178] sm:$0xff]
  %v208 = vld [vmem:[%s1 + $0x180] sm:$0xff]
  %v209 = vld [vmem:[%s1 + $0x188] sm:$0xff]
  %v210 = vld [vmem:[%s2] sm:$0x3]
  %v212 = vlaneseq
  %v213 = vshrl.u32 %v212, 7
  %v214 = vsub.s32 0, %v213
  %v215 = vrot.slane %v210, %v214
  %v216 = vlaneseq
  %v217 = vshrl.u32 %v216, 7
  %v218 = vsub.s32 1, %v217
  %v219 = vrot.slane %v210, %v218
  %v272 = vunpack.c.l.b16 %v160
  %v273 = vunpack.c.h.b16 %v160
  %v274 = vunpack.c.l.b16 %v161
  %v275 = vunpack.c.h.b16 %v161
  %v276 = vunpack.c.l.b16 %v162
  %v277 = vunpack.c.h.b16 %v162
  %v278 = vunpack.c.l.b16 %v163
  %v279 = vunpack.c.h.b16 %v163
  %v280 = vunpack.c.l.b16 %v164
  %v281 = vunpack.c.h.b16 %v164
  %v282 = vunpack.c.l.b16 %v165
  %v283 = vunpack.c.h.b16 %v165
  %v284 = vunpack.c.l.b16 %v166
  %v285 = vunpack.c.h.b16 %v166
  %v286 = vunpack.c.l.b16 %v167
  %v287 = vunpack.c.h.b16 %v167
  %v288 = vunpack.c.l.b16 %v168
  %v289 = vunpack.c.h.b16 %v168
  %v290 = vunpack.c.l.b16 %v169
  %v291 = vunpack.c.h.b16 %v169
  %v292 = vunpack.c.l.b16 %v170
  %v293 = vunpack.c.h.b16 %v170
  %v294 = vunpack.c.l.b16 %v171
  %v295 = vunpack.c.h.b16 %v171
  %v296 = vunpack.c.l.b16 %v172
  %v297 = vunpack.c.h.b16 %v172
  %v298 = vunpack.c.l.b16 %v173
  %v299 = vunpack.c.h.b16 %v173
  %v300 = vunpack.c.l.b16 %v174
  %v301 = vunpack.c.h.b16 %v174
  %v302 = vunpack.c.l.b16 %v175
  %v303 = vunpack.c.h.b16 %v175
  %v304 = vunpack.c.l.b16 %v176
  %v305 = vunpack.c.h.b16 %v176
  %v306 = vunpack.c.l.b16 %v177
  %v307 = vunpack.c.h.b16 %v177
  %v308 = vunpack.c.l.b16 %v178
  %v309 = vunpack.c.h.b16 %v178
  %v310 = vunpack.c.l.b16 %v179
  %v311 = vunpack.c.h.b16 %v179
  %v312 = vunpack.c.l.b16 %v180
  %v313 = vunpack.c.h.b16 %v180
  %v314 = vunpack.c.l.b16 %v181
  %v315 = vunpack.c.h.b16 %v181
  %v316 = vunpack.c.l.b16 %v182
  %v317 = vunpack.c.h.b16 %v182
  %v318 = vunpack.c.l.b16 %v183
  %v319 = vunpack.c.h.b16 %v183
  %v320 = vunpack.c.l.b16 %v184
  %v321 = vunpack.c.h.b16 %v184
  %v322 = vunpack.c.l.b16 %v185
  %v323 = vunpack.c.h.b16 %v185
  %v324 = vunpack.c.l.b16 %v186
  %v325 = vunpack.c.h.b16 %v186
  %v326 = vunpack.c.l.b16 %v187
  %v327 = vunpack.c.h.b16 %v187
  %v328 = vunpack.c.l.b16 %v188
  %v329 = vunpack.c.h.b16 %v188
  %v330 = vunpack.c.l.b16 %v189
  %v331 = vunpack.c.h.b16 %v189
  %v332 = vunpack.c.l.b16 %v190
  %v333 = vunpack.c.h.b16 %v190
  %v334 = vunpack.c.l.b16 %v191
  %v335 = vunpack.c.h.b16 %v191
  %v336 = vunpack.c.l.b16 %v192
  %v337 = vunpack.c.h.b16 %v192
  %v338 = vunpack.c.l.b16 %v193
  %v339 = vunpack.c.h.b16 %v193
  %v340 = vunpack.c.l.b16 %v194
  %v341 = vunpack.c.h.b16 %v194
  %v342 = vunpack.c.l.b16 %v195
  %v343 = vunpack.c.h.b16 %v195
  %v344 = vunpack.c.l.b16 %v196
  %v345 = vunpack.c.h.b16 %v196
  %v346 = vunpack.c.l.b16 %v197
  %v347 = vunpack.c.h.b16 %v197
  %v348 = vunpack.c.l.b16 %v198
  %v349 = vunpack.c.h.b16 %v198
  %v350 = vunpack.c.l.b16 %v199
  %v351 = vunpack.c.h.b16 %v199
  %v352 = vunpack.c.l.b16 %v200
  %v353 = vunpack.c.h.b16 %v200
  %v354 = vunpack.c.l.b16 %v201
  %v355 = vunpack.c.h.b16 %v201
  %v356 = vunpack.c.l.b16 %v202
  %v357 = vunpack.c.h.b16 %v202
  %v358 = vunpack.c.l.b16 %v203
  %v359 = vunpack.c.h.b16 %v203
  %v360 = vunpack.c.l.b16 %v204
  %v361 = vunpack.c.h.b16 %v204
  %v362 = vunpack.c.l.b16 %v205
  %v363 = vunpack.c.h.b16 %v205
  %v364 = vunpack.c.l.b16 %v206
  %v365 = vunpack.c.h.b16 %v206
  %v366 = vunpack.c.l.b16 %v207
  %v367 = vunpack.c.h.b16 %v207
  %v368 = vunpack.c.l.b16 %v208
  %v369 = vunpack.c.h.b16 %v208
  %v370 = vunpack.c.l.b16 %v209
  %v371 = vunpack.c.h.b16 %v209
  %v372 = vpack.c.b16 %v274, %v272
  %v373 = vpack.c.b16 %v275, %v273
  %v374 = vpack.c.b16 %v278, %v276
  %v375 = vpack.c.b16 %v279, %v277
  %v376 = vpack.c.b16 %v282, %v280
  %v377 = vpack.c.b16 %v283, %v281
  %v378 = vpack.c.b16 %v286, %v284
  %v379 = vpack.c.b16 %v287, %v285
  %v380 = vpack.c.b16 %v290, %v288
  %v381 = vpack.c.b16 %v291, %v289
  %v382 = vpack.c.b16 %v294, %v292
  %v383 = vpack.c.b16 %v295, %v293
  %v384 = vpack.c.b16 %v298, %v296
  %v385 = vpack.c.b16 %v299, %v297
  %v386 = vpack.c.b16 %v302, %v300
  %v387 = vpack.c.b16 %v303, %v301
  %v388 = vpack.c.b16 %v306, %v304
  %v389 = vpack.c.b16 %v307, %v305
  %v390 = vpack.c.b16 %v310, %v308
  %v391 = vpack.c.b16 %v311, %v309
  %v392 = vpack.c.b16 %v314, %v312
  %v393 = vpack.c.b16 %v315, %v313
  %v394 = vpack.c.b16 %v318, %v316
  %v395 = vpack.c.b16 %v319, %v317
  %v396 = vpack.c.b16 %v322, %v320
  %v397 = vpack.c.b16 %v323, %v321
  %v398 = vpack.c.b16 %v326, %v324
  %v399 = vpack.c.b16 %v327, %v325
  %v400 = vpack.c.b16 %v330, %v328
  %v401 = vpack.c.b16 %v331, %v329
  %v402 = vpack.c.b16 %v334, %v332
  %v403 = vpack.c.b16 %v335, %v333
  %v404 = vpack.c.b16 %v338, %v336
  %v405 = vpack.c.b16 %v339, %v337
  %v406 = vpack.c.b16 %v342, %v340
  %v407 = vpack.c.b16 %v343, %v341
  %v408 = vpack.c.b16 %v346, %v344
  %v409 = vpack.c.b16 %v347, %v345
  %v410 = vpack.c.b16 %v350, %v348
  %v411 = vpack.c.b16 %v351, %v349
  %v412 = vpack.c.b16 %v354, %v352
  %v413 = vpack.c.b16 %v355, %v353
  %v414 = vpack.c.b16 %v358, %v356
  %v415 = vpack.c.b16 %v359, %v357
  %v416 = vpack.c.b16 %v362, %v360
  %v417 = vpack.c.b16 %v363, %v361
  %v418 = vpack.c.b16 %v366, %v364
  %v419 = vpack.c.b16 %v367, %v365
  %v420 = vpack.c.b16 %v370, %v368
  %v421 = vpack.c.b16 %v371, %v369
  %vm472 = vcmask 130048
  %v474 = vsel %vm472, %v159, 0
  %476 = vmatprep.subr.bf16.mxu0 %v373
  %477 = vmatpush1.bf16.msra.mxu0 %v372
  %478 = vmatprep.subr.bf16.mxu0 %v375
  %479 = vmatpush1.bf16.msra.mxu0 %v374
  %480 = vmatprep.subr.bf16.mxu0 %v377
  %481 = vmatpush1.bf16.msra.mxu0 %v376
  %482 = vmatprep.subr.bf16.mxu0 %v379
  %483 = vmatpush1.bf16.msra.mxu0 %v378
  %484 = vmatprep.subr.bf16.mxu0 %v381
  %485 = vmatpush1.bf16.msra.mxu0 %v380
  %486 = vmatprep.subr.bf16.mxu0 %v383
  %487 = vmatpush1.bf16.msra.mxu0 %v382
  %488 = vmatprep.subr.bf16.mxu0 %v385
  %489 = vmatpush1.bf16.msra.mxu0 %v384
  %490 = vmatprep.subr.bf16.mxu0 %v387
  %491 = vmatpush1.bf16.msra.mxu0 %v386
  %492 = vmatprep.subr.bf16.mxu0 %v389
  %493 = vmatpush1.bf16.msra.mxu0 %v388
  %494 = vmatprep.subr.bf16.mxu0 %v391
  %495 = vmatpush1.bf16.msra.mxu0 %v390
  %496 = vmatprep.subr.bf16.mxu0 %v393
  %497 = vmatpush1.bf16.msra.mxu0 %v392
  %498 = vmatprep.subr.bf16.mxu0 %v395
  %499 = vmatpush1.bf16.msra.mxu0 %v394
  %500 = vmatprep.subr.bf16.mxu0 %v397
  %501 = vmatpush1.bf16.msra.mxu0 %v396
  %502 = vmatprep.subr.bf16.mxu0 %v399
  %503 = vmatpush1.bf16.msra.mxu0 %v398
  %504 = vmatprep.subr.bf16.mxu0 %v401
  %505 = vmatpush1.bf16.msra.mxu0 %v400
  %506 = vmatprep.subr.bf16.mxu0 %v403
  %507 = vmatpush1.bf16.msra.mxu0 %v402
  %508 = vmatprep.mubr.bf16.mxu0 %v157
  %509 = vmatmul.mubr.bf16.gmra.mrb[0].mxu0 %v156
  %v510 = vpop.f32.mrb[0].mxu0
  %v511 = vadd.f32 %v215, %v510
  %v512 = vpop.f32.mrb[0].mxu0
  %v513 = vadd.f32 %v219, %v512
  %v514 = vpop.f32.mrb[0].mxu0
  %v515 = vpop.f32.mrb[0].mxu0
  %516 = vdwg.mxu0
  %517 = vmatprep.subr.bf16.mxu0 %v405
  %518 = vmatpush1.bf16.msra.mxu0 %v404
  %519 = vmatprep.subr.bf16.mxu0 %v407
  %520 = vmatpush1.bf16.msra.mxu0 %v406
  %521 = vmatprep.subr.bf16.mxu0 %v409
  %522 = vmatpush1.bf16.msra.mxu0 %v408
  %523 = vmatprep.subr.bf16.mxu0 %v411
  %524 = vmatpush1.bf16.msra.mxu0 %v410
  %525 = vmatprep.subr.bf16.mxu0 %v413
  %526 = vmatpush1.bf16.msra.mxu0 %v412
  %527 = vmatprep.subr.bf16.mxu0 %v415
  %528 = vmatpush1.bf16.msra.mxu0 %v414
  %529 = vmatprep.subr.bf16.mxu0 %v417
  %530 = vmatpush1.bf16.msra.mxu0 %v416
  %531 = vmatprep.subr.bf16.mxu0 %v419
  %532 = vmatpush1.bf16.msra.mxu0 %v418
  %533 = vmatprep.subr.bf16.mxu0 %v421
  %534 = vmatpush1.bf16.msra.mxu0 %v420
  %535 = vmatprep.subr.bf16.mxu0 0
  %536 = vmatpush1.bf16.msra.mxu0 0
  %537 = vmatprep.subr.bf16.mxu0 0
  %538 = vmatpush1.bf16.msra.mxu0 0
  %539 = vmatprep.subr.bf16.mxu0 0
  %540 = vmatpush1.bf16.msra.mxu0 0
  %541 = vmatprep.subr.bf16.mxu0 0
  %542 = vmatpush1.bf16.msra.mxu0 0
  %543 = vmatprep.subr.bf16.mxu0 0
  %544 = vmatpush1.bf16.msra.mxu0 0
  %545 = vmatprep.subr.bf16.mxu0 0
  %546 = vmatpush1.bf16.msra.mxu0 0
  %547 = vmatprep.subr.bf16.mxu0 0
  %548 = vmatpush1.bf16.msra.mxu0 0
  %549 = vmatprep.mubr.bf16.mxu0 %v474
  %550 = vmatmul.mubr.bf16.gmra.mrb[0].mxu0 %v158
  %v551 = vpop.f32.mrb[0].mxu0
  %v552 = vadd.f32 %v511, %v551
  %v553 = vpop.f32.mrb[0].mxu0
  %v554 = vadd.f32 %v513, %v553
  %v555 = vpop.f32.mrb[0].mxu0
  %v556 = vpop.f32.mrb[0].mxu0
  %557 = vdwg.mxu0
  %v558 = vtanh.pop %v552
  %v559 = vtanh.pop %v554
  %v562 = vcombine.low %v558, %v559
  %v563 = vcombine.high %v558, %v559
  %v565 = vunpack.c.l.s4 1966171168
  %v566 = vunpack.c.0.s8 %v565
  %v567 = vlaneseq
  %v568 = vshrl.u32 %v567, 7
  %v569 = vsub.s32 %v566, %v568
  %v570 = vrot.slane %v562, %v569
  %v572 = vunpack.c.l.s4 1966171168
  %v573 = vunpack.c.0.s8 %v572
  %v574 = vlaneseq
  %v575 = vshrl.u32 %v574, 7
  %v576 = vsub.s32 %v573, %v575
  %v577 = vrot.slane %v563, %v576
  %v578 = vcombine.high %v570, %v570
  %v579 = vcombine.high %v577, %v577
  %v581 = vunpack.c.l.s4 1966171168
  %v582 = vunpack.c.0.s8 %v581
  %v583 = vlaneseq
  %v584 = vshrl.u32 %v583, 7
  %v585 = vsub.s32 %v582, %v584
  %v586 = vrot.slane %v570, %v585
  %v588 = vunpack.c.l.s4 1966171168
  %v589 = vunpack.c.0.s8 %v588
  %v590 = vlaneseq
  %v591 = vshrl.u32 %v590, 7
  %v592 = vsub.s32 %v589, %v591
  %v593 = vrot.slane %v577, %v592
  %v595 = vunpack.c.l.s4 1966171168
  %v596 = vunpack.c.0.s8 %v595
  %v597 = vlaneseq
  %v598 = vshrl.u32 %v597, 7
  %v599 = vsub.s32 %v596, %v598
  %v600 = vrot.slane %v578, %v599
  %v602 = vunpack.c.l.s4 1966171168
  %v603 = vunpack.c.0.s8 %v602
  %v604 = vlaneseq
  %v605 = vshrl.u32 %v604, 7
  %v606 = vsub.s32 %v603, %v605
  %v607 = vrot.slane %v579, %v606
  %v608 = vcombine.high %v586, %v586
  %v609 = vcombine.high %v600, %v600
  %v616 = vld [vmem:[%s3] sm:$0x3]
  %v618 = vlaneseq
  %v619 = vshrl.u32 %v618, 7
  %v620 = vsub.s32 0, %v619
  %v621 = vrot.slane %v616, %v620
  %v622 = vlaneseq
  %v623 = vshrl.u32 %v622, 7
  %v624 = vsub.s32 1, %v623
  %v625 = vrot.slane %v616, %v624
  %v626 = vcombine.low %v621, %v625
  %v628 = vunpack.c.l.s4 1966171168
  %v629 = vunpack.c.0.s8 %v628
  %v630 = vlaneseq
  %v631 = vshrl.u32 %v630, 7
  %v632 = vsub.s32 %v629, %v631
  %v633 = vrot.slane %v626, %v632
  %v634 = vcombine.high %v633, %v633
  %v636 = vunpack.c.l.s4 1966171168
  %v637 = vunpack.c.0.s8 %v636
  %v638 = vlaneseq
  %v639 = vshrl.u32 %v638, 7
  %v640 = vsub.s32 %v637, %v639
  %v641 = vrot.slane %v633, %v640
  %v643 = vunpack.c.l.s4 1966171168
  %v644 = vunpack.c.0.s8 %v643
  %v645 = vlaneseq
  %v646 = vshrl.u32 %v645, 7
  %v647 = vsub.s32 %v644, %v646
  %v648 = vrot.slane %v634, %v647
  %v649 = vcombine.high %v641, %v641
  %v653 = vmul.f32 %v586, %v641
  %v654 = vmul.f32 %v600, %v648
  %v655 = vmul.f32 %v608, %v649
  %v656 = vmul.f32 %v609, %v641
  %v657 = vmul.f32 %v593, %v648
  %v658 = vmul.f32 %v607, %v649
  %v665 = vcombine.low %v653, %v654
  %v667 = vunpack.c.l.s4 1966171168
  %v668 = vunpack.c.0.s8 %v667
  %v669 = vlaneseq
  %v670 = vshrl.u32 %v669, 7
  %v671 = vsub.s32 %v668, %v670
  %v672 = vrot.slane %v665, %v671
  %v674 = vunpack.c.l.s4 1966171168
  %v675 = vunpack.c.0.s8 %v674
  %v676 = vlaneseq
  %v677 = vshrl.u32 %v676, 7
  %v678 = vsub.s32 %v675, %v677
  %v679 = vrot.slane %v655, %v678
  %v680 = vcombine.low %v672, %v679
  %v681 = vcombine.high %v672, %v679
  %v683 = vunpack.c.l.s4 1966171168
  %v684 = vunpack.c.0.s8 %v683
  %v685 = vlaneseq
  %v686 = vshrl.u32 %v685, 7
  %v687 = vsub.s32 %v684, %v686
  %v688 = vrot.slane %v680, %v687
  %v690 = vunpack.c.l.s4 1966171168
  %v691 = vunpack.c.0.s8 %v690
  %v692 = vlaneseq
  %v693 = vshrl.u32 %v692, 7
  %v694 = vsub.s32 %v691, %v693
  %v695 = vrot.slane %v681, %v694
  %v696 = vcombine.low %v656, %v657
  %v698 = vunpack.c.l.s4 1966171168
  %v699 = vunpack.c.0.s8 %v698
  %v700 = vlaneseq
  %v701 = vshrl.u32 %v700, 7
  %v702 = vsub.s32 %v699, %v701
  %v703 = vrot.slane %v696, %v702
  %v705 = vunpack.c.l.s4 1966171168
  %v706 = vunpack.c.0.s8 %v705
  %v707 = vlaneseq
  %v708 = vshrl.u32 %v707, 7
  %v709 = vsub.s32 %v706, %v708
  %v710 = vrot.slane %v658, %v709
  %v711 = vcombine.low %v703, %v710
  %v712 = vcombine.high %v703, %v710
  %v714 = vunpack.c.l.s4 1966171168
  %v715 = vunpack.c.0.s8 %v714
  %v716 = vlaneseq
  %v717 = vshrl.u32 %v716, 7
  %v718 = vsub.s32 %v715, %v717
  %v719 = vrot.slane %v711, %v718
  %v721 = vunpack.c.l.s4 1966171168
  %v722 = vunpack.c.0.s8 %v721
  %v723 = vlaneseq
  %v724 = vshrl.u32 %v723, 7
  %v725 = vsub.s32 %v722, %v724
  %v726 = vrot.slane %v712, %v725
  %vm731 = vcmask 1042432
  %v732 = vsel %vm731, %v688, 0.0
  %vm733 = vcmask 583680
  %v734 = vsel %vm733, %v695, 0.0
  %v735 = vadd.f32 %v732, %v734
  %736 = vadd.xlane.f32.xlu0 %v735
  %v737 = vpop.xlane.xlu0 %736
  %v738 = vsel %vm731, %v719, 0.0
  %v739 = vsel %vm733, %v726, 0.0
  %v740 = vadd.f32 %v738, %v739
  %741 = vadd.xlane.f32.xlu0 %v740
  %v742 = vpop.xlane.xlu0 %741
  %v743 = vld [vmem:[#allocation2] sm:$0x1]
  %v745 = vlaneseq
  %v746 = vshrl.u32 %v745, 7
  %v747 = vsub.s32 0, %v746
  %v748 = vrot.slane %v743, %v747
  %749 = vset.pattern.permute.xlu0 0
  %750 = vperm.xlu0 %749, %v748
  %v751 = vpop.permute.xlu0 %750
  %v753 = vadd.f32 %v737, %v751
  %v754 = vadd.f32 %v742, %v751
  %v757 = vlaneseq
  %v758 = vand.u32 %v757, 127
  %v759 = vlaneseq
  %v760 = vshrl.u32 %v759, 7
  %v761 = vsub.s32 %v758, %v760
  %v762 = vrot.slane %v753, %v761
  %v763 = vlaneseq
  %v764 = vshrl.u32 %v763, 7
  %v765 = vsub.s32 %v758, %v764
  %v766 = vrot.slane %v754, %v765
  %vm767 = vcmask 1041409
  %v768 = vsel %vm767, %v766, %v762
  %vm770 = vcmask 17408
  %v771 = vsel %vm770, %v768, -inf
  %772 = vmax.xlane.f32.xlu0 %v771
  %v773 = vpop.xlane.xlu0 %772
  %v775 = vlaneseq
  %v776 = vshrl.u32 %v775, 7
  %v777 = vsub.s32 0, %v776
  %v778 = vrot.slane %v773, %v777
  %v779 = vlaneseq
  %v780 = vshrl.u32 %v779, 7
  %v781 = vsub.s32 1, %v780
  %v782 = vrot.slane %v773, %v781
  %v785 = vsub.f32 %v753, %v778
  %v786 = vsub.f32 %v754, %v782
  %v787 = vmul.f32 %v785, 1.442695
  %v788 = vpow.pop %v787
  %v789 = vmul.f32 %v786, 1.442695
  %v790 = vpow.pop %v789
  %793 = vset.pattern.permute.xlu0 0
  %794 = vperm.xlu0 %793, %v788
  %v795 = vpop.permute.xlu0 %794
  %796 = vset.pattern.permute.xlu0 0
  %797 = vperm.xlu0 %796, %v790
  %v798 = vpop.permute.xlu0 %797
  %v799 = vlaneseq
  %v800 = vshrl.u32 %v799, 7
  %v801 = vsub.s32 %v758, %v800
  %v802 = vrot.slane %v795, %v801
  %v803 = vlaneseq
  %v804 = vshrl.u32 %v803, 7
  %v805 = vsub.s32 %v758, %v804
  %v806 = vrot.slane %v798, %v805
  %v807 = vsel %vm767, %v806, %v802
  %v809 = vsel %vm770, %v807, 0.0
  %810 = vadd.xlane.f32.xlu0 %v809
  %v811 = vpop.xlane.xlu0 %810
  %v812 = vrcp.pop %v811
  %v814 = vlaneseq
  %v815 = vshrl.u32 %v814, 7
  %v816 = vsub.s32 0, %v815
  %v817 = vrot.slane %v812, %v816
  %v818 = vlaneseq
  %v819 = vshrl.u32 %v818, 7
  %v820 = vsub.s32 1, %v819
  %v821 = vrot.slane %v812, %v820
  %v824 = vmul.f32 %v788, %v817
  %v825 = vmul.f32 %v790, %v821
  %827 = vset.pattern.permute.xlu0 0
  %828 = vperm.xlu0 %827, %v824
  %v829 = vpop.permute.xlu0 %828
  %v830 = vlaneseq
  %v831 = vshrl.u32 %v830, 7
  %v832 = vsub.s32 %v758, %v831
  %v833 = vrot.slane %v829, %v832
  %v834 = vcombine.high %v23, %v23
  %v835 = vcombine.high %v24, %v24
  %vm836 = vcmask 23552
  %v837 = vsel %vm836, %v833, 0
  %v839 = vsel %vm731, %v23, 0
  %v841 = vsel %vm731, %v834, 0
  %v843 = vsel %vm731, %v24, 0
  %v845 = vsel %vm731, %v835, 0
  %847 = vmatprep.subr.mxu0 %v841
  %848 = vmatpush1.msra.mxu0 %v839
  %849 = vmatprep.subr.mxu0 0.0
  %850 = vmatpush1.msra.mxu0 0.0
  %851 = vmatprep.subr.mxu0 0.0
  %852 = vmatpush1.msra.mxu0 0.0
  %853 = vmatprep.subr.mxu0 0.0
  %854 = vmatpush1.msra.mxu0 0.0
  %855 = vmatprep.subr.mxu0 0.0
  %856 = vmatpush1.msra.mxu0 0.0
  %857 = vmatprep.subr.mxu0 0.0
  %858 = vmatpush1.msra.mxu0 0.0
  %859 = vmatprep.subr.mxu0 0.0
  %860 = vmatpush1.msra.mxu0 0.0
  %861 = vmatprep.subr.mxu0 0.0
  %862 = vmatpush1.msra.mxu0 0.0
  %863 = vmatprep.subr.mxu0 0.0
  %864 = vmatpush1.msra.mxu0 0.0
  %865 = vmatprep.subr.mxu0 0.0
  %866 = vmatpush1.msra.mxu0 0.0
  %867 = vmatprep.subr.mxu0 0.0
  %868 = vmatpush1.msra.mxu0 0.0
  %869 = vmatprep.subr.mxu0 0.0
  %870 = vmatpush1.msra.mxu0 0.0
  %871 = vmatprep.subr.mxu0 0.0
  %872 = vmatpush1.msra.mxu0 0.0
  %873 = vmatprep.subr.mxu0 0.0
  %874 = vmatpush1.msra.mxu0 0.0
  %875 = vmatprep.subr.mxu0 0.0
  %876 = vmatpush1.msra.mxu0 0.0
  %877 = vmatprep.subr.mxu0 0.0
  %878 = vmatpush1.msra.mxu0 0.0
  %879 = vmatprep.subr.mxu0 0.0
  %880 = vmatpush1.msra.mxu0 0.0
  %881 = vmatprep.subr.mxu0 0.0
  %882 = vmatpush1.msra.mxu0 0.0
  %883 = vmatprep.subr.mxu0 0.0
  %884 = vmatpush1.msra.mxu0 0.0
  %885 = vmatprep.subr.mxu0 0.0
  %886 = vmatpush1.msra.mxu0 0.0
  %887 = vmatprep.subr.mxu0 0.0
  %888 = vmatpush1.msra.mxu0 0.0
  %889 = vmatprep.subr.mxu0 0.0
  %890 = vmatpush1.msra.mxu0 0.0
  %891 = vmatprep.subr.mxu0 0.0
  %892 = vmatpush1.msra.mxu0 0.0
  %893 = vmatprep.subr.mxu0 0.0
  %894 = vmatpush1.msra.mxu0 0.0
  %895 = vmatprep.subr.mxu0 0.0
  %896 = vmatpush1.msra.mxu0 0.0
  %897 = vmatprep.subr.mxu0 0.0
  %898 = vmatpush1.msra.mxu0 0.0
  %899 = vmatprep.subr.mxu0 0.0
  %900 = vmatpush1.msra.mxu0 0.0
  %901 = vmatprep.subr.mxu0 0.0
  %902 = vmatpush1.msra.mxu0 0.0
  %903 = vmatprep.subr.mxu0 0.0
  %904 = vmatpush1.msra.mxu0 0.0
  %905 = vmatprep.subr.mxu0 0.0
  %906 = vmatpush1.msra.mxu0 0.0
  %907 = vmatprep.subr.mxu0 0.0
  %908 = vmatpush1.msra.mxu0 0.0
  %909 = vmatprep.subr.mxu0 0.0
  %910 = vmatpush1.msra.mxu0 0.0
  %911 = vmatprep.mubr.f32.mxu0 0.0
  %912 = vmatmul.mubr.f32.gmra.mrb[0].mxu0 %v837
  %v913 = vpop.f32.mrb[0].mxu0
  %v914 = vadd.f32 0.0, %v913
  %v915 = vpop.f32.mrb[0].mxu0
  %v916 = vadd.f32 0.0, %v915
  %917 = vdwg.mxu0
  %918 = vmatprep.subr.mxu0 %v845
  %919 = vmatpush1.msra.mxu0 %v843
  %920 = vmatprep.subr.mxu0 0.0
  %921 = vmatpush1.msra.mxu0 0.0
  %922 = vmatprep.subr.mxu0 0.0
  %923 = vmatpush1.msra.mxu0 0.0
  %924 = vmatprep.subr.mxu0 0.0
  %925 = vmatpush1.msra.mxu0 0.0
  %926 = vmatprep.subr.mxu0 0.0
  %927 = vmatpush1.msra.mxu0 0.0
  %928 = vmatprep.subr.mxu0 0.0
  %929 = vmatpush1.msra.mxu0 0.0
  %930 = vmatprep.subr.mxu0 0.0
  %931 = vmatpush1.msra.mxu0 0.0
  %932 = vmatprep.subr.mxu0 0.0
  %933 = vmatpush1.msra.mxu0 0.0
  %934 = vmatprep.subr.mxu0 0.0
  %935 = vmatpush1.msra.mxu0 0.0
  %936 = vmatprep.subr.mxu0 0.0
  %937 = vmatpush1.msra.mxu0 0.0
  %938 = vmatprep.subr.mxu0 0.0
  %939 = vmatpush1.msra.mxu0 0.0
  %940 = vmatprep.subr.mxu0 0.0
  %941 = vmatpush1.msra.mxu0 0.0
  %942 = vmatprep.subr.mxu0 0.0
  %943 = vmatpush1.msra.mxu0 0.0
  %944 = vmatprep.subr.mxu0 0.0
  %945 = vmatpush1.msra.mxu0 0.0
  %946 = vmatprep.subr.mxu0 0.0
  %947 = vmatpush1.msra.mxu0 0.0
  %948 = vmatprep.subr.mxu0 0.0
  %949 = vmatpush1.msra.mxu0 0.0
  %950 = vmatprep.subr.mxu0 0.0
  %951 = vmatpush1.msra.mxu0 0.0
  %952 = vmatprep.subr.mxu0 0.0
  %953 = vmatpush1.msra.mxu0 0.0
  %954 = vmatprep.subr.mxu0 0.0
  %955 = vmatpush1.msra.mxu0 0.0
  %956 = vmatprep.subr.mxu0 0.0
  %957 = vmatpush1.msra.mxu0 0.0
  %958 = vmatprep.subr.mxu0 0.0
  %959 = vmatpush1.msra.mxu0 0.0
  %960 = vmatprep.subr.mxu0 0.0
  %961 = vmatpush1.msra.mxu0 0.0
  %962 = vmatprep.subr.mxu0 0.0
  %963 = vmatpush1.msra.mxu0 0.0
  %964 = vmatprep.subr.mxu0 0.0
  %965 = vmatpush1.msra.mxu0 0.0
  %966 = vmatprep.subr.mxu0 0.0
  %967 = vmatpush1.msra.mxu0 0.0
  %968 = vmatprep.subr.mxu0 0.0
  %969 = vmatpush1.msra.mxu0 0.0
  %970 = vmatprep.subr.mxu0 0.0
  %971 = vmatpush1.msra.mxu0 0.0
  %972 = vmatprep.subr.mxu0 0.0
  %973 = vmatpush1.msra.mxu0 0.0
  %974 = vmatprep.subr.mxu0 0.0
  %975 = vmatpush1.msra.mxu0 0.0
  %976 = vmatprep.subr.mxu0 0.0
  %977 = vmatpush1.msra.mxu0 0.0
  %978 = vmatprep.subr.mxu0 0.0
  %979 = vmatpush1.msra.mxu0 0.0
  %980 = vmatprep.subr.mxu0 0.0
  %981 = vmatpush1.msra.mxu0 0.0
  %982 = vmatprep.mubr.f32.mxu0 0.0
  %983 = vmatmul.mubr.f32.gmra.mrb[0].mxu0 %v837
  %v984 = vpop.f32.mrb[0].mxu0
  %v985 = vadd.f32 0.0, %v984
  %v986 = vpop.f32.mrb[0].mxu0
  %v987 = vadd.f32 0.0, %v986
  %988 = vdwg.mxu0
  %990 = vset.pattern.permute.xlu0 0
  %991 = vperm.xlu0 %990, %v825
  %v992 = vpop.permute.xlu0 %991
  %v993 = vlaneseq
  %v994 = vshrl.u32 %v993, 7
  %v995 = vsub.s32 %v758, %v994
  %v996 = vrot.slane %v992, %v995
  %v997 = vcombine.high %v25, %v25
  %v998 = vcombine.high %v26, %v26
  %v999 = vsel %vm836, %v996, 0
  %v1001 = vsel %vm731, %v25, 0
  %v1003 = vsel %vm731, %v997, 0
  %v1005 = vsel %vm731, %v26, 0
  %v1007 = vsel %vm731, %v998, 0
  %1009 = vmatprep.subr.mxu0 %v1003
  %1010 = vmatpush1.msra.mxu0 %v1001
  %1011 = vmatprep.subr.mxu0 0.0
  %1012 = vmatpush1.msra.mxu0 0.0
  %1013 = vmatprep.subr.mxu0 0.0
  %1014 = vmatpush1.msra.mxu0 0.0
  %1015 = vmatprep.subr.mxu0 0.0
  %1016 = vmatpush1.msra.mxu0 0.0
  %1017 = vmatprep.subr.mxu0 0.0
  %1018 = vmatpush1.msra.mxu0 0.0
  %1019 = vmatprep.subr.mxu0 0.0
  %1020 = vmatpush1.msra.mxu0 0.0
  %1021 = vmatprep.subr.mxu0 0.0
  %1022 = vmatpush1.msra.mxu0 0.0
  %1023 = vmatprep.subr.mxu0 0.0
  %1024 = vmatpush1.msra.mxu0 0.0
  %1025 = vmatprep.subr.mxu0 0.0
  %1026 = vmatpush1.msra.mxu0 0.0
  %1027 = vmatprep.subr.mxu0 0.0
  %1028 = vmatpush1.msra.mxu0 0.0
  %1029 = vmatprep.subr.mxu0 0.0
  %1030 = vmatpush1.msra.mxu0 0.0
  %1031 = vmatprep.subr.mxu0 0.0
  %1032 = vmatpush1.msra.mxu0 0.0
  %1033 = vmatprep.subr.mxu0 0.0
  %1034 = vmatpush1.msra.mxu0 0.0
  %1035 = vmatprep.subr.mxu0 0.0
  %1036 = vmatpush1.msra.mxu0 0.0
  %1037 = vmatprep.subr.mxu0 0.0
  %1038 = vmatpush1.msra.mxu0 0.0
  %1039 = vmatprep.subr.mxu0 0.0
  %1040 = vmatpush1.msra.mxu0 0.0
  %1041 = vmatprep.subr.mxu0 0.0
  %1042 = vmatpush1.msra.mxu0 0.0
  %1043 = vmatprep.subr.mxu0 0.0
  %1044 = vmatpush1.msra.mxu0 0.0
  %1045 = vmatprep.subr.mxu0 0.0
  %1046 = vmatpush1.msra.mxu0 0.0
  %1047 = vmatprep.subr.mxu0 0.0
  %1048 = vmatpush1.msra.mxu0 0.0
  %1049 = vmatprep.subr.mxu0 0.0
  %1050 = vmatpush1.msra.mxu0 0.0
  %1051 = vmatprep.subr.mxu0 0.0
  %1052 = vmatpush1.msra.mxu0 0.0
  %1053 = vmatprep.subr.mxu0 0.0
  %1054 = vmatpush1.msra.mxu0 0.0
  %1055 = vmatprep.subr.mxu0 0.0
  %1056 = vmatpush1.msra.mxu0 0.0
  %1057 = vmatprep.subr.mxu0 0.0
  %1058 = vmatpush1.msra.mxu0 0.0
  %1059 = vmatprep.subr.mxu0 0.0
  %1060 = vmatpush1.msra.mxu0 0.0
  %1061 = vmatprep.subr.mxu0 0.0
  %1062 = vmatpush1.msra.mxu0 0.0
  %1063 = vmatprep.subr.mxu0 0.0
  %1064 = vmatpush1.msra.mxu0 0.0
  %1065 = vmatprep.subr.mxu0 0.0
  %1066 = vmatpush1.msra.mxu0 0.0
  %1067 = vmatprep.subr.mxu0 0.0
  %1068 = vmatpush1.msra.mxu0 0.0
  %1069 = vmatprep.subr.mxu0 0.0
  %1070 = vmatpush1.msra.mxu0 0.0
  %1071 = vmatprep.subr.mxu0 0.0
  %1072 = vmatpush1.msra.mxu0 0.0
  %1073 = vmatprep.mubr.f32.mxu0 0.0
  %1074 = vmatmul.mubr.f32.gmra.mrb[0].mxu0 %v999
  %v1075 = vpop.f32.mrb[0].mxu0
  %v1076 = vadd.f32 0.0, %v1075
  %v1077 = vpop.f32.mrb[0].mxu0
  %v1078 = vadd.f32 0.0, %v1077
  %1079 = vdwg.mxu0
  %1080 = vmatprep.subr.mxu0 %v1007
  %1081 = vmatpush1.msra.mxu0 %v1005
  %1082 = vmatprep.subr.mxu0 0.0
  %1083 = vmatpush1.msra.mxu0 0.0
  %1084 = vmatprep.subr.mxu0 0.0
  %1085 = vmatpush1.msra.mxu0 0.0
  %1086 = vmatprep.subr.mxu0 0.0
  %1087 = vmatpush1.msra.mxu0 0.0
  %1088 = vmatprep.subr.mxu0 0.0
  %1089 = vmatpush1.msra.mxu0 0.0
  %1090 = vmatprep.subr.mxu0 0.0
  %1091 = vmatpush1.msra.mxu0 0.0
  %1092 = vmatprep.subr.mxu0 0.0
  %1093 = vmatpush1.msra.mxu0 0.0
  %1094 = vmatprep.subr.mxu0 0.0
  %1095 = vmatpush1.msra.mxu0 0.0
  %1096 = vmatprep.subr.mxu0 0.0
  %1097 = vmatpush1.msra.mxu0 0.0
  %1098 = vmatprep.subr.mxu0 0.0
  %1099 = vmatpush1.msra.mxu0 0.0
  %1100 = vmatprep.subr.mxu0 0.0
  %1101 = vmatpush1.msra.mxu0 0.0
  %1102 = vmatprep.subr.mxu0 0.0
  %1103 = vmatpush1.msra.mxu0 0.0
  %1104 = vmatprep.subr.mxu0 0.0
  %1105 = vmatpush1.msra.mxu0 0.0
  %1106 = vmatprep.subr.mxu0 0.0
  %1107 = vmatpush1.msra.mxu0 0.0
  %1108 = vmatprep.subr.mxu0 0.0
  %1109 = vmatpush1.msra.mxu0 0.0
  %1110 = vmatprep.subr.mxu0 0.0
  %1111 = vmatpush1.msra.mxu0 0.0
  %1112 = vmatprep.subr.mxu0 0.0
  %1113 = vmatpush1.msra.mxu0 0.0
  %1114 = vmatprep.subr.mxu0 0.0
  %1115 = vmatpush1.msra.mxu0 0.0
  %1116 = vmatprep.subr.mxu0 0.0
  %1117 = vmatpush1.msra.mxu0 0.0
  %1118 = vmatprep.subr.mxu0 0.0
  %1119 = vmatpush1.msra.mxu0 0.0
  %1120 = vmatprep.subr.mxu0 0.0
  %1121 = vmatpush1.msra.mxu0 0.0
  %1122 = vmatprep.subr.mxu0 0.0
  %1123 = vmatpush1.msra.mxu0 0.0
  %1124 = vmatprep.subr.mxu0 0.0
  %1125 = vmatpush1.msra.mxu0 0.0
  %1126 = vmatprep.subr.mxu0 0.0
  %1127 = vmatpush1.msra.mxu0 0.0
  %1128 = vmatprep.subr.mxu0 0.0
  %1129 = vmatpush1.msra.mxu0 0.0
  %1130 = vmatprep.subr.mxu0 0.0
  %1131 = vmatpush1.msra.mxu0 0.0
  %1132 = vmatprep.subr.mxu0 0.0
  %1133 = vmatpush1.msra.mxu0 0.0
  %1134 = vmatprep.subr.mxu0 0.0
  %1135 = vmatpush1.msra.mxu0 0.0
  %1136 = vmatprep.subr.mxu0 0.0
  %1137 = vmatpush1.msra.mxu0 0.0
  %1138 = vmatprep.subr.mxu0 0.0
  %1139 = vmatpush1.msra.mxu0 0.0
  %1140 = vmatprep.subr.mxu0 0.0
  %1141 = vmatpush1.msra.mxu0 0.0
  %1142 = vmatprep.subr.mxu0 0.0
  %1143 = vmatpush1.msra.mxu0 0.0
  %1144 = vmatprep.mubr.f32.mxu0 0.0
  %1145 = vmatmul.mubr.f32.gmra.mrb[0].mxu0 %v999
  %v1146 = vpop.f32.mrb[0].mxu0
  %v1147 = vadd.f32 0.0, %v1146
  %v1148 = vpop.f32.mrb[0].mxu0
  %v1149 = vadd.f32 0.0, %v1148
  %1150 = vdwg.mxu0
  %v1159 = vcombine.low %v914, %v916
  %v1160 = vcombine.low %v985, %v987
  %v1162 = vunpack.c.l.s4 1983009808
  %v1163 = vunpack.c.0.s8 %v1162
  %v1164 = vlaneseq
  %v1165 = vshrl.u32 %v1164, 7
  %v1166 = vsub.s32 %v1163, %v1165
  %v1167 = vrot.slane %v1159, %v1166
  %v1169 = vunpack.c.l.s4 1983009808
  %v1170 = vunpack.c.0.s8 %v1169
  %v1171 = vlaneseq
  %v1172 = vshrl.u32 %v1171, 7
  %v1173 = vsub.s32 %v1170, %v1172
  %v1174 = vrot.slane %v1160, %v1173
  %v1175 = vcombine.low %v1167, %v1174
  %v1176 = vcombine.low %v1076, %v1078
  %v1177 = vcombine.low %v1147, %v1149
  %v1179 = vunpack.c.l.s4 1983009808
  %v1180 = vunpack.c.0.s8 %v1179
  %v1181 = vlaneseq
  %v1182 = vshrl.u32 %v1181, 7
  %v1183 = vsub.s32 %v1180, %v1182
  %v1184 = vrot.slane %v1176, %v1183
  %v1186 = vunpack.c.l.s4 1983009808
  %v1187 = vunpack.c.0.s8 %v1186
  %v1188 = vlaneseq
  %v1189 = vshrl.u32 %v1188, 7
  %v1190 = vsub.s32 %v1187, %v1189
  %v1191 = vrot.slane %v1177, %v1190
  %v1192 = vcombine.low %v1184, %v1191
  %vm1193 = vcmask 1044484
  %v1194 = vsel %vm1193, %v1175, %v1175
  %vm1195 = vcmask 1046534
  %v1196 = vsel %vm1195, %v1175, %v1194
  %v1197 = vrot.slane %v1192, 7
  %v1198 = vsel %vm767, %v1197, %v1196
  %vm1199 = vcmask 1043459
  %v1200 = vsel %vm1199, %v1197, %v1198
  %vm1201 = vcmask 1045509
  %v1202 = vsel %vm1201, %v1197, %v1200
  %vm1203 = vcmask 1047559
  %v1204 = vsel %vm1203, %v1197, %v1202
  %vm1206 = vcmask 1041408
  %vm1207 = vcmask 1043458
  %vm1208 = vmor %vm1207, %vm1206
  %vm1209 = vcmask 1045508
  %vm1210 = vmor %vm1209, %vm1208
  %vm1211 = vcmask 130054
  %vm1212 = vmor %vm1211, %vm1210
  %1213 = vst.msk [vmem:[%s5] sm:$0xff] %vm1212, %v1204
  // Predicated region
  $region22: #{naml_forward.10} parent=0 // pred_check
    _
  $region23: #{naml_forward.10} parent=0 // pred_check_branch
    %1215 = sbr.rel (0) target = $region25
  $region24: #{naml_forward.10} parent=0 // pred_region
    _
  $region25: #{naml_forward.10} parent=0 // pred_fallthru
    _
  // Predicated region
  $region26: #{naml_forward.10} parent=0 // pred_check
    _
  $region27: #{naml_forward.10} parent=0 // pred_check_branch
    %1217 = sbr.rel (0) target = $region29
  $region28: #{naml_forward.10} parent=0 // pred_region
    _
  $region29: #{naml_forward.10} parent=0 // pred_fallthru
    _

</llo_original>
